<compile_context>
chip_gen: v7x
topology: tpu7x:2x2x1
jax: 0.10.0
libtpu: 0.0.40
codegen_flags: <defaults>
</compile_context>

<pallas_src>
import math
from functools import partial

import jax
import jax.numpy as jnp
from jax import lax
from jax.experimental import pallas as pl
from jax.experimental.pallas import tpu as pltpu


TILE_M = 1024                   # stem rows per grid step (sweep 512-2048 per chip)
LANE = 128                      # output channels padded to multiples of this
MATMUL_DTYPE = jnp.bfloat16     # MXU operand dtype (accumulation stays f32)


# ----------------------------- small helpers ---------------------------------

def _round_up(x, m):
    return (x + m - 1) // m * m


def _bytes(shape, dtype):
    return math.prod(shape) * jnp.dtype(dtype).itemsize


def _vmem_limit(pipelined, resident=()):
    """Rough per-call VMEM need: 2x double-buffered blocks + resident blocks."""
    need = 2 * sum(_bytes(s, d) for s, d in pipelined)
    need += sum(_bytes(s, d) for s, d in resident)
    need += 2 << 20                                   # accumulator / compiler slack
    return int(min(max(need, 8 << 20), 48 << 20))     # stay under v7x 64 MiB physical


def _choose_tile_m(M, target):
    """Largest multiple-of-8 divisor of M <= target, preferring grid >= 2."""
    if M % 8 == 0:
        divs = [t for t in range(8, min(target, M) + 1, 8) if M % t == 0]
        if divs:
            two_plus = [t for t in divs if M // t >= 2]
            return (max(two_plus) if two_plus else max(divs)), M
    tm = min(target, _round_up(M, 8))
    return tm, _round_up(M, tm)


def _pad_last(a, to):
    p = to - a.shape[-1]
    if p == 0:
        return a
    cfg = [(0, 0)] * (a.ndim - 1) + [(0, p)]
    return jnp.pad(a, cfg)


# ----------------------------- stem kernel ------------------------------------
# Fuses the four 1x1 convs of the block: branch1x1, 3x3-reduce, 5x5-reduce read
# x; the pool branch reads pooled(x).  BN scale is folded into the bf16 weights,
# so the epilogue is f32 bias + ReLU.  t3/t5 are emitted as bf16 (conv inputs).

def _stem_kernel(x_ref, p_ref, w1_ref, w3_ref, w5_ref, wp_ref,
                 b1_ref, b3_ref, b5_ref, bp_ref,
                 y1_ref, t3_ref, t5_ref, y4_ref):
    x = x_ref[...]
    y1 = jnp.dot(x, w1_ref[...], preferred_element_type=jnp.float32) + b1_ref[...]
    y1_ref[...] = jnp.maximum(y1, 0.0).astype(y1_ref.dtype)

    t3 = jnp.dot(x, w3_ref[...], preferred_element_type=jnp.float32) + b3_ref[...]
    t3_ref[...] = jnp.maximum(t3, 0.0).astype(t3_ref.dtype)

    t5 = jnp.dot(x, w5_ref[...], preferred_element_type=jnp.float32) + b5_ref[...]
    t5_ref[...] = jnp.maximum(t5, 0.0).astype(t5_ref.dtype)

    y4 = jnp.dot(p_ref[...], wp_ref[...], preferred_element_type=jnp.float32) + bp_ref[...]
    y4_ref[...] = jnp.maximum(y4, 0.0).astype(y4_ref.dtype)


def stem_1x1(x2, p2, params, tile_m=TILE_M):
    """x2, p2: (M, Cin) bf16. Returns y1 f32, t3 bf16, t5 bf16, y4 f32 (padded Cout)."""
    w1, b1 = params["b1"]
    w3, b3 = params["b3_1"]
    w5, b5 = params["b5_1"]
    wp, bp = params["bp"]
    M, Cin = x2.shape
    C1, C3, C5, Cp = w1.shape[1], w3.shape[1], w5.shape[1], wp.shape[1]

    tm, Mp = _choose_tile_m(M, tile_m)
    if Mp != M:  # rare fallback when M has no multiple-of-8 divisor <= tile_m
        x2 = jnp.pad(x2, ((0, Mp - M), (0, 0)))
        p2 = jnp.pad(p2, ((0, Mp - M), (0, 0)))

    vlim = _vmem_limit(
        pipelined=[((tm, Cin), MATMUL_DTYPE), ((tm, Cin), MATMUL_DTYPE),
                   ((tm, C1), jnp.float32), ((tm, C3), MATMUL_DTYPE),
                   ((tm, C5), MATMUL_DTYPE), ((tm, Cp), jnp.float32)],
        resident=[(w1.shape, MATMUL_DTYPE), (w3.shape, MATMUL_DTYPE),
                  (w5.shape, MATMUL_DTYPE), (wp.shape, MATMUL_DTYPE),
                  ((1, C1), jnp.float32), ((1, C3), jnp.float32),
                  ((1, C5), jnp.float32), ((1, Cp), jnp.float32)])

    row = lambda i: (i, 0)
    rep = lambda i: (0, 0)
    y1, t3, t5, y4 = pl.pallas_call(
        _stem_kernel,
        out_shape=(jax.ShapeDtypeStruct((Mp, C1), jnp.float32),
                   jax.ShapeDtypeStruct((Mp, C3), MATMUL_DTYPE),
                   jax.ShapeDtypeStruct((Mp, C5), MATMUL_DTYPE),
                   jax.ShapeDtypeStruct((Mp, Cp), jnp.float32)),
        grid=(Mp // tm,),
        in_specs=[pl.BlockSpec((tm, Cin), row),
                  pl.BlockSpec((tm, Cin), row),
                  pl.BlockSpec(w1.shape, rep),
                  pl.BlockSpec(w3.shape, rep),
                  pl.BlockSpec(w5.shape, rep),
                  pl.BlockSpec(wp.shape, rep),
                  pl.BlockSpec((1, C1), rep),
                  pl.BlockSpec((1, C3), rep),
                  pl.BlockSpec((1, C5), rep),
                  pl.BlockSpec((1, Cp), rep)],
        out_specs=(pl.BlockSpec((tm, C1), row),
                   pl.BlockSpec((tm, C3), row),
                   pl.BlockSpec((tm, C5), row),
                   pl.BlockSpec((tm, Cp), row)),
        compiler_params=pltpu.CompilerParams(
            dimension_semantics=("parallel",), vmem_limit_bytes=vlim),
    )(x2, p2, w1, w3, w5, wp, b1, b3, b5, bp)

    if Mp != M:
        y1, t3, t5, y4 = y1[:M], t3[:M], t5[:M], y4[:M]
    return y1, t3, t5, y4


# ----------------------------- 3x3 conv kernel ---------------------------------
# In-kernel tap formation (no HBM im2col).  The activation is laid out once as
# a flat, shift-addressable slab per image:
#   pad W by one zero column on the right, pad H by one zero row top/bottom,
#   flatten (H+2, W+1) row-major and pad the flat axis by one zero row at each
#   end.  Then tap (i, j) of the conv at flattened output position m is simply
#   src[m + 1 + i*(W+1) + (j-1)], with every out-of-range access landing on a
#   zero entry.  The kernel does 9 accumulating K=Cin matmuls (f32 acc).
# The output keeps a throw-away column w == W (garbage, finite); it is sliced
# away (fused into the consumer copy) after the call.

def conv3x3_bn_relu(t2, w9, bias, N, H, W, out_dtype):
    """t2: (N*H*W, Cin) activation, w9: (9, Cin, Coutp) bf16 (BN-scale folded),
    bias: (1, Coutp) f32.  Returns (N*H*W, Coutp) in out_dtype."""
    M, Cin = t2.shape
    Coutp = w9.shape[-1]
    R = W + 1
    L = (H + 2) * R + 2
    Mrow = H * R

    x = t2.astype(MATMUL_DTYPE).reshape(N, H, W, Cin)
    xw = jnp.pad(x, ((0, 0), (0, 0), (0, 1), (0, 0)))        # zero col on the right
    xh = jnp.pad(xw, ((0, 0), (1, 1), (0, 0), (0, 0)))       # zero rows top/bottom
    src = jnp.pad(xh.reshape(N, (H + 2) * R, Cin), ((0, 0), (1, 1), (0, 0)))

    def kernel(s_ref, w_ref, b_ref, o_ref):
        acc = jnp.zeros((Mrow, Coutp), jnp.float32)
        for i in range(3):
            for j in range(3):
                off = 1 + i * R + (j - 1)                    # static per tap
                tap = s_ref[0, pl.ds(off, Mrow), :]
                acc = acc + jnp.dot(tap, w_ref[i * 3 + j],
                                    preferred_element_type=jnp.float32)
        o_ref[0] = jnp.maximum(acc + b_ref[...], 0.0).astype(o_ref.dtype)

    vlim = _vmem_limit(
        pipelined=[((1, L, Cin), MATMUL_DTYPE), ((1, Mrow, Coutp), out_dtype)],
        resident=[(w9.shape, MATMUL_DTYPE), ((1, Coutp), jnp.float32),
                  ((Mrow, Coutp), jnp.float32)])             # f32 accumulator

    out = pl.pallas_call(
        kernel,
        out_shape=jax.ShapeDtypeStruct((N, Mrow, Coutp), out_dtype),
        grid=(N,),
        in_specs=[pl.BlockSpec((1, L, Cin), lambda n: (n, 0, 0)),
                  pl.BlockSpec(w9.shape, lambda n: (0, 0, 0)),
                  pl.BlockSpec((1, Coutp), lambda n: (0, 0))],
        out_specs=pl.BlockSpec((1, Mrow, Coutp), lambda n: (n, 0, 0)),
        compiler_params=pltpu.CompilerParams(
            dimension_semantics=("parallel",), vmem_limit_bytes=vlim),
    )(src, w9, bias)

    # Drop the helper column (w == W) and flatten back to (M, Coutp).
    out = out.reshape(N, H, R, Coutp)[:, :, :W, :].reshape(M, Coutp)
    return out


# ----------------------------- parameter setup --------------------------------

def _make_conv(key, cin, cout, k):
    kw, kb = jax.random.split(key)
    w = 0.1 * jax.random.normal(kw, (cout, cin, k, k), jnp.float32)   # OIHW
    b = 0.1 * jax.random.normal(kb, (cout,), jnp.float32)
    return w, b


def _make_bn(key, c):
    k1, k2, k3, k4 = jax.random.split(key, 4)
    gamma = 1.0 + 0.1 * jax.random.normal(k1, (c,), jnp.float32)
    beta = 0.1 * jax.random.normal(k2, (c,), jnp.float32)
    mean = 0.1 * jax.random.normal(k3, (c,), jnp.float32)
    var = 1.0 + 0.1 * jax.random.uniform(k4, (c,), jnp.float32)
    return gamma, beta, mean, var


def _fold(conv_b, gamma, beta, mean, var, eps=1e-5):
    scale = gamma / jnp.sqrt(var + eps)
    bias = (conv_b - mean) * scale + beta
    return scale, bias


def _prep_1x1(w, scale, bias):
    # (Cout, Cin, 1, 1) -> (Cin, Coutp) bf16 with BN scale folded; bias (1, Coutp) f32.
    cout = w.shape[0]
    coutp = _round_up(cout, LANE)
    wm = jnp.transpose(w[:, :, 0, 0], (1, 0)) * scale[None, :]
    wm = _pad_last(wm, coutp).astype(MATMUL_DTYPE)
    return wm, _pad_last(bias[None, :], coutp)


def _prep_3x3(w, scale, bias, cin_pad):
    # (Cout, Cin, 3, 3) -> (9, Cin_pad, Coutp) bf16, tap-major, BN scale folded.
    cout, cin = w.shape[0], w.shape[1]
    coutp = _round_up(cout, LANE)
    w9 = jnp.transpose(w, (2, 3, 1, 0)).reshape(9, cin, cout) * scale[None, None, :]
    w9 = jnp.pad(w9, ((0, 0), (0, cin_pad - cin), (0, coutp - cout))).astype(MATMUL_DTYPE)
    return w9, _pad_last(bias[None, :], coutp)


def make_inception_params(key, in_planes, n1x1, n3x3, n5x5, pool_planes,
                          food_rate1, food_rate2, food_rate3):
    keys = jax.random.split(key, 14)

    def conv_bn(kc, kb, cin, cout, ksz, cin_pad=None):
        w, b = _make_conv(kc, cin, cout, ksz)
        g, bt, m, v = _make_bn(kb, cout)
        scale, bias = _fold(b, g, bt, m, v)
        if ksz == 1:
            return _prep_1x1(w, scale, bias)
        return _prep_3x3(w, scale, bias, cin_pad)

    f1p = _round_up(food_rate1, LANE)
    f2p = _round_up(food_rate2, LANE)
    f3p = _round_up(food_rate3, LANE)
    return {
        "b1":   conv_bn(keys[0],  keys[1],  in_planes,  n1x1,       1),
        "b3_1": conv_bn(keys[2],  keys[3],  in_planes,  food_rate1, 1),
        "b3_2": conv_bn(keys[4],  keys[5],  food_rate1, n3x3,       3, cin_pad=f1p),
        "b5_1": conv_bn(keys[6],  keys[7],  in_planes,  food_rate2, 1),
        "b5_2": conv_bn(keys[8],  keys[9],  food_rate2, food_rate3, 3, cin_pad=f2p),
        "b5_3": conv_bn(keys[10], keys[11], food_rate3, n5x5,       3, cin_pad=f3p),
        "bp":   conv_bn(keys[12], keys[13], in_planes,  pool_planes, 1),
    }


# ----------------------------- forward pass -----------------------------------

@partial(jax.jit, static_argnames=("dims",))
def inception_forward(x_nchw, params, *, dims):
    n1x1, n3x3, n5x5, pool_planes = dims
    N, Cin, H, W = x_nchw.shape
    x = jnp.transpose(x_nchw, (0, 2, 3, 1))                       # NHWC, f32

    # 3x3 / stride-1 / pad-1 max-pool in XLA (padding never beats the center).
    pooled = lax.reduce_window(x, -jnp.inf, lax.max,
                               (1, 3, 3, 1), (1, 1, 1, 1), "SAME")

    M = N * H * W
    x2 = x.reshape(M, Cin).astype(MATMUL_DTYPE)
    p2 = pooled.reshape(M, Cin).astype(MATMUL_DTYPE)

    # Fused stem: branch1x1 + 3x3-reduce + 5x5-reduce on x, pool-branch 1x1 on pooled.
    y1, t3, t5, y4 = stem_1x1(x2, p2, params)

    # branch3x3: conv3x3(pad1)+BN+ReLU on the reduced features (final -> f32).
    w32, b32 = params["b3_2"]
    y2 = conv3x3_bn_relu(t3, w32, b32, N, H, W, out_dtype=jnp.float32)

    # branch5x5: two stacked conv3x3(pad1)+BN+ReLU (intermediate -> bf16).
    w52, b52 = params["b5_2"]
    w53, b53 = params["b5_3"]
    t = conv3x3_bn_relu(t5, w52, b52, N, H, W, out_dtype=MATMUL_DTYPE)
    y3 = conv3x3_bn_relu(t, w53, b53, N, H, W, out_dtype=jnp.float32)

    # Strip channel padding and concatenate branches over channels.
    out = jnp.concatenate([y1[:, :n1x1], y2[:, :n3x3],
                           y3[:, :n5x5], y4[:, :pool_planes]], axis=-1)
    out = out.reshape(N, H, W, -1)
    return jnp.transpose(out, (0, 3, 1, 2))                       # back to NCHW


# ----------------------------- main -------------------------------------------

if __name__ == "__main__":
    # Small, conv-friendly shapes consistent with the module.
    N, in_planes, H, W = 2, 4, 16, 16                 # M = 512 -> stem grid of 2
    n1x1, n3x3, n5x5, pool_planes = 8, 8, 8, 8
    food_rate1, food_rate2, food_rate3 = 8, 8, 8

    key = jax.random.PRNGKey(0)
    kx, kp = jax.random.split(key)
    x = jax.random.normal(kx, (N, in_planes, H, W), jnp.float32)

    params = make_inception_params(kp, in_planes, n1x1, n3x3, n5x5, pool_planes,
                                   food_rate1, food_rate2, food_rate3)

    out = inception_forward(x, params, dims=(n1x1, n3x3, n5x5, pool_planes))
    out = jax.block_until_ready(out)

    expected_channels = n1x1 + n3x3 + n5x5 + pool_planes
    assert out.shape == (N, expected_channels, H, W), out.shape
    assert out.dtype == jnp.float32
    assert bool(jnp.all(jnp.isfinite(out)))
    print("KERNEL_OK")
</pallas_src>

<mosaic_0001>
module attributes {stable_mosaic.version = 11 : i64} {
  func.func @_stem_kernel(%arg0: i32, %arg1: memref<256x4xbf16, #tpu.memory_space<vmem>>, %arg2: memref<256x4xbf16, #tpu.memory_space<vmem>>, %arg3: memref<4x128xbf16, #tpu.memory_space<vmem>>, %arg4: memref<4x128xbf16, #tpu.memory_space<vmem>>, %arg5: memref<4x128xbf16, #tpu.memory_space<vmem>>, %arg6: memref<4x128xbf16, #tpu.memory_space<vmem>>, %arg7: memref<1x128xf32, #tpu.memory_space<vmem>>, %arg8: memref<1x128xf32, #tpu.memory_space<vmem>>, %arg9: memref<1x128xf32, #tpu.memory_space<vmem>>, %arg10: memref<1x128xf32, #tpu.memory_space<vmem>>, %arg11: memref<256x128xf32, #tpu.memory_space<vmem>>, %arg12: memref<256x128xbf16, #tpu.memory_space<vmem>>, %arg13: memref<256x128xbf16, #tpu.memory_space<vmem>>, %arg14: memref<256x128xf32, #tpu.memory_space<vmem>>) attributes {dimension_semantics = [#tpu.dimension_semantics<parallel>], iteration_bounds = array<i64: 2>, scalar_prefetch = 0 : i64, scratch_operands = 0 : i64, tpu.core_type = #tpu.core_type<tc>, window_params = [{transform_indices = @transform_0, window_bounds = array<i64: 256, 4>}, {transform_indices = @transform_1, window_bounds = array<i64: 256, 4>}, {pipeline_mode = #tpu.pipeline_mode<synchronous>, transform_indices = @transform_2, window_bounds = array<i64: 4, 128>}, {pipeline_mode = #tpu.pipeline_mode<synchronous>, transform_indices = @transform_3, window_bounds = array<i64: 4, 128>}, {pipeline_mode = #tpu.pipeline_mode<synchronous>, transform_indices = @transform_4, window_bounds = array<i64: 4, 128>}, {pipeline_mode = #tpu.pipeline_mode<synchronous>, transform_indices = @transform_5, window_bounds = array<i64: 4, 128>}, {pipeline_mode = #tpu.pipeline_mode<synchronous>, transform_indices = @transform_6, window_bounds = array<i64: 1, 128>}, {pipeline_mode = #tpu.pipeline_mode<synchronous>, transform_indices = @transform_7, window_bounds = array<i64: 1, 128>}, {pipeline_mode = #tpu.pipeline_mode<synchronous>, transform_indices = @transform_8, window_bounds = array<i64: 1, 128>}, {pipeline_mode = #tpu.pipeline_mode<synchronous>, transform_indices = @transform_9, window_bounds = array<i64: 1, 128>}, {transform_indices = @transform_10, window_bounds = array<i64: 256, 128>}, {transform_indices = @transform_11, window_bounds = array<i64: 256, 128>}, {transform_indices = @transform_12, window_bounds = array<i64: 256, 128>}, {transform_indices = @transform_13, window_bounds = array<i64: 256, 128>}]} {
    %c0 = arith.constant 0 : index
    %c0_0 = arith.constant 0 : index
    %0 = vector.load %arg1[%c0, %c0_0] : memref<256x4xbf16, #tpu.memory_space<vmem>>, vector<256x4xbf16>
    %c0_1 = arith.constant 0 : index
    %c0_2 = arith.constant 0 : index
    %1 = vector.load %arg3[%c0_1, %c0_2] : memref<4x128xbf16, #tpu.memory_space<vmem>>, vector<4x128xbf16>
    %cst = arith.constant dense<0.000000e+00> : vector<256x128xf32>
    %2 = tpu.matmul %0, %1, %cst {dimension_numbers = #tpu.dot_dimension_numbers<[1], [0], [0], [1], [0, 0, 1, 1], [], []>} : vector<256x4xbf16>, vector<4x128xbf16>, vector<256x128xf32> -> vector<256x128xf32>
    %c0_3 = arith.constant 0 : index
    %c0_4 = arith.constant 0 : index
    %3 = vector.load %arg7[%c0_3, %c0_4] : memref<1x128xf32, #tpu.memory_space<vmem>>, vector<1x128xf32>
    %4 = vector.broadcast %3 : vector<1x128xf32> to vector<256x128xf32>
    %5 = arith.addf %2, %4 : vector<256x128xf32>
    %cst_5 = arith.constant 0.000000e+00 : f32
    %6 = vector.broadcast %cst_5 : f32 to vector<256x128xf32>
    %7 = arith.maximumf %5, %6 : vector<256x128xf32>
    %c0_6 = arith.constant 0 : index
    %c0_7 = arith.constant 0 : index
    %8 = vector.load %arg11[%c0_6, %c0_7] : memref<256x128xf32, #tpu.memory_space<vmem>>, vector<256x128xf32>
    tpu.vector_store %arg11[%c0_6, %c0_7], %7 {strides = array<i32>} : memref<256x128xf32, #tpu.memory_space<vmem>>, vector<256x128xf32>,
    %c0_8 = arith.constant 0 : index
    %c0_9 = arith.constant 0 : index
    %9 = vector.load %arg4[%c0_8, %c0_9] : memref<4x128xbf16, #tpu.memory_space<vmem>>, vector<4x128xbf16>
    %cst_10 = arith.constant dense<0.000000e+00> : vector<256x128xf32>
    %10 = tpu.matmul %0, %9, %cst_10 {dimension_numbers = #tpu.dot_dimension_numbers<[1], [0], [0], [1], [0, 0, 1, 1], [], []>} : vector<256x4xbf16>, vector<4x128xbf16>, vector<256x128xf32> -> vector<256x128xf32>
    %c0_11 = arith.constant 0 : index
    %c0_12 = arith.constant 0 : index
    %11 = vector.load %arg8[%c0_11, %c0_12] : memref<1x128xf32, #tpu.memory_space<vmem>>, vector<1x128xf32>
    %12 = vector.broadcast %11 : vector<1x128xf32> to vector<256x128xf32>
    %13 = arith.addf %10, %12 : vector<256x128xf32>
    %cst_13 = arith.constant 0.000000e+00 : f32
    %14 = vector.broadcast %cst_13 : f32 to vector<256x128xf32>
    %15 = arith.maximumf %13, %14 : vector<256x128xf32>
    %16 = arith.truncf %15 : vector<256x128xf32> to vector<256x128xbf16>
    %c0_14 = arith.constant 0 : index
    %c0_15 = arith.constant 0 : index
    %17 = vector.load %arg12[%c0_14, %c0_15] : memref<256x128xbf16, #tpu.memory_space<vmem>>, vector<256x128xbf16>
    tpu.vector_store %arg12[%c0_14, %c0_15], %16 {strides = array<i32>} : memref<256x128xbf16, #tpu.memory_space<vmem>>, vector<256x128xbf16>,
    %c0_16 = arith.constant 0 : index
    %c0_17 = arith.constant 0 : index
    %18 = vector.load %arg5[%c0_16, %c0_17] : memref<4x128xbf16, #tpu.memory_space<vmem>>, vector<4x128xbf16>
    %cst_18 = arith.constant dense<0.000000e+00> : vector<256x128xf32>
    %19 = tpu.matmul %0, %18, %cst_18 {dimension_numbers = #tpu.dot_dimension_numbers<[1], [0], [0], [1], [0, 0, 1, 1], [], []>} : vector<256x4xbf16>, vector<4x128xbf16>, vector<256x128xf32> -> vector<256x128xf32>
    %c0_19 = arith.constant 0 : index
    %c0_20 = arith.constant 0 : index
    %20 = vector.load %arg9[%c0_19, %c0_20] : memref<1x128xf32, #tpu.memory_space<vmem>>, vector<1x128xf32>
    %21 = vector.broadcast %20 : vector<1x128xf32> to vector<256x128xf32>
    %22 = arith.addf %19, %21 : vector<256x128xf32>
    %cst_21 = arith.constant 0.000000e+00 : f32
    %23 = vector.broadcast %cst_21 : f32 to vector<256x128xf32>
    %24 = arith.maximumf %22, %23 : vector<256x128xf32>
    %25 = arith.truncf %24 : vector<256x128xf32> to vector<256x128xbf16>
    %c0_22 = arith.constant 0 : index
    %c0_23 = arith.constant 0 : index
    %26 = vector.load %arg13[%c0_22, %c0_23] : memref<256x128xbf16, #tpu.memory_space<vmem>>, vector<256x128xbf16>
    tpu.vector_store %arg13[%c0_22, %c0_23], %25 {strides = array<i32>} : memref<256x128xbf16, #tpu.memory_space<vmem>>, vector<256x128xbf16>,
    %c0_24 = arith.constant 0 : index
    %c0_25 = arith.constant 0 : index
    %27 = vector.load %arg2[%c0_24, %c0_25] : memref<256x4xbf16, #tpu.memory_space<vmem>>, vector<256x4xbf16>
    %c0_26 = arith.constant 0 : index
    %c0_27 = arith.constant 0 : index
    %28 = vector.load %arg6[%c0_26, %c0_27] : memref<4x128xbf16, #tpu.memory_space<vmem>>, vector<4x128xbf16>
    %cst_28 = arith.constant dense<0.000000e+00> : vector<256x128xf32>
    %29 = tpu.matmul %27, %28, %cst_28 {dimension_numbers = #tpu.dot_dimension_numbers<[1], [0], [0], [1], [0, 0, 1, 1], [], []>} : vector<256x4xbf16>, vector<4x128xbf16>, vector<256x128xf32> -> vector<256x128xf32>
    %c0_29 = arith.constant 0 : index
    %c0_30 = arith.constant 0 : index
    %30 = vector.load %arg10[%c0_29, %c0_30] : memref<1x128xf32, #tpu.memory_space<vmem>>, vector<1x128xf32>
    %31 = vector.broadcast %30 : vector<1x128xf32> to vector<256x128xf32>
    %32 = arith.addf %29, %31 : vector<256x128xf32>
    %cst_31 = arith.constant 0.000000e+00 : f32
    %33 = vector.broadcast %cst_31 : f32 to vector<256x128xf32>
    %34 = arith.maximumf %32, %33 : vector<256x128xf32>
    %c0_32 = arith.constant 0 : index
    %c0_33 = arith.constant 0 : index
    %35 = vector.load %arg14[%c0_32, %c0_33] : memref<256x128xf32, #tpu.memory_space<vmem>>, vector<256x128xf32>
    tpu.vector_store %arg14[%c0_32, %c0_33], %34 {strides = array<i32>} : memref<256x128xf32, #tpu.memory_space<vmem>>, vector<256x128xf32>,
    return
  }
  func.func @transform_0(%arg0: i32) -> (i32, i32) {
    %c0_i32 = arith.constant 0 : i32
    %c0_i32_0 = arith.constant 0 : i32
    return %arg0, %c0_i32 : i32, i32
  }
  func.func @transform_1(%arg0: i32) -> (i32, i32) {
    %c0_i32 = arith.constant 0 : i32
    %c0_i32_0 = arith.constant 0 : i32
    return %arg0, %c0_i32 : i32, i32
  }
  func.func @transform_2(%arg0: i32) -> (i32, i32) {
    %c0_i32 = arith.constant 0 : i32
    %c0_i32_0 = arith.constant 0 : i32
    %c0_i32_1 = arith.constant 0 : i32
    return %c0_i32, %c0_i32_0 : i32, i32
  }
  func.func @transform_3(%arg0: i32) -> (i32, i32) {
    %c0_i32 = arith.constant 0 : i32
    %c0_i32_0 = arith.constant 0 : i32
    %c0_i32_1 = arith.constant 0 : i32
    return %c0_i32, %c0_i32_0 : i32, i32
  }
  func.func @transform_4(%arg0: i32) -> (i32, i32) {
    %c0_i32 = arith.constant 0 : i32
    %c0_i32_0 = arith.constant 0 : i32
    %c0_i32_1 = arith.constant 0 : i32
    return %c0_i32, %c0_i32_0 : i32, i32
  }
  func.func @transform_5(%arg0: i32) -> (i32, i32) {
    %c0_i32 = arith.constant 0 : i32
    %c0_i32_0 = arith.constant 0 : i32
    %c0_i32_1 = arith.constant 0 : i32
    return %c0_i32, %c0_i32_0 : i32, i32
  }
  func.func @transform_6(%arg0: i32) -> (i32, i32) {
    %c0_i32 = arith.constant 0 : i32
    %c0_i32_0 = arith.constant 0 : i32
    %c0_i32_1 = arith.constant 0 : i32
    return %c0_i32, %c0_i32_0 : i32, i32
  }
  func.func @transform_7(%arg0: i32) -> (i32, i32) {
    %c0_i32 = arith.constant 0 : i32
    %c0_i32_0 = arith.constant 0 : i32
    %c0_i32_1 = arith.constant 0 : i32
    return %c0_i32, %c0_i32_0 : i32, i32
  }
  func.func @transform_8(%arg0: i32) -> (i32, i32) {
    %c0_i32 = arith.constant 0 : i32
    %c0_i32_0 = arith.constant 0 : i32
    %c0_i32_1 = arith.constant 0 : i32
    return %c0_i32, %c0_i32_0 : i32, i32
  }
  func.func @transform_9(%arg0: i32) -> (i32, i32) {
    %c0_i32 = arith.constant 0 : i32
    %c0_i32_0 = arith.constant 0 : i32
    %c0_i32_1 = arith.constant 0 : i32
    return %c0_i32, %c0_i32_0 : i32, i32
  }
  func.func @transform_10(%arg0: i32) -> (i32, i32) {
    %c0_i32 = arith.constant 0 : i32
    %c0_i32_0 = arith.constant 0 : i32
    return %arg0, %c0_i32 : i32, i32
  }
  func.func @transform_11(%arg0: i32) -> (i32, i32) {
    %c0_i32 = arith.constant 0 : i32
    %c0_i32_0 = arith.constant 0 : i32
    return %arg0, %c0_i32 : i32, i32
  }
  func.func @transform_12(%arg0: i32) -> (i32, i32) {
    %c0_i32 = arith.constant 0 : i32
    %c0_i32_0 = arith.constant 0 : i32
    return %arg0, %c0_i32 : i32, i32
  }
  func.func @transform_13(%arg0: i32) -> (i32, i32) {
    %c0_i32 = arith.constant 0 : i32
    %c0_i32_0 = arith.constant 0 : i32
    return %arg0, %c0_i32 : i32, i32
  }
}

module attributes {stable_mosaic.version = 11 : i64} {
  func.func @kernel(%arg0: i32, %arg1: memref<1x308x128xbf16, #tpu.memory_space<vmem>>, %arg2: memref<9x128x128xbf16, #tpu.memory_space<vmem>>, %arg3: memref<1x128xf32, #tpu.memory_space<vmem>>, %arg4: memref<1x272x128xf32, #tpu.memory_space<vmem>>) attributes {dimension_semantics = [#tpu.dimension_semantics<parallel>], iteration_bounds = array<i64: 2>, scalar_prefetch = 0 : i64, scratch_operands = 0 : i64, tpu.core_type = #tpu.core_type<tc>, window_params = [{transform_indices = @transform_0, window_bounds = array<i64: 1, 308, 128>}, {pipeline_mode = #tpu.pipeline_mode<synchronous>, transform_indices = @transform_1, window_bounds = array<i64: 9, 128, 128>}, {pipeline_mode = #tpu.pipeline_mode<synchronous>, transform_indices = @transform_2, window_bounds = array<i64: 1, 128>}, {transform_indices = @transform_3, window_bounds = array<i64: 1, 272, 128>}]} {
    %cst = arith.constant 0.000000e+00 : f32
    %0 = vector.broadcast %cst : f32 to vector<272x128xf32>
    %c0 = arith.constant 0 : index
    %c0_0 = arith.constant 0 : index
    %c0_1 = arith.constant 0 : index
    %1 = vector.load %arg1[%c0, %c0_0, %c0_1] : memref<1x308x128xbf16, #tpu.memory_space<vmem>>, vector<1x272x128xbf16>
    %2 = vector.shape_cast %1 : vector<1x272x128xbf16> to vector<272x128xbf16>
    %c0_2 = arith.constant 0 : index
    %c0_3 = arith.constant 0 : index
    %c0_4 = arith.constant 0 : index
    %3 = vector.load %arg2[%c0_2, %c0_3, %c0_4] : memref<9x128x128xbf16, #tpu.memory_space<vmem>>, vector<1x128x128xbf16>
    %4 = vector.shape_cast %3 : vector<1x128x128xbf16> to vector<128x128xbf16>
    %cst_5 = arith.constant dense<0.000000e+00> : vector<272x128xf32>
    %5 = tpu.matmul %2, %4, %cst_5 {dimension_numbers = #tpu.dot_dimension_numbers<[1], [0], [0], [1], [0, 0, 1, 1], [], []>} : vector<272x128xbf16>, vector<128x128xbf16>, vector<272x128xf32> -> vector<272x128xf32>
    %6 = arith.addf %0, %5 : vector<272x128xf32>
    %c0_6 = arith.constant 0 : index
    %c1 = arith.constant 1 : index
    %c0_7 = arith.constant 0 : index
    %7 = vector.load %arg1[%c0_6, %c1, %c0_7] : memref<1x308x128xbf16, #tpu.memory_space<vmem>>, vector<1x272x128xbf16>
    %8 = vector.shape_cast %7 : vector<1x272x128xbf16> to vector<272x128xbf16>
    %c1_8 = arith.constant 1 : index
    %c0_9 = arith.constant 0 : index
    %c0_10 = arith.constant 0 : index
    %9 = vector.load %arg2[%c1_8, %c0_9, %c0_10] : memref<9x128x128xbf16, #tpu.memory_space<vmem>>, vector<1x128x128xbf16>
    %10 = vector.shape_cast %9 : vector<1x128x128xbf16> to vector<128x128xbf16>
    %cst_11 = arith.constant dense<0.000000e+00> : vector<272x128xf32>
    %11 = tpu.matmul %8, %10, %cst_11 {dimension_numbers = #tpu.dot_dimension_numbers<[1], [0], [0], [1], [0, 0, 1, 1], [], []>} : vector<272x128xbf16>, vector<128x128xbf16>, vector<272x128xf32> -> vector<272x128xf32>
    %12 = arith.addf %6, %11 : vector<272x128xf32>
    %c0_12 = arith.constant 0 : index
    %c2 = arith.constant 2 : index
    %c0_13 = arith.constant 0 : index
    %13 = vector.load %arg1[%c0_12, %c2, %c0_13] : memref<1x308x128xbf16, #tpu.memory_space<vmem>>, vector<1x272x128xbf16>
    %14 = vector.shape_cast %13 : vector<1x272x128xbf16> to vector<272x128xbf16>
    %c2_14 = arith.constant 2 : index
    %c0_15 = arith.constant 0 : index
    %c0_16 = arith.constant 0 : index
    %15 = vector.load %arg2[%c2_14, %c0_15, %c0_16] : memref<9x128x128xbf16, #tpu.memory_space<vmem>>, vector<1x128x128xbf16>
    %16 = vector.shape_cast %15 : vector<1x128x128xbf16> to vector<128x128xbf16>
    %cst_17 = arith.constant dense<0.000000e+00> : vector<272x128xf32>
    %17 = tpu.matmul %14, %16, %cst_17 {dimension_numbers = #tpu.dot_dimension_numbers<[1], [0], [0], [1], [0, 0, 1, 1], [], []>} : vector<272x128xbf16>, vector<128x128xbf16>, vector<272x128xf32> -> vector<272x128xf32>
    %18 = arith.addf %12, %17 : vector<272x128xf32>
    %c0_18 = arith.constant 0 : index
    %c17 = arith.constant 17 : index
    %c0_19 = arith.constant 0 : index
    %19 = vector.load %arg1[%c0_18, %c17, %c0_19] : memref<1x308x128xbf16, #tpu.memory_space<vmem>>, vector<1x272x128xbf16>
    %20 = vector.shape_cast %19 : vector<1x272x128xbf16> to vector<272x128xbf16>
    %c3 = arith.constant 3 : index
    %c0_20 = arith.constant 0 : index
    %c0_21 = arith.constant 0 : index
    %21 = vector.load %arg2[%c3, %c0_20, %c0_21] : memref<9x128x128xbf16, #tpu.memory_space<vmem>>, vector<1x128x128xbf16>
    %22 = vector.shape_cast %21 : vector<1x128x128xbf16> to vector<128x128xbf16>
    %cst_22 = arith.constant dense<0.000000e+00> : vector<272x128xf32>
    %23 = tpu.matmul %20, %22, %cst_22 {dimension_numbers = #tpu.dot_dimension_numbers<[1], [0], [0], [1], [0, 0, 1, 1], [], []>} : vector<272x128xbf16>, vector<128x128xbf16>, vector<272x128xf32> -> vector<272x128xf32>
    %24 = arith.addf %18, %23 : vector<272x128xf32>
    %c0_23 = arith.constant 0 : index
    %c18 = arith.constant 18 : index
    %c0_24 = arith.constant 0 : index
    %25 = vector.load %arg1[%c0_23, %c18, %c0_24] : memref<1x308x128xbf16, #tpu.memory_space<vmem>>, vector<1x272x128xbf16>
    %26 = vector.shape_cast %25 : vector<1x272x128xbf16> to vector<272x128xbf16>
    %c4 = arith.constant 4 : index
    %c0_25 = arith.constant 0 : index
    %c0_26 = arith.constant 0 : index
    %27 = vector.load %arg2[%c4, %c0_25, %c0_26] : memref<9x128x128xbf16, #tpu.memory_space<vmem>>, vector<1x128x128xbf16>
    %28 = vector.shape_cast %27 : vector<1x128x128xbf16> to vector<128x128xbf16>
    %cst_27 = arith.constant dense<0.000000e+00> : vector<272x128xf32>
    %29 = tpu.matmul %26, %28, %cst_27 {dimension_numbers = #tpu.dot_dimension_numbers<[1], [0], [0], [1], [0, 0, 1, 1], [], []>} : vector<272x128xbf16>, vector<128x128xbf16>, vector<272x128xf32> -> vector<272x128xf32>
    %30 = arith.addf %24, %29 : vector<272x128xf32>
    %c0_28 = arith.constant 0 : index
    %c19 = arith.constant 19 : index
    %c0_29 = arith.constant 0 : index
    %31 = vector.load %arg1[%c0_28, %c19, %c0_29] : memref<1x308x128xbf16, #tpu.memory_space<vmem>>, vector<1x272x128xbf16>
    %32 = vector.shape_cast %31 : vector<1x272x128xbf16> to vector<272x128xbf16>
    %c5 = arith.constant 5 : index
    %c0_30 = arith.constant 0 : index
    %c0_31 = arith.constant 0 : index
    %33 = vector.load %arg2[%c5, %c0_30, %c0_31] : memref<9x128x128xbf16, #tpu.memory_space<vmem>>, vector<1x128x128xbf16>
    %34 = vector.shape_cast %33 : vector<1x128x128xbf16> to vector<128x128xbf16>
    %cst_32 = arith.constant dense<0.000000e+00> : vector<272x128xf32>
    %35 = tpu.matmul %32, %34, %cst_32 {dimension_numbers = #tpu.dot_dimension_numbers<[1], [0], [0], [1], [0, 0, 1, 1], [], []>} : vector<272x128xbf16>, vector<128x128xbf16>, vector<272x128xf32> -> vector<272x128xf32>
    %36 = arith.addf %30, %35 : vector<272x128xf32>
    %c0_33 = arith.constant 0 : index
    %c34 = arith.constant 34 : index
    %c0_34 = arith.constant 0 : index
    %37 = vector.load %arg1[%c0_33, %c34, %c0_34] : memref<1x308x128xbf16, #tpu.memory_space<vmem>>, vector<1x272x128xbf16>
    %38 = vector.shape_cast %37 : vector<1x272x128xbf16> to vector<272x128xbf16>
    %c6 = arith.constant 6 : index
    %c0_35 = arith.constant 0 : index
    %c0_36 = arith.constant 0 : index
    %39 = vector.load %arg2[%c6, %c0_35, %c0_36] : memref<9x128x128xbf16, #tpu.memory_space<vmem>>, vector<1x128x128xbf16>
    %40 = vector.shape_cast %39 : vector<1x128x128xbf16> to vector<128x128xbf16>
    %cst_37 = arith.constant dense<0.000000e+00> : vector<272x128xf32>
    %41 = tpu.matmul %38, %40, %cst_37 {dimension_numbers = #tpu.dot_dimension_numbers<[1], [0], [0], [1], [0, 0, 1, 1], [], []>} : vector<272x128xbf16>, vector<128x128xbf16>, vector<272x128xf32> -> vector<272x128xf32>
    %42 = arith.addf %36, %41 : vector<272x128xf32>
    %c0_38 = arith.constant 0 : index
    %c35 = arith.constant 35 : index
    %c0_39 = arith.constant 0 : index
    %43 = vector.load %arg1[%c0_38, %c35, %c0_39] : memref<1x308x128xbf16, #tpu.memory_space<vmem>>, vector<1x272x128xbf16>
    %44 = vector.shape_cast %43 : vector<1x272x128xbf16> to vector<272x128xbf16>
    %c7 = arith.constant 7 : index
    %c0_40 = arith.constant 0 : index
    %c0_41 = arith.constant 0 : index
    %45 = vector.load %arg2[%c7, %c0_40, %c0_41] : memref<9x128x128xbf16, #tpu.memory_space<vmem>>, vector<1x128x128xbf16>
    %46 = vector.shape_cast %45 : vector<1x128x128xbf16> to vector<128x128xbf16>
    %cst_42 = arith.constant dense<0.000000e+00> : vector<272x128xf32>
    %47 = tpu.matmul %44, %46, %cst_42 {dimension_numbers = #tpu.dot_dimension_numbers<[1], [0], [0], [1], [0, 0, 1, 1], [], []>} : vector<272x128xbf16>, vector<128x128xbf16>, vector<272x128xf32> -> vector<272x128xf32>
    %48 = arith.addf %42, %47 : vector<272x128xf32>
    %c0_43 = arith.constant 0 : index
    %c36 = arith.constant 36 : index
    %c0_44 = arith.constant 0 : index
    %49 = vector.load %arg1[%c0_43, %c36, %c0_44] : memref<1x308x128xbf16, #tpu.memory_space<vmem>>, vector<1x272x128xbf16>
    %50 = vector.shape_cast %49 : vector<1x272x128xbf16> to vector<272x128xbf16>
    %c8 = arith.constant 8 : index
    %c0_45 = arith.constant 0 : index
    %c0_46 = arith.constant 0 : index
    %51 = vector.load %arg2[%c8, %c0_45, %c0_46] : memref<9x128x128xbf16, #tpu.memory_space<vmem>>, vector<1x128x128xbf16>
    %52 = vector.shape_cast %51 : vector<1x128x128xbf16> to vector<128x128xbf16>
    %cst_47 = arith.constant dense<0.000000e+00> : vector<272x128xf32>
    %53 = tpu.matmul %50, %52, %cst_47 {dimension_numbers = #tpu.dot_dimension_numbers<[1], [0], [0], [1], [0, 0, 1, 1], [], []>} : vector<272x128xbf16>, vector<128x128xbf16>, vector<272x128xf32> -> vector<272x128xf32>
    %54 = arith.addf %48, %53 : vector<272x128xf32>
    %c0_48 = arith.constant 0 : index
    %c0_49 = arith.constant 0 : index
    %55 = vector.load %arg3[%c0_48, %c0_49] : memref<1x128xf32, #tpu.memory_space<vmem>>, vector<1x128xf32>
    %56 = vector.broadcast %55 : vector<1x128xf32> to vector<272x128xf32>
    %57 = arith.addf %54, %56 : vector<272x128xf32>
    %cst_50 = arith.constant 0.000000e+00 : f32
    %58 = vector.broadcast %cst_50 : f32 to vector<272x128xf32>
    %59 = arith.maximumf %57, %58 : vector<272x128xf32>
    %c0_51 = arith.constant 0 : index
    %c0_52 = arith.constant 0 : index
    %c0_53 = arith.constant 0 : index
    %60 = vector.load %arg4[%c0_51, %c0_52, %c0_53] : memref<1x272x128xf32, #tpu.memory_space<vmem>>, vector<1x272x128xf32>
    %61 = vector.shape_cast %60 : vector<1x272x128xf32> to vector<272x128xf32>
    %62 = vector.shape_cast %59 : vector<272x128xf32> to vector<1x272x128xf32>
    tpu.vector_store %arg4[%c0_51, %c0_52, %c0_53], %62 {strides = array<i32>} : memref<1x272x128xf32, #tpu.memory_space<vmem>>, vector<1x272x128xf32>,
    return
  }
  func.func @transform_0(%arg0: i32) -> (i32, i32, i32) {
    %c0_i32 = arith.constant 0 : i32
    %c0_i32_0 = arith.constant 0 : i32
    %c0_i32_1 = arith.constant 0 : i32
    return %arg0, %c0_i32, %c0_i32_0 : i32, i32, i32
  }
  func.func @transform_1(%arg0: i32) -> (i32, i32, i32) {
    %c0_i32 = arith.constant 0 : i32
    %c0_i32_0 = arith.constant 0 : i32
    %c0_i32_1 = arith.constant 0 : i32
    %c0_i32_2 = arith.constant 0 : i32
    return %c0_i32, %c0_i32_0, %c0_i32_1 : i32, i32, i32
  }
  func.func @transform_2(%arg0: i32) -> (i32, i32) {
    %c0_i32 = arith.constant 0 : i32
    %c0_i32_0 = arith.constant 0 : i32
    %c0_i32_1 = arith.constant 0 : i32
    return %c0_i32, %c0_i32_0 : i32, i32
  }
  func.func @transform_3(%arg0: i32) -> (i32, i32, i32) {
    %c0_i32 = arith.constant 0 : i32
    %c0_i32_0 = arith.constant 0 : i32
    %c0_i32_1 = arith.constant 0 : i32
    return %arg0, %c0_i32, %c0_i32_0 : i32, i32, i32
  }
}

module attributes {stable_mosaic.version = 11 : i64} {
  func.func @kernel(%arg0: i32, %arg1: memref<1x308x128xbf16, #tpu.memory_space<vmem>>, %arg2: memref<9x128x128xbf16, #tpu.memory_space<vmem>>, %arg3: memref<1x128xf32, #tpu.memory_space<vmem>>, %arg4: memref<1x272x128xbf16, #tpu.memory_space<vmem>>) attributes {dimension_semantics = [#tpu.dimension_semantics<parallel>], iteration_bounds = array<i64: 2>, scalar_prefetch = 0 : i64, scratch_operands = 0 : i64, tpu.core_type = #tpu.core_type<tc>, window_params = [{transform_indices = @transform_0, window_bounds = array<i64: 1, 308, 128>}, {pipeline_mode = #tpu.pipeline_mode<synchronous>, transform_indices = @transform_1, window_bounds = array<i64: 9, 128, 128>}, {pipeline_mode = #tpu.pipeline_mode<synchronous>, transform_indices = @transform_2, window_bounds = array<i64: 1, 128>}, {transform_indices = @transform_3, window_bounds = array<i64: 1, 272, 128>}]} {
    %cst = arith.constant 0.000000e+00 : f32
    %0 = vector.broadcast %cst : f32 to vector<272x128xf32>
    %c0 = arith.constant 0 : index
    %c0_0 = arith.constant 0 : index
    %c0_1 = arith.constant 0 : index
    %1 = vector.load %arg1[%c0, %c0_0, %c0_1] : memref<1x308x128xbf16, #tpu.memory_space<vmem>>, vector<1x272x128xbf16>
    %2 = vector.shape_cast %1 : vector<1x272x128xbf16> to vector<272x128xbf16>
    %c0_2 = arith.constant 0 : index
    %c0_3 = arith.constant 0 : index
    %c0_4 = arith.constant 0 : index
    %3 = vector.load %arg2[%c0_2, %c0_3, %c0_4] : memref<9x128x128xbf16, #tpu.memory_space<vmem>>, vector<1x128x128xbf16>
    %4 = vector.shape_cast %3 : vector<1x128x128xbf16> to vector<128x128xbf16>
    %cst_5 = arith.constant dense<0.000000e+00> : vector<272x128xf32>
    %5 = tpu.matmul %2, %4, %cst_5 {dimension_numbers = #tpu.dot_dimension_numbers<[1], [0], [0], [1], [0, 0, 1, 1], [], []>} : vector<272x128xbf16>, vector<128x128xbf16>, vector<272x128xf32> -> vector<272x128xf32>
    %6 = arith.addf %0, %5 : vector<272x128xf32>
    %c0_6 = arith.constant 0 : index
    %c1 = arith.constant 1 : index
    %c0_7 = arith.constant 0 : index
    %7 = vector.load %arg1[%c0_6, %c1, %c0_7] : memref<1x308x128xbf16, #tpu.memory_space<vmem>>, vector<1x272x128xbf16>
    %8 = vector.shape_cast %7 : vector<1x272x128xbf16> to vector<272x128xbf16>
    %c1_8 = arith.constant 1 : index
    %c0_9 = arith.constant 0 : index
    %c0_10 = arith.constant 0 : index
    %9 = vector.load %arg2[%c1_8, %c0_9, %c0_10] : memref<9x128x128xbf16, #tpu.memory_space<vmem>>, vector<1x128x128xbf16>
    %10 = vector.shape_cast %9 : vector<1x128x128xbf16> to vector<128x128xbf16>
    %cst_11 = arith.constant dense<0.000000e+00> : vector<272x128xf32>
    %11 = tpu.matmul %8, %10, %cst_11 {dimension_numbers = #tpu.dot_dimension_numbers<[1], [0], [0], [1], [0, 0, 1, 1], [], []>} : vector<272x128xbf16>, vector<128x128xbf16>, vector<272x128xf32> -> vector<272x128xf32>
    %12 = arith.addf %6, %11 : vector<272x128xf32>
    %c0_12 = arith.constant 0 : index
    %c2 = arith.constant 2 : index
    %c0_13 = arith.constant 0 : index
    %13 = vector.load %arg1[%c0_12, %c2, %c0_13] : memref<1x308x128xbf16, #tpu.memory_space<vmem>>, vector<1x272x128xbf16>
    %14 = vector.shape_cast %13 : vector<1x272x128xbf16> to vector<272x128xbf16>
    %c2_14 = arith.constant 2 : index
    %c0_15 = arith.constant 0 : index
    %c0_16 = arith.constant 0 : index
    %15 = vector.load %arg2[%c2_14, %c0_15, %c0_16] : memref<9x128x128xbf16, #tpu.memory_space<vmem>>, vector<1x128x128xbf16>
    %16 = vector.shape_cast %15 : vector<1x128x128xbf16> to vector<128x128xbf16>
    %cst_17 = arith.constant dense<0.000000e+00> : vector<272x128xf32>
    %17 = tpu.matmul %14, %16, %cst_17 {dimension_numbers = #tpu.dot_dimension_numbers<[1], [0], [0], [1], [0, 0, 1, 1], [], []>} : vector<272x128xbf16>, vector<128x128xbf16>, vector<272x128xf32> -> vector<272x128xf32>
    %18 = arith.addf %12, %17 : vector<272x128xf32>
    %c0_18 = arith.constant 0 : index
    %c17 = arith.constant 17 : index
    %c0_19 = arith.constant 0 : index
    %19 = vector.load %arg1[%c0_18, %c17, %c0_19] : memref<1x308x128xbf16, #tpu.memory_space<vmem>>, vector<1x272x128xbf16>
    %20 = vector.shape_cast %19 : vector<1x272x128xbf16> to vector<272x128xbf16>
    %c3 = arith.constant 3 : index
    %c0_20 = arith.constant 0 : index
    %c0_21 = arith.constant 0 : index
    %21 = vector.load %arg2[%c3, %c0_20, %c0_21] : memref<9x128x128xbf16, #tpu.memory_space<vmem>>, vector<1x128x128xbf16>
    %22 = vector.shape_cast %21 : vector<1x128x128xbf16> to vector<128x128xbf16>
    %cst_22 = arith.constant dense<0.000000e+00> : vector<272x128xf32>
    %23 = tpu.matmul %20, %22, %cst_22 {dimension_numbers = #tpu.dot_dimension_numbers<[1], [0], [0], [1], [0, 0, 1, 1], [], []>} : vector<272x128xbf16>, vector<128x128xbf16>, vector<272x128xf32> -> vector<272x128xf32>
    %24 = arith.addf %18, %23 : vector<272x128xf32>
    %c0_23 = arith.constant 0 : index
    %c18 = arith.constant 18 : index
    %c0_24 = arith.constant 0 : index
    %25 = vector.load %arg1[%c0_23, %c18, %c0_24] : memref<1x308x128xbf16, #tpu.memory_space<vmem>>, vector<1x272x128xbf16>
    %26 = vector.shape_cast %25 : vector<1x272x128xbf16> to vector<272x128xbf16>
    %c4 = arith.constant 4 : index
    %c0_25 = arith.constant 0 : index
    %c0_26 = arith.constant 0 : index
    %27 = vector.load %arg2[%c4, %c0_25, %c0_26] : memref<9x128x128xbf16, #tpu.memory_space<vmem>>, vector<1x128x128xbf16>
    %28 = vector.shape_cast %27 : vector<1x128x128xbf16> to vector<128x128xbf16>
    %cst_27 = arith.constant dense<0.000000e+00> : vector<272x128xf32>
    %29 = tpu.matmul %26, %28, %cst_27 {dimension_numbers = #tpu.dot_dimension_numbers<[1], [0], [0], [1], [0, 0, 1, 1], [], []>} : vector<272x128xbf16>, vector<128x128xbf16>, vector<272x128xf32> -> vector<272x128xf32>
    %30 = arith.addf %24, %29 : vector<272x128xf32>
    %c0_28 = arith.constant 0 : index
    %c19 = arith.constant 19 : index
    %c0_29 = arith.constant 0 : index
    %31 = vector.load %arg1[%c0_28, %c19, %c0_29] : memref<1x308x128xbf16, #tpu.memory_space<vmem>>, vector<1x272x128xbf16>
    %32 = vector.shape_cast %31 : vector<1x272x128xbf16> to vector<272x128xbf16>
    %c5 = arith.constant 5 : index
    %c0_30 = arith.constant 0 : index
    %c0_31 = arith.constant 0 : index
    %33 = vector.load %arg2[%c5, %c0_30, %c0_31] : memref<9x128x128xbf16, #tpu.memory_space<vmem>>, vector<1x128x128xbf16>
    %34 = vector.shape_cast %33 : vector<1x128x128xbf16> to vector<128x128xbf16>
    %cst_32 = arith.constant dense<0.000000e+00> : vector<272x128xf32>
    %35 = tpu.matmul %32, %34, %cst_32 {dimension_numbers = #tpu.dot_dimension_numbers<[1], [0], [0], [1], [0, 0, 1, 1], [], []>} : vector<272x128xbf16>, vector<128x128xbf16>, vector<272x128xf32> -> vector<272x128xf32>
    %36 = arith.addf %30, %35 : vector<272x128xf32>
    %c0_33 = arith.constant 0 : index
    %c34 = arith.constant 34 : index
    %c0_34 = arith.constant 0 : index
    %37 = vector.load %arg1[%c0_33, %c34, %c0_34] : memref<1x308x128xbf16, #tpu.memory_space<vmem>>, vector<1x272x128xbf16>
    %38 = vector.shape_cast %37 : vector<1x272x128xbf16> to vector<272x128xbf16>
    %c6 = arith.constant 6 : index
    %c0_35 = arith.constant 0 : index
    %c0_36 = arith.constant 0 : index
    %39 = vector.load %arg2[%c6, %c0_35, %c0_36] : memref<9x128x128xbf16, #tpu.memory_space<vmem>>, vector<1x128x128xbf16>
    %40 = vector.shape_cast %39 : vector<1x128x128xbf16> to vector<128x128xbf16>
    %cst_37 = arith.constant dense<0.000000e+00> : vector<272x128xf32>
    %41 = tpu.matmul %38, %40, %cst_37 {dimension_numbers = #tpu.dot_dimension_numbers<[1], [0], [0], [1], [0, 0, 1, 1], [], []>} : vector<272x128xbf16>, vector<128x128xbf16>, vector<272x128xf32> -> vector<272x128xf32>
    %42 = arith.addf %36, %41 : vector<272x128xf32>
    %c0_38 = arith.constant 0 : index
    %c35 = arith.constant 35 : index
    %c0_39 = arith.constant 0 : index
    %43 = vector.load %arg1[%c0_38, %c35, %c0_39] : memref<1x308x128xbf16, #tpu.memory_space<vmem>>, vector<1x272x128xbf16>
    %44 = vector.shape_cast %43 : vector<1x272x128xbf16> to vector<272x128xbf16>
    %c7 = arith.constant 7 : index
    %c0_40 = arith.constant 0 : index
    %c0_41 = arith.constant 0 : index
    %45 = vector.load %arg2[%c7, %c0_40, %c0_41] : memref<9x128x128xbf16, #tpu.memory_space<vmem>>, vector<1x128x128xbf16>
    %46 = vector.shape_cast %45 : vector<1x128x128xbf16> to vector<128x128xbf16>
    %cst_42 = arith.constant dense<0.000000e+00> : vector<272x128xf32>
    %47 = tpu.matmul %44, %46, %cst_42 {dimension_numbers = #tpu.dot_dimension_numbers<[1], [0], [0], [1], [0, 0, 1, 1], [], []>} : vector<272x128xbf16>, vector<128x128xbf16>, vector<272x128xf32> -> vector<272x128xf32>
    %48 = arith.addf %42, %47 : vector<272x128xf32>
    %c0_43 = arith.constant 0 : index
    %c36 = arith.constant 36 : index
    %c0_44 = arith.constant 0 : index
    %49 = vector.load %arg1[%c0_43, %c36, %c0_44] : memref<1x308x128xbf16, #tpu.memory_space<vmem>>, vector<1x272x128xbf16>
    %50 = vector.shape_cast %49 : vector<1x272x128xbf16> to vector<272x128xbf16>
    %c8 = arith.constant 8 : index
    %c0_45 = arith.constant 0 : index
    %c0_46 = arith.constant 0 : index
    %51 = vector.load %arg2[%c8, %c0_45, %c0_46] : memref<9x128x128xbf16, #tpu.memory_space<vmem>>, vector<1x128x128xbf16>
    %52 = vector.shape_cast %51 : vector<1x128x128xbf16> to vector<128x128xbf16>
    %cst_47 = arith.constant dense<0.000000e+00> : vector<272x128xf32>
    %53 = tpu.matmul %50, %52, %cst_47 {dimension_numbers = #tpu.dot_dimension_numbers<[1], [0], [0], [1], [0, 0, 1, 1], [], []>} : vector<272x128xbf16>, vector<128x128xbf16>, vector<272x128xf32> -> vector<272x128xf32>
    %54 = arith.addf %48, %53 : vector<272x128xf32>
    %c0_48 = arith.constant 0 : index
    %c0_49 = arith.constant 0 : index
    %55 = vector.load %arg3[%c0_48, %c0_49] : memref<1x128xf32, #tpu.memory_space<vmem>>, vector<1x128xf32>
    %56 = vector.broadcast %55 : vector<1x128xf32> to vector<272x128xf32>
    %57 = arith.addf %54, %56 : vector<272x128xf32>
    %cst_50 = arith.constant 0.000000e+00 : f32
    %58 = vector.broadcast %cst_50 : f32 to vector<272x128xf32>
    %59 = arith.maximumf %57, %58 : vector<272x128xf32>
    %60 = arith.truncf %59 : vector<272x128xf32> to vector<272x128xbf16>
    %c0_51 = arith.constant 0 : index
    %c0_52 = arith.constant 0 : index
    %c0_53 = arith.constant 0 : index
    %61 = vector.load %arg4[%c0_51, %c0_52, %c0_53] : memref<1x272x128xbf16, #tpu.memory_space<vmem>>, vector<1x272x128xbf16>
    %62 = vector.shape_cast %61 : vector<1x272x128xbf16> to vector<272x128xbf16>
    %63 = vector.shape_cast %60 : vector<272x128xbf16> to vector<1x272x128xbf16>
    tpu.vector_store %arg4[%c0_51, %c0_52, %c0_53], %63 {strides = array<i32>} : memref<1x272x128xbf16, #tpu.memory_space<vmem>>, vector<1x272x128xbf16>,
    return
  }
  func.func @transform_0(%arg0: i32) -> (i32, i32, i32) {
    %c0_i32 = arith.constant 0 : i32
    %c0_i32_0 = arith.constant 0 : i32
    %c0_i32_1 = arith.constant 0 : i32
    return %arg0, %c0_i32, %c0_i32_0 : i32, i32, i32
  }
  func.func @transform_1(%arg0: i32) -> (i32, i32, i32) {
    %c0_i32 = arith.constant 0 : i32
    %c0_i32_0 = arith.constant 0 : i32
    %c0_i32_1 = arith.constant 0 : i32
    %c0_i32_2 = arith.constant 0 : i32
    return %c0_i32, %c0_i32_0, %c0_i32_1 : i32, i32, i32
  }
  func.func @transform_2(%arg0: i32) -> (i32, i32) {
    %c0_i32 = arith.constant 0 : i32
    %c0_i32_0 = arith.constant 0 : i32
    %c0_i32_1 = arith.constant 0 : i32
    return %c0_i32, %c0_i32_0 : i32, i32
  }
  func.func @transform_3(%arg0: i32) -> (i32, i32, i32) {
    %c0_i32 = arith.constant 0 : i32
    %c0_i32_0 = arith.constant 0 : i32
    %c0_i32_1 = arith.constant 0 : i32
    return %arg0, %c0_i32, %c0_i32_0 : i32, i32, i32
  }
}

</mosaic_0001>

<llo_original>
// kernel: inception_forward.4
$region0: #{inception_forward.4}
  #allocation0 [shape = 'u32[]', space=smem, size = 0x4, offset = 0x4, fixed_abs, tag = 'smem constant byte address 0x4 - core index']
  #allocation1 [shape = 'u32[144,128]{1,0:T(1,128)}', space=vmem, size = 0x12000, scoped, tag = 'internal scratch']
  %s0 = inlined_call_operand.vmem [shape: bf16[512,4], index: 0, kind: input, shape index: {}]
  %s1 = inlined_call_operand.vmem [shape: bf16[512,4], index: 1, kind: input, shape index: {}]
  %s2 = inlined_call_operand.vmem [shape: bf16[4,128], index: 2, kind: input, shape index: {}]
  %s3 = inlined_call_operand.vmem [shape: bf16[4,128], index: 3, kind: input, shape index: {}]
  %s4 = inlined_call_operand.vmem [shape: bf16[4,128], index: 4, kind: input, shape index: {}]
  %s5 = inlined_call_operand.vmem [shape: bf16[4,128], index: 5, kind: input, shape index: {}]
  %s6 = inlined_call_operand.vmem [shape: f32[1,128], index: 6, kind: input, shape index: {}]
  %s7 = inlined_call_operand.vmem [shape: f32[1,128], index: 7, kind: input, shape index: {}]
  %s8 = inlined_call_operand.vmem [shape: f32[1,128], index: 8, kind: input, shape index: {}]
  %s9 = inlined_call_operand.vmem [shape: f32[1,128], index: 9, kind: input, shape index: {}]
  %s10 = inlined_call_operand.vmem [shape: f32[512,128], index: 10, kind: output, shape index: {0}]
  %s11 = inlined_call_operand.vmem [shape: bf16[512,128], index: 11, kind: output, shape index: {1}]
  %s12 = inlined_call_operand.vmem [shape: bf16[512,128], index: 12, kind: output, shape index: {2}]
  %s13 = inlined_call_operand.vmem [shape: f32[512,128], index: 13, kind: output, shape index: {3}]
  %14 = xla_tuple %s10, %s11, %s12, %s13
  %s15 = sld [smem:[#allocation0]]
  $region97: #{inception_forward.4} parent=0
    _
  %s17 = ssub.s32 1, %s15
  %s18 = scalar_select 0, %s17, %s15
  loop: start=0, step=1, limit=4
  $region2: #{inception_forward.4} parent=0 // loop_pre_header
    _
  $region3: #{inception_forward.4} parent=0 // loop_header
    %s20 = sphi 0, %s24
    %p21 = scmp.ge.s32.totalorder %s20, 4
    %s30 = sphi 0, %s32
    %s33 = sphi 0, %s30
    %s34 = sphi 0, %s33
    %s50 = sphi 0, %s34
    %s56 = sphi 0, %s58
    %s59 = sphi 0, %s56
    %s60 = sphi 0, %s59
    %s76 = sphi 0, %s60
    %s80 = sphi 0, %s80
    %s82 = sphi 0, %s80
    %s83 = sphi 0, %s82
    %s97 = sphi 0, %s83
    %s101 = sphi 0, %s101
    %s103 = sphi 0, %s101
    %s104 = sphi 0, %s103
    %s118 = sphi 0, %s104
    %s122 = sphi 0, %s122
    %s124 = sphi 0, %s122
    %s125 = sphi 0, %s124
    %s139 = sphi 0, %s125
    %s143 = sphi 0, %s143
    %s145 = sphi 0, %s143
    %s146 = sphi 0, %s145
    %s160 = sphi 0, %s146
    %s164 = sphi 0, %s164
    %s166 = sphi 0, %s164
    %s167 = sphi 0, %s166
    %s181 = sphi 0, %s167
    %s185 = sphi 0, %s185
    %s187 = sphi 0, %s185
    %s188 = sphi 0, %s187
    %s202 = sphi 0, %s188
    %s206 = sphi 0, %s206
    %s208 = sphi 0, %s206
    %s209 = sphi 0, %s208
    %s223 = sphi 0, %s209
    %s227 = sphi 0, %s227
    %s229 = sphi 0, %s227
    %s230 = sphi 0, %s229
    %s244 = sphi 0, %s230
    %s250 = sphi 0, %s252
    %s253 = sphi 0, %s250
    %s254 = sphi 0, %s253
    %s270 = sphi 0, %s254
    %s276 = sphi 0, %s278
    %s279 = sphi 0, %s276
    %s280 = sphi 0, %s279
    %s296 = sphi 0, %s280
    %s302 = sphi 0, %s304
    %s305 = sphi 0, %s302
    %s306 = sphi 0, %s305
    %s322 = sphi 0, %s306
    %s328 = sphi 0, %s330
    %s331 = sphi 0, %s328
    %s332 = sphi 0, %s331
    %s348 = sphi 0, %s332
  $region4: #{inception_forward.4} parent=0 // loop_header_branch
    %23 = sbr.rel (%p21) target = $region8
  $region5: #{inception_forward.4} parent=0 // loop_body
    %s25 = ssub.s32 %s20, 1
    %s26 = ssub.s32 %s20, 2
    %s27 = sadd.s32 %s20, 1
    %s28 = ssub.s32 %s20, %s27
    %p29 = scmp.eq.s32.totalorder %s28, 0
    %s31 = sadd.s32 %s30, 1
    %s32 = scalar_select %p29, %s30, %s31
    %p35 = pneg %p29
    %p36 = scmp.eq.s32.totalorder %s20, 1
    %p37 = por %p35, %p36
    %p38 = scmp.ne.s32.totalorder %s30, %s33
    %p39 = scmp.eq.s32.totalorder %s20, 0
    %p40 = por %p38, %p39
    %p41 = scmp.ne.s32.totalorder %s30, %s33
    %p42 = scmp.eq.s32.totalorder %s25, 1
    %p43 = por %p41, %p42
    %p44 = scmp.ne.s32.totalorder %s33, %s34
    %p45 = scmp.eq.s32.totalorder %s25, 0
    %p46 = por %p44, %p45
    %p47 = scmp.ne.s32.totalorder %s33, %s34
    %p48 = scmp.eq.s32.totalorder %s26, 1
    %p49 = por %p47, %p48
    %p51 = scmp.ne.s32.totalorder %s34, %s50
    %p52 = scmp.eq.s32.totalorder %s26, 0
    %p53 = por %p51, %p52
    %s54 = ssub.s32 %s20, %s27
    %p55 = scmp.eq.s32.totalorder %s54, 0
    %s57 = sadd.s32 %s56, 1
    %s58 = scalar_select %p55, %s56, %s57
    %p61 = pneg %p55
    %p62 = scmp.eq.s32.totalorder %s20, 1
    %p63 = por %p61, %p62
    %p64 = scmp.ne.s32.totalorder %s56, %s59
    %p65 = scmp.eq.s32.totalorder %s20, 0
    %p66 = por %p64, %p65
    %p67 = scmp.ne.s32.totalorder %s56, %s59
    %p68 = scmp.eq.s32.totalorder %s25, 1
    %p69 = por %p67, %p68
    %p70 = scmp.ne.s32.totalorder %s59, %s60
    %p71 = scmp.eq.s32.totalorder %s25, 0
    %p72 = por %p70, %p71
    %p73 = scmp.ne.s32.totalorder %s59, %s60
    %p74 = scmp.eq.s32.totalorder %s26, 1
    %p75 = por %p73, %p74
    %p77 = scmp.ne.s32.totalorder %s60, %s76
    %p78 = scmp.eq.s32.totalorder %s26, 0
    %p79 = por %p77, %p78
    %s81 = sadd.s32 %s80, 1
    %p84 = scmp.eq.s32.totalorder %s20, 1
    %p85 = scmp.ne.s32.totalorder %s80, %s82
    %p86 = scmp.eq.s32.totalorder %s20, 0
    %p87 = por %p85, %p86
    %p88 = scmp.ne.s32.totalorder %s80, %s82
    %p89 = scmp.eq.s32.totalorder %s25, 1
    %p90 = por %p88, %p89
    %p91 = scmp.ne.s32.totalorder %s82, %s83
    %p92 = scmp.eq.s32.totalorder %s25, 0
    %p93 = por %p91, %p92
    %p94 = scmp.ne.s32.totalorder %s82, %s83
    %p95 = scmp.eq.s32.totalorder %s26, 1
    %p96 = por %p94, %p95
    %p98 = scmp.ne.s32.totalorder %s83, %s97
    %p99 = scmp.eq.s32.totalorder %s26, 0
    %p100 = por %p98, %p99
    %s102 = sadd.s32 %s101, 1
    %p105 = scmp.eq.s32.totalorder %s20, 1
    %p106 = scmp.ne.s32.totalorder %s101, %s103
    %p107 = scmp.eq.s32.totalorder %s20, 0
    %p108 = por %p106, %p107
    %p109 = scmp.ne.s32.totalorder %s101, %s103
    %p110 = scmp.eq.s32.totalorder %s25, 1
    %p111 = por %p109, %p110
    %p112 = scmp.ne.s32.totalorder %s103, %s104
    %p113 = scmp.eq.s32.totalorder %s25, 0
    %p114 = por %p112, %p113
    %p115 = scmp.ne.s32.totalorder %s103, %s104
    %p116 = scmp.eq.s32.totalorder %s26, 1
    %p117 = por %p115, %p116
    %p119 = scmp.ne.s32.totalorder %s104, %s118
    %p120 = scmp.eq.s32.totalorder %s26, 0
    %p121 = por %p119, %p120
    %s123 = sadd.s32 %s122, 1
    %p126 = scmp.eq.s32.totalorder %s20, 1
    %p127 = scmp.ne.s32.totalorder %s122, %s124
    %p128 = scmp.eq.s32.totalorder %s20, 0
    %p129 = por %p127, %p128
    %p130 = scmp.ne.s32.totalorder %s122, %s124
    %p131 = scmp.eq.s32.totalorder %s25, 1
    %p132 = por %p130, %p131
    %p133 = scmp.ne.s32.totalorder %s124, %s125
    %p134 = scmp.eq.s32.totalorder %s25, 0
    %p135 = por %p133, %p134
    %p136 = scmp.ne.s32.totalorder %s124, %s125
    %p137 = scmp.eq.s32.totalorder %s26, 1
    %p138 = por %p136, %p137
    %p140 = scmp.ne.s32.totalorder %s125, %s139
    %p141 = scmp.eq.s32.totalorder %s26, 0
    %p142 = por %p140, %p141
    %s144 = sadd.s32 %s143, 1
    %p147 = scmp.eq.s32.totalorder %s20, 1
    %p148 = scmp.ne.s32.totalorder %s143, %s145
    %p149 = scmp.eq.s32.totalorder %s20, 0
    %p150 = por %p148, %p149
    %p151 = scmp.ne.s32.totalorder %s143, %s145
    %p152 = scmp.eq.s32.totalorder %s25, 1
    %p153 = por %p151, %p152
    %p154 = scmp.ne.s32.totalorder %s145, %s146
    %p155 = scmp.eq.s32.totalorder %s25, 0
    %p156 = por %p154, %p155
    %p157 = scmp.ne.s32.totalorder %s145, %s146
    %p158 = scmp.eq.s32.totalorder %s26, 1
    %p159 = por %p157, %p158
    %p161 = scmp.ne.s32.totalorder %s146, %s160
    %p162 = scmp.eq.s32.totalorder %s26, 0
    %p163 = por %p161, %p162
    %s165 = sadd.s32 %s164, 1
    %p168 = scmp.eq.s32.totalorder %s20, 1
    %p169 = scmp.ne.s32.totalorder %s164, %s166
    %p170 = scmp.eq.s32.totalorder %s20, 0
    %p171 = por %p169, %p170
    %p172 = scmp.ne.s32.totalorder %s164, %s166
    %p173 = scmp.eq.s32.totalorder %s25, 1
    %p174 = por %p172, %p173
    %p175 = scmp.ne.s32.totalorder %s166, %s167
    %p176 = scmp.eq.s32.totalorder %s25, 0
    %p177 = por %p175, %p176
    %p178 = scmp.ne.s32.totalorder %s166, %s167
    %p179 = scmp.eq.s32.totalorder %s26, 1
    %p180 = por %p178, %p179
    %p182 = scmp.ne.s32.totalorder %s167, %s181
    %p183 = scmp.eq.s32.totalorder %s26, 0
    %p184 = por %p182, %p183
    %s186 = sadd.s32 %s185, 1
    %p189 = scmp.eq.s32.totalorder %s20, 1
    %p190 = scmp.ne.s32.totalorder %s185, %s187
    %p191 = scmp.eq.s32.totalorder %s20, 0
    %p192 = por %p190, %p191
    %p193 = scmp.ne.s32.totalorder %s185, %s187
    %p194 = scmp.eq.s32.totalorder %s25, 1
    %p195 = por %p193, %p194
    %p196 = scmp.ne.s32.totalorder %s187, %s188
    %p197 = scmp.eq.s32.totalorder %s25, 0
    %p198 = por %p196, %p197
    %p199 = scmp.ne.s32.totalorder %s187, %s188
    %p200 = scmp.eq.s32.totalorder %s26, 1
    %p201 = por %p199, %p200
    %p203 = scmp.ne.s32.totalorder %s188, %s202
    %p204 = scmp.eq.s32.totalorder %s26, 0
    %p205 = por %p203, %p204
    %s207 = sadd.s32 %s206, 1
    %p210 = scmp.eq.s32.totalorder %s20, 1
    %p211 = scmp.ne.s32.totalorder %s206, %s208
    %p212 = scmp.eq.s32.totalorder %s20, 0
    %p213 = por %p211, %p212
    %p214 = scmp.ne.s32.totalorder %s206, %s208
    %p215 = scmp.eq.s32.totalorder %s25, 1
    %p216 = por %p214, %p215
    %p217 = scmp.ne.s32.totalorder %s208, %s209
    %p218 = scmp.eq.s32.totalorder %s25, 0
    %p219 = por %p217, %p218
    %p220 = scmp.ne.s32.totalorder %s208, %s209
    %p221 = scmp.eq.s32.totalorder %s26, 1
    %p222 = por %p220, %p221
    %p224 = scmp.ne.s32.totalorder %s209, %s223
    %p225 = scmp.eq.s32.totalorder %s26, 0
    %p226 = por %p224, %p225
    %s228 = sadd.s32 %s227, 1
    %p231 = scmp.eq.s32.totalorder %s20, 1
    %p232 = scmp.ne.s32.totalorder %s227, %s229
    %p233 = scmp.eq.s32.totalorder %s20, 0
    %p234 = por %p232, %p233
    %p235 = scmp.ne.s32.totalorder %s227, %s229
    %p236 = scmp.eq.s32.totalorder %s25, 1
    %p237 = por %p235, %p236
    %p238 = scmp.ne.s32.totalorder %s229, %s230
    %p239 = scmp.eq.s32.totalorder %s25, 0
    %p240 = por %p238, %p239
    %p241 = scmp.ne.s32.totalorder %s229, %s230
    %p242 = scmp.eq.s32.totalorder %s26, 1
    %p243 = por %p241, %p242
    %p245 = scmp.ne.s32.totalorder %s230, %s244
    %p246 = scmp.eq.s32.totalorder %s26, 0
    %p247 = por %p245, %p246
    %s248 = ssub.s32 %s20, %s27
    %p249 = scmp.eq.s32.totalorder %s248, 0
    %s251 = sadd.s32 %s250, 1
    %s252 = scalar_select %p249, %s250, %s251
    %p255 = pneg %p249
    %p256 = scmp.eq.s32.totalorder %s20, 1
    %p257 = por %p255, %p256
    %p258 = scmp.ne.s32.totalorder %s250, %s253
    %p259 = scmp.eq.s32.totalorder %s20, 0
    %p260 = por %p258, %p259
    %p261 = scmp.ne.s32.totalorder %s250, %s253
    %p262 = scmp.eq.s32.totalorder %s25, 1
    %p263 = por %p261, %p262
    %p264 = scmp.ne.s32.totalorder %s253, %s254
    %p265 = scmp.eq.s32.totalorder %s25, 0
    %p266 = por %p264, %p265
    %p267 = scmp.ne.s32.totalorder %s253, %s254
    %p268 = scmp.eq.s32.totalorder %s26, 1
    %p269 = por %p267, %p268
    %p271 = scmp.ne.s32.totalorder %s254, %s270
    %p272 = scmp.eq.s32.totalorder %s26, 0
    %p273 = por %p271, %p272
    %s274 = ssub.s32 %s20, %s27
    %p275 = scmp.eq.s32.totalorder %s274, 0
    %s277 = sadd.s32 %s276, 1
    %s278 = scalar_select %p275, %s276, %s277
    %p281 = pneg %p275
    %p282 = scmp.eq.s32.totalorder %s20, 1
    %p283 = por %p281, %p282
    %p284 = scmp.ne.s32.totalorder %s276, %s279
    %p285 = scmp.eq.s32.totalorder %s20, 0
    %p286 = por %p284, %p285
    %p287 = scmp.ne.s32.totalorder %s276, %s279
    %p288 = scmp.eq.s32.totalorder %s25, 1
    %p289 = por %p287, %p288
    %p290 = scmp.ne.s32.totalorder %s279, %s280
    %p291 = scmp.eq.s32.totalorder %s25, 0
    %p292 = por %p290, %p291
    %p293 = scmp.ne.s32.totalorder %s279, %s280
    %p294 = scmp.eq.s32.totalorder %s26, 1
    %p295 = por %p293, %p294
    %p297 = scmp.ne.s32.totalorder %s280, %s296
    %p298 = scmp.eq.s32.totalorder %s26, 0
    %p299 = por %p297, %p298
    %s300 = ssub.s32 %s20, %s27
    %p301 = scmp.eq.s32.totalorder %s300, 0
    %s303 = sadd.s32 %s302, 1
    %s304 = scalar_select %p301, %s302, %s303
    %p307 = pneg %p301
    %p308 = scmp.eq.s32.totalorder %s20, 1
    %p309 = por %p307, %p308
    %p310 = scmp.ne.s32.totalorder %s302, %s305
    %p311 = scmp.eq.s32.totalorder %s20, 0
    %p312 = por %p310, %p311
    %p313 = scmp.ne.s32.totalorder %s302, %s305
    %p314 = scmp.eq.s32.totalorder %s25, 1
    %p315 = por %p313, %p314
    %p316 = scmp.ne.s32.totalorder %s305, %s306
    %p317 = scmp.eq.s32.totalorder %s25, 0
    %p318 = por %p316, %p317
    %p319 = scmp.ne.s32.totalorder %s305, %s306
    %p320 = scmp.eq.s32.totalorder %s26, 1
    %p321 = por %p319, %p320
    %p323 = scmp.ne.s32.totalorder %s306, %s322
    %p324 = scmp.eq.s32.totalorder %s26, 0
    %p325 = por %p323, %p324
    %s326 = ssub.s32 %s20, %s27
    %p327 = scmp.eq.s32.totalorder %s326, 0
    %s329 = sadd.s32 %s328, 1
    %s330 = scalar_select %p327, %s328, %s329
    %p333 = pneg %p327
    %p334 = scmp.eq.s32.totalorder %s20, 1
    %p335 = por %p333, %p334
    %p336 = scmp.ne.s32.totalorder %s328, %s331
    %p337 = scmp.eq.s32.totalorder %s20, 0
    %p338 = por %p336, %p337
    %p339 = scmp.ne.s32.totalorder %s328, %s331
    %p340 = scmp.eq.s32.totalorder %s25, 1
    %p341 = por %p339, %p340
    %p342 = scmp.ne.s32.totalorder %s331, %s332
    %p343 = scmp.eq.s32.totalorder %s25, 0
    %p344 = por %p342, %p343
    %p345 = scmp.ne.s32.totalorder %s331, %s332
    %p346 = scmp.eq.s32.totalorder %s26, 1
    %p347 = por %p345, %p346
    %p349 = scmp.ne.s32.totalorder %s332, %s348
    %p350 = scmp.eq.s32.totalorder %s26, 0
    %p351 = por %p349, %p350
    %p352 = scmp.le.s32.totalorder 1, %s20
    %p353 = scmp.lt.s32.totalorder %s20, 3
    %p354 = pnand %p352, %p353
    %p355 = pneg %p354
    // Predicated region
    $region9: #{inception_forward.4} parent=5 // pred_check
      _
    $region10: #{inception_forward.4} parent=5 // pred_check_branch
      %357 = sbr.rel (%p354) target = $region12
    $region11: #{inception_forward.4} parent=5 // pred_region
      %s358 = ssub.s32 %s20, 1
      // Predicated region
      $region13: #{inception_forward.4} parent=11 // pred_check
        %p359 = pneg %p93
      $region14: #{inception_forward.4} parent=11 // pred_check_branch
        %361 = sbr.rel (%p359) target = $region16
      $region15: #{inception_forward.4} parent=11 // pred_region
        _
      $region16: #{inception_forward.4} parent=11 // pred_fallthru
        _
      // Predicated region
      $region17: #{inception_forward.4} parent=11 // pred_check
        %p362 = pneg %p114
      $region18: #{inception_forward.4} parent=11 // pred_check_branch
        %364 = sbr.rel (%p362) target = $region20
      $region19: #{inception_forward.4} parent=11 // pred_region
        _
      $region20: #{inception_forward.4} parent=11 // pred_fallthru
        _
      // Predicated region
      $region21: #{inception_forward.4} parent=11 // pred_check
        %p365 = pneg %p135
      $region22: #{inception_forward.4} parent=11 // pred_check_branch
        %367 = sbr.rel (%p365) target = $region24
      $region23: #{inception_forward.4} parent=11 // pred_region
        _
      $region24: #{inception_forward.4} parent=11 // pred_fallthru
        _
      // Predicated region
      $region25: #{inception_forward.4} parent=11 // pred_check
        %p368 = pneg %p156
      $region26: #{inception_forward.4} parent=11 // pred_check_branch
        %370 = sbr.rel (%p368) target = $region28
      $region27: #{inception_forward.4} parent=11 // pred_region
        _
      $region28: #{inception_forward.4} parent=11 // pred_fallthru
        _
      // Predicated region
      $region29: #{inception_forward.4} parent=11 // pred_check
        %p371 = pneg %p177
      $region30: #{inception_forward.4} parent=11 // pred_check_branch
        %373 = sbr.rel (%p371) target = $region32
      $region31: #{inception_forward.4} parent=11 // pred_region
        _
      $region32: #{inception_forward.4} parent=11 // pred_fallthru
        _
      // Predicated region
      $region33: #{inception_forward.4} parent=11 // pred_check
        %p374 = pneg %p198
      $region34: #{inception_forward.4} parent=11 // pred_check_branch
        %376 = sbr.rel (%p374) target = $region36
      $region35: #{inception_forward.4} parent=11 // pred_region
        _
      $region36: #{inception_forward.4} parent=11 // pred_fallthru
        _
      // Predicated region
      $region37: #{inception_forward.4} parent=11 // pred_check
        %p377 = pneg %p219
      $region38: #{inception_forward.4} parent=11 // pred_check_branch
        %379 = sbr.rel (%p377) target = $region40
      $region39: #{inception_forward.4} parent=11 // pred_region
        _
      $region40: #{inception_forward.4} parent=11 // pred_fallthru
        _
      // Predicated region
      $region41: #{inception_forward.4} parent=11 // pred_check
        %p380 = pneg %p240
      $region42: #{inception_forward.4} parent=11 // pred_check_branch
        %382 = sbr.rel (%p380) target = $region44
      $region43: #{inception_forward.4} parent=11 // pred_region
        _
      $region44: #{inception_forward.4} parent=11 // pred_fallthru
        _
    $region12: #{inception_forward.4} parent=5 // pred_fallthru
      _
    %p383 = scmp.lt.s32.totalorder %s20, 2
    // Predicated region
    $region45: #{inception_forward.4} parent=5 // pred_check
      %p384 = pneg %p383
    $region46: #{inception_forward.4} parent=5 // pred_check_branch
      %386 = sbr.rel (%p384) target = $region48
    $region47: #{inception_forward.4} parent=5 // pred_region
      // Predicated region
      $region49: #{inception_forward.4} parent=47 // pred_check
        %p387 = pneg %p40
      $region50: #{inception_forward.4} parent=47 // pred_check_branch
        %389 = sbr.rel (%p387) target = $region52
      $region51: #{inception_forward.4} parent=47 // pred_region
        %s390 = smul.u32 32, %s20
        %p391 = scmp.lt.s32.totalorder %s390, 63
        %s392 = scalar_select %p391, %s390, 63
        %s393 = smul.addr %s392, 4
        %s394 = scalar_lea.vmem %s0, %s393
        %s395 = smul.u32 32, %s20
      $region52: #{inception_forward.4} parent=47 // pred_fallthru
        _
      // Predicated region
      $region53: #{inception_forward.4} parent=47 // pred_check
        %p396 = pneg %p66
      $region54: #{inception_forward.4} parent=47 // pred_check_branch
        %398 = sbr.rel (%p396) target = $region56
      $region55: #{inception_forward.4} parent=47 // pred_region
        %s399 = smul.u32 32, %s20
        %p400 = scmp.lt.s32.totalorder %s399, 63
        %s401 = scalar_select %p400, %s399, 63
        %s402 = smul.addr %s401, 4
        %s403 = scalar_lea.vmem %s1, %s402
        %s404 = smul.u32 32, %s20
      $region56: #{inception_forward.4} parent=47 // pred_fallthru
        _
    $region48: #{inception_forward.4} parent=5 // pred_fallthru
      _
    %p405 = scmp.le.s32.totalorder 1, %s20
    %p406 = scmp.lt.s32.totalorder %s20, 3
    %p407 = pnand %p405, %p406
    %p408 = pneg %p407
    // Predicated region
    $region57: #{inception_forward.4} parent=5 // pred_check
      _
    $region58: #{inception_forward.4} parent=5 // pred_check_branch
      %410 = sbr.rel (%p407) target = $region60
    $region59: #{inception_forward.4} parent=5 // pred_region
      %s411 = ssub.s32 %s20, 1
      %s412 = smul.u32 32, %s25
      %p413 = scmp.lt.s32.totalorder %s412, 63
      %s414 = scalar_select %p413, %s412, 63
      %s415 = smul.addr %s414, 4
      %s416 = scalar_lea.vmem %s0, %s415
      %p417 = pneg %p46
      %p418 = pneg %p43
      %s419 = smul.u32 32, %s25
      %p420 = scmp.lt.s32.totalorder %s419, 63
      %s421 = scalar_select %p420, %s419, 63
      %s422 = smul.addr %s421, 4
      %s423 = scalar_lea.vmem %s1, %s422
      %p424 = pneg %p72
      %p425 = pneg %p69
      %p426 = pneg %p93
      %p427 = pneg %p90
      %p428 = pneg %p114
      %p429 = pneg %p111
      %p430 = pneg %p135
      %p431 = pneg %p132
      %p432 = pneg %p156
      %p433 = pneg %p153
      %p434 = pneg %p177
      %p435 = pneg %p174
      %p436 = pneg %p198
      %p437 = pneg %p195
      %p438 = pneg %p219
      %p439 = pneg %p216
      %p440 = pneg %p240
      %p441 = pneg %p237
      %p442 = pneg %p266
      %p443 = pneg %p263
      %s444 = smul.u32 32, %s25
      %p445 = scmp.lt.s32.totalorder %s444, 63
      %s446 = scalar_select %p445, %s444, 63
      %s447 = smul.addr %s446, 8
      %s448 = scalar_lea.vmem %s10, %s447
      %p449 = pneg %p292
      %p450 = pneg %p289
      %s451 = smul.u32 32, %s25
      %p452 = scmp.lt.s32.totalorder %s451, 63
      %s453 = scalar_select %p452, %s451, 63
      %s454 = smul.addr %s453, 4
      %s455 = scalar_lea.vmem %s11, %s454
      %p456 = pneg %p318
      %p457 = pneg %p315
      %s458 = smul.u32 32, %s25
      %p459 = scmp.lt.s32.totalorder %s458, 63
      %s460 = scalar_select %p459, %s458, 63
      %s461 = smul.addr %s460, 4
      %s462 = scalar_lea.vmem %s12, %s461
      %p463 = pneg %p344
      %p464 = pneg %p341
      %s465 = smul.u32 32, %s25
      %p466 = scmp.lt.s32.totalorder %s465, 63
      %s467 = scalar_select %p466, %s465, 63
      %s468 = smul.addr %s467, 8
      %s469 = scalar_lea.vmem %s13, %s468
      %s470 = smul.u32 32, %s25
      %p471 = scmp.lt.s32.totalorder %s470, 63
      %s472 = scalar_select %p471, %s470, 63
      %s473 = smul.addr %s472, 4
      %s474 = scalar_lea.vmem %s0, %s473
      %s475 = smul.u32 32, %s25
      %s476 = smul.u32 32, %s25
      %p477 = scmp.lt.s32.totalorder %s476, 63
      %s478 = scalar_select %p477, %s476, 63
      %s479 = smul.addr %s478, 4
      %s480 = scalar_lea.vmem %s1, %s479
      %s481 = smul.u32 32, %s25
      %s482 = smul.u32 32, %s25
      %p483 = scmp.lt.s32.totalorder %s482, 63
      %s484 = scalar_select %p483, %s482, 63
      %s485 = smul.addr %s484, 8
      %s486 = scalar_lea.vmem %s10, %s485
      %s487 = smul.u32 32, %s25
      %s488 = smul.u32 32, %s25
      %p489 = scmp.lt.s32.totalorder %s488, 63
      %s490 = scalar_select %p489, %s488, 63
      %s491 = smul.addr %s490, 4
      %s492 = scalar_lea.vmem %s11, %s491
      %s493 = smul.u32 32, %s25
      %s494 = smul.u32 32, %s25
      %p495 = scmp.lt.s32.totalorder %s494, 63
      %s496 = scalar_select %p495, %s494, 63
      %s497 = smul.addr %s496, 4
      %s498 = scalar_lea.vmem %s12, %s497
      %s499 = smul.u32 32, %s25
      %s500 = smul.u32 32, %s25
      %p501 = scmp.lt.s32.totalorder %s500, 63
      %s502 = scalar_select %p501, %s500, 63
      %s503 = smul.addr %s502, 8
      %s504 = scalar_lea.vmem %s13, %s503
      %s505 = smul.u32 32, %s25
      %v507 = vld [vmem:[%s474] sm:$0xf]
      %v508 = vld [vmem:[%s474 + $0x4] sm:$0xf]
      %v509 = vld [vmem:[%s474 + $0x8] sm:$0xf]
      %v510 = vld [vmem:[%s474 + $0xc] sm:$0xf]
      %v511 = vld [vmem:[%s474 + $0x10] sm:$0xf]
      %v512 = vld [vmem:[%s474 + $0x14] sm:$0xf]
      %v513 = vld [vmem:[%s474 + $0x18] sm:$0xf]
      %v514 = vld [vmem:[%s474 + $0x1c] sm:$0xf]
      %v515 = vld [vmem:[%s474 + $0x20] sm:$0xf]
      %v516 = vld [vmem:[%s474 + $0x24] sm:$0xf]
      %v517 = vld [vmem:[%s474 + $0x28] sm:$0xf]
      %v518 = vld [vmem:[%s474 + $0x2c] sm:$0xf]
      %v519 = vld [vmem:[%s474 + $0x30] sm:$0xf]
      %v520 = vld [vmem:[%s474 + $0x34] sm:$0xf]
      %v521 = vld [vmem:[%s474 + $0x38] sm:$0xf]
      %v522 = vld [vmem:[%s474 + $0x3c] sm:$0xf]
      %v523 = vld [vmem:[%s474 + $0x40] sm:$0xf]
      %v524 = vld [vmem:[%s474 + $0x44] sm:$0xf]
      %v525 = vld [vmem:[%s474 + $0x48] sm:$0xf]
      %v526 = vld [vmem:[%s474 + $0x4c] sm:$0xf]
      %v527 = vld [vmem:[%s474 + $0x50] sm:$0xf]
      %v528 = vld [vmem:[%s474 + $0x54] sm:$0xf]
      %v529 = vld [vmem:[%s474 + $0x58] sm:$0xf]
      %v530 = vld [vmem:[%s474 + $0x5c] sm:$0xf]
      %v531 = vld [vmem:[%s474 + $0x60] sm:$0xf]
      %v532 = vld [vmem:[%s474 + $0x64] sm:$0xf]
      %v533 = vld [vmem:[%s474 + $0x68] sm:$0xf]
      %v534 = vld [vmem:[%s474 + $0x6c] sm:$0xf]
      %v535 = vld [vmem:[%s474 + $0x70] sm:$0xf]
      %v536 = vld [vmem:[%s474 + $0x74] sm:$0xf]
      %v537 = vld [vmem:[%s474 + $0x78] sm:$0xf]
      %v538 = vld [vmem:[%s474 + $0x7c] sm:$0xf]
      %v539 = vld [vmem:[%s2] sm:$0x3]
      %v540 = vld [vmem:[%s6] sm:$0x1]
      %v542 = vlaneseq
      %v543 = vshrl.u32 %v542, 7
      %v544 = vsub.s32 0, %v543
      %v545 = vrot.slane %v540, %v544
      %v579 = vunpack.c.l.b16 %v507
      %v580 = vunpack.c.l.b16 %v508
      %v581 = vunpack.c.l.b16 %v509
      %v582 = vunpack.c.l.b16 %v510
      %v583 = vunpack.c.l.b16 %v511
      %v584 = vunpack.c.l.b16 %v512
      %v585 = vunpack.c.l.b16 %v513
      %v586 = vunpack.c.l.b16 %v514
      %v587 = vunpack.c.l.b16 %v515
      %v588 = vunpack.c.l.b16 %v516
      %v589 = vunpack.c.l.b16 %v517
      %v590 = vunpack.c.l.b16 %v518
      %v591 = vunpack.c.l.b16 %v519
      %v592 = vunpack.c.l.b16 %v520
      %v593 = vunpack.c.l.b16 %v521
      %v594 = vunpack.c.l.b16 %v522
      %v595 = vunpack.c.l.b16 %v523
      %v596 = vunpack.c.l.b16 %v524
      %v597 = vunpack.c.l.b16 %v525
      %v598 = vunpack.c.l.b16 %v526
      %v599 = vunpack.c.l.b16 %v527
      %v600 = vunpack.c.l.b16 %v528
      %v601 = vunpack.c.l.b16 %v529
      %v602 = vunpack.c.l.b16 %v530
      %v603 = vunpack.c.l.b16 %v531
      %v604 = vunpack.c.l.b16 %v532
      %v605 = vunpack.c.l.b16 %v533
      %v606 = vunpack.c.l.b16 %v534
      %v607 = vunpack.c.l.b16 %v535
      %v608 = vunpack.c.l.b16 %v536
      %v609 = vunpack.c.l.b16 %v537
      %v610 = vunpack.c.l.b16 %v538
      %v611 = vpack.c.b16 %v580, %v579
      %v612 = vpack.c.b16 %v582, %v581
      %v613 = vpack.c.b16 %v584, %v583
      %v614 = vpack.c.b16 %v586, %v585
      %v615 = vpack.c.b16 %v588, %v587
      %v616 = vpack.c.b16 %v590, %v589
      %v617 = vpack.c.b16 %v592, %v591
      %v618 = vpack.c.b16 %v594, %v593
      %v619 = vpack.c.b16 %v596, %v595
      %v620 = vpack.c.b16 %v598, %v597
      %v621 = vpack.c.b16 %v600, %v599
      %v622 = vpack.c.b16 %v602, %v601
      %v623 = vpack.c.b16 %v604, %v603
      %v624 = vpack.c.b16 %v606, %v605
      %v625 = vpack.c.b16 %v608, %v607
      %v626 = vpack.c.b16 %v610, %v609
      %vm627 = vcmask 31744
      %v629 = vsel %vm627, %v611, 0
      %v632 = vsel %vm627, %v612, 0
      %v635 = vsel %vm627, %v613, 0
      %v638 = vsel %vm627, %v614, 0
      %v641 = vsel %vm627, %v615, 0
      %v644 = vsel %vm627, %v616, 0
      %v647 = vsel %vm627, %v617, 0
      %v650 = vsel %vm627, %v618, 0
      %v653 = vsel %vm627, %v619, 0
      %v656 = vsel %vm627, %v620, 0
      %v659 = vsel %vm627, %v621, 0
      %v662 = vsel %vm627, %v622, 0
      %v665 = vsel %vm627, %v623, 0
      %v668 = vsel %vm627, %v624, 0
      %v671 = vsel %vm627, %v625, 0
      %v674 = vsel %vm627, %v626, 0
      %vm676 = vcmask 1041408
      %v678 = vsel %vm676, %v539, 0
      %680 = vmatprep.subr.bf16.mxu0 0
      %681 = vmatpush1.bf16.msra.mxu0 %v678
      %682 = vmatprep.subr.bf16.mxu0 0
      %683 = vmatpush1.bf16.msra.mxu0 0
      %684 = vmatprep.subr.bf16.mxu0 0
      %685 = vmatpush1.bf16.msra.mxu0 0
      %686 = vmatprep.subr.bf16.mxu0 0
      %687 = vmatpush1.bf16.msra.mxu0 0
      %688 = vmatprep.subr.bf16.mxu0 0
      %689 = vmatpush1.bf16.msra.mxu0 0
      %690 = vmatprep.subr.bf16.mxu0 0
      %691 = vmatpush1.bf16.msra.mxu0 0
      %692 = vmatprep.subr.bf16.mxu0 0
      %693 = vmatpush1.bf16.msra.mxu0 0
      %694 = vmatprep.subr.bf16.mxu0 0
      %695 = vmatpush1.bf16.msra.mxu0 0
      %696 = vmatprep.subr.bf16.mxu0 0
      %697 = vmatpush1.bf16.msra.mxu0 0
      %698 = vmatprep.subr.bf16.mxu0 0
      %699 = vmatpush1.bf16.msra.mxu0 0
      %700 = vmatprep.subr.bf16.mxu0 0
      %701 = vmatpush1.bf16.msra.mxu0 0
      %702 = vmatprep.subr.bf16.mxu0 0
      %703 = vmatpush1.bf16.msra.mxu0 0
      %704 = vmatprep.subr.bf16.mxu0 0
      %705 = vmatpush1.bf16.msra.mxu0 0
      %706 = vmatprep.subr.bf16.mxu0 0
      %707 = vmatpush1.bf16.msra.mxu0 0
      %708 = vmatprep.subr.bf16.mxu0 0
      %709 = vmatpush1.bf16.msra.mxu0 0
      %710 = vmatprep.subr.bf16.mxu0 0
      %711 = vmatpush1.bf16.msra.mxu0 0
      %712 = vmatprep.mubr.bf16.mxu0 0
      %713 = vmatmul.mubr.bf16.gmra.mrb[0].mxu0 %v629
      %v714 = vpop.f32.mrb[0].mxu0
      %v715 = vadd.f32 %v545, %v714
      %v716 = vpop.f32.mrb[0].mxu0
      %v717 = vpop.f32.mrb[0].mxu0
      %v718 = vadd.f32 %v545, %v717
      %v719 = vpop.f32.mrb[0].mxu0
      %720 = vmatprep.mubr.bf16.mxu0 0
      %721 = vmatmul.mubr.bf16.gmra.mrb[0].mxu0 %v632
      %v722 = vpop.f32.mrb[0].mxu0
      %v723 = vadd.f32 %v545, %v722
      %v724 = vpop.f32.mrb[0].mxu0
      %v725 = vpop.f32.mrb[0].mxu0
      %v726 = vadd.f32 %v545, %v725
      %v727 = vpop.f32.mrb[0].mxu0
      %728 = vmatprep.mubr.bf16.mxu0 0
      %729 = vmatmul.mubr.bf16.gmra.mrb[0].mxu0 %v635
      %v730 = vpop.f32.mrb[0].mxu0
      %v731 = vadd.f32 %v545, %v730
      %v732 = vpop.f32.mrb[0].mxu0
      %v733 = vpop.f32.mrb[0].mxu0
      %v734 = vadd.f32 %v545, %v733
      %v735 = vpop.f32.mrb[0].mxu0
      %736 = vmatprep.mubr.bf16.mxu0 0
      %737 = vmatmul.mubr.bf16.gmra.mrb[0].mxu0 %v638
      %v738 = vpop.f32.mrb[0].mxu0
      %v739 = vadd.f32 %v545, %v738
      %v740 = vpop.f32.mrb[0].mxu0
      %v741 = vpop.f32.mrb[0].mxu0
      %v742 = vadd.f32 %v545, %v741
      %v743 = vpop.f32.mrb[0].mxu0
      %744 = vmatprep.mubr.bf16.mxu0 0
      %745 = vmatmul.mubr.bf16.gmra.mrb[0].mxu0 %v641
      %v746 = vpop.f32.mrb[0].mxu0
      %v747 = vadd.f32 %v545, %v746
      %v748 = vpop.f32.mrb[0].mxu0
      %v749 = vpop.f32.mrb[0].mxu0
      %v750 = vadd.f32 %v545, %v749
      %v751 = vpop.f32.mrb[0].mxu0
      %752 = vmatprep.mubr.bf16.mxu0 0
      %753 = vmatmul.mubr.bf16.gmra.mrb[0].mxu0 %v644
      %v754 = vpop.f32.mrb[0].mxu0
      %v755 = vadd.f32 %v545, %v754
      %v756 = vpop.f32.mrb[0].mxu0
      %v757 = vpop.f32.mrb[0].mxu0
      %v758 = vadd.f32 %v545, %v757
      %v759 = vpop.f32.mrb[0].mxu0
      %760 = vmatprep.mubr.bf16.mxu0 0
      %761 = vmatmul.mubr.bf16.gmra.mrb[0].mxu0 %v647
      %v762 = vpop.f32.mrb[0].mxu0
      %v763 = vadd.f32 %v545, %v762
      %v764 = vpop.f32.mrb[0].mxu0
      %v765 = vpop.f32.mrb[0].mxu0
      %v766 = vadd.f32 %v545, %v765
      %v767 = vpop.f32.mrb[0].mxu0
      %768 = vmatprep.mubr.bf16.mxu0 0
      %769 = vmatmul.mubr.bf16.gmra.mrb[0].mxu0 %v650
      %v770 = vpop.f32.mrb[0].mxu0
      %v771 = vadd.f32 %v545, %v770
      %v772 = vpop.f32.mrb[0].mxu0
      %v773 = vpop.f32.mrb[0].mxu0
      %v774 = vadd.f32 %v545, %v773
      %v775 = vpop.f32.mrb[0].mxu0
      %776 = vmatprep.mubr.bf16.mxu0 0
      %777 = vmatmul.mubr.bf16.gmra.mrb[0].mxu0 %v653
      %v778 = vpop.f32.mrb[0].mxu0
      %v779 = vadd.f32 %v545, %v778
      %v780 = vpop.f32.mrb[0].mxu0
      %v781 = vpop.f32.mrb[0].mxu0
      %v782 = vadd.f32 %v545, %v781
      %v783 = vpop.f32.mrb[0].mxu0
      %784 = vmatprep.mubr.bf16.mxu0 0
      %785 = vmatmul.mubr.bf16.gmra.mrb[0].mxu0 %v656
      %v786 = vpop.f32.mrb[0].mxu0
      %v787 = vadd.f32 %v545, %v786
      %v788 = vpop.f32.mrb[0].mxu0
      %v789 = vpop.f32.mrb[0].mxu0
      %v790 = vadd.f32 %v545, %v789
      %v791 = vpop.f32.mrb[0].mxu0
      %792 = vmatprep.mubr.bf16.mxu0 0
      %793 = vmatmul.mubr.bf16.gmra.mrb[0].mxu0 %v659
      %v794 = vpop.f32.mrb[0].mxu0
      %v795 = vadd.f32 %v545, %v794
      %v796 = vpop.f32.mrb[0].mxu0
      %v797 = vpop.f32.mrb[0].mxu0
      %v798 = vadd.f32 %v545, %v797
      %v799 = vpop.f32.mrb[0].mxu0
      %800 = vmatprep.mubr.bf16.mxu0 0
      %801 = vmatmul.mubr.bf16.gmra.mrb[0].mxu0 %v662
      %v802 = vpop.f32.mrb[0].mxu0
      %v803 = vadd.f32 %v545, %v802
      %v804 = vpop.f32.mrb[0].mxu0
      %v805 = vpop.f32.mrb[0].mxu0
      %v806 = vadd.f32 %v545, %v805
      %v807 = vpop.f32.mrb[0].mxu0
      %808 = vmatprep.mubr.bf16.mxu0 0
      %809 = vmatmul.mubr.bf16.gmra.mrb[0].mxu0 %v665
      %v810 = vpop.f32.mrb[0].mxu0
      %v811 = vadd.f32 %v545, %v810
      %v812 = vpop.f32.mrb[0].mxu0
      %v813 = vpop.f32.mrb[0].mxu0
      %v814 = vadd.f32 %v545, %v813
      %v815 = vpop.f32.mrb[0].mxu0
      %816 = vmatprep.mubr.bf16.mxu0 0
      %817 = vmatmul.mubr.bf16.gmra.mrb[0].mxu0 %v668
      %v818 = vpop.f32.mrb[0].mxu0
      %v819 = vadd.f32 %v545, %v818
      %v820 = vpop.f32.mrb[0].mxu0
      %v821 = vpop.f32.mrb[0].mxu0
      %v822 = vadd.f32 %v545, %v821
      %v823 = vpop.f32.mrb[0].mxu0
      %824 = vmatprep.mubr.bf16.mxu0 0
      %825 = vmatmul.mubr.bf16.gmra.mrb[0].mxu0 %v671
      %v826 = vpop.f32.mrb[0].mxu0
      %v827 = vadd.f32 %v545, %v826
      %v828 = vpop.f32.mrb[0].mxu0
      %v829 = vpop.f32.mrb[0].mxu0
      %v830 = vadd.f32 %v545, %v829
      %v831 = vpop.f32.mrb[0].mxu0
      %832 = vmatprep.mubr.bf16.mxu0 0
      %833 = vmatmul.mubr.bf16.gmra.mrb[0].mxu0 %v674
      %v834 = vpop.f32.mrb[0].mxu0
      %v835 = vadd.f32 %v545, %v834
      %v836 = vpop.f32.mrb[0].mxu0
      %v837 = vpop.f32.mrb[0].mxu0
      %v838 = vadd.f32 %v545, %v837
      %v839 = vpop.f32.mrb[0].mxu0
      %840 = vdwg.mxu0
      %v841 = vmax.f32 %v715, 0.0
      %v842 = vmax.f32 %v718, 0.0
      %v843 = vmax.f32 %v723, 0.0
      %v844 = vmax.f32 %v726, 0.0
      %v845 = vmax.f32 %v731, 0.0
      %v846 = vmax.f32 %v734, 0.0
      %v847 = vmax.f32 %v739, 0.0
      %v848 = vmax.f32 %v742, 0.0
      %v849 = vmax.f32 %v747, 0.0
      %v850 = vmax.f32 %v750, 0.0
      %v851 = vmax.f32 %v755, 0.0
      %v852 = vmax.f32 %v758, 0.0
      %v853 = vmax.f32 %v763, 0.0
      %v854 = vmax.f32 %v766, 0.0
      %v855 = vmax.f32 %v771, 0.0
      %v856 = vmax.f32 %v774, 0.0
      %v857 = vmax.f32 %v779, 0.0
      %v858 = vmax.f32 %v782, 0.0
      %v859 = vmax.f32 %v787, 0.0
      %v860 = vmax.f32 %v790, 0.0
      %v861 = vmax.f32 %v795, 0.0
      %v862 = vmax.f32 %v798, 0.0
      %v863 = vmax.f32 %v803, 0.0
      %v864 = vmax.f32 %v806, 0.0
      %v865 = vmax.f32 %v811, 0.0
      %v866 = vmax.f32 %v814, 0.0
      %v867 = vmax.f32 %v819, 0.0
      %v868 = vmax.f32 %v822, 0.0
      %v869 = vmax.f32 %v827, 0.0
      %v870 = vmax.f32 %v830, 0.0
      %v871 = vmax.f32 %v835, 0.0
      %v872 = vmax.f32 %v838, 0.0
      %873 = vst [vmem:[%s486] sm:$0xff] %v841
      %874 = vst [vmem:[%s486 + $0x8] sm:$0xff] %v842
      %875 = vst [vmem:[%s486 + $0x10] sm:$0xff] %v843
      %876 = vst [vmem:[%s486 + $0x18] sm:$0xff] %v844
      %877 = vst [vmem:[%s486 + $0x20] sm:$0xff] %v845
      %878 = vst [vmem:[%s486 + $0x28] sm:$0xff] %v846
      %879 = vst [vmem:[%s486 + $0x30] sm:$0xff] %v847
      %880 = vst [vmem:[%s486 + $0x38] sm:$0xff] %v848
      %881 = vst [vmem:[%s486 + $0x40] sm:$0xff] %v849
      %882 = vst [vmem:[%s486 + $0x48] sm:$0xff] %v850
      %883 = vst [vmem:[%s486 + $0x50] sm:$0xff] %v851
      %884 = vst [vmem:[%s486 + $0x58] sm:$0xff] %v852
      %885 = vst [vmem:[%s486 + $0x60] sm:$0xff] %v853
      %886 = vst [vmem:[%s486 + $0x68] sm:$0xff] %v854
      %887 = vst [vmem:[%s486 + $0x70] sm:$0xff] %v855
      %888 = vst [vmem:[%s486 + $0x78] sm:$0xff] %v856
      %889 = vst [vmem:[%s486 + $0x80] sm:$0xff] %v857
      %890 = vst [vmem:[%s486 + $0x88] sm:$0xff] %v858
      %891 = vst [vmem:[%s486 + $0x90] sm:$0xff] %v859
      %892 = vst [vmem:[%s486 + $0x98] sm:$0xff] %v860
      %893 = vst [vmem:[%s486 + $0xa0] sm:$0xff] %v861
      %894 = vst [vmem:[%s486 + $0xa8] sm:$0xff] %v862
      %895 = vst [vmem:[%s486 + $0xb0] sm:$0xff] %v863
      %896 = vst [vmem:[%s486 + $0xb8] sm:$0xff] %v864
      %897 = vst [vmem:[%s486 + $0xc0] sm:$0xff] %v865
      %898 = vst [vmem:[%s486 + $0xc8] sm:$0xff] %v866
      %899 = vst [vmem:[%s486 + $0xd0] sm:$0xff] %v867
      %900 = vst [vmem:[%s486 + $0xd8] sm:$0xff] %v868
      %901 = vst [vmem:[%s486 + $0xe0] sm:$0xff] %v869
      %902 = vst [vmem:[%s486 + $0xe8] sm:$0xff] %v870
      %903 = vst [vmem:[%s486 + $0xf0] sm:$0xff] %v871
      %904 = vst [vmem:[%s486 + $0xf8] sm:$0xff] %v872
      %v905 = vld [vmem:[%s3] sm:$0x3]
      %v906 = vld [vmem:[%s7] sm:$0x1]
      %v908 = vlaneseq
      %v909 = vshrl.u32 %v908, 7
      %v910 = vsub.s32 0, %v909
      %v911 = vrot.slane %v906, %v910
      %v914 = vsel %vm676, %v905, 0
      %916 = vmatprep.subr.bf16.mxu0 0
      %917 = vmatpush1.bf16.msra.mxu0 %v914
      %918 = vmatprep.subr.bf16.mxu0 0
      %919 = vmatpush1.bf16.msra.mxu0 0
      %920 = vmatprep.subr.bf16.mxu0 0
      %921 = vmatpush1.bf16.msra.mxu0 0
      %922 = vmatprep.subr.bf16.mxu0 0
      %923 = vmatpush1.bf16.msra.mxu0 0
      %924 = vmatprep.subr.bf16.mxu0 0
      %925 = vmatpush1.bf16.msra.mxu0 0
      %926 = vmatprep.subr.bf16.mxu0 0
      %927 = vmatpush1.bf16.msra.mxu0 0
      %928 = vmatprep.subr.bf16.mxu0 0
      %929 = vmatpush1.bf16.msra.mxu0 0
      %930 = vmatprep.subr.bf16.mxu0 0
      %931 = vmatpush1.bf16.msra.mxu0 0
      %932 = vmatprep.subr.bf16.mxu0 0
      %933 = vmatpush1.bf16.msra.mxu0 0
      %934 = vmatprep.subr.bf16.mxu0 0
      %935 = vmatpush1.bf16.msra.mxu0 0
      %936 = vmatprep.subr.bf16.mxu0 0
      %937 = vmatpush1.bf16.msra.mxu0 0
      %938 = vmatprep.subr.bf16.mxu0 0
      %939 = vmatpush1.bf16.msra.mxu0 0
      %940 = vmatprep.subr.bf16.mxu0 0
      %941 = vmatpush1.bf16.msra.mxu0 0
      %942 = vmatprep.subr.bf16.mxu0 0
      %943 = vmatpush1.bf16.msra.mxu0 0
      %944 = vmatprep.subr.bf16.mxu0 0
      %945 = vmatpush1.bf16.msra.mxu0 0
      %946 = vmatprep.subr.bf16.mxu0 0
      %947 = vmatpush1.bf16.msra.mxu0 0
      %948 = vmatprep.mubr.bf16.mxu0 0
      %949 = vmatmul.mubr.bf16.gmra.mrb[0].mxu0 %v629
      %v950 = vpop.f32.mrb[0].mxu0
      %v951 = vadd.f32 %v911, %v950
      %v952 = vpop.f32.mrb[0].mxu0
      %v953 = vpop.f32.mrb[0].mxu0
      %v954 = vadd.f32 %v911, %v953
      %v955 = vpop.f32.mrb[0].mxu0
      %956 = vmatprep.mubr.bf16.mxu0 0
      %957 = vmatmul.mubr.bf16.gmra.mrb[0].mxu0 %v632
      %v958 = vpop.f32.mrb[0].mxu0
      %v959 = vadd.f32 %v911, %v958
      %v960 = vpop.f32.mrb[0].mxu0
      %v961 = vpop.f32.mrb[0].mxu0
      %v962 = vadd.f32 %v911, %v961
      %v963 = vpop.f32.mrb[0].mxu0
      %964 = vmatprep.mubr.bf16.mxu0 0
      %965 = vmatmul.mubr.bf16.gmra.mrb[0].mxu0 %v635
      %v966 = vpop.f32.mrb[0].mxu0
      %v967 = vadd.f32 %v911, %v966
      %v968 = vpop.f32.mrb[0].mxu0
      %v969 = vpop.f32.mrb[0].mxu0
      %v970 = vadd.f32 %v911, %v969
      %v971 = vpop.f32.mrb[0].mxu0
      %972 = vmatprep.mubr.bf16.mxu0 0
      %973 = vmatmul.mubr.bf16.gmra.mrb[0].mxu0 %v638
      %v974 = vpop.f32.mrb[0].mxu0
      %v975 = vadd.f32 %v911, %v974
      %v976 = vpop.f32.mrb[0].mxu0
      %v977 = vpop.f32.mrb[0].mxu0
      %v978 = vadd.f32 %v911, %v977
      %v979 = vpop.f32.mrb[0].mxu0
      %980 = vmatprep.mubr.bf16.mxu0 0
      %981 = vmatmul.mubr.bf16.gmra.mrb[0].mxu0 %v641
      %v982 = vpop.f32.mrb[0].mxu0
      %v983 = vadd.f32 %v911, %v982
      %v984 = vpop.f32.mrb[0].mxu0
      %v985 = vpop.f32.mrb[0].mxu0
      %v986 = vadd.f32 %v911, %v985
      %v987 = vpop.f32.mrb[0].mxu0
      %988 = vmatprep.mubr.bf16.mxu0 0
      %989 = vmatmul.mubr.bf16.gmra.mrb[0].mxu0 %v644
      %v990 = vpop.f32.mrb[0].mxu0
      %v991 = vadd.f32 %v911, %v990
      %v992 = vpop.f32.mrb[0].mxu0
      %v993 = vpop.f32.mrb[0].mxu0
      %v994 = vadd.f32 %v911, %v993
      %v995 = vpop.f32.mrb[0].mxu0
      %996 = vmatprep.mubr.bf16.mxu0 0
      %997 = vmatmul.mubr.bf16.gmra.mrb[0].mxu0 %v647
      %v998 = vpop.f32.mrb[0].mxu0
      %v999 = vadd.f32 %v911, %v998
      %v1000 = vpop.f32.mrb[0].mxu0
      %v1001 = vpop.f32.mrb[0].mxu0
      %v1002 = vadd.f32 %v911, %v1001
      %v1003 = vpop.f32.mrb[0].mxu0
      %1004 = vmatprep.mubr.bf16.mxu0 0
      %1005 = vmatmul.mubr.bf16.gmra.mrb[0].mxu0 %v650
      %v1006 = vpop.f32.mrb[0].mxu0
      %v1007 = vadd.f32 %v911, %v1006
      %v1008 = vpop.f32.mrb[0].mxu0
      %v1009 = vpop.f32.mrb[0].mxu0
      %v1010 = vadd.f32 %v911, %v1009
      %v1011 = vpop.f32.mrb[0].mxu0
      %1012 = vmatprep.mubr.bf16.mxu0 0
      %1013 = vmatmul.mubr.bf16.gmra.mrb[0].mxu0 %v653
      %v1014 = vpop.f32.mrb[0].mxu0
      %v1015 = vadd.f32 %v911, %v1014
      %v1016 = vpop.f32.mrb[0].mxu0
      %v1017 = vpop.f32.mrb[0].mxu0
      %v1018 = vadd.f32 %v911, %v1017
      %v1019 = vpop.f32.mrb[0].mxu0
      %1020 = vmatprep.mubr.bf16.mxu0 0
      %1021 = vmatmul.mubr.bf16.gmra.mrb[0].mxu0 %v656
      %v1022 = vpop.f32.mrb[0].mxu0
      %v1023 = vadd.f32 %v911, %v1022
      %v1024 = vpop.f32.mrb[0].mxu0
      %v1025 = vpop.f32.mrb[0].mxu0
      %v1026 = vadd.f32 %v911, %v1025
      %v1027 = vpop.f32.mrb[0].mxu0
      %1028 = vmatprep.mubr.bf16.mxu0 0
      %1029 = vmatmul.mubr.bf16.gmra.mrb[0].mxu0 %v659
      %v1030 = vpop.f32.mrb[0].mxu0
      %v1031 = vadd.f32 %v911, %v1030
      %v1032 = vpop.f32.mrb[0].mxu0
      %v1033 = vpop.f32.mrb[0].mxu0
      %v1034 = vadd.f32 %v911, %v1033
      %v1035 = vpop.f32.mrb[0].mxu0
      %1036 = vmatprep.mubr.bf16.mxu0 0
      %1037 = vmatmul.mubr.bf16.gmra.mrb[0].mxu0 %v662
      %v1038 = vpop.f32.mrb[0].mxu0
      %v1039 = vadd.f32 %v911, %v1038
      %v1040 = vpop.f32.mrb[0].mxu0
      %v1041 = vpop.f32.mrb[0].mxu0
      %v1042 = vadd.f32 %v911, %v1041
      %v1043 = vpop.f32.mrb[0].mxu0
      %1044 = vmatprep.mubr.bf16.mxu0 0
      %1045 = vmatmul.mubr.bf16.gmra.mrb[0].mxu0 %v665
      %v1046 = vpop.f32.mrb[0].mxu0
      %v1047 = vadd.f32 %v911, %v1046
      %v1048 = vpop.f32.mrb[0].mxu0
      %v1049 = vpop.f32.mrb[0].mxu0
      %v1050 = vadd.f32 %v911, %v1049
      %v1051 = vpop.f32.mrb[0].mxu0
      %1052 = vmatprep.mubr.bf16.mxu0 0
      %1053 = vmatmul.mubr.bf16.gmra.mrb[0].mxu0 %v668
      %v1054 = vpop.f32.mrb[0].mxu0
      %v1055 = vadd.f32 %v911, %v1054
      %v1056 = vpop.f32.mrb[0].mxu0
      %v1057 = vpop.f32.mrb[0].mxu0
      %v1058 = vadd.f32 %v911, %v1057
      %v1059 = vpop.f32.mrb[0].mxu0
      %1060 = vmatprep.mubr.bf16.mxu0 0
      %1061 = vmatmul.mubr.bf16.gmra.mrb[0].mxu0 %v671
      %v1062 = vpop.f32.mrb[0].mxu0
      %v1063 = vadd.f32 %v911, %v1062
      %v1064 = vpop.f32.mrb[0].mxu0
      %v1065 = vpop.f32.mrb[0].mxu0
      %v1066 = vadd.f32 %v911, %v1065
      %v1067 = vpop.f32.mrb[0].mxu0
      %1068 = vmatprep.mubr.bf16.mxu0 0
      %1069 = vmatmul.mubr.bf16.gmra.mrb[0].mxu0 %v674
      %v1070 = vpop.f32.mrb[0].mxu0
      %v1071 = vadd.f32 %v911, %v1070
      %v1072 = vpop.f32.mrb[0].mxu0
      %v1073 = vpop.f32.mrb[0].mxu0
      %v1074 = vadd.f32 %v911, %v1073
      %v1075 = vpop.f32.mrb[0].mxu0
      %1076 = vdwg.mxu0
      %v1077 = vmax.f32 %v951, 0.0
      %v1078 = vmax.f32 %v954, 0.0
      %v1079 = vmax.f32 %v959, 0.0
      %v1080 = vmax.f32 %v962, 0.0
      %v1081 = vmax.f32 %v967, 0.0
      %v1082 = vmax.f32 %v970, 0.0
      %v1083 = vmax.f32 %v975, 0.0
      %v1084 = vmax.f32 %v978, 0.0
      %v1085 = vmax.f32 %v983, 0.0
      %v1086 = vmax.f32 %v986, 0.0
      %v1087 = vmax.f32 %v991, 0.0
      %v1088 = vmax.f32 %v994, 0.0
      %v1089 = vmax.f32 %v999, 0.0
      %v1090 = vmax.f32 %v1002, 0.0
      %v1091 = vmax.f32 %v1007, 0.0
      %v1092 = vmax.f32 %v1010, 0.0
      %v1093 = vmax.f32 %v1015, 0.0
      %v1094 = vmax.f32 %v1018, 0.0
      %v1095 = vmax.f32 %v1023, 0.0
      %v1096 = vmax.f32 %v1026, 0.0
      %v1097 = vmax.f32 %v1031, 0.0
      %v1098 = vmax.f32 %v1034, 0.0
      %v1099 = vmax.f32 %v1039, 0.0
      %v1100 = vmax.f32 %v1042, 0.0
      %v1101 = vmax.f32 %v1047, 0.0
      %v1102 = vmax.f32 %v1050, 0.0
      %v1103 = vmax.f32 %v1055, 0.0
      %v1104 = vmax.f32 %v1058, 0.0
      %v1105 = vmax.f32 %v1063, 0.0
      %v1106 = vmax.f32 %v1066, 0.0
      %v1107 = vmax.f32 %v1071, 0.0
      %v1108 = vmax.f32 %v1074, 0.0
      %v1109 = vpack.c.bf16 %v1078, %v1077
      %v1110 = vpack.c.bf16 %v1080, %v1079
      %v1111 = vpack.c.bf16 %v1082, %v1081
      %v1112 = vpack.c.bf16 %v1084, %v1083
      %v1113 = vpack.c.bf16 %v1086, %v1085
      %v1114 = vpack.c.bf16 %v1088, %v1087
      %v1115 = vpack.c.bf16 %v1090, %v1089
      %v1116 = vpack.c.bf16 %v1092, %v1091
      %v1117 = vpack.c.bf16 %v1094, %v1093
      %v1118 = vpack.c.bf16 %v1096, %v1095
      %v1119 = vpack.c.bf16 %v1098, %v1097
      %v1120 = vpack.c.bf16 %v1100, %v1099
      %v1121 = vpack.c.bf16 %v1102, %v1101
      %v1122 = vpack.c.bf16 %v1104, %v1103
      %v1123 = vpack.c.bf16 %v1106, %v1105
      %v1124 = vpack.c.bf16 %v1108, %v1107
      %v1141 = vunpack.c.l.b16 %v1109
      %v1142 = vunpack.c.h.b16 %v1109
      %v1143 = vunpack.c.l.b16 %v1110
      %v1144 = vunpack.c.h.b16 %v1110
      %v1145 = vunpack.c.l.b16 %v1111
      %v1146 = vunpack.c.h.b16 %v1111
      %v1147 = vunpack.c.l.b16 %v1112
      %v1148 = vunpack.c.h.b16 %v1112
      %v1149 = vunpack.c.l.b16 %v1113
      %v1150 = vunpack.c.h.b16 %v1113
      %v1151 = vunpack.c.l.b16 %v1114
      %v1152 = vunpack.c.h.b16 %v1114
      %v1153 = vunpack.c.l.b16 %v1115
      %v1154 = vunpack.c.h.b16 %v1115
      %v1155 = vunpack.c.l.b16 %v1116
      %v1156 = vunpack.c.h.b16 %v1116
      %v1157 = vunpack.c.l.b16 %v1117
      %v1158 = vunpack.c.h.b16 %v1117
      %v1159 = vunpack.c.l.b16 %v1118
      %v1160 = vunpack.c.h.b16 %v1118
      %v1161 = vunpack.c.l.b16 %v1119
      %v1162 = vunpack.c.h.b16 %v1119
      %v1163 = vunpack.c.l.b16 %v1120
      %v1164 = vunpack.c.h.b16 %v1120
      %v1165 = vunpack.c.l.b16 %v1121
      %v1166 = vunpack.c.h.b16 %v1121
      %v1167 = vunpack.c.l.b16 %v1122
      %v1168 = vunpack.c.h.b16 %v1122
      %v1169 = vunpack.c.l.b16 %v1123
      %v1170 = vunpack.c.h.b16 %v1123
      %v1171 = vunpack.c.l.b16 %v1124
      %v1172 = vunpack.c.h.b16 %v1124
      %v1173 = vpack.c.b16 %v1141, %v1141
      %v1174 = vpack.c.b16 %v1142, %v1142
      %v1175 = vpack.c.b16 %v1143, %v1143
      %v1176 = vpack.c.b16 %v1144, %v1144
      %v1177 = vpack.c.b16 %v1145, %v1145
      %v1178 = vpack.c.b16 %v1146, %v1146
      %v1179 = vpack.c.b16 %v1147, %v1147
      %v1180 = vpack.c.b16 %v1148, %v1148
      %v1181 = vpack.c.b16 %v1149, %v1149
      %v1182 = vpack.c.b16 %v1150, %v1150
      %v1183 = vpack.c.b16 %v1151, %v1151
      %v1184 = vpack.c.b16 %v1152, %v1152
      %v1185 = vpack.c.b16 %v1153, %v1153
      %v1186 = vpack.c.b16 %v1154, %v1154
      %v1187 = vpack.c.b16 %v1155, %v1155
      %v1188 = vpack.c.b16 %v1156, %v1156
      %v1189 = vpack.c.b16 %v1157, %v1157
      %v1190 = vpack.c.b16 %v1158, %v1158
      %v1191 = vpack.c.b16 %v1159, %v1159
      %v1192 = vpack.c.b16 %v1160, %v1160
      %v1193 = vpack.c.b16 %v1161, %v1161
      %v1194 = vpack.c.b16 %v1162, %v1162
      %v1195 = vpack.c.b16 %v1163, %v1163
      %v1196 = vpack.c.b16 %v1164, %v1164
      %v1197 = vpack.c.b16 %v1165, %v1165
      %v1198 = vpack.c.b16 %v1166, %v1166
      %v1199 = vpack.c.b16 %v1167, %v1167
      %v1200 = vpack.c.b16 %v1168, %v1168
      %v1201 = vpack.c.b16 %v1169, %v1169
      %v1202 = vpack.c.b16 %v1170, %v1170
      %v1203 = vpack.c.b16 %v1171, %v1171
      %v1204 = vpack.c.b16 %v1172, %v1172
      %1237 = vst [vmem:[%s492] sm:$0xf] %v1173
      %1238 = vst [vmem:[%s492 + $0x4] sm:$0xf] %v1174
      %1239 = vst [vmem:[%s492 + $0x8] sm:$0xf] %v1175
      %1240 = vst [vmem:[%s492 + $0xc] sm:$0xf] %v1176
      %1241 = vst [vmem:[%s492 + $0x10] sm:$0xf] %v1177
      %1242 = vst [vmem:[%s492 + $0x14] sm:$0xf] %v1178
      %1243 = vst [vmem:[%s492 + $0x18] sm:$0xf] %v1179
      %1244 = vst [vmem:[%s492 + $0x1c] sm:$0xf] %v1180
      %1245 = vst [vmem:[%s492 + $0x20] sm:$0xf] %v1181
      %1246 = vst [vmem:[%s492 + $0x24] sm:$0xf] %v1182
      %1247 = vst [vmem:[%s492 + $0x28] sm:$0xf] %v1183
      %1248 = vst [vmem:[%s492 + $0x2c] sm:$0xf] %v1184
      %1249 = vst [vmem:[%s492 + $0x30] sm:$0xf] %v1185
      %1250 = vst [vmem:[%s492 + $0x34] sm:$0xf] %v1186
      %1251 = vst [vmem:[%s492 + $0x38] sm:$0xf] %v1187
      %1252 = vst [vmem:[%s492 + $0x3c] sm:$0xf] %v1188
      %1253 = vst [vmem:[%s492 + $0x40] sm:$0xf] %v1189
      %1254 = vst [vmem:[%s492 + $0x44] sm:$0xf] %v1190
      %1255 = vst [vmem:[%s492 + $0x48] sm:$0xf] %v1191
      %1256 = vst [vmem:[%s492 + $0x4c] sm:$0xf] %v1192
      %1257 = vst [vmem:[%s492 + $0x50] sm:$0xf] %v1193
      %1258 = vst [vmem:[%s492 + $0x54] sm:$0xf] %v1194
      %1259 = vst [vmem:[%s492 + $0x58] sm:$0xf] %v1195
      %1260 = vst [vmem:[%s492 + $0x5c] sm:$0xf] %v1196
      %1261 = vst [vmem:[%s492 + $0x60] sm:$0xf] %v1197
      %1262 = vst [vmem:[%s492 + $0x64] sm:$0xf] %v1198
      %1263 = vst [vmem:[%s492 + $0x68] sm:$0xf] %v1199
      %1264 = vst [vmem:[%s492 + $0x6c] sm:$0xf] %v1200
      %1265 = vst [vmem:[%s492 + $0x70] sm:$0xf] %v1201
      %1266 = vst [vmem:[%s492 + $0x74] sm:$0xf] %v1202
      %1267 = vst [vmem:[%s492 + $0x78] sm:$0xf] %v1203
      %1268 = vst [vmem:[%s492 + $0x7c] sm:$0xf] %v1204
      %v1269 = vld [vmem:[%s4] sm:$0x3]
      %v1270 = vld [vmem:[%s8] sm:$0x1]
      %v1272 = vlaneseq
      %v1273 = vshrl.u32 %v1272, 7
      %v1274 = vsub.s32 0, %v1273
      %v1275 = vrot.slane %v1270, %v1274
      %v1278 = vsel %vm676, %v1269, 0
      %1280 = vmatprep.subr.bf16.mxu0 0
      %1281 = vmatpush1.bf16.msra.mxu0 %v1278
      %1282 = vmatprep.subr.bf16.mxu0 0
      %1283 = vmatpush1.bf16.msra.mxu0 0
      %1284 = vmatprep.subr.bf16.mxu0 0
      %1285 = vmatpush1.bf16.msra.mxu0 0
      %1286 = vmatprep.subr.bf16.mxu0 0
      %1287 = vmatpush1.bf16.msra.mxu0 0
      %1288 = vmatprep.subr.bf16.mxu0 0
      %1289 = vmatpush1.bf16.msra.mxu0 0
      %1290 = vmatprep.subr.bf16.mxu0 0
      %1291 = vmatpush1.bf16.msra.mxu0 0
      %1292 = vmatprep.subr.bf16.mxu0 0
      %1293 = vmatpush1.bf16.msra.mxu0 0
      %1294 = vmatprep.subr.bf16.mxu0 0
      %1295 = vmatpush1.bf16.msra.mxu0 0
      %1296 = vmatprep.subr.bf16.mxu0 0
      %1297 = vmatpush1.bf16.msra.mxu0 0
      %1298 = vmatprep.subr.bf16.mxu0 0
      %1299 = vmatpush1.bf16.msra.mxu0 0
      %1300 = vmatprep.subr.bf16.mxu0 0
      %1301 = vmatpush1.bf16.msra.mxu0 0
      %1302 = vmatprep.subr.bf16.mxu0 0
      %1303 = vmatpush1.bf16.msra.mxu0 0
      %1304 = vmatprep.subr.bf16.mxu0 0
      %1305 = vmatpush1.bf16.msra.mxu0 0
      %1306 = vmatprep.subr.bf16.mxu0 0
      %1307 = vmatpush1.bf16.msra.mxu0 0
      %1308 = vmatprep.subr.bf16.mxu0 0
      %1309 = vmatpush1.bf16.msra.mxu0 0
      %1310 = vmatprep.subr.bf16.mxu0 0
      %1311 = vmatpush1.bf16.msra.mxu0 0
      %1312 = vmatprep.mubr.bf16.mxu0 0
      %1313 = vmatmul.mubr.bf16.gmra.mrb[0].mxu0 %v629
      %v1314 = vpop.f32.mrb[0].mxu0
      %v1315 = vadd.f32 %v1275, %v1314
      %v1316 = vpop.f32.mrb[0].mxu0
      %v1317 = vpop.f32.mrb[0].mxu0
      %v1318 = vadd.f32 %v1275, %v1317
      %v1319 = vpop.f32.mrb[0].mxu0
      %1320 = vmatprep.mubr.bf16.mxu0 0
      %1321 = vmatmul.mubr.bf16.gmra.mrb[0].mxu0 %v632
      %v1322 = vpop.f32.mrb[0].mxu0
      %v1323 = vadd.f32 %v1275, %v1322
      %v1324 = vpop.f32.mrb[0].mxu0
      %v1325 = vpop.f32.mrb[0].mxu0
      %v1326 = vadd.f32 %v1275, %v1325
      %v1327 = vpop.f32.mrb[0].mxu0
      %1328 = vmatprep.mubr.bf16.mxu0 0
      %1329 = vmatmul.mubr.bf16.gmra.mrb[0].mxu0 %v635
      %v1330 = vpop.f32.mrb[0].mxu0
      %v1331 = vadd.f32 %v1275, %v1330
      %v1332 = vpop.f32.mrb[0].mxu0
      %v1333 = vpop.f32.mrb[0].mxu0
      %v1334 = vadd.f32 %v1275, %v1333
      %v1335 = vpop.f32.mrb[0].mxu0
      %1336 = vmatprep.mubr.bf16.mxu0 0
      %1337 = vmatmul.mubr.bf16.gmra.mrb[0].mxu0 %v638
      %v1338 = vpop.f32.mrb[0].mxu0
      %v1339 = vadd.f32 %v1275, %v1338
      %v1340 = vpop.f32.mrb[0].mxu0
      %v1341 = vpop.f32.mrb[0].mxu0
      %v1342 = vadd.f32 %v1275, %v1341
      %v1343 = vpop.f32.mrb[0].mxu0
      %1344 = vmatprep.mubr.bf16.mxu0 0
      %1345 = vmatmul.mubr.bf16.gmra.mrb[0].mxu0 %v641
      %v1346 = vpop.f32.mrb[0].mxu0
      %v1347 = vadd.f32 %v1275, %v1346
      %v1348 = vpop.f32.mrb[0].mxu0
      %v1349 = vpop.f32.mrb[0].mxu0
      %v1350 = vadd.f32 %v1275, %v1349
      %v1351 = vpop.f32.mrb[0].mxu0
      %1352 = vmatprep.mubr.bf16.mxu0 0
      %1353 = vmatmul.mubr.bf16.gmra.mrb[0].mxu0 %v644
      %v1354 = vpop.f32.mrb[0].mxu0
      %v1355 = vadd.f32 %v1275, %v1354
      %v1356 = vpop.f32.mrb[0].mxu0
      %v1357 = vpop.f32.mrb[0].mxu0
      %v1358 = vadd.f32 %v1275, %v1357
      %v1359 = vpop.f32.mrb[0].mxu0
      %1360 = vmatprep.mubr.bf16.mxu0 0
      %1361 = vmatmul.mubr.bf16.gmra.mrb[0].mxu0 %v647
      %v1362 = vpop.f32.mrb[0].mxu0
      %v1363 = vadd.f32 %v1275, %v1362
      %v1364 = vpop.f32.mrb[0].mxu0
      %v1365 = vpop.f32.mrb[0].mxu0
      %v1366 = vadd.f32 %v1275, %v1365
      %v1367 = vpop.f32.mrb[0].mxu0
      %1368 = vmatprep.mubr.bf16.mxu0 0
      %1369 = vmatmul.mubr.bf16.gmra.mrb[0].mxu0 %v650
      %v1370 = vpop.f32.mrb[0].mxu0
      %v1371 = vadd.f32 %v1275, %v1370
      %v1372 = vpop.f32.mrb[0].mxu0
      %v1373 = vpop.f32.mrb[0].mxu0
      %v1374 = vadd.f32 %v1275, %v1373
      %v1375 = vpop.f32.mrb[0].mxu0
      %1376 = vmatprep.mubr.bf16.mxu0 0
      %1377 = vmatmul.mubr.bf16.gmra.mrb[0].mxu0 %v653
      %v1378 = vpop.f32.mrb[0].mxu0
      %v1379 = vadd.f32 %v1275, %v1378
      %v1380 = vpop.f32.mrb[0].mxu0
      %v1381 = vpop.f32.mrb[0].mxu0
      %v1382 = vadd.f32 %v1275, %v1381
      %v1383 = vpop.f32.mrb[0].mxu0
      %1384 = vmatprep.mubr.bf16.mxu0 0
      %1385 = vmatmul.mubr.bf16.gmra.mrb[0].mxu0 %v656
      %v1386 = vpop.f32.mrb[0].mxu0
      %v1387 = vadd.f32 %v1275, %v1386
      %v1388 = vpop.f32.mrb[0].mxu0
      %v1389 = vpop.f32.mrb[0].mxu0
      %v1390 = vadd.f32 %v1275, %v1389
      %v1391 = vpop.f32.mrb[0].mxu0
      %1392 = vmatprep.mubr.bf16.mxu0 0
      %1393 = vmatmul.mubr.bf16.gmra.mrb[0].mxu0 %v659
      %v1394 = vpop.f32.mrb[0].mxu0
      %v1395 = vadd.f32 %v1275, %v1394
      %v1396 = vpop.f32.mrb[0].mxu0
      %v1397 = vpop.f32.mrb[0].mxu0
      %v1398 = vadd.f32 %v1275, %v1397
      %v1399 = vpop.f32.mrb[0].mxu0
      %1400 = vmatprep.mubr.bf16.mxu0 0
      %1401 = vmatmul.mubr.bf16.gmra.mrb[0].mxu0 %v662
      %v1402 = vpop.f32.mrb[0].mxu0
      %v1403 = vadd.f32 %v1275, %v1402
      %v1404 = vpop.f32.mrb[0].mxu0
      %v1405 = vpop.f32.mrb[0].mxu0
      %v1406 = vadd.f32 %v1275, %v1405
      %v1407 = vpop.f32.mrb[0].mxu0
      %1408 = vmatprep.mubr.bf16.mxu0 0
      %1409 = vmatmul.mubr.bf16.gmra.mrb[0].mxu0 %v665
      %v1410 = vpop.f32.mrb[0].mxu0
      %v1411 = vadd.f32 %v1275, %v1410
      %v1412 = vpop.f32.mrb[0].mxu0
      %v1413 = vpop.f32.mrb[0].mxu0
      %v1414 = vadd.f32 %v1275, %v1413
      %v1415 = vpop.f32.mrb[0].mxu0
      %1416 = vmatprep.mubr.bf16.mxu0 0
      %1417 = vmatmul.mubr.bf16.gmra.mrb[0].mxu0 %v668
      %v1418 = vpop.f32.mrb[0].mxu0
      %v1419 = vadd.f32 %v1275, %v1418
      %v1420 = vpop.f32.mrb[0].mxu0
      %v1421 = vpop.f32.mrb[0].mxu0
      %v1422 = vadd.f32 %v1275, %v1421
      %v1423 = vpop.f32.mrb[0].mxu0
      %1424 = vmatprep.mubr.bf16.mxu0 0
      %1425 = vmatmul.mubr.bf16.gmra.mrb[0].mxu0 %v671
      %v1426 = vpop.f32.mrb[0].mxu0
      %v1427 = vadd.f32 %v1275, %v1426
      %v1428 = vpop.f32.mrb[0].mxu0
      %v1429 = vpop.f32.mrb[0].mxu0
      %v1430 = vadd.f32 %v1275, %v1429
      %v1431 = vpop.f32.mrb[0].mxu0
      %1432 = vmatprep.mubr.bf16.mxu0 0
      %1433 = vmatmul.mubr.bf16.gmra.mrb[0].mxu0 %v674
      %v1434 = vpop.f32.mrb[0].mxu0
      %v1435 = vadd.f32 %v1275, %v1434
      %v1436 = vpop.f32.mrb[0].mxu0
      %v1437 = vpop.f32.mrb[0].mxu0
      %v1438 = vadd.f32 %v1275, %v1437
      %v1439 = vpop.f32.mrb[0].mxu0
      %1440 = vdwg.mxu0
      %v1441 = vmax.f32 %v1315, 0.0
      %v1442 = vmax.f32 %v1318, 0.0
      %v1443 = vmax.f32 %v1323, 0.0
      %v1444 = vmax.f32 %v1326, 0.0
      %v1445 = vmax.f32 %v1331, 0.0
      %v1446 = vmax.f32 %v1334, 0.0
      %v1447 = vmax.f32 %v1339, 0.0
      %v1448 = vmax.f32 %v1342, 0.0
      %v1449 = vmax.f32 %v1347, 0.0
      %v1450 = vmax.f32 %v1350, 0.0
      %v1451 = vmax.f32 %v1355, 0.0
      %v1452 = vmax.f32 %v1358, 0.0
      %v1453 = vmax.f32 %v1363, 0.0
      %v1454 = vmax.f32 %v1366, 0.0
      %v1455 = vmax.f32 %v1371, 0.0
      %v1456 = vmax.f32 %v1374, 0.0
      %v1457 = vmax.f32 %v1379, 0.0
      %v1458 = vmax.f32 %v1382, 0.0
      %v1459 = vmax.f32 %v1387, 0.0
      %v1460 = vmax.f32 %v1390, 0.0
      %v1461 = vmax.f32 %v1395, 0.0
      %v1462 = vmax.f32 %v1398, 0.0
      %v1463 = vmax.f32 %v1403, 0.0
      %v1464 = vmax.f32 %v1406, 0.0
      %v1465 = vmax.f32 %v1411, 0.0
      %v1466 = vmax.f32 %v1414, 0.0
      %v1467 = vmax.f32 %v1419, 0.0
      %v1468 = vmax.f32 %v1422, 0.0
      %v1469 = vmax.f32 %v1427, 0.0
      %v1470 = vmax.f32 %v1430, 0.0
      %v1471 = vmax.f32 %v1435, 0.0
      %v1472 = vmax.f32 %v1438, 0.0
      %v1473 = vpack.c.bf16 %v1442, %v1441
      %v1474 = vpack.c.bf16 %v1444, %v1443
      %v1475 = vpack.c.bf16 %v1446, %v1445
      %v1476 = vpack.c.bf16 %v1448, %v1447
      %v1477 = vpack.c.bf16 %v1450, %v1449
      %v1478 = vpack.c.bf16 %v1452, %v1451
      %v1479 = vpack.c.bf16 %v1454, %v1453
      %v1480 = vpack.c.bf16 %v1456, %v1455
      %v1481 = vpack.c.bf16 %v1458, %v1457
      %v1482 = vpack.c.bf16 %v1460, %v1459
      %v1483 = vpack.c.bf16 %v1462, %v1461
      %v1484 = vpack.c.bf16 %v1464, %v1463
      %v1485 = vpack.c.bf16 %v1466, %v1465
      %v1486 = vpack.c.bf16 %v1468, %v1467
      %v1487 = vpack.c.bf16 %v1470, %v1469
      %v1488 = vpack.c.bf16 %v1472, %v1471
      %v1505 = vunpack.c.l.b16 %v1473
      %v1506 = vunpack.c.h.b16 %v1473
      %v1507 = vunpack.c.l.b16 %v1474
      %v1508 = vunpack.c.h.b16 %v1474
      %v1509 = vunpack.c.l.b16 %v1475
      %v1510 = vunpack.c.h.b16 %v1475
      %v1511 = vunpack.c.l.b16 %v1476
      %v1512 = vunpack.c.h.b16 %v1476
      %v1513 = vunpack.c.l.b16 %v1477
      %v1514 = vunpack.c.h.b16 %v1477
      %v1515 = vunpack.c.l.b16 %v1478
      %v1516 = vunpack.c.h.b16 %v1478
      %v1517 = vunpack.c.l.b16 %v1479
      %v1518 = vunpack.c.h.b16 %v1479
      %v1519 = vunpack.c.l.b16 %v1480
      %v1520 = vunpack.c.h.b16 %v1480
      %v1521 = vunpack.c.l.b16 %v1481
      %v1522 = vunpack.c.h.b16 %v1481
      %v1523 = vunpack.c.l.b16 %v1482
      %v1524 = vunpack.c.h.b16 %v1482
      %v1525 = vunpack.c.l.b16 %v1483
      %v1526 = vunpack.c.h.b16 %v1483
      %v1527 = vunpack.c.l.b16 %v1484
      %v1528 = vunpack.c.h.b16 %v1484
      %v1529 = vunpack.c.l.b16 %v1485
      %v1530 = vunpack.c.h.b16 %v1485
      %v1531 = vunpack.c.l.b16 %v1486
      %v1532 = vunpack.c.h.b16 %v1486
      %v1533 = vunpack.c.l.b16 %v1487
      %v1534 = vunpack.c.h.b16 %v1487
      %v1535 = vunpack.c.l.b16 %v1488
      %v1536 = vunpack.c.h.b16 %v1488
      %v1537 = vpack.c.b16 %v1505, %v1505
      %v1538 = vpack.c.b16 %v1506, %v1506
      %v1539 = vpack.c.b16 %v1507, %v1507
      %v1540 = vpack.c.b16 %v1508, %v1508
      %v1541 = vpack.c.b16 %v1509, %v1509
      %v1542 = vpack.c.b16 %v1510, %v1510
      %v1543 = vpack.c.b16 %v1511, %v1511
      %v1544 = vpack.c.b16 %v1512, %v1512
      %v1545 = vpack.c.b16 %v1513, %v1513
      %v1546 = vpack.c.b16 %v1514, %v1514
      %v1547 = vpack.c.b16 %v1515, %v1515
      %v1548 = vpack.c.b16 %v1516, %v1516
      %v1549 = vpack.c.b16 %v1517, %v1517
      %v1550 = vpack.c.b16 %v1518, %v1518
      %v1551 = vpack.c.b16 %v1519, %v1519
      %v1552 = vpack.c.b16 %v1520, %v1520
      %v1553 = vpack.c.b16 %v1521, %v1521
      %v1554 = vpack.c.b16 %v1522, %v1522
      %v1555 = vpack.c.b16 %v1523, %v1523
      %v1556 = vpack.c.b16 %v1524, %v1524
      %v1557 = vpack.c.b16 %v1525, %v1525
      %v1558 = vpack.c.b16 %v1526, %v1526
      %v1559 = vpack.c.b16 %v1527, %v1527
      %v1560 = vpack.c.b16 %v1528, %v1528
      %v1561 = vpack.c.b16 %v1529, %v1529
      %v1562 = vpack.c.b16 %v1530, %v1530
      %v1563 = vpack.c.b16 %v1531, %v1531
      %v1564 = vpack.c.b16 %v1532, %v1532
      %v1565 = vpack.c.b16 %v1533, %v1533
      %v1566 = vpack.c.b16 %v1534, %v1534
      %v1567 = vpack.c.b16 %v1535, %v1535
      %v1568 = vpack.c.b16 %v1536, %v1536
      %1601 = vst [vmem:[%s498] sm:$0xf] %v1537
      %1602 = vst [vmem:[%s498 + $0x4] sm:$0xf] %v1538
      %1603 = vst [vmem:[%s498 + $0x8] sm:$0xf] %v1539
      %1604 = vst [vmem:[%s498 + $0xc] sm:$0xf] %v1540
      %1605 = vst [vmem:[%s498 + $0x10] sm:$0xf] %v1541
      %1606 = vst [vmem:[%s498 + $0x14] sm:$0xf] %v1542
      %1607 = vst [vmem:[%s498 + $0x18] sm:$0xf] %v1543
      %1608 = vst [vmem:[%s498 + $0x1c] sm:$0xf] %v1544
      %1609 = vst [vmem:[%s498 + $0x20] sm:$0xf] %v1545
      %1610 = vst [vmem:[%s498 + $0x24] sm:$0xf] %v1546
      %1611 = vst [vmem:[%s498 + $0x28] sm:$0xf] %v1547
      %1612 = vst [vmem:[%s498 + $0x2c] sm:$0xf] %v1548
      %1613 = vst [vmem:[%s498 + $0x30] sm:$0xf] %v1549
      %1614 = vst [vmem:[%s498 + $0x34] sm:$0xf] %v1550
      %1615 = vst [vmem:[%s498 + $0x38] sm:$0xf] %v1551
      %1616 = vst [vmem:[%s498 + $0x3c] sm:$0xf] %v1552
      %1617 = vst [vmem:[%s498 + $0x40] sm:$0xf] %v1553
      %1618 = vst [vmem:[%s498 + $0x44] sm:$0xf] %v1554
      %1619 = vst [vmem:[%s498 + $0x48] sm:$0xf] %v1555
      %1620 = vst [vmem:[%s498 + $0x4c] sm:$0xf] %v1556
      %1621 = vst [vmem:[%s498 + $0x50] sm:$0xf] %v1557
      %1622 = vst [vmem:[%s498 + $0x54] sm:$0xf] %v1558
      %1623 = vst [vmem:[%s498 + $0x58] sm:$0xf] %v1559
      %1624 = vst [vmem:[%s498 + $0x5c] sm:$0xf] %v1560
      %1625 = vst [vmem:[%s498 + $0x60] sm:$0xf] %v1561
      %1626 = vst [vmem:[%s498 + $0x64] sm:$0xf] %v1562
      %1627 = vst [vmem:[%s498 + $0x68] sm:$0xf] %v1563
      %1628 = vst [vmem:[%s498 + $0x6c] sm:$0xf] %v1564
      %1629 = vst [vmem:[%s498 + $0x70] sm:$0xf] %v1565
      %1630 = vst [vmem:[%s498 + $0x74] sm:$0xf] %v1566
      %1631 = vst [vmem:[%s498 + $0x78] sm:$0xf] %v1567
      %1632 = vst [vmem:[%s498 + $0x7c] sm:$0xf] %v1568
      %v1633 = vld [vmem:[%s480] sm:$0xf]
      %v1634 = vld [vmem:[%s480 + $0x4] sm:$0xf]
      %v1635 = vld [vmem:[%s480 + $0x8] sm:$0xf]
      %v1636 = vld [vmem:[%s480 + $0xc] sm:$0xf]
      %v1637 = vld [vmem:[%s480 + $0x10] sm:$0xf]
      %v1638 = vld [vmem:[%s480 + $0x14] sm:$0xf]
      %v1639 = vld [vmem:[%s480 + $0x18] sm:$0xf]
      %v1640 = vld [vmem:[%s480 + $0x1c] sm:$0xf]
      %v1641 = vld [vmem:[%s480 + $0x20] sm:$0xf]
      %v1642 = vld [vmem:[%s480 + $0x24] sm:$0xf]
      %v1643 = vld [vmem:[%s480 + $0x28] sm:$0xf]
      %v1644 = vld [vmem:[%s480 + $0x2c] sm:$0xf]
      %v1645 = vld [vmem:[%s480 + $0x30] sm:$0xf]
      %v1646 = vld [vmem:[%s480 + $0x34] sm:$0xf]
      %v1647 = vld [vmem:[%s480 + $0x38] sm:$0xf]
      %v1648 = vld [vmem:[%s480 + $0x3c] sm:$0xf]
      %v1649 = vld [vmem:[%s480 + $0x40] sm:$0xf]
      %v1650 = vld [vmem:[%s480 + $0x44] sm:$0xf]
      %v1651 = vld [vmem:[%s480 + $0x48] sm:$0xf]
      %v1652 = vld [vmem:[%s480 + $0x4c] sm:$0xf]
      %v1653 = vld [vmem:[%s480 + $0x50] sm:$0xf]
      %v1654 = vld [vmem:[%s480 + $0x54] sm:$0xf]
      %v1655 = vld [vmem:[%s480 + $0x58] sm:$0xf]
      %v1656 = vld [vmem:[%s480 + $0x5c] sm:$0xf]
      %v1657 = vld [vmem:[%s480 + $0x60] sm:$0xf]
      %v1658 = vld [vmem:[%s480 + $0x64] sm:$0xf]
      %v1659 = vld [vmem:[%s480 + $0x68] sm:$0xf]
      %v1660 = vld [vmem:[%s480 + $0x6c] sm:$0xf]
      %v1661 = vld [vmem:[%s480 + $0x70] sm:$0xf]
      %v1662 = vld [vmem:[%s480 + $0x74] sm:$0xf]
      %v1663 = vld [vmem:[%s480 + $0x78] sm:$0xf]
      %v1664 = vld [vmem:[%s480 + $0x7c] sm:$0xf]
      %v1665 = vld [vmem:[%s5] sm:$0x3]
      %v1666 = vld [vmem:[%s9] sm:$0x1]
      %v1668 = vlaneseq
      %v1669 = vshrl.u32 %v1668, 7
      %v1670 = vsub.s32 0, %v1669
      %v1671 = vrot.slane %v1666, %v1670
      %v1705 = vunpack.c.l.b16 %v1633
      %v1706 = vunpack.c.l.b16 %v1634
      %v1707 = vunpack.c.l.b16 %v1635
      %v1708 = vunpack.c.l.b16 %v1636
      %v1709 = vunpack.c.l.b16 %v1637
      %v1710 = vunpack.c.l.b16 %v1638
      %v1711 = vunpack.c.l.b16 %v1639
      %v1712 = vunpack.c.l.b16 %v1640
      %v1713 = vunpack.c.l.b16 %v1641
      %v1714 = vunpack.c.l.b16 %v1642
      %v1715 = vunpack.c.l.b16 %v1643
      %v1716 = vunpack.c.l.b16 %v1644
      %v1717 = vunpack.c.l.b16 %v1645
      %v1718 = vunpack.c.l.b16 %v1646
      %v1719 = vunpack.c.l.b16 %v1647
      %v1720 = vunpack.c.l.b16 %v1648
      %v1721 = vunpack.c.l.b16 %v1649
      %v1722 = vunpack.c.l.b16 %v1650
      %v1723 = vunpack.c.l.b16 %v1651
      %v1724 = vunpack.c.l.b16 %v1652
      %v1725 = vunpack.c.l.b16 %v1653
      %v1726 = vunpack.c.l.b16 %v1654
      %v1727 = vunpack.c.l.b16 %v1655
      %v1728 = vunpack.c.l.b16 %v1656
      %v1729 = vunpack.c.l.b16 %v1657
      %v1730 = vunpack.c.l.b16 %v1658
      %v1731 = vunpack.c.l.b16 %v1659
      %v1732 = vunpack.c.l.b16 %v1660
      %v1733 = vunpack.c.l.b16 %v1661
      %v1734 = vunpack.c.l.b16 %v1662
      %v1735 = vunpack.c.l.b16 %v1663
      %v1736 = vunpack.c.l.b16 %v1664
      %v1737 = vpack.c.b16 %v1706, %v1705
      %v1738 = vpack.c.b16 %v1708, %v1707
      %v1739 = vpack.c.b16 %v1710, %v1709
      %v1740 = vpack.c.b16 %v1712, %v1711
      %v1741 = vpack.c.b16 %v1714, %v1713
      %v1742 = vpack.c.b16 %v1716, %v1715
      %v1743 = vpack.c.b16 %v1718, %v1717
      %v1744 = vpack.c.b16 %v1720, %v1719
      %v1745 = vpack.c.b16 %v1722, %v1721
      %v1746 = vpack.c.b16 %v1724, %v1723
      %v1747 = vpack.c.b16 %v1726, %v1725
      %v1748 = vpack.c.b16 %v1728, %v1727
      %v1749 = vpack.c.b16 %v1730, %v1729
      %v1750 = vpack.c.b16 %v1732, %v1731
      %v1751 = vpack.c.b16 %v1734, %v1733
      %v1752 = vpack.c.b16 %v1736, %v1735
      %v1754 = vsel %vm627, %v1737, 0
      %v1757 = vsel %vm627, %v1738, 0
      %v1760 = vsel %vm627, %v1739, 0
      %v1763 = vsel %vm627, %v1740, 0
      %v1766 = vsel %vm627, %v1741, 0
      %v1769 = vsel %vm627, %v1742, 0
      %v1772 = vsel %vm627, %v1743, 0
      %v1775 = vsel %vm627, %v1744, 0
      %v1778 = vsel %vm627, %v1745, 0
      %v1781 = vsel %vm627, %v1746, 0
      %v1784 = vsel %vm627, %v1747, 0
      %v1787 = vsel %vm627, %v1748, 0
      %v1790 = vsel %vm627, %v1749, 0
      %v1793 = vsel %vm627, %v1750, 0
      %v1796 = vsel %vm627, %v1751, 0
      %v1799 = vsel %vm627, %v1752, 0
      %v1802 = vsel %vm676, %v1665, 0
      %1804 = vmatprep.subr.bf16.mxu0 0
      %1805 = vmatpush1.bf16.msra.mxu0 %v1802
      %1806 = vmatprep.subr.bf16.mxu0 0
      %1807 = vmatpush1.bf16.msra.mxu0 0
      %1808 = vmatprep.subr.bf16.mxu0 0
      %1809 = vmatpush1.bf16.msra.mxu0 0
      %1810 = vmatprep.subr.bf16.mxu0 0
      %1811 = vmatpush1.bf16.msra.mxu0 0
      %1812 = vmatprep.subr.bf16.mxu0 0
      %1813 = vmatpush1.bf16.msra.mxu0 0
      %1814 = vmatprep.subr.bf16.mxu0 0
      %1815 = vmatpush1.bf16.msra.mxu0 0
      %1816 = vmatprep.subr.bf16.mxu0 0
      %1817 = vmatpush1.bf16.msra.mxu0 0
      %1818 = vmatprep.subr.bf16.mxu0 0
      %1819 = vmatpush1.bf16.msra.mxu0 0
      %1820 = vmatprep.subr.bf16.mxu0 0
      %1821 = vmatpush1.bf16.msra.mxu0 0
      %1822 = vmatprep.subr.bf16.mxu0 0
      %1823 = vmatpush1.bf16.msra.mxu0 0
      %1824 = vmatprep.subr.bf16.mxu0 0
      %1825 = vmatpush1.bf16.msra.mxu0 0
      %1826 = vmatprep.subr.bf16.mxu0 0
      %1827 = vmatpush1.bf16.msra.mxu0 0
      %1828 = vmatprep.subr.bf16.mxu0 0
      %1829 = vmatpush1.bf16.msra.mxu0 0
      %1830 = vmatprep.subr.bf16.mxu0 0
      %1831 = vmatpush1.bf16.msra.mxu0 0
      %1832 = vmatprep.subr.bf16.mxu0 0
      %1833 = vmatpush1.bf16.msra.mxu0 0
      %1834 = vmatprep.subr.bf16.mxu0 0
      %1835 = vmatpush1.bf16.msra.mxu0 0
      %1836 = vmatprep.mubr.bf16.mxu0 0
      %1837 = vmatmul.mubr.bf16.gmra.mrb[0].mxu0 %v1754
      %v1838 = vpop.f32.mrb[0].mxu0
      %v1839 = vadd.f32 %v1671, %v1838
      %v1840 = vpop.f32.mrb[0].mxu0
      %v1841 = vpop.f32.mrb[0].mxu0
      %v1842 = vadd.f32 %v1671, %v1841
      %v1843 = vpop.f32.mrb[0].mxu0
      %1844 = vmatprep.mubr.bf16.mxu0 0
      %1845 = vmatmul.mubr.bf16.gmra.mrb[0].mxu0 %v1757
      %v1846 = vpop.f32.mrb[0].mxu0
      %v1847 = vadd.f32 %v1671, %v1846
      %v1848 = vpop.f32.mrb[0].mxu0
      %v1849 = vpop.f32.mrb[0].mxu0
      %v1850 = vadd.f32 %v1671, %v1849
      %v1851 = vpop.f32.mrb[0].mxu0
      %1852 = vmatprep.mubr.bf16.mxu0 0
      %1853 = vmatmul.mubr.bf16.gmra.mrb[0].mxu0 %v1760
      %v1854 = vpop.f32.mrb[0].mxu0
      %v1855 = vadd.f32 %v1671, %v1854
      %v1856 = vpop.f32.mrb[0].mxu0
      %v1857 = vpop.f32.mrb[0].mxu0
      %v1858 = vadd.f32 %v1671, %v1857
      %v1859 = vpop.f32.mrb[0].mxu0
      %1860 = vmatprep.mubr.bf16.mxu0 0
      %1861 = vmatmul.mubr.bf16.gmra.mrb[0].mxu0 %v1763
      %v1862 = vpop.f32.mrb[0].mxu0
      %v1863 = vadd.f32 %v1671, %v1862
      %v1864 = vpop.f32.mrb[0].mxu0
      %v1865 = vpop.f32.mrb[0].mxu0
      %v1866 = vadd.f32 %v1671, %v1865
      %v1867 = vpop.f32.mrb[0].mxu0
      %1868 = vmatprep.mubr.bf16.mxu0 0
      %1869 = vmatmul.mubr.bf16.gmra.mrb[0].mxu0 %v1766
      %v1870 = vpop.f32.mrb[0].mxu0
      %v1871 = vadd.f32 %v1671, %v1870
      %v1872 = vpop.f32.mrb[0].mxu0
      %v1873 = vpop.f32.mrb[0].mxu0
      %v1874 = vadd.f32 %v1671, %v1873
      %v1875 = vpop.f32.mrb[0].mxu0
      %1876 = vmatprep.mubr.bf16.mxu0 0
      %1877 = vmatmul.mubr.bf16.gmra.mrb[0].mxu0 %v1769
      %v1878 = vpop.f32.mrb[0].mxu0
      %v1879 = vadd.f32 %v1671, %v1878
      %v1880 = vpop.f32.mrb[0].mxu0
      %v1881 = vpop.f32.mrb[0].mxu0
      %v1882 = vadd.f32 %v1671, %v1881
      %v1883 = vpop.f32.mrb[0].mxu0
      %1884 = vmatprep.mubr.bf16.mxu0 0
      %1885 = vmatmul.mubr.bf16.gmra.mrb[0].mxu0 %v1772
      %v1886 = vpop.f32.mrb[0].mxu0
      %v1887 = vadd.f32 %v1671, %v1886
      %v1888 = vpop.f32.mrb[0].mxu0
      %v1889 = vpop.f32.mrb[0].mxu0
      %v1890 = vadd.f32 %v1671, %v1889
      %v1891 = vpop.f32.mrb[0].mxu0
      %1892 = vmatprep.mubr.bf16.mxu0 0
      %1893 = vmatmul.mubr.bf16.gmra.mrb[0].mxu0 %v1775
      %v1894 = vpop.f32.mrb[0].mxu0
      %v1895 = vadd.f32 %v1671, %v1894
      %v1896 = vpop.f32.mrb[0].mxu0
      %v1897 = vpop.f32.mrb[0].mxu0
      %v1898 = vadd.f32 %v1671, %v1897
      %v1899 = vpop.f32.mrb[0].mxu0
      %1900 = vmatprep.mubr.bf16.mxu0 0
      %1901 = vmatmul.mubr.bf16.gmra.mrb[0].mxu0 %v1778
      %v1902 = vpop.f32.mrb[0].mxu0
      %v1903 = vadd.f32 %v1671, %v1902
      %v1904 = vpop.f32.mrb[0].mxu0
      %v1905 = vpop.f32.mrb[0].mxu0
      %v1906 = vadd.f32 %v1671, %v1905
      %v1907 = vpop.f32.mrb[0].mxu0
      %1908 = vmatprep.mubr.bf16.mxu0 0
      %1909 = vmatmul.mubr.bf16.gmra.mrb[0].mxu0 %v1781
      %v1910 = vpop.f32.mrb[0].mxu0
      %v1911 = vadd.f32 %v1671, %v1910
      %v1912 = vpop.f32.mrb[0].mxu0
      %v1913 = vpop.f32.mrb[0].mxu0
      %v1914 = vadd.f32 %v1671, %v1913
      %v1915 = vpop.f32.mrb[0].mxu0
      %1916 = vmatprep.mubr.bf16.mxu0 0
      %1917 = vmatmul.mubr.bf16.gmra.mrb[0].mxu0 %v1784
      %v1918 = vpop.f32.mrb[0].mxu0
      %v1919 = vadd.f32 %v1671, %v1918
      %v1920 = vpop.f32.mrb[0].mxu0
      %v1921 = vpop.f32.mrb[0].mxu0
      %v1922 = vadd.f32 %v1671, %v1921
      %v1923 = vpop.f32.mrb[0].mxu0
      %1924 = vmatprep.mubr.bf16.mxu0 0
      %1925 = vmatmul.mubr.bf16.gmra.mrb[0].mxu0 %v1787
      %v1926 = vpop.f32.mrb[0].mxu0
      %v1927 = vadd.f32 %v1671, %v1926
      %v1928 = vpop.f32.mrb[0].mxu0
      %v1929 = vpop.f32.mrb[0].mxu0
      %v1930 = vadd.f32 %v1671, %v1929
      %v1931 = vpop.f32.mrb[0].mxu0
      %1932 = vmatprep.mubr.bf16.mxu0 0
      %1933 = vmatmul.mubr.bf16.gmra.mrb[0].mxu0 %v1790
      %v1934 = vpop.f32.mrb[0].mxu0
      %v1935 = vadd.f32 %v1671, %v1934
      %v1936 = vpop.f32.mrb[0].mxu0
      %v1937 = vpop.f32.mrb[0].mxu0
      %v1938 = vadd.f32 %v1671, %v1937
      %v1939 = vpop.f32.mrb[0].mxu0
      %1940 = vmatprep.mubr.bf16.mxu0 0
      %1941 = vmatmul.mubr.bf16.gmra.mrb[0].mxu0 %v1793
      %v1942 = vpop.f32.mrb[0].mxu0
      %v1943 = vadd.f32 %v1671, %v1942
      %v1944 = vpop.f32.mrb[0].mxu0
      %v1945 = vpop.f32.mrb[0].mxu0
      %v1946 = vadd.f32 %v1671, %v1945
      %v1947 = vpop.f32.mrb[0].mxu0
      %1948 = vmatprep.mubr.bf16.mxu0 0
      %1949 = vmatmul.mubr.bf16.gmra.mrb[0].mxu0 %v1796
      %v1950 = vpop.f32.mrb[0].mxu0
      %v1951 = vadd.f32 %v1671, %v1950
      %v1952 = vpop.f32.mrb[0].mxu0
      %v1953 = vpop.f32.mrb[0].mxu0
      %v1954 = vadd.f32 %v1671, %v1953
      %v1955 = vpop.f32.mrb[0].mxu0
      %1956 = vmatprep.mubr.bf16.mxu0 0
      %1957 = vmatmul.mubr.bf16.gmra.mrb[0].mxu0 %v1799
      %v1958 = vpop.f32.mrb[0].mxu0
      %v1959 = vadd.f32 %v1671, %v1958
      %v1960 = vpop.f32.mrb[0].mxu0
      %v1961 = vpop.f32.mrb[0].mxu0
      %v1962 = vadd.f32 %v1671, %v1961
      %v1963 = vpop.f32.mrb[0].mxu0
      %1964 = vdwg.mxu0
      %v1965 = vmax.f32 %v1839, 0.0
      %v1966 = vmax.f32 %v1842, 0.0
      %v1967 = vmax.f32 %v1847, 0.0
      %v1968 = vmax.f32 %v1850, 0.0
      %v1969 = vmax.f32 %v1855, 0.0
      %v1970 = vmax.f32 %v1858, 0.0
      %v1971 = vmax.f32 %v1863, 0.0
      %v1972 = vmax.f32 %v1866, 0.0
      %v1973 = vmax.f32 %v1871, 0.0
      %v1974 = vmax.f32 %v1874, 0.0
      %v1975 = vmax.f32 %v1879, 0.0
      %v1976 = vmax.f32 %v1882, 0.0
      %v1977 = vmax.f32 %v1887, 0.0
      %v1978 = vmax.f32 %v1890, 0.0
      %v1979 = vmax.f32 %v1895, 0.0
      %v1980 = vmax.f32 %v1898, 0.0
      %v1981 = vmax.f32 %v1903, 0.0
      %v1982 = vmax.f32 %v1906, 0.0
      %v1983 = vmax.f32 %v1911, 0.0
      %v1984 = vmax.f32 %v1914, 0.0
      %v1985 = vmax.f32 %v1919, 0.0
      %v1986 = vmax.f32 %v1922, 0.0
      %v1987 = vmax.f32 %v1927, 0.0
      %v1988 = vmax.f32 %v1930, 0.0
      %v1989 = vmax.f32 %v1935, 0.0
      %v1990 = vmax.f32 %v1938, 0.0
      %v1991 = vmax.f32 %v1943, 0.0
      %v1992 = vmax.f32 %v1946, 0.0
      %v1993 = vmax.f32 %v1951, 0.0
      %v1994 = vmax.f32 %v1954, 0.0
      %v1995 = vmax.f32 %v1959, 0.0
      %v1996 = vmax.f32 %v1962, 0.0
      %1997 = vst [vmem:[%s504] sm:$0xff] %v1965
      %1998 = vst [vmem:[%s504 + $0x8] sm:$0xff] %v1966
      %1999 = vst [vmem:[%s504 + $0x10] sm:$0xff] %v1967
      %2000 = vst [vmem:[%s504 + $0x18] sm:$0xff] %v1968
      %2001 = vst [vmem:[%s504 + $0x20] sm:$0xff] %v1969
      %2002 = vst [vmem:[%s504 + $0x28] sm:$0xff] %v1970
      %2003 = vst [vmem:[%s504 + $0x30] sm:$0xff] %v1971
      %2004 = vst [vmem:[%s504 + $0x38] sm:$0xff] %v1972
      %2005 = vst [vmem:[%s504 + $0x40] sm:$0xff] %v1973
      %2006 = vst [vmem:[%s504 + $0x48] sm:$0xff] %v1974
      %2007 = vst [vmem:[%s504 + $0x50] sm:$0xff] %v1975
      %2008 = vst [vmem:[%s504 + $0x58] sm:$0xff] %v1976
      %2009 = vst [vmem:[%s504 + $0x60] sm:$0xff] %v1977
      %2010 = vst [vmem:[%s504 + $0x68] sm:$0xff] %v1978
      %2011 = vst [vmem:[%s504 + $0x70] sm:$0xff] %v1979
      %2012 = vst [vmem:[%s504 + $0x78] sm:$0xff] %v1980
      %2013 = vst [vmem:[%s504 + $0x80] sm:$0xff] %v1981
      %2014 = vst [vmem:[%s504 + $0x88] sm:$0xff] %v1982
      %2015 = vst [vmem:[%s504 + $0x90] sm:$0xff] %v1983
      %2016 = vst [vmem:[%s504 + $0x98] sm:$0xff] %v1984
      %2017 = vst [vmem:[%s504 + $0xa0] sm:$0xff] %v1985
      %2018 = vst [vmem:[%s504 + $0xa8] sm:$0xff] %v1986
      %2019 = vst [vmem:[%s504 + $0xb0] sm:$0xff] %v1987
      %2020 = vst [vmem:[%s504 + $0xb8] sm:$0xff] %v1988
      %2021 = vst [vmem:[%s504 + $0xc0] sm:$0xff] %v1989
      %2022 = vst [vmem:[%s504 + $0xc8] sm:$0xff] %v1990
      %2023 = vst [vmem:[%s504 + $0xd0] sm:$0xff] %v1991
      %2024 = vst [vmem:[%s504 + $0xd8] sm:$0xff] %v1992
      %2025 = vst [vmem:[%s504 + $0xe0] sm:$0xff] %v1993
      %2026 = vst [vmem:[%s504 + $0xe8] sm:$0xff] %v1994
      %2027 = vst [vmem:[%s504 + $0xf0] sm:$0xff] %v1995
      %2028 = vst [vmem:[%s504 + $0xf8] sm:$0xff] %v1996
      %s2029 = smul.u32 32, %s25
      %p2030 = scmp.lt.s32.totalorder %s2029, 63
      %s2031 = scalar_select %p2030, %s2029, 63
      %s2032 = smul.addr %s2031, 8
      %s2033 = scalar_lea.vmem %s10, %s2032
      %s2034 = smul.u32 32, %s25
      %p2035 = scmp.lt.s32.totalorder %s2034, 63
      %s2036 = scalar_select %p2035, %s2034, 63
      %s2037 = smul.addr %s2036, 4
      %s2038 = scalar_lea.vmem %s11, %s2037
      %s2039 = smul.u32 32, %s25
      %p2040 = scmp.lt.s32.totalorder %s2039, 63
      %s2041 = scalar_select %p2040, %s2039, 63
      %s2042 = smul.addr %s2041, 4
      %s2043 = scalar_lea.vmem %s12, %s2042
      %s2044 = smul.u32 32, %s25
      %p2045 = scmp.lt.s32.totalorder %s2044, 63
      %s2046 = scalar_select %p2045, %s2044, 63
      %s2047 = smul.addr %s2046, 8
      %s2048 = scalar_lea.vmem %s13, %s2047
      // Predicated region
      $region61: #{inception_forward.4} parent=59 // pred_check
        %p2049 = pneg %p263
      $region62: #{inception_forward.4} parent=59 // pred_check_branch
        %2051 = sbr.rel (%p2049) target = $region64
      $region63: #{inception_forward.4} parent=59 // pred_region
        %s2052 = smul.u32 32, %s25
      $region64: #{inception_forward.4} parent=59 // pred_fallthru
        _
      // Predicated region
      $region65: #{inception_forward.4} parent=59 // pred_check
        %p2053 = pneg %p289
      $region66: #{inception_forward.4} parent=59 // pred_check_branch
        %2055 = sbr.rel (%p2053) target = $region68
      $region67: #{inception_forward.4} parent=59 // pred_region
        %s2056 = smul.u32 32, %s25
      $region68: #{inception_forward.4} parent=59 // pred_fallthru
        _
      // Predicated region
      $region69: #{inception_forward.4} parent=59 // pred_check
        %p2057 = pneg %p315
      $region70: #{inception_forward.4} parent=59 // pred_check_branch
        %2059 = sbr.rel (%p2057) target = $region72
      $region71: #{inception_forward.4} parent=59 // pred_region
        %s2060 = smul.u32 32, %s25
      $region72: #{inception_forward.4} parent=59 // pred_fallthru
        _
      // Predicated region
      $region73: #{inception_forward.4} parent=59 // pred_check
        %p2061 = pneg %p341
      $region74: #{inception_forward.4} parent=59 // pred_check_branch
        %2063 = sbr.rel (%p2061) target = $region76
      $region75: #{inception_forward.4} parent=59 // pred_region
        %s2064 = smul.u32 32, %s25
      $region76: #{inception_forward.4} parent=59 // pred_fallthru
        _
    $region60: #{inception_forward.4} parent=5 // pred_fallthru
      _
    %p2065 = scmp.le.s32.totalorder 2, %s20
    // Predicated region
    $region77: #{inception_forward.4} parent=5 // pred_check
      %p2066 = pneg %p2065
    $region78: #{inception_forward.4} parent=5 // pred_check_branch
      %2068 = sbr.rel (%p2066) target = $region80
    $region79: #{inception_forward.4} parent=5 // pred_region
      %s2069 = ssub.s32 %s20, 2
      // Predicated region
      $region81: #{inception_forward.4} parent=79 // pred_check
        %p2070 = pneg %p269
      $region82: #{inception_forward.4} parent=79 // pred_check_branch
        %2072 = sbr.rel (%p2070) target = $region84
      $region83: #{inception_forward.4} parent=79 // pred_region
        %s2073 = smul.u32 32, %s26
        %p2074 = scmp.lt.s32.totalorder %s2073, 63
        %s2075 = scalar_select %p2074, %s2073, 63
        %s2076 = smul.addr %s2075, 8
        %s2077 = scalar_lea.vmem %s10, %s2076
      $region84: #{inception_forward.4} parent=79 // pred_fallthru
        _
      // Predicated region
      $region85: #{inception_forward.4} parent=79 // pred_check
        %p2078 = pneg %p295
      $region86: #{inception_forward.4} parent=79 // pred_check_branch
        %2080 = sbr.rel (%p2078) target = $region88
      $region87: #{inception_forward.4} parent=79 // pred_region
        %s2081 = smul.u32 32, %s26
        %p2082 = scmp.lt.s32.totalorder %s2081, 63
        %s2083 = scalar_select %p2082, %s2081, 63
        %s2084 = smul.addr %s2083, 4
        %s2085 = scalar_lea.vmem %s11, %s2084
      $region88: #{inception_forward.4} parent=79 // pred_fallthru
        _
      // Predicated region
      $region89: #{inception_forward.4} parent=79 // pred_check
        %p2086 = pneg %p321
      $region90: #{inception_forward.4} parent=79 // pred_check_branch
        %2088 = sbr.rel (%p2086) target = $region92
      $region91: #{inception_forward.4} parent=79 // pred_region
        %s2089 = smul.u32 32, %s26
        %p2090 = scmp.lt.s32.totalorder %s2089, 63
        %s2091 = scalar_select %p2090, %s2089, 63
        %s2092 = smul.addr %s2091, 4
        %s2093 = scalar_lea.vmem %s12, %s2092
      $region92: #{inception_forward.4} parent=79 // pred_fallthru
        _
      // Predicated region
      $region93: #{inception_forward.4} parent=79 // pred_check
        %p2094 = pneg %p347
      $region94: #{inception_forward.4} parent=79 // pred_check_branch
        %2096 = sbr.rel (%p2094) target = $region96
      $region95: #{inception_forward.4} parent=79 // pred_region
        %s2097 = smul.u32 32, %s26
        %p2098 = scmp.lt.s32.totalorder %s2097, 63
        %s2099 = scalar_select %p2098, %s2097, 63
        %s2100 = smul.addr %s2099, 8
        %s2101 = scalar_lea.vmem %s13, %s2100
      $region96: #{inception_forward.4} parent=79 // pred_fallthru
        _
    $region80: #{inception_forward.4} parent=5 // pred_fallthru
      _
  $region6: #{inception_forward.4} parent=0 // loop_footer
    %s24 = sadd.s32 1, %s20
  $region7: #{inception_forward.4} parent=0 // loop_footer_branch
    %19 = sbr.rel target = $region3
  $region8: #{inception_forward.4} parent=0 // loop_exit
    _

// kernel: inception_forward.5
$region0: #{inception_forward.5}
  #allocation0 [shape = 'u32[]', space=smem, size = 0x4, offset = 0x4, fixed_abs, tag = 'smem constant byte address 0x4 - core index']
  #allocation1 [shape = 'u32[144,128]{1,0:T(1,128)}', space=vmem, size = 0x12000, scoped, tag = 'internal scratch']
  %s0 = inlined_call_operand.vmem [shape: bf16[2,308,128], index: 0, kind: input, shape index: {}]
  %s1 = inlined_call_operand.vmem [shape: bf16[9,128,128], index: 1, kind: input, shape index: {}]
  %s2 = inlined_call_operand.vmem [shape: f32[1,128], index: 2, kind: input, shape index: {}]
  %s3 = inlined_call_operand.vmem [shape: f32[2,272,128], index: 3, kind: output, shape index: {}]
  %s4 = sld [smem:[#allocation0]]
  $region45: #{inception_forward.5} parent=0
    _
  %s6 = ssub.s32 1, %s4
  %s7 = scalar_select 0, %s6, %s4
  loop: start=0, step=1, limit=4
  $region2: #{inception_forward.5} parent=0 // loop_pre_header
    _
  $region3: #{inception_forward.5} parent=0 // loop_header
    %s9 = sphi 0, %s13
    %p10 = scmp.ge.s32.totalorder %s9, 4
    %s19 = sphi 0, %s21
    %s22 = sphi 0, %s19
    %s23 = sphi 0, %s22
    %s39 = sphi 0, %s23
    %s43 = sphi 0, %s43
    %s45 = sphi 0, %s43
    %s46 = sphi 0, %s45
    %s60 = sphi 0, %s46
    %s64 = sphi 0, %s64
    %s66 = sphi 0, %s64
    %s67 = sphi 0, %s66
    %s81 = sphi 0, %s67
    %s87 = sphi 0, %s89
    %s90 = sphi 0, %s87
    %s91 = sphi 0, %s90
    %s107 = sphi 0, %s91
  $region4: #{inception_forward.5} parent=0 // loop_header_branch
    %12 = sbr.rel (%p10) target = $region8
  $region5: #{inception_forward.5} parent=0 // loop_body
    %s14 = ssub.s32 %s9, 1
    %s15 = ssub.s32 %s9, 2
    %s16 = sadd.s32 %s9, 1
    %s17 = ssub.s32 %s9, %s16
    %p18 = scmp.eq.s32.totalorder %s17, 0
    %s20 = sadd.s32 %s19, 1
    %s21 = scalar_select %p18, %s19, %s20
    %p24 = pneg %p18
    %p25 = scmp.eq.s32.totalorder %s9, 1
    %p26 = por %p24, %p25
    %p27 = scmp.ne.s32.totalorder %s19, %s22
    %p28 = scmp.eq.s32.totalorder %s9, 0
    %p29 = por %p27, %p28
    %p30 = scmp.ne.s32.totalorder %s19, %s22
    %p31 = scmp.eq.s32.totalorder %s14, 1
    %p32 = por %p30, %p31
    %p33 = scmp.ne.s32.totalorder %s22, %s23
    %p34 = scmp.eq.s32.totalorder %s14, 0
    %p35 = por %p33, %p34
    %p36 = scmp.ne.s32.totalorder %s22, %s23
    %p37 = scmp.eq.s32.totalorder %s15, 1
    %p38 = por %p36, %p37
    %p40 = scmp.ne.s32.totalorder %s23, %s39
    %p41 = scmp.eq.s32.totalorder %s15, 0
    %p42 = por %p40, %p41
    %s44 = sadd.s32 %s43, 1
    %p47 = scmp.eq.s32.totalorder %s9, 1
    %p48 = scmp.ne.s32.totalorder %s43, %s45
    %p49 = scmp.eq.s32.totalorder %s9, 0
    %p50 = por %p48, %p49
    %p51 = scmp.ne.s32.totalorder %s43, %s45
    %p52 = scmp.eq.s32.totalorder %s14, 1
    %p53 = por %p51, %p52
    %p54 = scmp.ne.s32.totalorder %s45, %s46
    %p55 = scmp.eq.s32.totalorder %s14, 0
    %p56 = por %p54, %p55
    %p57 = scmp.ne.s32.totalorder %s45, %s46
    %p58 = scmp.eq.s32.totalorder %s15, 1
    %p59 = por %p57, %p58
    %p61 = scmp.ne.s32.totalorder %s46, %s60
    %p62 = scmp.eq.s32.totalorder %s15, 0
    %p63 = por %p61, %p62
    %s65 = sadd.s32 %s64, 1
    %p68 = scmp.eq.s32.totalorder %s9, 1
    %p69 = scmp.ne.s32.totalorder %s64, %s66
    %p70 = scmp.eq.s32.totalorder %s9, 0
    %p71 = por %p69, %p70
    %p72 = scmp.ne.s32.totalorder %s64, %s66
    %p73 = scmp.eq.s32.totalorder %s14, 1
    %p74 = por %p72, %p73
    %p75 = scmp.ne.s32.totalorder %s66, %s67
    %p76 = scmp.eq.s32.totalorder %s14, 0
    %p77 = por %p75, %p76
    %p78 = scmp.ne.s32.totalorder %s66, %s67
    %p79 = scmp.eq.s32.totalorder %s15, 1
    %p80 = por %p78, %p79
    %p82 = scmp.ne.s32.totalorder %s67, %s81
    %p83 = scmp.eq.s32.totalorder %s15, 0
    %p84 = por %p82, %p83
    %s85 = ssub.s32 %s9, %s16
    %p86 = scmp.eq.s32.totalorder %s85, 0
    %s88 = sadd.s32 %s87, 1
    %s89 = scalar_select %p86, %s87, %s88
    %p92 = pneg %p86
    %p93 = scmp.eq.s32.totalorder %s9, 1
    %p94 = por %p92, %p93
    %p95 = scmp.ne.s32.totalorder %s87, %s90
    %p96 = scmp.eq.s32.totalorder %s9, 0
    %p97 = por %p95, %p96
    %p98 = scmp.ne.s32.totalorder %s87, %s90
    %p99 = scmp.eq.s32.totalorder %s14, 1
    %p100 = por %p98, %p99
    %p101 = scmp.ne.s32.totalorder %s90, %s91
    %p102 = scmp.eq.s32.totalorder %s14, 0
    %p103 = por %p101, %p102
    %p104 = scmp.ne.s32.totalorder %s90, %s91
    %p105 = scmp.eq.s32.totalorder %s15, 1
    %p106 = por %p104, %p105
    %p108 = scmp.ne.s32.totalorder %s91, %s107
    %p109 = scmp.eq.s32.totalorder %s15, 0
    %p110 = por %p108, %p109
    %p111 = scmp.le.s32.totalorder 1, %s9
    %p112 = scmp.lt.s32.totalorder %s9, 3
    %p113 = pnand %p111, %p112
    %p114 = pneg %p113
    // Predicated region
    $region9: #{inception_forward.5} parent=5 // pred_check
      _
    $region10: #{inception_forward.5} parent=5 // pred_check_branch
      %116 = sbr.rel (%p113) target = $region12
    $region11: #{inception_forward.5} parent=5 // pred_region
      %s117 = ssub.s32 %s9, 1
      // Predicated region
      $region13: #{inception_forward.5} parent=11 // pred_check
        %p118 = pneg %p56
      $region14: #{inception_forward.5} parent=11 // pred_check_branch
        %120 = sbr.rel (%p118) target = $region16
      $region15: #{inception_forward.5} parent=11 // pred_region
        _
      $region16: #{inception_forward.5} parent=11 // pred_fallthru
        _
      // Predicated region
      $region17: #{inception_forward.5} parent=11 // pred_check
        %p121 = pneg %p77
      $region18: #{inception_forward.5} parent=11 // pred_check_branch
        %123 = sbr.rel (%p121) target = $region20
      $region19: #{inception_forward.5} parent=11 // pred_region
        _
      $region20: #{inception_forward.5} parent=11 // pred_fallthru
        _
    $region12: #{inception_forward.5} parent=5 // pred_fallthru
      _
    %p124 = scmp.lt.s32.totalorder %s9, 2
    // Predicated region
    $region21: #{inception_forward.5} parent=5 // pred_check
      %p125 = pneg %p124
    $region22: #{inception_forward.5} parent=5 // pred_check_branch
      %127 = sbr.rel (%p125) target = $region24
    $region23: #{inception_forward.5} parent=5 // pred_region
      // Predicated region
      $region25: #{inception_forward.5} parent=23 // pred_check
        %p128 = pneg %p29
      $region26: #{inception_forward.5} parent=23 // pred_check_branch
        %130 = sbr.rel (%p128) target = $region28
      $region27: #{inception_forward.5} parent=23 // pred_region
        %p131 = scmp.lt.s32.totalorder %s9, 1
        %s132 = scalar_select %p131, %s9, 1
        %s133 = smul.addr %s132, 39
        %s134 = smul.addr %s133, 4
        %s135 = scalar_lea.vmem %s0, %s134
      $region28: #{inception_forward.5} parent=23 // pred_fallthru
        _
    $region24: #{inception_forward.5} parent=5 // pred_fallthru
      _
    %p136 = scmp.le.s32.totalorder 1, %s9
    %p137 = scmp.lt.s32.totalorder %s9, 3
    %p138 = pnand %p136, %p137
    %p139 = pneg %p138
    // Predicated region
    $region29: #{inception_forward.5} parent=5 // pred_check
      _
    $region30: #{inception_forward.5} parent=5 // pred_check_branch
      %141 = sbr.rel (%p138) target = $region32
    $region31: #{inception_forward.5} parent=5 // pred_region
      %s142 = ssub.s32 %s9, 1
      %p143 = scmp.lt.s32.totalorder %s14, 1
      %s144 = scalar_select %p143, %s14, 1
      %s145 = smul.addr %s144, 39
      %s146 = smul.addr %s145, 4
      %s147 = scalar_lea.vmem %s0, %s146
      %p148 = pneg %p35
      %p149 = pneg %p32
      %p150 = pneg %p56
      %p151 = pneg %p53
      %p152 = pneg %p77
      %p153 = pneg %p74
      %p154 = pneg %p103
      %p155 = pneg %p100
      %p156 = scmp.lt.s32.totalorder %s14, 1
      %s157 = scalar_select %p156, %s14, 1
      %s158 = smul.addr %s157, 34
      %s159 = smul.addr %s158, 8
      %s160 = scalar_lea.vmem %s3, %s159
      %p161 = scmp.lt.s32.totalorder %s14, 1
      %s162 = scalar_select %p161, %s14, 1
      %s163 = smul.addr %s162, 39
      %s164 = smul.addr %s163, 4
      %s165 = scalar_lea.vmem %s0, %s164
      %p166 = scmp.lt.s32.totalorder %s14, 1
      %s167 = scalar_select %p166, %s14, 1
      %s168 = smul.addr %s167, 34
      %s169 = smul.addr %s168, 8
      %s170 = scalar_lea.vmem %s3, %s169
      %v172 = vld [vmem:[%s165] sm:$0xf]
      %v173 = vld [vmem:[%s165 + $0x4] sm:$0xf]
      %v174 = vld [vmem:[%s165 + $0x8] sm:$0xf]
      %v175 = vld [vmem:[%s165 + $0xc] sm:$0xf]
      %v176 = vld [vmem:[%s165 + $0x10] sm:$0xf]
      %v177 = vld [vmem:[%s165 + $0x14] sm:$0xf]
      %v178 = vld [vmem:[%s165 + $0x18] sm:$0xf]
      %v179 = vld [vmem:[%s165 + $0x1c] sm:$0xf]
      %v180 = vld [vmem:[%s165 + $0x20] sm:$0xf]
      %v181 = vld [vmem:[%s165 + $0x24] sm:$0xf]
      %v182 = vld [vmem:[%s165 + $0x28] sm:$0xf]
      %v183 = vld [vmem:[%s165 + $0x2c] sm:$0xf]
      %v184 = vld [vmem:[%s165 + $0x30] sm:$0xf]
      %v185 = vld [vmem:[%s165 + $0x34] sm:$0xf]
      %v186 = vld [vmem:[%s165 + $0x38] sm:$0xf]
      %v187 = vld [vmem:[%s165 + $0x3c] sm:$0xf]
      %v188 = vld [vmem:[%s165 + $0x40] sm:$0xf]
      %v189 = vld [vmem:[%s165 + $0x44] sm:$0xf]
      %v190 = vld [vmem:[%s165 + $0x48] sm:$0xf]
      %v191 = vld [vmem:[%s165 + $0x4c] sm:$0xf]
      %v192 = vld [vmem:[%s165 + $0x50] sm:$0xf]
      %v193 = vld [vmem:[%s165 + $0x54] sm:$0xf]
      %v194 = vld [vmem:[%s165 + $0x58] sm:$0xf]
      %v195 = vld [vmem:[%s165 + $0x5c] sm:$0xf]
      %v196 = vld [vmem:[%s165 + $0x60] sm:$0xf]
      %v197 = vld [vmem:[%s165 + $0x64] sm:$0xf]
      %v198 = vld [vmem:[%s165 + $0x68] sm:$0xf]
      %v199 = vld [vmem:[%s165 + $0x6c] sm:$0xf]
      %v200 = vld [vmem:[%s165 + $0x70] sm:$0xf]
      %v201 = vld [vmem:[%s165 + $0x74] sm:$0xf]
      %v202 = vld [vmem:[%s165 + $0x78] sm:$0xf]
      %v203 = vld [vmem:[%s165 + $0x7c] sm:$0xf]
      %v204 = vld [vmem:[%s165 + $0x80] sm:$0xf]
      %v205 = vld [vmem:[%s165 + $0x84] sm:$0xf]
      %v206 = vld [vmem:[%s1] sm:$0xf]
      %v207 = vld [vmem:[%s1 + $0x4] sm:$0xf]
      %v208 = vld [vmem:[%s1 + $0x8] sm:$0xf]
      %v209 = vld [vmem:[%s1 + $0xc] sm:$0xf]
      %v210 = vld [vmem:[%s1 + $0x10] sm:$0xf]
      %v211 = vld [vmem:[%s1 + $0x14] sm:$0xf]
      %v212 = vld [vmem:[%s1 + $0x18] sm:$0xf]
      %v213 = vld [vmem:[%s1 + $0x1c] sm:$0xf]
      %v214 = vld [vmem:[%s1 + $0x20] sm:$0xf]
      %v215 = vld [vmem:[%s1 + $0x24] sm:$0xf]
      %v216 = vld [vmem:[%s1 + $0x28] sm:$0xf]
      %v217 = vld [vmem:[%s1 + $0x2c] sm:$0xf]
      %v218 = vld [vmem:[%s1 + $0x30] sm:$0xf]
      %v219 = vld [vmem:[%s1 + $0x34] sm:$0xf]
      %v220 = vld [vmem:[%s1 + $0x38] sm:$0xf]
      %v221 = vld [vmem:[%s1 + $0x3c] sm:$0xf]
      %v222 = vld [vmem:[%s165 + $0x88] sm:$0x1]
      %s223 = scalar_lea.vmem %s1, 64
      %v224 = vld [vmem:[%s223] sm:$0xf]
      %v225 = vld [vmem:[%s223 + $0x4] sm:$0xf]
      %v226 = vld [vmem:[%s223 + $0x8] sm:$0xf]
      %v227 = vld [vmem:[%s223 + $0xc] sm:$0xf]
      %v228 = vld [vmem:[%s223 + $0x10] sm:$0xf]
      %v229 = vld [vmem:[%s223 + $0x14] sm:$0xf]
      %v230 = vld [vmem:[%s223 + $0x18] sm:$0xf]
      %v231 = vld [vmem:[%s223 + $0x1c] sm:$0xf]
      %v232 = vld [vmem:[%s223 + $0x20] sm:$0xf]
      %v233 = vld [vmem:[%s223 + $0x24] sm:$0xf]
      %v234 = vld [vmem:[%s223 + $0x28] sm:$0xf]
      %v235 = vld [vmem:[%s223 + $0x2c] sm:$0xf]
      %v236 = vld [vmem:[%s223 + $0x30] sm:$0xf]
      %v237 = vld [vmem:[%s223 + $0x34] sm:$0xf]
      %v238 = vld [vmem:[%s223 + $0x38] sm:$0xf]
      %v239 = vld [vmem:[%s223 + $0x3c] sm:$0xf]
      %v275 = vunpack.c.l.b16 %v172
      %v276 = vunpack.c.l.b16 %v173
      %v277 = vunpack.c.l.b16 %v174
      %v278 = vunpack.c.l.b16 %v175
      %v279 = vunpack.c.l.b16 %v176
      %v280 = vunpack.c.l.b16 %v177
      %v281 = vunpack.c.l.b16 %v178
      %v282 = vunpack.c.l.b16 %v179
      %v283 = vunpack.c.l.b16 %v180
      %v284 = vunpack.c.l.b16 %v181
      %v285 = vunpack.c.l.b16 %v182
      %v286 = vunpack.c.l.b16 %v183
      %v287 = vunpack.c.l.b16 %v184
      %v288 = vunpack.c.l.b16 %v185
      %v289 = vunpack.c.l.b16 %v186
      %v290 = vunpack.c.l.b16 %v187
      %v291 = vunpack.c.l.b16 %v188
      %v292 = vunpack.c.l.b16 %v189
      %v293 = vunpack.c.l.b16 %v190
      %v294 = vunpack.c.l.b16 %v191
      %v295 = vunpack.c.l.b16 %v192
      %v296 = vunpack.c.l.b16 %v193
      %v297 = vunpack.c.l.b16 %v194
      %v298 = vunpack.c.l.b16 %v195
      %v299 = vunpack.c.l.b16 %v196
      %v300 = vunpack.c.l.b16 %v197
      %v301 = vunpack.c.l.b16 %v198
      %v302 = vunpack.c.l.b16 %v199
      %v303 = vunpack.c.l.b16 %v200
      %v304 = vunpack.c.l.b16 %v201
      %v305 = vunpack.c.l.b16 %v202
      %v306 = vunpack.c.l.b16 %v203
      %v307 = vunpack.c.l.b16 %v204
      %v308 = vunpack.c.l.b16 %v205
      %v309 = vunpack.c.l.b16 %v222
      %v310 = vpack.c.b16 %v276, %v275
      %v311 = vpack.c.b16 %v278, %v277
      %v312 = vpack.c.b16 %v280, %v279
      %v313 = vpack.c.b16 %v282, %v281
      %v314 = vpack.c.b16 %v284, %v283
      %v315 = vpack.c.b16 %v286, %v285
      %v316 = vpack.c.b16 %v288, %v287
      %v317 = vpack.c.b16 %v290, %v289
      %v318 = vpack.c.b16 %v292, %v291
      %v319 = vpack.c.b16 %v294, %v293
      %v320 = vpack.c.b16 %v296, %v295
      %v321 = vpack.c.b16 %v298, %v297
      %v322 = vpack.c.b16 %v300, %v299
      %v323 = vpack.c.b16 %v302, %v301
      %v324 = vpack.c.b16 %v304, %v303
      %v325 = vpack.c.b16 %v306, %v305
      %v326 = vpack.c.b16 %v308, %v307
      %v327 = vpack.c.b16 %v309, %v309
      %vm328 = vsmask.f32 7424
      %v330 = vshrl.u32 %v310, 16
      %v332 = vshll.u32 %v310, 16
      %v334 = vrot.slane %v332, 1
      %v335 = vor.u32 %v330, %v334
      %v337 = vshll.u32 %v311, 16
      %v339 = vrot.slane %v337, 1
      %v340 = vsel %vm328, %v335, %v339
      %v341 = vshrl.u32 %v311, 16
      %v343 = vor.u32 %v341, %v339
      %v345 = vshll.u32 %v312, 16
      %v347 = vrot.slane %v345, 1
      %v348 = vsel %vm328, %v343, %v347
      %v349 = vshrl.u32 %v312, 16
      %v351 = vor.u32 %v349, %v347
      %v353 = vshll.u32 %v313, 16
      %v355 = vrot.slane %v353, 1
      %v356 = vsel %vm328, %v351, %v355
      %v357 = vshrl.u32 %v313, 16
      %v359 = vor.u32 %v357, %v355
      %v361 = vshll.u32 %v314, 16
      %v363 = vrot.slane %v361, 1
      %v364 = vsel %vm328, %v359, %v363
      %v365 = vshrl.u32 %v314, 16
      %v367 = vor.u32 %v365, %v363
      %v369 = vshll.u32 %v315, 16
      %v371 = vrot.slane %v369, 1
      %v372 = vsel %vm328, %v367, %v371
      %v373 = vshrl.u32 %v315, 16
      %v375 = vor.u32 %v373, %v371
      %v377 = vshll.u32 %v316, 16
      %v379 = vrot.slane %v377, 1
      %v380 = vsel %vm328, %v375, %v379
      %v381 = vshrl.u32 %v316, 16
      %v383 = vor.u32 %v381, %v379
      %v385 = vshll.u32 %v317, 16
      %v387 = vrot.slane %v385, 1
      %v388 = vsel %vm328, %v383, %v387
      %v389 = vshrl.u32 %v317, 16
      %v391 = vor.u32 %v389, %v387
      %v393 = vshll.u32 %v318, 16
      %v395 = vrot.slane %v393, 1
      %v396 = vsel %vm328, %v391, %v395
      %v397 = vshrl.u32 %v318, 16
      %v399 = vor.u32 %v397, %v395
      %v401 = vshll.u32 %v319, 16
      %v403 = vrot.slane %v401, 1
      %v404 = vsel %vm328, %v399, %v403
      %v405 = vshrl.u32 %v319, 16
      %v407 = vor.u32 %v405, %v403
      %v409 = vshll.u32 %v320, 16
      %v411 = vrot.slane %v409, 1
      %v412 = vsel %vm328, %v407, %v411
      %v413 = vshrl.u32 %v320, 16
      %v415 = vor.u32 %v413, %v411
      %v417 = vshll.u32 %v321, 16
      %v419 = vrot.slane %v417, 1
      %v420 = vsel %vm328, %v415, %v419
      %v421 = vshrl.u32 %v321, 16
      %v423 = vor.u32 %v421, %v419
      %v425 = vshll.u32 %v322, 16
      %v427 = vrot.slane %v425, 1
      %v428 = vsel %vm328, %v423, %v427
      %v429 = vshrl.u32 %v322, 16
      %v431 = vor.u32 %v429, %v427
      %v433 = vshll.u32 %v323, 16
      %v435 = vrot.slane %v433, 1
      %v436 = vsel %vm328, %v431, %v435
      %v437 = vshrl.u32 %v323, 16
      %v439 = vor.u32 %v437, %v435
      %v441 = vshll.u32 %v324, 16
      %v443 = vrot.slane %v441, 1
      %v444 = vsel %vm328, %v439, %v443
      %v445 = vshrl.u32 %v324, 16
      %v447 = vor.u32 %v445, %v443
      %v449 = vshll.u32 %v325, 16
      %v451 = vrot.slane %v449, 1
      %v452 = vsel %vm328, %v447, %v451
      %v453 = vshrl.u32 %v325, 16
      %v455 = vor.u32 %v453, %v451
      %v457 = vshll.u32 %v326, 16
      %v459 = vrot.slane %v457, 1
      %v460 = vsel %vm328, %v455, %v459
      %v461 = vshrl.u32 %v326, 16
      %v463 = vor.u32 %v461, %v459
      %v465 = vshll.u32 %v327, 16
      %v467 = vrot.slane %v465, 1
      %v468 = vsel %vm328, %v463, %v467
      %v502 = vunpack.c.l.b16 %v224
      %v503 = vunpack.c.l.b16 %v225
      %v504 = vunpack.c.l.b16 %v226
      %v505 = vunpack.c.l.b16 %v227
      %v506 = vunpack.c.l.b16 %v228
      %v507 = vunpack.c.l.b16 %v229
      %v508 = vunpack.c.l.b16 %v230
      %v509 = vunpack.c.l.b16 %v231
      %v510 = vunpack.c.l.b16 %v232
      %v511 = vunpack.c.l.b16 %v233
      %v512 = vunpack.c.l.b16 %v234
      %v513 = vunpack.c.l.b16 %v235
      %v514 = vunpack.c.l.b16 %v236
      %v515 = vunpack.c.l.b16 %v237
      %v516 = vunpack.c.l.b16 %v238
      %v517 = vunpack.c.l.b16 %v239
      %v518 = vpack.c.b16 %v503, %v502
      %v519 = vpack.c.b16 %v505, %v504
      %v520 = vpack.c.b16 %v507, %v506
      %v521 = vpack.c.b16 %v509, %v508
      %v522 = vpack.c.b16 %v511, %v510
      %v523 = vpack.c.b16 %v513, %v512
      %v524 = vpack.c.b16 %v515, %v514
      %v525 = vpack.c.b16 %v517, %v516
      %534 = vmatprep.subr.bf16.mxu0 0
      %535 = vmatpush1.bf16.msra.mxu0 %v518
      %536 = vmatprep.subr.bf16.mxu0 0
      %537 = vmatpush1.bf16.msra.mxu0 %v519
      %538 = vmatprep.subr.bf16.mxu0 0
      %539 = vmatpush1.bf16.msra.mxu0 %v520
      %540 = vmatprep.subr.bf16.mxu0 0
      %541 = vmatpush1.bf16.msra.mxu0 %v521
      %542 = vmatprep.subr.bf16.mxu0 0
      %543 = vmatpush1.bf16.msra.mxu0 %v522
      %544 = vmatprep.subr.bf16.mxu0 0
      %545 = vmatpush1.bf16.msra.mxu0 %v523
      %546 = vmatprep.subr.bf16.mxu0 0
      %547 = vmatpush1.bf16.msra.mxu0 %v524
      %548 = vmatprep.subr.bf16.mxu0 0
      %549 = vmatpush1.bf16.msra.mxu0 %v525
      %550 = vmatprep.subr.bf16.mxu0 0
      %551 = vmatpush1.bf16.msra.mxu0 0
      %552 = vmatprep.subr.bf16.mxu0 0
      %553 = vmatpush1.bf16.msra.mxu0 0
      %554 = vmatprep.subr.bf16.mxu0 0
      %555 = vmatpush1.bf16.msra.mxu0 0
      %556 = vmatprep.subr.bf16.mxu0 0
      %557 = vmatpush1.bf16.msra.mxu0 0
      %558 = vmatprep.subr.bf16.mxu0 0
      %559 = vmatpush1.bf16.msra.mxu0 0
      %560 = vmatprep.subr.bf16.mxu0 0
      %561 = vmatpush1.bf16.msra.mxu0 0
      %562 = vmatprep.subr.bf16.mxu0 0
      %563 = vmatpush1.bf16.msra.mxu0 0
      %564 = vmatprep.subr.bf16.mxu0 0
      %565 = vmatpush1.bf16.msra.mxu0 0
      %566 = vmatprep.mubr.bf16.mxu0 0
      %567 = vmatmul.mubr.bf16.gmra.mrb[0].mxu0 %v340
      %v568 = vpop.f32.mrb[0].mxu0
      %v569 = vadd.f32 0.0, %v568
      %v570 = vpop.f32.mrb[0].mxu0
      %v571 = vpop.f32.mrb[0].mxu0
      %v572 = vadd.f32 0.0, %v571
      %v573 = vpop.f32.mrb[0].mxu0
      %574 = vmatprep.mubr.bf16.mxu0 0
      %575 = vmatmul.mubr.bf16.gmra.mrb[0].mxu0 %v348
      %v576 = vpop.f32.mrb[0].mxu0
      %v577 = vadd.f32 0.0, %v576
      %v578 = vpop.f32.mrb[0].mxu0
      %v579 = vpop.f32.mrb[0].mxu0
      %v580 = vadd.f32 0.0, %v579
      %v581 = vpop.f32.mrb[0].mxu0
      %582 = vmatprep.mubr.bf16.mxu0 0
      %583 = vmatmul.mubr.bf16.gmra.mrb[0].mxu0 %v356
      %v584 = vpop.f32.mrb[0].mxu0
      %v585 = vadd.f32 0.0, %v584
      %v586 = vpop.f32.mrb[0].mxu0
      %v587 = vpop.f32.mrb[0].mxu0
      %v588 = vadd.f32 0.0, %v587
      %v589 = vpop.f32.mrb[0].mxu0
      %590 = vmatprep.mubr.bf16.mxu0 0
      %591 = vmatmul.mubr.bf16.gmra.mrb[0].mxu0 %v364
      %v592 = vpop.f32.mrb[0].mxu0
      %v593 = vadd.f32 0.0, %v592
      %v594 = vpop.f32.mrb[0].mxu0
      %v595 = vpop.f32.mrb[0].mxu0
      %v596 = vadd.f32 0.0, %v595
      %v597 = vpop.f32.mrb[0].mxu0
      %598 = vmatprep.mubr.bf16.mxu0 0
      %599 = vmatmul.mubr.bf16.gmra.mrb[0].mxu0 %v372
      %v600 = vpop.f32.mrb[0].mxu0
      %v601 = vadd.f32 0.0, %v600
      %v602 = vpop.f32.mrb[0].mxu0
      %v603 = vpop.f32.mrb[0].mxu0
      %v604 = vadd.f32 0.0, %v603
      %v605 = vpop.f32.mrb[0].mxu0
      %606 = vmatprep.mubr.bf16.mxu0 0
      %607 = vmatmul.mubr.bf16.gmra.mrb[0].mxu0 %v380
      %v608 = vpop.f32.mrb[0].mxu0
      %v609 = vadd.f32 0.0, %v608
      %v610 = vpop.f32.mrb[0].mxu0
      %v611 = vpop.f32.mrb[0].mxu0
      %v612 = vadd.f32 0.0, %v611
      %v613 = vpop.f32.mrb[0].mxu0
      %614 = vmatprep.mubr.bf16.mxu0 0
      %615 = vmatmul.mubr.bf16.gmra.mrb[0].mxu0 %v388
      %v616 = vpop.f32.mrb[0].mxu0
      %v617 = vadd.f32 0.0, %v616
      %v618 = vpop.f32.mrb[0].mxu0
      %v619 = vpop.f32.mrb[0].mxu0
      %v620 = vadd.f32 0.0, %v619
      %v621 = vpop.f32.mrb[0].mxu0
      %622 = vmatprep.mubr.bf16.mxu0 0
      %623 = vmatmul.mubr.bf16.gmra.mrb[0].mxu0 %v396
      %v624 = vpop.f32.mrb[0].mxu0
      %v625 = vadd.f32 0.0, %v624
      %v626 = vpop.f32.mrb[0].mxu0
      %v627 = vpop.f32.mrb[0].mxu0
      %v628 = vadd.f32 0.0, %v627
      %v629 = vpop.f32.mrb[0].mxu0
      %630 = vmatprep.mubr.bf16.mxu0 0
      %631 = vmatmul.mubr.bf16.gmra.mrb[0].mxu0 %v404
      %v632 = vpop.f32.mrb[0].mxu0
      %v633 = vadd.f32 0.0, %v632
      %v634 = vpop.f32.mrb[0].mxu0
      %v635 = vpop.f32.mrb[0].mxu0
      %v636 = vadd.f32 0.0, %v635
      %v637 = vpop.f32.mrb[0].mxu0
      %638 = vmatprep.mubr.bf16.mxu0 0
      %639 = vmatmul.mubr.bf16.gmra.mrb[0].mxu0 %v412
      %v640 = vpop.f32.mrb[0].mxu0
      %v641 = vadd.f32 0.0, %v640
      %v642 = vpop.f32.mrb[0].mxu0
      %v643 = vpop.f32.mrb[0].mxu0
      %v644 = vadd.f32 0.0, %v643
      %v645 = vpop.f32.mrb[0].mxu0
      %646 = vmatprep.mubr.bf16.mxu0 0
      %647 = vmatmul.mubr.bf16.gmra.mrb[0].mxu0 %v420
      %v648 = vpop.f32.mrb[0].mxu0
      %v649 = vadd.f32 0.0, %v648
      %v650 = vpop.f32.mrb[0].mxu0
      %v651 = vpop.f32.mrb[0].mxu0
      %v652 = vadd.f32 0.0, %v651
      %v653 = vpop.f32.mrb[0].mxu0
      %654 = vmatprep.mubr.bf16.mxu0 0
      %655 = vmatmul.mubr.bf16.gmra.mrb[0].mxu0 %v428
      %v656 = vpop.f32.mrb[0].mxu0
      %v657 = vadd.f32 0.0, %v656
      %v658 = vpop.f32.mrb[0].mxu0
      %v659 = vpop.f32.mrb[0].mxu0
      %v660 = vadd.f32 0.0, %v659
      %v661 = vpop.f32.mrb[0].mxu0
      %662 = vmatprep.mubr.bf16.mxu0 0
      %663 = vmatmul.mubr.bf16.gmra.mrb[0].mxu0 %v436
      %v664 = vpop.f32.mrb[0].mxu0
      %v665 = vadd.f32 0.0, %v664
      %v666 = vpop.f32.mrb[0].mxu0
      %v667 = vpop.f32.mrb[0].mxu0
      %v668 = vadd.f32 0.0, %v667
      %v669 = vpop.f32.mrb[0].mxu0
      %670 = vmatprep.mubr.bf16.mxu0 0
      %671 = vmatmul.mubr.bf16.gmra.mrb[0].mxu0 %v444
      %v672 = vpop.f32.mrb[0].mxu0
      %v673 = vadd.f32 0.0, %v672
      %v674 = vpop.f32.mrb[0].mxu0
      %v675 = vpop.f32.mrb[0].mxu0
      %v676 = vadd.f32 0.0, %v675
      %v677 = vpop.f32.mrb[0].mxu0
      %678 = vmatprep.mubr.bf16.mxu0 0
      %679 = vmatmul.mubr.bf16.gmra.mrb[0].mxu0 %v452
      %v680 = vpop.f32.mrb[0].mxu0
      %v681 = vadd.f32 0.0, %v680
      %v682 = vpop.f32.mrb[0].mxu0
      %v683 = vpop.f32.mrb[0].mxu0
      %v684 = vadd.f32 0.0, %v683
      %v685 = vpop.f32.mrb[0].mxu0
      %686 = vmatprep.mubr.bf16.mxu0 0
      %687 = vmatmul.mubr.bf16.gmra.mrb[0].mxu0 %v460
      %v688 = vpop.f32.mrb[0].mxu0
      %v689 = vadd.f32 0.0, %v688
      %v690 = vpop.f32.mrb[0].mxu0
      %v691 = vpop.f32.mrb[0].mxu0
      %v692 = vadd.f32 0.0, %v691
      %v693 = vpop.f32.mrb[0].mxu0
      %694 = vmatprep.mubr.bf16.mxu0 0
      %695 = vmatmul.mubr.bf16.gmra.mrb[0].mxu0 %v468
      %v696 = vpop.f32.mrb[0].mxu0
      %v697 = vadd.f32 0.0, %v696
      %v698 = vpop.f32.mrb[0].mxu0
      %v699 = vpop.f32.mrb[0].mxu0
      %v700 = vadd.f32 0.0, %v699
      %v701 = vpop.f32.mrb[0].mxu0
      %702 = vdwg.mxu0
      %v736 = vunpack.c.l.b16 %v206
      %v737 = vunpack.c.l.b16 %v207
      %v738 = vunpack.c.l.b16 %v208
      %v739 = vunpack.c.l.b16 %v209
      %v740 = vunpack.c.l.b16 %v210
      %v741 = vunpack.c.l.b16 %v211
      %v742 = vunpack.c.l.b16 %v212
      %v743 = vunpack.c.l.b16 %v213
      %v744 = vunpack.c.l.b16 %v214
      %v745 = vunpack.c.l.b16 %v215
      %v746 = vunpack.c.l.b16 %v216
      %v747 = vunpack.c.l.b16 %v217
      %v748 = vunpack.c.l.b16 %v218
      %v749 = vunpack.c.l.b16 %v219
      %v750 = vunpack.c.l.b16 %v220
      %v751 = vunpack.c.l.b16 %v221
      %v752 = vpack.c.b16 %v737, %v736
      %v753 = vpack.c.b16 %v739, %v738
      %v754 = vpack.c.b16 %v741, %v740
      %v755 = vpack.c.b16 %v743, %v742
      %v756 = vpack.c.b16 %v745, %v744
      %v757 = vpack.c.b16 %v747, %v746
      %v758 = vpack.c.b16 %v749, %v748
      %v759 = vpack.c.b16 %v751, %v750
      %768 = vmatprep.subr.bf16.mxu0 0
      %769 = vmatpush1.bf16.msra.mxu0 %v752
      %770 = vmatprep.subr.bf16.mxu0 0
      %771 = vmatpush1.bf16.msra.mxu0 %v753
      %772 = vmatprep.subr.bf16.mxu0 0
      %773 = vmatpush1.bf16.msra.mxu0 %v754
      %774 = vmatprep.subr.bf16.mxu0 0
      %775 = vmatpush1.bf16.msra.mxu0 %v755
      %776 = vmatprep.subr.bf16.mxu0 0
      %777 = vmatpush1.bf16.msra.mxu0 %v756
      %778 = vmatprep.subr.bf16.mxu0 0
      %779 = vmatpush1.bf16.msra.mxu0 %v757
      %780 = vmatprep.subr.bf16.mxu0 0
      %781 = vmatpush1.bf16.msra.mxu0 %v758
      %782 = vmatprep.subr.bf16.mxu0 0
      %783 = vmatpush1.bf16.msra.mxu0 %v759
      %784 = vmatprep.subr.bf16.mxu0 0
      %785 = vmatpush1.bf16.msra.mxu0 0
      %786 = vmatprep.subr.bf16.mxu0 0
      %787 = vmatpush1.bf16.msra.mxu0 0
      %788 = vmatprep.subr.bf16.mxu0 0
      %789 = vmatpush1.bf16.msra.mxu0 0
      %790 = vmatprep.subr.bf16.mxu0 0
      %791 = vmatpush1.bf16.msra.mxu0 0
      %792 = vmatprep.subr.bf16.mxu0 0
      %793 = vmatpush1.bf16.msra.mxu0 0
      %794 = vmatprep.subr.bf16.mxu0 0
      %795 = vmatpush1.bf16.msra.mxu0 0
      %796 = vmatprep.subr.bf16.mxu0 0
      %797 = vmatpush1.bf16.msra.mxu0 0
      %798 = vmatprep.subr.bf16.mxu0 0
      %799 = vmatpush1.bf16.msra.mxu0 0
      %800 = vmatprep.mubr.bf16.mxu0 0
      %801 = vmatmul.mubr.bf16.gmra.mrb[0].mxu0 %v310
      %v802 = vpop.f32.mrb[0].mxu0
      %v803 = vadd.f32 %v569, %v802
      %v804 = vpop.f32.mrb[0].mxu0
      %v805 = vpop.f32.mrb[0].mxu0
      %v806 = vadd.f32 %v572, %v805
      %v807 = vpop.f32.mrb[0].mxu0
      %808 = vmatprep.mubr.bf16.mxu0 0
      %809 = vmatmul.mubr.bf16.gmra.mrb[0].mxu0 %v311
      %v810 = vpop.f32.mrb[0].mxu0
      %v811 = vadd.f32 %v577, %v810
      %v812 = vpop.f32.mrb[0].mxu0
      %v813 = vpop.f32.mrb[0].mxu0
      %v814 = vadd.f32 %v580, %v813
      %v815 = vpop.f32.mrb[0].mxu0
      %816 = vmatprep.mubr.bf16.mxu0 0
      %817 = vmatmul.mubr.bf16.gmra.mrb[0].mxu0 %v312
      %v818 = vpop.f32.mrb[0].mxu0
      %v819 = vadd.f32 %v585, %v818
      %v820 = vpop.f32.mrb[0].mxu0
      %v821 = vpop.f32.mrb[0].mxu0
      %v822 = vadd.f32 %v588, %v821
      %v823 = vpop.f32.mrb[0].mxu0
      %824 = vmatprep.mubr.bf16.mxu0 0
      %825 = vmatmul.mubr.bf16.gmra.mrb[0].mxu0 %v313
      %v826 = vpop.f32.mrb[0].mxu0
      %v827 = vadd.f32 %v593, %v826
      %v828 = vpop.f32.mrb[0].mxu0
      %v829 = vpop.f32.mrb[0].mxu0
      %v830 = vadd.f32 %v596, %v829
      %v831 = vpop.f32.mrb[0].mxu0
      %832 = vmatprep.mubr.bf16.mxu0 0
      %833 = vmatmul.mubr.bf16.gmra.mrb[0].mxu0 %v314
      %v834 = vpop.f32.mrb[0].mxu0
      %v835 = vadd.f32 %v601, %v834
      %v836 = vpop.f32.mrb[0].mxu0
      %v837 = vpop.f32.mrb[0].mxu0
      %v838 = vadd.f32 %v604, %v837
      %v839 = vpop.f32.mrb[0].mxu0
      %840 = vmatprep.mubr.bf16.mxu0 0
      %841 = vmatmul.mubr.bf16.gmra.mrb[0].mxu0 %v315
      %v842 = vpop.f32.mrb[0].mxu0
      %v843 = vadd.f32 %v609, %v842
      %v844 = vpop.f32.mrb[0].mxu0
      %v845 = vpop.f32.mrb[0].mxu0
      %v846 = vadd.f32 %v612, %v845
      %v847 = vpop.f32.mrb[0].mxu0
      %848 = vmatprep.mubr.bf16.mxu0 0
      %849 = vmatmul.mubr.bf16.gmra.mrb[0].mxu0 %v316
      %v850 = vpop.f32.mrb[0].mxu0
      %v851 = vadd.f32 %v617, %v850
      %v852 = vpop.f32.mrb[0].mxu0
      %v853 = vpop.f32.mrb[0].mxu0
      %v854 = vadd.f32 %v620, %v853
      %v855 = vpop.f32.mrb[0].mxu0
      %856 = vmatprep.mubr.bf16.mxu0 0
      %857 = vmatmul.mubr.bf16.gmra.mrb[0].mxu0 %v317
      %v858 = vpop.f32.mrb[0].mxu0
      %v859 = vadd.f32 %v625, %v858
      %v860 = vpop.f32.mrb[0].mxu0
      %v861 = vpop.f32.mrb[0].mxu0
      %v862 = vadd.f32 %v628, %v861
      %v863 = vpop.f32.mrb[0].mxu0
      %864 = vmatprep.mubr.bf16.mxu0 0
      %865 = vmatmul.mubr.bf16.gmra.mrb[0].mxu0 %v318
      %v866 = vpop.f32.mrb[0].mxu0
      %v867 = vadd.f32 %v633, %v866
      %v868 = vpop.f32.mrb[0].mxu0
      %v869 = vpop.f32.mrb[0].mxu0
      %v870 = vadd.f32 %v636, %v869
      %v871 = vpop.f32.mrb[0].mxu0
      %872 = vmatprep.mubr.bf16.mxu0 0
      %873 = vmatmul.mubr.bf16.gmra.mrb[0].mxu0 %v319
      %v874 = vpop.f32.mrb[0].mxu0
      %v875 = vadd.f32 %v641, %v874
      %v876 = vpop.f32.mrb[0].mxu0
      %v877 = vpop.f32.mrb[0].mxu0
      %v878 = vadd.f32 %v644, %v877
      %v879 = vpop.f32.mrb[0].mxu0
      %880 = vmatprep.mubr.bf16.mxu0 0
      %881 = vmatmul.mubr.bf16.gmra.mrb[0].mxu0 %v320
      %v882 = vpop.f32.mrb[0].mxu0
      %v883 = vadd.f32 %v649, %v882
      %v884 = vpop.f32.mrb[0].mxu0
      %v885 = vpop.f32.mrb[0].mxu0
      %v886 = vadd.f32 %v652, %v885
      %v887 = vpop.f32.mrb[0].mxu0
      %888 = vmatprep.mubr.bf16.mxu0 0
      %889 = vmatmul.mubr.bf16.gmra.mrb[0].mxu0 %v321
      %v890 = vpop.f32.mrb[0].mxu0
      %v891 = vadd.f32 %v657, %v890
      %v892 = vpop.f32.mrb[0].mxu0
      %v893 = vpop.f32.mrb[0].mxu0
      %v894 = vadd.f32 %v660, %v893
      %v895 = vpop.f32.mrb[0].mxu0
      %896 = vmatprep.mubr.bf16.mxu0 0
      %897 = vmatmul.mubr.bf16.gmra.mrb[0].mxu0 %v322
      %v898 = vpop.f32.mrb[0].mxu0
      %v899 = vadd.f32 %v665, %v898
      %v900 = vpop.f32.mrb[0].mxu0
      %v901 = vpop.f32.mrb[0].mxu0
      %v902 = vadd.f32 %v668, %v901
      %v903 = vpop.f32.mrb[0].mxu0
      %904 = vmatprep.mubr.bf16.mxu0 0
      %905 = vmatmul.mubr.bf16.gmra.mrb[0].mxu0 %v323
      %v906 = vpop.f32.mrb[0].mxu0
      %v907 = vadd.f32 %v673, %v906
      %v908 = vpop.f32.mrb[0].mxu0
      %v909 = vpop.f32.mrb[0].mxu0
      %v910 = vadd.f32 %v676, %v909
      %v911 = vpop.f32.mrb[0].mxu0
      %912 = vmatprep.mubr.bf16.mxu0 0
      %913 = vmatmul.mubr.bf16.gmra.mrb[0].mxu0 %v324
      %v914 = vpop.f32.mrb[0].mxu0
      %v915 = vadd.f32 %v681, %v914
      %v916 = vpop.f32.mrb[0].mxu0
      %v917 = vpop.f32.mrb[0].mxu0
      %v918 = vadd.f32 %v684, %v917
      %v919 = vpop.f32.mrb[0].mxu0
      %920 = vmatprep.mubr.bf16.mxu0 0
      %921 = vmatmul.mubr.bf16.gmra.mrb[0].mxu0 %v325
      %v922 = vpop.f32.mrb[0].mxu0
      %v923 = vadd.f32 %v689, %v922
      %v924 = vpop.f32.mrb[0].mxu0
      %v925 = vpop.f32.mrb[0].mxu0
      %v926 = vadd.f32 %v692, %v925
      %v927 = vpop.f32.mrb[0].mxu0
      %928 = vmatprep.mubr.bf16.mxu0 0
      %929 = vmatmul.mubr.bf16.gmra.mrb[0].mxu0 %v326
      %v930 = vpop.f32.mrb[0].mxu0
      %v931 = vadd.f32 %v697, %v930
      %v932 = vpop.f32.mrb[0].mxu0
      %v933 = vpop.f32.mrb[0].mxu0
      %v934 = vadd.f32 %v700, %v933
      %v935 = vpop.f32.mrb[0].mxu0
      %936 = vdwg.mxu0
      %v937 = vld [vmem:[%s165] sm:$0xe]
      %s938 = scalar_lea.vmem %s1, 128
      %v939 = vld [vmem:[%s938] sm:$0xf]
      %v940 = vld [vmem:[%s938 + $0x4] sm:$0xf]
      %v941 = vld [vmem:[%s938 + $0x8] sm:$0xf]
      %v942 = vld [vmem:[%s938 + $0xc] sm:$0xf]
      %v943 = vld [vmem:[%s938 + $0x10] sm:$0xf]
      %v944 = vld [vmem:[%s938 + $0x14] sm:$0xf]
      %v945 = vld [vmem:[%s938 + $0x18] sm:$0xf]
      %v946 = vld [vmem:[%s938 + $0x1c] sm:$0xf]
      %v947 = vld [vmem:[%s938 + $0x20] sm:$0xf]
      %v948 = vld [vmem:[%s938 + $0x24] sm:$0xf]
      %v949 = vld [vmem:[%s938 + $0x28] sm:$0xf]
      %v950 = vld [vmem:[%s938 + $0x2c] sm:$0xf]
      %v951 = vld [vmem:[%s938 + $0x30] sm:$0xf]
      %v952 = vld [vmem:[%s938 + $0x34] sm:$0xf]
      %v953 = vld [vmem:[%s938 + $0x38] sm:$0xf]
      %v954 = vld [vmem:[%s938 + $0x3c] sm:$0xf]
      %v956 = vunpack.c.l.b16 %v937
      %v957 = vpack.c.b16 %v276, %v956
      %vm958 = vcmask 1046528
      %v959 = vrot.slane %v957, 1
      %v960 = vrot.slane %v311, 1
      %v961 = vsel %vm958, %v959, %v960
      %v962 = vrot.slane %v312, 1
      %v963 = vsel %vm958, %v960, %v962
      %v964 = vrot.slane %v313, 1
      %v965 = vsel %vm958, %v962, %v964
      %v966 = vrot.slane %v314, 1
      %v967 = vsel %vm958, %v964, %v966
      %v968 = vrot.slane %v315, 1
      %v969 = vsel %vm958, %v966, %v968
      %v970 = vrot.slane %v316, 1
      %v971 = vsel %vm958, %v968, %v970
      %v972 = vrot.slane %v317, 1
      %v973 = vsel %vm958, %v970, %v972
      %v974 = vrot.slane %v318, 1
      %v975 = vsel %vm958, %v972, %v974
      %v976 = vrot.slane %v319, 1
      %v977 = vsel %vm958, %v974, %v976
      %v978 = vrot.slane %v320, 1
      %v979 = vsel %vm958, %v976, %v978
      %v980 = vrot.slane %v321, 1
      %v981 = vsel %vm958, %v978, %v980
      %v982 = vrot.slane %v322, 1
      %v983 = vsel %vm958, %v980, %v982
      %v984 = vrot.slane %v323, 1
      %v985 = vsel %vm958, %v982, %v984
      %v986 = vrot.slane %v324, 1
      %v987 = vsel %vm958, %v984, %v986
      %v988 = vrot.slane %v325, 1
      %v989 = vsel %vm958, %v986, %v988
      %v990 = vrot.slane %v326, 1
      %v991 = vsel %vm958, %v988, %v990
      %v992 = vrot.slane %v327, 1
      %v993 = vsel %vm958, %v990, %v992
      %v1027 = vunpack.c.l.b16 %v939
      %v1028 = vunpack.c.l.b16 %v940
      %v1029 = vunpack.c.l.b16 %v941
      %v1030 = vunpack.c.l.b16 %v942
      %v1031 = vunpack.c.l.b16 %v943
      %v1032 = vunpack.c.l.b16 %v944
      %v1033 = vunpack.c.l.b16 %v945
      %v1034 = vunpack.c.l.b16 %v946
      %v1035 = vunpack.c.l.b16 %v947
      %v1036 = vunpack.c.l.b16 %v948
      %v1037 = vunpack.c.l.b16 %v949
      %v1038 = vunpack.c.l.b16 %v950
      %v1039 = vunpack.c.l.b16 %v951
      %v1040 = vunpack.c.l.b16 %v952
      %v1041 = vunpack.c.l.b16 %v953
      %v1042 = vunpack.c.l.b16 %v954
      %v1043 = vpack.c.b16 %v1028, %v1027
      %v1044 = vpack.c.b16 %v1030, %v1029
      %v1045 = vpack.c.b16 %v1032, %v1031
      %v1046 = vpack.c.b16 %v1034, %v1033
      %v1047 = vpack.c.b16 %v1036, %v1035
      %v1048 = vpack.c.b16 %v1038, %v1037
      %v1049 = vpack.c.b16 %v1040, %v1039
      %v1050 = vpack.c.b16 %v1042, %v1041
      %1059 = vmatprep.subr.bf16.mxu0 0
      %1060 = vmatpush1.bf16.msra.mxu0 %v1043
      %1061 = vmatprep.subr.bf16.mxu0 0
      %1062 = vmatpush1.bf16.msra.mxu0 %v1044
      %1063 = vmatprep.subr.bf16.mxu0 0
      %1064 = vmatpush1.bf16.msra.mxu0 %v1045
      %1065 = vmatprep.subr.bf16.mxu0 0
      %1066 = vmatpush1.bf16.msra.mxu0 %v1046
      %1067 = vmatprep.subr.bf16.mxu0 0
      %1068 = vmatpush1.bf16.msra.mxu0 %v1047
      %1069 = vmatprep.subr.bf16.mxu0 0
      %1070 = vmatpush1.bf16.msra.mxu0 %v1048
      %1071 = vmatprep.subr.bf16.mxu0 0
      %1072 = vmatpush1.bf16.msra.mxu0 %v1049
      %1073 = vmatprep.subr.bf16.mxu0 0
      %1074 = vmatpush1.bf16.msra.mxu0 %v1050
      %1075 = vmatprep.subr.bf16.mxu0 0
      %1076 = vmatpush1.bf16.msra.mxu0 0
      %1077 = vmatprep.subr.bf16.mxu0 0
      %1078 = vmatpush1.bf16.msra.mxu0 0
      %1079 = vmatprep.subr.bf16.mxu0 0
      %1080 = vmatpush1.bf16.msra.mxu0 0
      %1081 = vmatprep.subr.bf16.mxu0 0
      %1082 = vmatpush1.bf16.msra.mxu0 0
      %1083 = vmatprep.subr.bf16.mxu0 0
      %1084 = vmatpush1.bf16.msra.mxu0 0
      %1085 = vmatprep.subr.bf16.mxu0 0
      %1086 = vmatpush1.bf16.msra.mxu0 0
      %1087 = vmatprep.subr.bf16.mxu0 0
      %1088 = vmatpush1.bf16.msra.mxu0 0
      %1089 = vmatprep.subr.bf16.mxu0 0
      %1090 = vmatpush1.bf16.msra.mxu0 0
      %1091 = vmatprep.mubr.bf16.mxu0 0
      %1092 = vmatmul.mubr.bf16.gmra.mrb[0].mxu0 %v961
      %v1093 = vpop.f32.mrb[0].mxu0
      %v1094 = vadd.f32 0.0, %v1093
      %v1095 = vpop.f32.mrb[0].mxu0
      %v1096 = vpop.f32.mrb[0].mxu0
      %v1097 = vadd.f32 0.0, %v1096
      %v1098 = vpop.f32.mrb[0].mxu0
      %1099 = vmatprep.mubr.bf16.mxu0 0
      %1100 = vmatmul.mubr.bf16.gmra.mrb[0].mxu0 %v963
      %v1101 = vpop.f32.mrb[0].mxu0
      %v1102 = vadd.f32 0.0, %v1101
      %v1103 = vpop.f32.mrb[0].mxu0
      %v1104 = vpop.f32.mrb[0].mxu0
      %v1105 = vadd.f32 0.0, %v1104
      %v1106 = vpop.f32.mrb[0].mxu0
      %1107 = vmatprep.mubr.bf16.mxu0 0
      %1108 = vmatmul.mubr.bf16.gmra.mrb[0].mxu0 %v965
      %v1109 = vpop.f32.mrb[0].mxu0
      %v1110 = vadd.f32 0.0, %v1109
      %v1111 = vpop.f32.mrb[0].mxu0
      %v1112 = vpop.f32.mrb[0].mxu0
      %v1113 = vadd.f32 0.0, %v1112
      %v1114 = vpop.f32.mrb[0].mxu0
      %1115 = vmatprep.mubr.bf16.mxu0 0
      %1116 = vmatmul.mubr.bf16.gmra.mrb[0].mxu0 %v967
      %v1117 = vpop.f32.mrb[0].mxu0
      %v1118 = vadd.f32 0.0, %v1117
      %v1119 = vpop.f32.mrb[0].mxu0
      %v1120 = vpop.f32.mrb[0].mxu0
      %v1121 = vadd.f32 0.0, %v1120
      %v1122 = vpop.f32.mrb[0].mxu0
      %1123 = vmatprep.mubr.bf16.mxu0 0
      %1124 = vmatmul.mubr.bf16.gmra.mrb[0].mxu0 %v969
      %v1125 = vpop.f32.mrb[0].mxu0
      %v1126 = vadd.f32 0.0, %v1125
      %v1127 = vpop.f32.mrb[0].mxu0
      %v1128 = vpop.f32.mrb[0].mxu0
      %v1129 = vadd.f32 0.0, %v1128
      %v1130 = vpop.f32.mrb[0].mxu0
      %1131 = vmatprep.mubr.bf16.mxu0 0
      %1132 = vmatmul.mubr.bf16.gmra.mrb[0].mxu0 %v971
      %v1133 = vpop.f32.mrb[0].mxu0
      %v1134 = vadd.f32 0.0, %v1133
      %v1135 = vpop.f32.mrb[0].mxu0
      %v1136 = vpop.f32.mrb[0].mxu0
      %v1137 = vadd.f32 0.0, %v1136
      %v1138 = vpop.f32.mrb[0].mxu0
      %1139 = vmatprep.mubr.bf16.mxu0 0
      %1140 = vmatmul.mubr.bf16.gmra.mrb[0].mxu0 %v973
      %v1141 = vpop.f32.mrb[0].mxu0
      %v1142 = vadd.f32 0.0, %v1141
      %v1143 = vpop.f32.mrb[0].mxu0
      %v1144 = vpop.f32.mrb[0].mxu0
      %v1145 = vadd.f32 0.0, %v1144
      %v1146 = vpop.f32.mrb[0].mxu0
      %1147 = vmatprep.mubr.bf16.mxu0 0
      %1148 = vmatmul.mubr.bf16.gmra.mrb[0].mxu0 %v975
      %v1149 = vpop.f32.mrb[0].mxu0
      %v1150 = vadd.f32 0.0, %v1149
      %v1151 = vpop.f32.mrb[0].mxu0
      %v1152 = vpop.f32.mrb[0].mxu0
      %v1153 = vadd.f32 0.0, %v1152
      %v1154 = vpop.f32.mrb[0].mxu0
      %1155 = vmatprep.mubr.bf16.mxu0 0
      %1156 = vmatmul.mubr.bf16.gmra.mrb[0].mxu0 %v977
      %v1157 = vpop.f32.mrb[0].mxu0
      %v1158 = vadd.f32 0.0, %v1157
      %v1159 = vpop.f32.mrb[0].mxu0
      %v1160 = vpop.f32.mrb[0].mxu0
      %v1161 = vadd.f32 0.0, %v1160
      %v1162 = vpop.f32.mrb[0].mxu0
      %1163 = vmatprep.mubr.bf16.mxu0 0
      %1164 = vmatmul.mubr.bf16.gmra.mrb[0].mxu0 %v979
      %v1165 = vpop.f32.mrb[0].mxu0
      %v1166 = vadd.f32 0.0, %v1165
      %v1167 = vpop.f32.mrb[0].mxu0
      %v1168 = vpop.f32.mrb[0].mxu0
      %v1169 = vadd.f32 0.0, %v1168
      %v1170 = vpop.f32.mrb[0].mxu0
      %1171 = vmatprep.mubr.bf16.mxu0 0
      %1172 = vmatmul.mubr.bf16.gmra.mrb[0].mxu0 %v981
      %v1173 = vpop.f32.mrb[0].mxu0
      %v1174 = vadd.f32 0.0, %v1173
      %v1175 = vpop.f32.mrb[0].mxu0
      %v1176 = vpop.f32.mrb[0].mxu0
      %v1177 = vadd.f32 0.0, %v1176
      %v1178 = vpop.f32.mrb[0].mxu0
      %1179 = vmatprep.mubr.bf16.mxu0 0
      %1180 = vmatmul.mubr.bf16.gmra.mrb[0].mxu0 %v983
      %v1181 = vpop.f32.mrb[0].mxu0
      %v1182 = vadd.f32 0.0, %v1181
      %v1183 = vpop.f32.mrb[0].mxu0
      %v1184 = vpop.f32.mrb[0].mxu0
      %v1185 = vadd.f32 0.0, %v1184
      %v1186 = vpop.f32.mrb[0].mxu0
      %1187 = vmatprep.mubr.bf16.mxu0 0
      %1188 = vmatmul.mubr.bf16.gmra.mrb[0].mxu0 %v985
      %v1189 = vpop.f32.mrb[0].mxu0
      %v1190 = vadd.f32 0.0, %v1189
      %v1191 = vpop.f32.mrb[0].mxu0
      %v1192 = vpop.f32.mrb[0].mxu0
      %v1193 = vadd.f32 0.0, %v1192
      %v1194 = vpop.f32.mrb[0].mxu0
      %1195 = vmatprep.mubr.bf16.mxu0 0
      %1196 = vmatmul.mubr.bf16.gmra.mrb[0].mxu0 %v987
      %v1197 = vpop.f32.mrb[0].mxu0
      %v1198 = vadd.f32 0.0, %v1197
      %v1199 = vpop.f32.mrb[0].mxu0
      %v1200 = vpop.f32.mrb[0].mxu0
      %v1201 = vadd.f32 0.0, %v1200
      %v1202 = vpop.f32.mrb[0].mxu0
      %1203 = vmatprep.mubr.bf16.mxu0 0
      %1204 = vmatmul.mubr.bf16.gmra.mrb[0].mxu0 %v989
      %v1205 = vpop.f32.mrb[0].mxu0
      %v1206 = vadd.f32 0.0, %v1205
      %v1207 = vpop.f32.mrb[0].mxu0
      %v1208 = vpop.f32.mrb[0].mxu0
      %v1209 = vadd.f32 0.0, %v1208
      %v1210 = vpop.f32.mrb[0].mxu0
      %1211 = vmatprep.mubr.bf16.mxu0 0
      %1212 = vmatmul.mubr.bf16.gmra.mrb[0].mxu0 %v991
      %v1213 = vpop.f32.mrb[0].mxu0
      %v1214 = vadd.f32 0.0, %v1213
      %v1215 = vpop.f32.mrb[0].mxu0
      %v1216 = vpop.f32.mrb[0].mxu0
      %v1217 = vadd.f32 0.0, %v1216
      %v1218 = vpop.f32.mrb[0].mxu0
      %1219 = vmatprep.mubr.bf16.mxu0 0
      %1220 = vmatmul.mubr.bf16.gmra.mrb[0].mxu0 %v993
      %v1221 = vpop.f32.mrb[0].mxu0
      %v1222 = vadd.f32 0.0, %v1221
      %v1223 = vpop.f32.mrb[0].mxu0
      %v1224 = vpop.f32.mrb[0].mxu0
      %v1225 = vadd.f32 0.0, %v1224
      %v1226 = vpop.f32.mrb[0].mxu0
      %1227 = vdwg.mxu0
      %v1228 = vadd.f32 %v803, %v1094
      %v1229 = vadd.f32 %v806, %v1097
      %v1230 = vadd.f32 %v811, %v1102
      %v1231 = vadd.f32 %v814, %v1105
      %v1232 = vadd.f32 %v819, %v1110
      %v1233 = vadd.f32 %v822, %v1113
      %v1234 = vadd.f32 %v827, %v1118
      %v1235 = vadd.f32 %v830, %v1121
      %v1236 = vadd.f32 %v835, %v1126
      %v1237 = vadd.f32 %v838, %v1129
      %v1238 = vadd.f32 %v843, %v1134
      %v1239 = vadd.f32 %v846, %v1137
      %v1240 = vadd.f32 %v851, %v1142
      %v1241 = vadd.f32 %v854, %v1145
      %v1242 = vadd.f32 %v859, %v1150
      %v1243 = vadd.f32 %v862, %v1153
      %v1244 = vadd.f32 %v867, %v1158
      %v1245 = vadd.f32 %v870, %v1161
      %v1246 = vadd.f32 %v875, %v1166
      %v1247 = vadd.f32 %v878, %v1169
      %v1248 = vadd.f32 %v883, %v1174
      %v1249 = vadd.f32 %v886, %v1177
      %v1250 = vadd.f32 %v891, %v1182
      %v1251 = vadd.f32 %v894, %v1185
      %v1252 = vadd.f32 %v899, %v1190
      %v1253 = vadd.f32 %v902, %v1193
      %v1254 = vadd.f32 %v907, %v1198
      %v1255 = vadd.f32 %v910, %v1201
      %v1256 = vadd.f32 %v915, %v1206
      %v1257 = vadd.f32 %v918, %v1209
      %v1258 = vadd.f32 %v923, %v1214
      %v1259 = vadd.f32 %v926, %v1217
      %v1260 = vadd.f32 %v931, %v1222
      %v1261 = vadd.f32 %v934, %v1225
      %v1262 = vld [vmem:[%s165 + $0x8] sm:$0xf]
      %v1263 = vld [vmem:[%s165 + $0xc] sm:$0xf]
      %v1264 = vld [vmem:[%s165 + $0x10] sm:$0xf]
      %v1265 = vld [vmem:[%s165 + $0x14] sm:$0xf]
      %v1266 = vld [vmem:[%s165 + $0x18] sm:$0xf]
      %v1267 = vld [vmem:[%s165 + $0x1c] sm:$0xf]
      %v1268 = vld [vmem:[%s165 + $0x20] sm:$0xf]
      %v1269 = vld [vmem:[%s165 + $0x24] sm:$0xf]
      %v1270 = vld [vmem:[%s165 + $0x28] sm:$0xf]
      %v1271 = vld [vmem:[%s165 + $0x2c] sm:$0xf]
      %v1272 = vld [vmem:[%s165 + $0x30] sm:$0xf]
      %v1273 = vld [vmem:[%s165 + $0x34] sm:$0xf]
      %v1274 = vld [vmem:[%s165 + $0x38] sm:$0xf]
      %v1275 = vld [vmem:[%s165 + $0x3c] sm:$0xf]
      %v1276 = vld [vmem:[%s165 + $0x40] sm:$0xf]
      %v1277 = vld [vmem:[%s165 + $0x44] sm:$0xf]
      %v1278 = vld [vmem:[%s165 + $0x48] sm:$0xf]
      %v1279 = vld [vmem:[%s165 + $0x4c] sm:$0xf]
      %v1280 = vld [vmem:[%s165 + $0x50] sm:$0xf]
      %v1281 = vld [vmem:[%s165 + $0x54] sm:$0xf]
      %v1282 = vld [vmem:[%s165 + $0x58] sm:$0xf]
      %v1283 = vld [vmem:[%s165 + $0x5c] sm:$0xf]
      %v1284 = vld [vmem:[%s165 + $0x60] sm:$0xf]
      %v1285 = vld [vmem:[%s165 + $0x64] sm:$0xf]
      %v1286 = vld [vmem:[%s165 + $0x68] sm:$0xf]
      %v1287 = vld [vmem:[%s165 + $0x6c] sm:$0xf]
      %v1288 = vld [vmem:[%s165 + $0x70] sm:$0xf]
      %v1289 = vld [vmem:[%s165 + $0x74] sm:$0xf]
      %v1290 = vld [vmem:[%s165 + $0x78] sm:$0xf]
      %v1291 = vld [vmem:[%s165 + $0x7c] sm:$0xf]
      %v1292 = vld [vmem:[%s165 + $0x80] sm:$0xf]
      %v1293 = vld [vmem:[%s165 + $0x84] sm:$0xf]
      %v1294 = vld [vmem:[%s165 + $0x88] sm:$0xf]
      %v1295 = vld [vmem:[%s165 + $0x8c] sm:$0xf]
      %v1296 = vld [vmem:[%s165 + $0x90] sm:$0x1]
      %s1297 = scalar_lea.vmem %s1, 192
      %v1298 = vld [vmem:[%s1297] sm:$0xf]
      %v1299 = vld [vmem:[%s1297 + $0x4] sm:$0xf]
      %v1300 = vld [vmem:[%s1297 + $0x8] sm:$0xf]
      %v1301 = vld [vmem:[%s1297 + $0xc] sm:$0xf]
      %v1302 = vld [vmem:[%s1297 + $0x10] sm:$0xf]
      %v1303 = vld [vmem:[%s1297 + $0x14] sm:$0xf]
      %v1304 = vld [vmem:[%s1297 + $0x18] sm:$0xf]
      %v1305 = vld [vmem:[%s1297 + $0x1c] sm:$0xf]
      %v1306 = vld [vmem:[%s1297 + $0x20] sm:$0xf]
      %v1307 = vld [vmem:[%s1297 + $0x24] sm:$0xf]
      %v1308 = vld [vmem:[%s1297 + $0x28] sm:$0xf]
      %v1309 = vld [vmem:[%s1297 + $0x2c] sm:$0xf]
      %v1310 = vld [vmem:[%s1297 + $0x30] sm:$0xf]
      %v1311 = vld [vmem:[%s1297 + $0x34] sm:$0xf]
      %v1312 = vld [vmem:[%s1297 + $0x38] sm:$0xf]
      %v1313 = vld [vmem:[%s1297 + $0x3c] sm:$0xf]
      %v1349 = vunpack.c.l.b16 %v1262
      %v1350 = vunpack.c.l.b16 %v1263
      %v1351 = vunpack.c.l.b16 %v1264
      %v1352 = vunpack.c.l.b16 %v1265
      %v1353 = vunpack.c.l.b16 %v1266
      %v1354 = vunpack.c.l.b16 %v1267
      %v1355 = vunpack.c.l.b16 %v1268
      %v1356 = vunpack.c.l.b16 %v1269
      %v1357 = vunpack.c.l.b16 %v1270
      %v1358 = vunpack.c.l.b16 %v1271
      %v1359 = vunpack.c.l.b16 %v1272
      %v1360 = vunpack.c.l.b16 %v1273
      %v1361 = vunpack.c.l.b16 %v1274
      %v1362 = vunpack.c.l.b16 %v1275
      %v1363 = vunpack.c.l.b16 %v1276
      %v1364 = vunpack.c.l.b16 %v1277
      %v1365 = vunpack.c.l.b16 %v1278
      %v1366 = vunpack.c.l.b16 %v1279
      %v1367 = vunpack.c.l.b16 %v1280
      %v1368 = vunpack.c.l.b16 %v1281
      %v1369 = vunpack.c.l.b16 %v1282
      %v1370 = vunpack.c.l.b16 %v1283
      %v1371 = vunpack.c.l.b16 %v1284
      %v1372 = vunpack.c.l.b16 %v1285
      %v1373 = vunpack.c.l.b16 %v1286
      %v1374 = vunpack.c.l.b16 %v1287
      %v1375 = vunpack.c.l.b16 %v1288
      %v1376 = vunpack.c.l.b16 %v1289
      %v1377 = vunpack.c.l.b16 %v1290
      %v1378 = vunpack.c.l.b16 %v1291
      %v1379 = vunpack.c.l.b16 %v1292
      %v1380 = vunpack.c.l.b16 %v1293
      %v1381 = vunpack.c.l.b16 %v1294
      %v1382 = vunpack.c.l.b16 %v1295
      %v1383 = vunpack.c.l.b16 %v1296
      %v1384 = vpack.c.b16 %v1350, %v1349
      %v1385 = vpack.c.b16 %v1352, %v1351
      %v1386 = vpack.c.b16 %v1354, %v1353
      %v1387 = vpack.c.b16 %v1356, %v1355
      %v1388 = vpack.c.b16 %v1358, %v1357
      %v1389 = vpack.c.b16 %v1360, %v1359
      %v1390 = vpack.c.b16 %v1362, %v1361
      %v1391 = vpack.c.b16 %v1364, %v1363
      %v1392 = vpack.c.b16 %v1366, %v1365
      %v1393 = vpack.c.b16 %v1368, %v1367
      %v1394 = vpack.c.b16 %v1370, %v1369
      %v1395 = vpack.c.b16 %v1372, %v1371
      %v1396 = vpack.c.b16 %v1374, %v1373
      %v1397 = vpack.c.b16 %v1376, %v1375
      %v1398 = vpack.c.b16 %v1378, %v1377
      %v1399 = vpack.c.b16 %v1380, %v1379
      %v1400 = vpack.c.b16 %v1382, %v1381
      %v1401 = vpack.c.b16 %v1383, %v1383
      %v1403 = vshrl.u32 %v1384, 16
      %v1405 = vshll.u32 %v1384, 16
      %v1407 = vrot.slane %v1405, 1
      %v1408 = vor.u32 %v1403, %v1407
      %v1410 = vshll.u32 %v1385, 16
      %v1412 = vrot.slane %v1410, 1
      %v1413 = vsel %vm328, %v1408, %v1412
      %v1414 = vshrl.u32 %v1385, 16
      %v1416 = vor.u32 %v1414, %v1412
      %v1418 = vshll.u32 %v1386, 16
      %v1420 = vrot.slane %v1418, 1
      %v1421 = vsel %vm328, %v1416, %v1420
      %v1422 = vshrl.u32 %v1386, 16
      %v1424 = vor.u32 %v1422, %v1420
      %v1426 = vshll.u32 %v1387, 16
      %v1428 = vrot.slane %v1426, 1
      %v1429 = vsel %vm328, %v1424, %v1428
      %v1430 = vshrl.u32 %v1387, 16
      %v1432 = vor.u32 %v1430, %v1428
      %v1434 = vshll.u32 %v1388, 16
      %v1436 = vrot.slane %v1434, 1
      %v1437 = vsel %vm328, %v1432, %v1436
      %v1438 = vshrl.u32 %v1388, 16
      %v1440 = vor.u32 %v1438, %v1436
      %v1442 = vshll.u32 %v1389, 16
      %v1444 = vrot.slane %v1442, 1
      %v1445 = vsel %vm328, %v1440, %v1444
      %v1446 = vshrl.u32 %v1389, 16
      %v1448 = vor.u32 %v1446, %v1444
      %v1450 = vshll.u32 %v1390, 16
      %v1452 = vrot.slane %v1450, 1
      %v1453 = vsel %vm328, %v1448, %v1452
      %v1454 = vshrl.u32 %v1390, 16
      %v1456 = vor.u32 %v1454, %v1452
      %v1458 = vshll.u32 %v1391, 16
      %v1460 = vrot.slane %v1458, 1
      %v1461 = vsel %vm328, %v1456, %v1460
      %v1462 = vshrl.u32 %v1391, 16
      %v1464 = vor.u32 %v1462, %v1460
      %v1466 = vshll.u32 %v1392, 16
      %v1468 = vrot.slane %v1466, 1
      %v1469 = vsel %vm328, %v1464, %v1468
      %v1470 = vshrl.u32 %v1392, 16
      %v1472 = vor.u32 %v1470, %v1468
      %v1474 = vshll.u32 %v1393, 16
      %v1476 = vrot.slane %v1474, 1
      %v1477 = vsel %vm328, %v1472, %v1476
      %v1478 = vshrl.u32 %v1393, 16
      %v1480 = vor.u32 %v1478, %v1476
      %v1482 = vshll.u32 %v1394, 16
      %v1484 = vrot.slane %v1482, 1
      %v1485 = vsel %vm328, %v1480, %v1484
      %v1486 = vshrl.u32 %v1394, 16
      %v1488 = vor.u32 %v1486, %v1484
      %v1490 = vshll.u32 %v1395, 16
      %v1492 = vrot.slane %v1490, 1
      %v1493 = vsel %vm328, %v1488, %v1492
      %v1494 = vshrl.u32 %v1395, 16
      %v1496 = vor.u32 %v1494, %v1492
      %v1498 = vshll.u32 %v1396, 16
      %v1500 = vrot.slane %v1498, 1
      %v1501 = vsel %vm328, %v1496, %v1500
      %v1502 = vshrl.u32 %v1396, 16
      %v1504 = vor.u32 %v1502, %v1500
      %v1506 = vshll.u32 %v1397, 16
      %v1508 = vrot.slane %v1506, 1
      %v1509 = vsel %vm328, %v1504, %v1508
      %v1510 = vshrl.u32 %v1397, 16
      %v1512 = vor.u32 %v1510, %v1508
      %v1514 = vshll.u32 %v1398, 16
      %v1516 = vrot.slane %v1514, 1
      %v1517 = vsel %vm328, %v1512, %v1516
      %v1518 = vshrl.u32 %v1398, 16
      %v1520 = vor.u32 %v1518, %v1516
      %v1522 = vshll.u32 %v1399, 16
      %v1524 = vrot.slane %v1522, 1
      %v1525 = vsel %vm328, %v1520, %v1524
      %v1526 = vshrl.u32 %v1399, 16
      %v1528 = vor.u32 %v1526, %v1524
      %v1530 = vshll.u32 %v1400, 16
      %v1532 = vrot.slane %v1530, 1
      %v1533 = vsel %vm328, %v1528, %v1532
      %v1534 = vshrl.u32 %v1400, 16
      %v1536 = vor.u32 %v1534, %v1532
      %v1538 = vshll.u32 %v1401, 16
      %v1540 = vrot.slane %v1538, 1
      %v1541 = vsel %vm328, %v1536, %v1540
      %v1575 = vunpack.c.l.b16 %v1298
      %v1576 = vunpack.c.l.b16 %v1299
      %v1577 = vunpack.c.l.b16 %v1300
      %v1578 = vunpack.c.l.b16 %v1301
      %v1579 = vunpack.c.l.b16 %v1302
      %v1580 = vunpack.c.l.b16 %v1303
      %v1581 = vunpack.c.l.b16 %v1304
      %v1582 = vunpack.c.l.b16 %v1305
      %v1583 = vunpack.c.l.b16 %v1306
      %v1584 = vunpack.c.l.b16 %v1307
      %v1585 = vunpack.c.l.b16 %v1308
      %v1586 = vunpack.c.l.b16 %v1309
      %v1587 = vunpack.c.l.b16 %v1310
      %v1588 = vunpack.c.l.b16 %v1311
      %v1589 = vunpack.c.l.b16 %v1312
      %v1590 = vunpack.c.l.b16 %v1313
      %v1591 = vpack.c.b16 %v1576, %v1575
      %v1592 = vpack.c.b16 %v1578, %v1577
      %v1593 = vpack.c.b16 %v1580, %v1579
      %v1594 = vpack.c.b16 %v1582, %v1581
      %v1595 = vpack.c.b16 %v1584, %v1583
      %v1596 = vpack.c.b16 %v1586, %v1585
      %v1597 = vpack.c.b16 %v1588, %v1587
      %v1598 = vpack.c.b16 %v1590, %v1589
      %1607 = vmatprep.subr.bf16.mxu0 0
      %1608 = vmatpush1.bf16.msra.mxu0 %v1591
      %1609 = vmatprep.subr.bf16.mxu0 0
      %1610 = vmatpush1.bf16.msra.mxu0 %v1592
      %1611 = vmatprep.subr.bf16.mxu0 0
      %1612 = vmatpush1.bf16.msra.mxu0 %v1593
      %1613 = vmatprep.subr.bf16.mxu0 0
      %1614 = vmatpush1.bf16.msra.mxu0 %v1594
      %1615 = vmatprep.subr.bf16.mxu0 0
      %1616 = vmatpush1.bf16.msra.mxu0 %v1595
      %1617 = vmatprep.subr.bf16.mxu0 0
      %1618 = vmatpush1.bf16.msra.mxu0 %v1596
      %1619 = vmatprep.subr.bf16.mxu0 0
      %1620 = vmatpush1.bf16.msra.mxu0 %v1597
      %1621 = vmatprep.subr.bf16.mxu0 0
      %1622 = vmatpush1.bf16.msra.mxu0 %v1598
      %1623 = vmatprep.subr.bf16.mxu0 0
      %1624 = vmatpush1.bf16.msra.mxu0 0
      %1625 = vmatprep.subr.bf16.mxu0 0
      %1626 = vmatpush1.bf16.msra.mxu0 0
      %1627 = vmatprep.subr.bf16.mxu0 0
      %1628 = vmatpush1.bf16.msra.mxu0 0
      %1629 = vmatprep.subr.bf16.mxu0 0
      %1630 = vmatpush1.bf16.msra.mxu0 0
      %1631 = vmatprep.subr.bf16.mxu0 0
      %1632 = vmatpush1.bf16.msra.mxu0 0
      %1633 = vmatprep.subr.bf16.mxu0 0
      %1634 = vmatpush1.bf16.msra.mxu0 0
      %1635 = vmatprep.subr.bf16.mxu0 0
      %1636 = vmatpush1.bf16.msra.mxu0 0
      %1637 = vmatprep.subr.bf16.mxu0 0
      %1638 = vmatpush1.bf16.msra.mxu0 0
      %1639 = vmatprep.mubr.bf16.mxu0 0
      %1640 = vmatmul.mubr.bf16.gmra.mrb[0].mxu0 %v1413
      %v1641 = vpop.f32.mrb[0].mxu0
      %v1642 = vadd.f32 0.0, %v1641
      %v1643 = vpop.f32.mrb[0].mxu0
      %v1644 = vpop.f32.mrb[0].mxu0
      %v1645 = vadd.f32 0.0, %v1644
      %v1646 = vpop.f32.mrb[0].mxu0
      %1647 = vmatprep.mubr.bf16.mxu0 0
      %1648 = vmatmul.mubr.bf16.gmra.mrb[0].mxu0 %v1421
      %v1649 = vpop.f32.mrb[0].mxu0
      %v1650 = vadd.f32 0.0, %v1649
      %v1651 = vpop.f32.mrb[0].mxu0
      %v1652 = vpop.f32.mrb[0].mxu0
      %v1653 = vadd.f32 0.0, %v1652
      %v1654 = vpop.f32.mrb[0].mxu0
      %1655 = vmatprep.mubr.bf16.mxu0 0
      %1656 = vmatmul.mubr.bf16.gmra.mrb[0].mxu0 %v1429
      %v1657 = vpop.f32.mrb[0].mxu0
      %v1658 = vadd.f32 0.0, %v1657
      %v1659 = vpop.f32.mrb[0].mxu0
      %v1660 = vpop.f32.mrb[0].mxu0
      %v1661 = vadd.f32 0.0, %v1660
      %v1662 = vpop.f32.mrb[0].mxu0
      %1663 = vmatprep.mubr.bf16.mxu0 0
      %1664 = vmatmul.mubr.bf16.gmra.mrb[0].mxu0 %v1437
      %v1665 = vpop.f32.mrb[0].mxu0
      %v1666 = vadd.f32 0.0, %v1665
      %v1667 = vpop.f32.mrb[0].mxu0
      %v1668 = vpop.f32.mrb[0].mxu0
      %v1669 = vadd.f32 0.0, %v1668
      %v1670 = vpop.f32.mrb[0].mxu0
      %1671 = vmatprep.mubr.bf16.mxu0 0
      %1672 = vmatmul.mubr.bf16.gmra.mrb[0].mxu0 %v1445
      %v1673 = vpop.f32.mrb[0].mxu0
      %v1674 = vadd.f32 0.0, %v1673
      %v1675 = vpop.f32.mrb[0].mxu0
      %v1676 = vpop.f32.mrb[0].mxu0
      %v1677 = vadd.f32 0.0, %v1676
      %v1678 = vpop.f32.mrb[0].mxu0
      %1679 = vmatprep.mubr.bf16.mxu0 0
      %1680 = vmatmul.mubr.bf16.gmra.mrb[0].mxu0 %v1453
      %v1681 = vpop.f32.mrb[0].mxu0
      %v1682 = vadd.f32 0.0, %v1681
      %v1683 = vpop.f32.mrb[0].mxu0
      %v1684 = vpop.f32.mrb[0].mxu0
      %v1685 = vadd.f32 0.0, %v1684
      %v1686 = vpop.f32.mrb[0].mxu0
      %1687 = vmatprep.mubr.bf16.mxu0 0
      %1688 = vmatmul.mubr.bf16.gmra.mrb[0].mxu0 %v1461
      %v1689 = vpop.f32.mrb[0].mxu0
      %v1690 = vadd.f32 0.0, %v1689
      %v1691 = vpop.f32.mrb[0].mxu0
      %v1692 = vpop.f32.mrb[0].mxu0
      %v1693 = vadd.f32 0.0, %v1692
      %v1694 = vpop.f32.mrb[0].mxu0
      %1695 = vmatprep.mubr.bf16.mxu0 0
      %1696 = vmatmul.mubr.bf16.gmra.mrb[0].mxu0 %v1469
      %v1697 = vpop.f32.mrb[0].mxu0
      %v1698 = vadd.f32 0.0, %v1697
      %v1699 = vpop.f32.mrb[0].mxu0
      %v1700 = vpop.f32.mrb[0].mxu0
      %v1701 = vadd.f32 0.0, %v1700
      %v1702 = vpop.f32.mrb[0].mxu0
      %1703 = vmatprep.mubr.bf16.mxu0 0
      %1704 = vmatmul.mubr.bf16.gmra.mrb[0].mxu0 %v1477
      %v1705 = vpop.f32.mrb[0].mxu0
      %v1706 = vadd.f32 0.0, %v1705
      %v1707 = vpop.f32.mrb[0].mxu0
      %v1708 = vpop.f32.mrb[0].mxu0
      %v1709 = vadd.f32 0.0, %v1708
      %v1710 = vpop.f32.mrb[0].mxu0
      %1711 = vmatprep.mubr.bf16.mxu0 0
      %1712 = vmatmul.mubr.bf16.gmra.mrb[0].mxu0 %v1485
      %v1713 = vpop.f32.mrb[0].mxu0
      %v1714 = vadd.f32 0.0, %v1713
      %v1715 = vpop.f32.mrb[0].mxu0
      %v1716 = vpop.f32.mrb[0].mxu0
      %v1717 = vadd.f32 0.0, %v1716
      %v1718 = vpop.f32.mrb[0].mxu0
      %1719 = vmatprep.mubr.bf16.mxu0 0
      %1720 = vmatmul.mubr.bf16.gmra.mrb[0].mxu0 %v1493
      %v1721 = vpop.f32.mrb[0].mxu0
      %v1722 = vadd.f32 0.0, %v1721
      %v1723 = vpop.f32.mrb[0].mxu0
      %v1724 = vpop.f32.mrb[0].mxu0
      %v1725 = vadd.f32 0.0, %v1724
      %v1726 = vpop.f32.mrb[0].mxu0
      %1727 = vmatprep.mubr.bf16.mxu0 0
      %1728 = vmatmul.mubr.bf16.gmra.mrb[0].mxu0 %v1501
      %v1729 = vpop.f32.mrb[0].mxu0
      %v1730 = vadd.f32 0.0, %v1729
      %v1731 = vpop.f32.mrb[0].mxu0
      %v1732 = vpop.f32.mrb[0].mxu0
      %v1733 = vadd.f32 0.0, %v1732
      %v1734 = vpop.f32.mrb[0].mxu0
      %1735 = vmatprep.mubr.bf16.mxu0 0
      %1736 = vmatmul.mubr.bf16.gmra.mrb[0].mxu0 %v1509
      %v1737 = vpop.f32.mrb[0].mxu0
      %v1738 = vadd.f32 0.0, %v1737
      %v1739 = vpop.f32.mrb[0].mxu0
      %v1740 = vpop.f32.mrb[0].mxu0
      %v1741 = vadd.f32 0.0, %v1740
      %v1742 = vpop.f32.mrb[0].mxu0
      %1743 = vmatprep.mubr.bf16.mxu0 0
      %1744 = vmatmul.mubr.bf16.gmra.mrb[0].mxu0 %v1517
      %v1745 = vpop.f32.mrb[0].mxu0
      %v1746 = vadd.f32 0.0, %v1745
      %v1747 = vpop.f32.mrb[0].mxu0
      %v1748 = vpop.f32.mrb[0].mxu0
      %v1749 = vadd.f32 0.0, %v1748
      %v1750 = vpop.f32.mrb[0].mxu0
      %1751 = vmatprep.mubr.bf16.mxu0 0
      %1752 = vmatmul.mubr.bf16.gmra.mrb[0].mxu0 %v1525
      %v1753 = vpop.f32.mrb[0].mxu0
      %v1754 = vadd.f32 0.0, %v1753
      %v1755 = vpop.f32.mrb[0].mxu0
      %v1756 = vpop.f32.mrb[0].mxu0
      %v1757 = vadd.f32 0.0, %v1756
      %v1758 = vpop.f32.mrb[0].mxu0
      %1759 = vmatprep.mubr.bf16.mxu0 0
      %1760 = vmatmul.mubr.bf16.gmra.mrb[0].mxu0 %v1533
      %v1761 = vpop.f32.mrb[0].mxu0
      %v1762 = vadd.f32 0.0, %v1761
      %v1763 = vpop.f32.mrb[0].mxu0
      %v1764 = vpop.f32.mrb[0].mxu0
      %v1765 = vadd.f32 0.0, %v1764
      %v1766 = vpop.f32.mrb[0].mxu0
      %1767 = vmatprep.mubr.bf16.mxu0 0
      %1768 = vmatmul.mubr.bf16.gmra.mrb[0].mxu0 %v1541
      %v1769 = vpop.f32.mrb[0].mxu0
      %v1770 = vadd.f32 0.0, %v1769
      %v1771 = vpop.f32.mrb[0].mxu0
      %v1772 = vpop.f32.mrb[0].mxu0
      %v1773 = vadd.f32 0.0, %v1772
      %v1774 = vpop.f32.mrb[0].mxu0
      %1775 = vdwg.mxu0
      %v1776 = vadd.f32 %v1228, %v1642
      %v1777 = vadd.f32 %v1229, %v1645
      %v1778 = vadd.f32 %v1230, %v1650
      %v1779 = vadd.f32 %v1231, %v1653
      %v1780 = vadd.f32 %v1232, %v1658
      %v1781 = vadd.f32 %v1233, %v1661
      %v1782 = vadd.f32 %v1234, %v1666
      %v1783 = vadd.f32 %v1235, %v1669
      %v1784 = vadd.f32 %v1236, %v1674
      %v1785 = vadd.f32 %v1237, %v1677
      %v1786 = vadd.f32 %v1238, %v1682
      %v1787 = vadd.f32 %v1239, %v1685
      %v1788 = vadd.f32 %v1240, %v1690
      %v1789 = vadd.f32 %v1241, %v1693
      %v1790 = vadd.f32 %v1242, %v1698
      %v1791 = vadd.f32 %v1243, %v1701
      %v1792 = vadd.f32 %v1244, %v1706
      %v1793 = vadd.f32 %v1245, %v1709
      %v1794 = vadd.f32 %v1246, %v1714
      %v1795 = vadd.f32 %v1247, %v1717
      %v1796 = vadd.f32 %v1248, %v1722
      %v1797 = vadd.f32 %v1249, %v1725
      %v1798 = vadd.f32 %v1250, %v1730
      %v1799 = vadd.f32 %v1251, %v1733
      %v1800 = vadd.f32 %v1252, %v1738
      %v1801 = vadd.f32 %v1253, %v1741
      %v1802 = vadd.f32 %v1254, %v1746
      %v1803 = vadd.f32 %v1255, %v1749
      %v1804 = vadd.f32 %v1256, %v1754
      %v1805 = vadd.f32 %v1257, %v1757
      %v1806 = vadd.f32 %v1258, %v1762
      %v1807 = vadd.f32 %v1259, %v1765
      %v1808 = vadd.f32 %v1260, %v1770
      %v1809 = vadd.f32 %v1261, %v1773
      %v1810 = vld [vmem:[%s165 + $0x8] sm:$0xe]
      %s1811 = scalar_lea.vmem %s1, 256
      %v1812 = vld [vmem:[%s1811] sm:$0xf]
      %v1813 = vld [vmem:[%s1811 + $0x4] sm:$0xf]
      %v1814 = vld [vmem:[%s1811 + $0x8] sm:$0xf]
      %v1815 = vld [vmem:[%s1811 + $0xc] sm:$0xf]
      %v1816 = vld [vmem:[%s1811 + $0x10] sm:$0xf]
      %v1817 = vld [vmem:[%s1811 + $0x14] sm:$0xf]
      %v1818 = vld [vmem:[%s1811 + $0x18] sm:$0xf]
      %v1819 = vld [vmem:[%s1811 + $0x1c] sm:$0xf]
      %v1820 = vld [vmem:[%s1811 + $0x20] sm:$0xf]
      %v1821 = vld [vmem:[%s1811 + $0x24] sm:$0xf]
      %v1822 = vld [vmem:[%s1811 + $0x28] sm:$0xf]
      %v1823 = vld [vmem:[%s1811 + $0x2c] sm:$0xf]
      %v1824 = vld [vmem:[%s1811 + $0x30] sm:$0xf]
      %v1825 = vld [vmem:[%s1811 + $0x34] sm:$0xf]
      %v1826 = vld [vmem:[%s1811 + $0x38] sm:$0xf]
      %v1827 = vld [vmem:[%s1811 + $0x3c] sm:$0xf]
      %v1829 = vunpack.c.l.b16 %v1810
      %v1830 = vpack.c.b16 %v1350, %v1829
      %v1831 = vrot.slane %v1830, 1
      %v1832 = vrot.slane %v1385, 1
      %v1833 = vsel %vm958, %v1831, %v1832
      %v1834 = vrot.slane %v1386, 1
      %v1835 = vsel %vm958, %v1832, %v1834
      %v1836 = vrot.slane %v1387, 1
      %v1837 = vsel %vm958, %v1834, %v1836
      %v1838 = vrot.slane %v1388, 1
      %v1839 = vsel %vm958, %v1836, %v1838
      %v1840 = vrot.slane %v1389, 1
      %v1841 = vsel %vm958, %v1838, %v1840
      %v1842 = vrot.slane %v1390, 1
      %v1843 = vsel %vm958, %v1840, %v1842
      %v1844 = vrot.slane %v1391, 1
      %v1845 = vsel %vm958, %v1842, %v1844
      %v1846 = vrot.slane %v1392, 1
      %v1847 = vsel %vm958, %v1844, %v1846
      %v1848 = vrot.slane %v1393, 1
      %v1849 = vsel %vm958, %v1846, %v1848
      %v1850 = vrot.slane %v1394, 1
      %v1851 = vsel %vm958, %v1848, %v1850
      %v1852 = vrot.slane %v1395, 1
      %v1853 = vsel %vm958, %v1850, %v1852
      %v1854 = vrot.slane %v1396, 1
      %v1855 = vsel %vm958, %v1852, %v1854
      %v1856 = vrot.slane %v1397, 1
      %v1857 = vsel %vm958, %v1854, %v1856
      %v1858 = vrot.slane %v1398, 1
      %v1859 = vsel %vm958, %v1856, %v1858
      %v1860 = vrot.slane %v1399, 1
      %v1861 = vsel %vm958, %v1858, %v1860
      %v1862 = vrot.slane %v1400, 1
      %v1863 = vsel %vm958, %v1860, %v1862
      %v1864 = vrot.slane %v1401, 1
      %v1865 = vsel %vm958, %v1862, %v1864
      %v1899 = vunpack.c.l.b16 %v1812
      %v1900 = vunpack.c.l.b16 %v1813
      %v1901 = vunpack.c.l.b16 %v1814
      %v1902 = vunpack.c.l.b16 %v1815
      %v1903 = vunpack.c.l.b16 %v1816
      %v1904 = vunpack.c.l.b16 %v1817
      %v1905 = vunpack.c.l.b16 %v1818
      %v1906 = vunpack.c.l.b16 %v1819
      %v1907 = vunpack.c.l.b16 %v1820
      %v1908 = vunpack.c.l.b16 %v1821
      %v1909 = vunpack.c.l.b16 %v1822
      %v1910 = vunpack.c.l.b16 %v1823
      %v1911 = vunpack.c.l.b16 %v1824
      %v1912 = vunpack.c.l.b16 %v1825
      %v1913 = vunpack.c.l.b16 %v1826
      %v1914 = vunpack.c.l.b16 %v1827
      %v1915 = vpack.c.b16 %v1900, %v1899
      %v1916 = vpack.c.b16 %v1902, %v1901
      %v1917 = vpack.c.b16 %v1904, %v1903
      %v1918 = vpack.c.b16 %v1906, %v1905
      %v1919 = vpack.c.b16 %v1908, %v1907
      %v1920 = vpack.c.b16 %v1910, %v1909
      %v1921 = vpack.c.b16 %v1912, %v1911
      %v1922 = vpack.c.b16 %v1914, %v1913
      %1931 = vmatprep.subr.bf16.mxu0 0
      %1932 = vmatpush1.bf16.msra.mxu0 %v1915
      %1933 = vmatprep.subr.bf16.mxu0 0
      %1934 = vmatpush1.bf16.msra.mxu0 %v1916
      %1935 = vmatprep.subr.bf16.mxu0 0
      %1936 = vmatpush1.bf16.msra.mxu0 %v1917
      %1937 = vmatprep.subr.bf16.mxu0 0
      %1938 = vmatpush1.bf16.msra.mxu0 %v1918
      %1939 = vmatprep.subr.bf16.mxu0 0
      %1940 = vmatpush1.bf16.msra.mxu0 %v1919
      %1941 = vmatprep.subr.bf16.mxu0 0
      %1942 = vmatpush1.bf16.msra.mxu0 %v1920
      %1943 = vmatprep.subr.bf16.mxu0 0
      %1944 = vmatpush1.bf16.msra.mxu0 %v1921
      %1945 = vmatprep.subr.bf16.mxu0 0
      %1946 = vmatpush1.bf16.msra.mxu0 %v1922
      %1947 = vmatprep.subr.bf16.mxu0 0
      %1948 = vmatpush1.bf16.msra.mxu0 0
      %1949 = vmatprep.subr.bf16.mxu0 0
      %1950 = vmatpush1.bf16.msra.mxu0 0
      %1951 = vmatprep.subr.bf16.mxu0 0
      %1952 = vmatpush1.bf16.msra.mxu0 0
      %1953 = vmatprep.subr.bf16.mxu0 0
      %1954 = vmatpush1.bf16.msra.mxu0 0
      %1955 = vmatprep.subr.bf16.mxu0 0
      %1956 = vmatpush1.bf16.msra.mxu0 0
      %1957 = vmatprep.subr.bf16.mxu0 0
      %1958 = vmatpush1.bf16.msra.mxu0 0
      %1959 = vmatprep.subr.bf16.mxu0 0
      %1960 = vmatpush1.bf16.msra.mxu0 0
      %1961 = vmatprep.subr.bf16.mxu0 0
      %1962 = vmatpush1.bf16.msra.mxu0 0
      %1963 = vmatprep.mubr.bf16.mxu0 0
      %1964 = vmatmul.mubr.bf16.gmra.mrb[0].mxu0 %v1833
      %v1965 = vpop.f32.mrb[0].mxu0
      %v1966 = vadd.f32 0.0, %v1965
      %v1967 = vpop.f32.mrb[0].mxu0
      %v1968 = vpop.f32.mrb[0].mxu0
      %v1969 = vadd.f32 0.0, %v1968
      %v1970 = vpop.f32.mrb[0].mxu0
      %1971 = vmatprep.mubr.bf16.mxu0 0
      %1972 = vmatmul.mubr.bf16.gmra.mrb[0].mxu0 %v1835
      %v1973 = vpop.f32.mrb[0].mxu0
      %v1974 = vadd.f32 0.0, %v1973
      %v1975 = vpop.f32.mrb[0].mxu0
      %v1976 = vpop.f32.mrb[0].mxu0
      %v1977 = vadd.f32 0.0, %v1976
      %v1978 = vpop.f32.mrb[0].mxu0
      %1979 = vmatprep.mubr.bf16.mxu0 0
      %1980 = vmatmul.mubr.bf16.gmra.mrb[0].mxu0 %v1837
      %v1981 = vpop.f32.mrb[0].mxu0
      %v1982 = vadd.f32 0.0, %v1981
      %v1983 = vpop.f32.mrb[0].mxu0
      %v1984 = vpop.f32.mrb[0].mxu0
      %v1985 = vadd.f32 0.0, %v1984
      %v1986 = vpop.f32.mrb[0].mxu0
      %1987 = vmatprep.mubr.bf16.mxu0 0
      %1988 = vmatmul.mubr.bf16.gmra.mrb[0].mxu0 %v1839
      %v1989 = vpop.f32.mrb[0].mxu0
      %v1990 = vadd.f32 0.0, %v1989
      %v1991 = vpop.f32.mrb[0].mxu0
      %v1992 = vpop.f32.mrb[0].mxu0
      %v1993 = vadd.f32 0.0, %v1992
      %v1994 = vpop.f32.mrb[0].mxu0
      %1995 = vmatprep.mubr.bf16.mxu0 0
      %1996 = vmatmul.mubr.bf16.gmra.mrb[0].mxu0 %v1841
      %v1997 = vpop.f32.mrb[0].mxu0
      %v1998 = vadd.f32 0.0, %v1997
      %v1999 = vpop.f32.mrb[0].mxu0
      %v2000 = vpop.f32.mrb[0].mxu0
      %v2001 = vadd.f32 0.0, %v2000
      %v2002 = vpop.f32.mrb[0].mxu0
      %2003 = vmatprep.mubr.bf16.mxu0 0
      %2004 = vmatmul.mubr.bf16.gmra.mrb[0].mxu0 %v1843
      %v2005 = vpop.f32.mrb[0].mxu0
      %v2006 = vadd.f32 0.0, %v2005
      %v2007 = vpop.f32.mrb[0].mxu0
      %v2008 = vpop.f32.mrb[0].mxu0
      %v2009 = vadd.f32 0.0, %v2008
      %v2010 = vpop.f32.mrb[0].mxu0
      %2011 = vmatprep.mubr.bf16.mxu0 0
      %2012 = vmatmul.mubr.bf16.gmra.mrb[0].mxu0 %v1845
      %v2013 = vpop.f32.mrb[0].mxu0
      %v2014 = vadd.f32 0.0, %v2013
      %v2015 = vpop.f32.mrb[0].mxu0
      %v2016 = vpop.f32.mrb[0].mxu0
      %v2017 = vadd.f32 0.0, %v2016
      %v2018 = vpop.f32.mrb[0].mxu0
      %2019 = vmatprep.mubr.bf16.mxu0 0
      %2020 = vmatmul.mubr.bf16.gmra.mrb[0].mxu0 %v1847
      %v2021 = vpop.f32.mrb[0].mxu0
      %v2022 = vadd.f32 0.0, %v2021
      %v2023 = vpop.f32.mrb[0].mxu0
      %v2024 = vpop.f32.mrb[0].mxu0
      %v2025 = vadd.f32 0.0, %v2024
      %v2026 = vpop.f32.mrb[0].mxu0
      %2027 = vmatprep.mubr.bf16.mxu0 0
      %2028 = vmatmul.mubr.bf16.gmra.mrb[0].mxu0 %v1849
      %v2029 = vpop.f32.mrb[0].mxu0
      %v2030 = vadd.f32 0.0, %v2029
      %v2031 = vpop.f32.mrb[0].mxu0
      %v2032 = vpop.f32.mrb[0].mxu0
      %v2033 = vadd.f32 0.0, %v2032
      %v2034 = vpop.f32.mrb[0].mxu0
      %2035 = vmatprep.mubr.bf16.mxu0 0
      %2036 = vmatmul.mubr.bf16.gmra.mrb[0].mxu0 %v1851
      %v2037 = vpop.f32.mrb[0].mxu0
      %v2038 = vadd.f32 0.0, %v2037
      %v2039 = vpop.f32.mrb[0].mxu0
      %v2040 = vpop.f32.mrb[0].mxu0
      %v2041 = vadd.f32 0.0, %v2040
      %v2042 = vpop.f32.mrb[0].mxu0
      %2043 = vmatprep.mubr.bf16.mxu0 0
      %2044 = vmatmul.mubr.bf16.gmra.mrb[0].mxu0 %v1853
      %v2045 = vpop.f32.mrb[0].mxu0
      %v2046 = vadd.f32 0.0, %v2045
      %v2047 = vpop.f32.mrb[0].mxu0
      %v2048 = vpop.f32.mrb[0].mxu0
      %v2049 = vadd.f32 0.0, %v2048
      %v2050 = vpop.f32.mrb[0].mxu0
      %2051 = vmatprep.mubr.bf16.mxu0 0
      %2052 = vmatmul.mubr.bf16.gmra.mrb[0].mxu0 %v1855
      %v2053 = vpop.f32.mrb[0].mxu0
      %v2054 = vadd.f32 0.0, %v2053
      %v2055 = vpop.f32.mrb[0].mxu0
      %v2056 = vpop.f32.mrb[0].mxu0
      %v2057 = vadd.f32 0.0, %v2056
      %v2058 = vpop.f32.mrb[0].mxu0
      %2059 = vmatprep.mubr.bf16.mxu0 0
      %2060 = vmatmul.mubr.bf16.gmra.mrb[0].mxu0 %v1857
      %v2061 = vpop.f32.mrb[0].mxu0
      %v2062 = vadd.f32 0.0, %v2061
      %v2063 = vpop.f32.mrb[0].mxu0
      %v2064 = vpop.f32.mrb[0].mxu0
      %v2065 = vadd.f32 0.0, %v2064
      %v2066 = vpop.f32.mrb[0].mxu0
      %2067 = vmatprep.mubr.bf16.mxu0 0
      %2068 = vmatmul.mubr.bf16.gmra.mrb[0].mxu0 %v1859
      %v2069 = vpop.f32.mrb[0].mxu0
      %v2070 = vadd.f32 0.0, %v2069
      %v2071 = vpop.f32.mrb[0].mxu0
      %v2072 = vpop.f32.mrb[0].mxu0
      %v2073 = vadd.f32 0.0, %v2072
      %v2074 = vpop.f32.mrb[0].mxu0
      %2075 = vmatprep.mubr.bf16.mxu0 0
      %2076 = vmatmul.mubr.bf16.gmra.mrb[0].mxu0 %v1861
      %v2077 = vpop.f32.mrb[0].mxu0
      %v2078 = vadd.f32 0.0, %v2077
      %v2079 = vpop.f32.mrb[0].mxu0
      %v2080 = vpop.f32.mrb[0].mxu0
      %v2081 = vadd.f32 0.0, %v2080
      %v2082 = vpop.f32.mrb[0].mxu0
      %2083 = vmatprep.mubr.bf16.mxu0 0
      %2084 = vmatmul.mubr.bf16.gmra.mrb[0].mxu0 %v1863
      %v2085 = vpop.f32.mrb[0].mxu0
      %v2086 = vadd.f32 0.0, %v2085
      %v2087 = vpop.f32.mrb[0].mxu0
      %v2088 = vpop.f32.mrb[0].mxu0
      %v2089 = vadd.f32 0.0, %v2088
      %v2090 = vpop.f32.mrb[0].mxu0
      %2091 = vmatprep.mubr.bf16.mxu0 0
      %2092 = vmatmul.mubr.bf16.gmra.mrb[0].mxu0 %v1865
      %v2093 = vpop.f32.mrb[0].mxu0
      %v2094 = vadd.f32 0.0, %v2093
      %v2095 = vpop.f32.mrb[0].mxu0
      %v2096 = vpop.f32.mrb[0].mxu0
      %v2097 = vadd.f32 0.0, %v2096
      %v2098 = vpop.f32.mrb[0].mxu0
      %2099 = vdwg.mxu0
      %v2100 = vadd.f32 %v1776, %v1966
      %v2101 = vadd.f32 %v1777, %v1969
      %v2102 = vadd.f32 %v1778, %v1974
      %v2103 = vadd.f32 %v1779, %v1977
      %v2104 = vadd.f32 %v1780, %v1982
      %v2105 = vadd.f32 %v1781, %v1985
      %v2106 = vadd.f32 %v1782, %v1990
      %v2107 = vadd.f32 %v1783, %v1993
      %v2108 = vadd.f32 %v1784, %v1998
      %v2109 = vadd.f32 %v1785, %v2001
      %v2110 = vadd.f32 %v1786, %v2006
      %v2111 = vadd.f32 %v1787, %v2009
      %v2112 = vadd.f32 %v1788, %v2014
      %v2113 = vadd.f32 %v1789, %v2017
      %v2114 = vadd.f32 %v1790, %v2022
      %v2115 = vadd.f32 %v1791, %v2025
      %v2116 = vadd.f32 %v1792, %v2030
      %v2117 = vadd.f32 %v1793, %v2033
      %v2118 = vadd.f32 %v1794, %v2038
      %v2119 = vadd.f32 %v1795, %v2041
      %v2120 = vadd.f32 %v1796, %v2046
      %v2121 = vadd.f32 %v1797, %v2049
      %v2122 = vadd.f32 %v1798, %v2054
      %v2123 = vadd.f32 %v1799, %v2057
      %v2124 = vadd.f32 %v1800, %v2062
      %v2125 = vadd.f32 %v1801, %v2065
      %v2126 = vadd.f32 %v1802, %v2070
      %v2127 = vadd.f32 %v1803, %v2073
      %v2128 = vadd.f32 %v1804, %v2078
      %v2129 = vadd.f32 %v1805, %v2081
      %v2130 = vadd.f32 %v1806, %v2086
      %v2131 = vadd.f32 %v1807, %v2089
      %v2132 = vadd.f32 %v1808, %v2094
      %v2133 = vadd.f32 %v1809, %v2097
      %v2134 = vld [vmem:[%s165 + $0x90] sm:$0x3]
      %s2135 = scalar_lea.vmem %s1, 320
      %v2136 = vld [vmem:[%s2135] sm:$0xf]
      %v2137 = vld [vmem:[%s2135 + $0x4] sm:$0xf]
      %v2138 = vld [vmem:[%s2135 + $0x8] sm:$0xf]
      %v2139 = vld [vmem:[%s2135 + $0xc] sm:$0xf]
      %v2140 = vld [vmem:[%s2135 + $0x10] sm:$0xf]
      %v2141 = vld [vmem:[%s2135 + $0x14] sm:$0xf]
      %v2142 = vld [vmem:[%s2135 + $0x18] sm:$0xf]
      %v2143 = vld [vmem:[%s2135 + $0x1c] sm:$0xf]
      %v2144 = vld [vmem:[%s2135 + $0x20] sm:$0xf]
      %v2145 = vld [vmem:[%s2135 + $0x24] sm:$0xf]
      %v2146 = vld [vmem:[%s2135 + $0x28] sm:$0xf]
      %v2147 = vld [vmem:[%s2135 + $0x2c] sm:$0xf]
      %v2148 = vld [vmem:[%s2135 + $0x30] sm:$0xf]
      %v2149 = vld [vmem:[%s2135 + $0x34] sm:$0xf]
      %v2150 = vld [vmem:[%s2135 + $0x38] sm:$0xf]
      %v2151 = vld [vmem:[%s2135 + $0x3c] sm:$0xf]
      %v2153 = vunpack.c.l.b16 %v2134
      %v2154 = vpack.c.b16 %v2153, %v2153
      %vm2155 = vsmask.f32 6400
      %v2157 = vshrl.u32 %v1830, 16
      %v2159 = vrot.slane %v2157, 1
      %v2160 = vshll.u32 %v1830, 16
      %v2162 = vrot.slane %v2160, 2
      %v2163 = vor.u32 %v2159, %v2162
      %v2164 = vrot.slane %v1414, 1
      %v2165 = vrot.slane %v1410, 2
      %v2166 = vor.u32 %v2164, %v2165
      %v2167 = vsel %vm2155, %v2163, %v2166
      %v2168 = vrot.slane %v1422, 1
      %v2169 = vrot.slane %v1418, 2
      %v2170 = vor.u32 %v2168, %v2169
      %v2171 = vsel %vm2155, %v2166, %v2170
      %v2172 = vrot.slane %v1430, 1
      %v2173 = vrot.slane %v1426, 2
      %v2174 = vor.u32 %v2172, %v2173
      %v2175 = vsel %vm2155, %v2170, %v2174
      %v2176 = vrot.slane %v1438, 1
      %v2177 = vrot.slane %v1434, 2
      %v2178 = vor.u32 %v2176, %v2177
      %v2179 = vsel %vm2155, %v2174, %v2178
      %v2180 = vrot.slane %v1446, 1
      %v2181 = vrot.slane %v1442, 2
      %v2182 = vor.u32 %v2180, %v2181
      %v2183 = vsel %vm2155, %v2178, %v2182
      %v2184 = vrot.slane %v1454, 1
      %v2185 = vrot.slane %v1450, 2
      %v2186 = vor.u32 %v2184, %v2185
      %v2187 = vsel %vm2155, %v2182, %v2186
      %v2188 = vrot.slane %v1462, 1
      %v2189 = vrot.slane %v1458, 2
      %v2190 = vor.u32 %v2188, %v2189
      %v2191 = vsel %vm2155, %v2186, %v2190
      %v2192 = vrot.slane %v1470, 1
      %v2193 = vrot.slane %v1466, 2
      %v2194 = vor.u32 %v2192, %v2193
      %v2195 = vsel %vm2155, %v2190, %v2194
      %v2196 = vrot.slane %v1478, 1
      %v2197 = vrot.slane %v1474, 2
      %v2198 = vor.u32 %v2196, %v2197
      %v2199 = vsel %vm2155, %v2194, %v2198
      %v2200 = vrot.slane %v1486, 1
      %v2201 = vrot.slane %v1482, 2
      %v2202 = vor.u32 %v2200, %v2201
      %v2203 = vsel %vm2155, %v2198, %v2202
      %v2204 = vrot.slane %v1494, 1
      %v2205 = vrot.slane %v1490, 2
      %v2206 = vor.u32 %v2204, %v2205
      %v2207 = vsel %vm2155, %v2202, %v2206
      %v2208 = vrot.slane %v1502, 1
      %v2209 = vrot.slane %v1498, 2
      %v2210 = vor.u32 %v2208, %v2209
      %v2211 = vsel %vm2155, %v2206, %v2210
      %v2212 = vrot.slane %v1510, 1
      %v2213 = vrot.slane %v1506, 2
      %v2214 = vor.u32 %v2212, %v2213
      %v2215 = vsel %vm2155, %v2210, %v2214
      %v2216 = vrot.slane %v1518, 1
      %v2217 = vrot.slane %v1514, 2
      %v2218 = vor.u32 %v2216, %v2217
      %v2219 = vsel %vm2155, %v2214, %v2218
      %v2220 = vrot.slane %v1526, 1
      %v2221 = vrot.slane %v1522, 2
      %v2222 = vor.u32 %v2220, %v2221
      %v2223 = vsel %vm2155, %v2218, %v2222
      %v2224 = vrot.slane %v1534, 1
      %v2225 = vrot.slane %v1530, 2
      %v2226 = vor.u32 %v2224, %v2225
      %v2227 = vsel %vm2155, %v2222, %v2226
      %v2229 = vshrl.u32 %v2154, 16
      %v2231 = vrot.slane %v2229, 1
      %v2232 = vshll.u32 %v2154, 16
      %v2234 = vrot.slane %v2232, 2
      %v2235 = vor.u32 %v2231, %v2234
      %v2236 = vsel %vm2155, %v2226, %v2235
      %v2270 = vunpack.c.l.b16 %v2136
      %v2271 = vunpack.c.l.b16 %v2137
      %v2272 = vunpack.c.l.b16 %v2138
      %v2273 = vunpack.c.l.b16 %v2139
      %v2274 = vunpack.c.l.b16 %v2140
      %v2275 = vunpack.c.l.b16 %v2141
      %v2276 = vunpack.c.l.b16 %v2142
      %v2277 = vunpack.c.l.b16 %v2143
      %v2278 = vunpack.c.l.b16 %v2144
      %v2279 = vunpack.c.l.b16 %v2145
      %v2280 = vunpack.c.l.b16 %v2146
      %v2281 = vunpack.c.l.b16 %v2147
      %v2282 = vunpack.c.l.b16 %v2148
      %v2283 = vunpack.c.l.b16 %v2149
      %v2284 = vunpack.c.l.b16 %v2150
      %v2285 = vunpack.c.l.b16 %v2151
      %v2286 = vpack.c.b16 %v2271, %v2270
      %v2287 = vpack.c.b16 %v2273, %v2272
      %v2288 = vpack.c.b16 %v2275, %v2274
      %v2289 = vpack.c.b16 %v2277, %v2276
      %v2290 = vpack.c.b16 %v2279, %v2278
      %v2291 = vpack.c.b16 %v2281, %v2280
      %v2292 = vpack.c.b16 %v2283, %v2282
      %v2293 = vpack.c.b16 %v2285, %v2284
      %2302 = vmatprep.subr.bf16.mxu0 0
      %2303 = vmatpush1.bf16.msra.mxu0 %v2286
      %2304 = vmatprep.subr.bf16.mxu0 0
      %2305 = vmatpush1.bf16.msra.mxu0 %v2287
      %2306 = vmatprep.subr.bf16.mxu0 0
      %2307 = vmatpush1.bf16.msra.mxu0 %v2288
      %2308 = vmatprep.subr.bf16.mxu0 0
      %2309 = vmatpush1.bf16.msra.mxu0 %v2289
      %2310 = vmatprep.subr.bf16.mxu0 0
      %2311 = vmatpush1.bf16.msra.mxu0 %v2290
      %2312 = vmatprep.subr.bf16.mxu0 0
      %2313 = vmatpush1.bf16.msra.mxu0 %v2291
      %2314 = vmatprep.subr.bf16.mxu0 0
      %2315 = vmatpush1.bf16.msra.mxu0 %v2292
      %2316 = vmatprep.subr.bf16.mxu0 0
      %2317 = vmatpush1.bf16.msra.mxu0 %v2293
      %2318 = vmatprep.subr.bf16.mxu0 0
      %2319 = vmatpush1.bf16.msra.mxu0 0
      %2320 = vmatprep.subr.bf16.mxu0 0
      %2321 = vmatpush1.bf16.msra.mxu0 0
      %2322 = vmatprep.subr.bf16.mxu0 0
      %2323 = vmatpush1.bf16.msra.mxu0 0
      %2324 = vmatprep.subr.bf16.mxu0 0
      %2325 = vmatpush1.bf16.msra.mxu0 0
      %2326 = vmatprep.subr.bf16.mxu0 0
      %2327 = vmatpush1.bf16.msra.mxu0 0
      %2328 = vmatprep.subr.bf16.mxu0 0
      %2329 = vmatpush1.bf16.msra.mxu0 0
      %2330 = vmatprep.subr.bf16.mxu0 0
      %2331 = vmatpush1.bf16.msra.mxu0 0
      %2332 = vmatprep.subr.bf16.mxu0 0
      %2333 = vmatpush1.bf16.msra.mxu0 0
      %2334 = vmatprep.mubr.bf16.mxu0 0
      %2335 = vmatmul.mubr.bf16.gmra.mrb[0].mxu0 %v2167
      %v2336 = vpop.f32.mrb[0].mxu0
      %v2337 = vadd.f32 0.0, %v2336
      %v2338 = vpop.f32.mrb[0].mxu0
      %v2339 = vpop.f32.mrb[0].mxu0
      %v2340 = vadd.f32 0.0, %v2339
      %v2341 = vpop.f32.mrb[0].mxu0
      %2342 = vmatprep.mubr.bf16.mxu0 0
      %2343 = vmatmul.mubr.bf16.gmra.mrb[0].mxu0 %v2171
      %v2344 = vpop.f32.mrb[0].mxu0
      %v2345 = vadd.f32 0.0, %v2344
      %v2346 = vpop.f32.mrb[0].mxu0
      %v2347 = vpop.f32.mrb[0].mxu0
      %v2348 = vadd.f32 0.0, %v2347
      %v2349 = vpop.f32.mrb[0].mxu0
      %2350 = vmatprep.mubr.bf16.mxu0 0
      %2351 = vmatmul.mubr.bf16.gmra.mrb[0].mxu0 %v2175
      %v2352 = vpop.f32.mrb[0].mxu0
      %v2353 = vadd.f32 0.0, %v2352
      %v2354 = vpop.f32.mrb[0].mxu0
      %v2355 = vpop.f32.mrb[0].mxu0
      %v2356 = vadd.f32 0.0, %v2355
      %v2357 = vpop.f32.mrb[0].mxu0
      %2358 = vmatprep.mubr.bf16.mxu0 0
      %2359 = vmatmul.mubr.bf16.gmra.mrb[0].mxu0 %v2179
      %v2360 = vpop.f32.mrb[0].mxu0
      %v2361 = vadd.f32 0.0, %v2360
      %v2362 = vpop.f32.mrb[0].mxu0
      %v2363 = vpop.f32.mrb[0].mxu0
      %v2364 = vadd.f32 0.0, %v2363
      %v2365 = vpop.f32.mrb[0].mxu0
      %2366 = vmatprep.mubr.bf16.mxu0 0
      %2367 = vmatmul.mubr.bf16.gmra.mrb[0].mxu0 %v2183
      %v2368 = vpop.f32.mrb[0].mxu0
      %v2369 = vadd.f32 0.0, %v2368
      %v2370 = vpop.f32.mrb[0].mxu0
      %v2371 = vpop.f32.mrb[0].mxu0
      %v2372 = vadd.f32 0.0, %v2371
      %v2373 = vpop.f32.mrb[0].mxu0
      %2374 = vmatprep.mubr.bf16.mxu0 0
      %2375 = vmatmul.mubr.bf16.gmra.mrb[0].mxu0 %v2187
      %v2376 = vpop.f32.mrb[0].mxu0
      %v2377 = vadd.f32 0.0, %v2376
      %v2378 = vpop.f32.mrb[0].mxu0
      %v2379 = vpop.f32.mrb[0].mxu0
      %v2380 = vadd.f32 0.0, %v2379
      %v2381 = vpop.f32.mrb[0].mxu0
      %2382 = vmatprep.mubr.bf16.mxu0 0
      %2383 = vmatmul.mubr.bf16.gmra.mrb[0].mxu0 %v2191
      %v2384 = vpop.f32.mrb[0].mxu0
      %v2385 = vadd.f32 0.0, %v2384
      %v2386 = vpop.f32.mrb[0].mxu0
      %v2387 = vpop.f32.mrb[0].mxu0
      %v2388 = vadd.f32 0.0, %v2387
      %v2389 = vpop.f32.mrb[0].mxu0
      %2390 = vmatprep.mubr.bf16.mxu0 0
      %2391 = vmatmul.mubr.bf16.gmra.mrb[0].mxu0 %v2195
      %v2392 = vpop.f32.mrb[0].mxu0
      %v2393 = vadd.f32 0.0, %v2392
      %v2394 = vpop.f32.mrb[0].mxu0
      %v2395 = vpop.f32.mrb[0].mxu0
      %v2396 = vadd.f32 0.0, %v2395
      %v2397 = vpop.f32.mrb[0].mxu0
      %2398 = vmatprep.mubr.bf16.mxu0 0
      %2399 = vmatmul.mubr.bf16.gmra.mrb[0].mxu0 %v2199
      %v2400 = vpop.f32.mrb[0].mxu0
      %v2401 = vadd.f32 0.0, %v2400
      %v2402 = vpop.f32.mrb[0].mxu0
      %v2403 = vpop.f32.mrb[0].mxu0
      %v2404 = vadd.f32 0.0, %v2403
      %v2405 = vpop.f32.mrb[0].mxu0
      %2406 = vmatprep.mubr.bf16.mxu0 0
      %2407 = vmatmul.mubr.bf16.gmra.mrb[0].mxu0 %v2203
      %v2408 = vpop.f32.mrb[0].mxu0
      %v2409 = vadd.f32 0.0, %v2408
      %v2410 = vpop.f32.mrb[0].mxu0
      %v2411 = vpop.f32.mrb[0].mxu0
      %v2412 = vadd.f32 0.0, %v2411
      %v2413 = vpop.f32.mrb[0].mxu0
      %2414 = vmatprep.mubr.bf16.mxu0 0
      %2415 = vmatmul.mubr.bf16.gmra.mrb[0].mxu0 %v2207
      %v2416 = vpop.f32.mrb[0].mxu0
      %v2417 = vadd.f32 0.0, %v2416
      %v2418 = vpop.f32.mrb[0].mxu0
      %v2419 = vpop.f32.mrb[0].mxu0
      %v2420 = vadd.f32 0.0, %v2419
      %v2421 = vpop.f32.mrb[0].mxu0
      %2422 = vmatprep.mubr.bf16.mxu0 0
      %2423 = vmatmul.mubr.bf16.gmra.mrb[0].mxu0 %v2211
      %v2424 = vpop.f32.mrb[0].mxu0
      %v2425 = vadd.f32 0.0, %v2424
      %v2426 = vpop.f32.mrb[0].mxu0
      %v2427 = vpop.f32.mrb[0].mxu0
      %v2428 = vadd.f32 0.0, %v2427
      %v2429 = vpop.f32.mrb[0].mxu0
      %2430 = vmatprep.mubr.bf16.mxu0 0
      %2431 = vmatmul.mubr.bf16.gmra.mrb[0].mxu0 %v2215
      %v2432 = vpop.f32.mrb[0].mxu0
      %v2433 = vadd.f32 0.0, %v2432
      %v2434 = vpop.f32.mrb[0].mxu0
      %v2435 = vpop.f32.mrb[0].mxu0
      %v2436 = vadd.f32 0.0, %v2435
      %v2437 = vpop.f32.mrb[0].mxu0
      %2438 = vmatprep.mubr.bf16.mxu0 0
      %2439 = vmatmul.mubr.bf16.gmra.mrb[0].mxu0 %v2219
      %v2440 = vpop.f32.mrb[0].mxu0
      %v2441 = vadd.f32 0.0, %v2440
      %v2442 = vpop.f32.mrb[0].mxu0
      %v2443 = vpop.f32.mrb[0].mxu0
      %v2444 = vadd.f32 0.0, %v2443
      %v2445 = vpop.f32.mrb[0].mxu0
      %2446 = vmatprep.mubr.bf16.mxu0 0
      %2447 = vmatmul.mubr.bf16.gmra.mrb[0].mxu0 %v2223
      %v2448 = vpop.f32.mrb[0].mxu0
      %v2449 = vadd.f32 0.0, %v2448
      %v2450 = vpop.f32.mrb[0].mxu0
      %v2451 = vpop.f32.mrb[0].mxu0
      %v2452 = vadd.f32 0.0, %v2451
      %v2453 = vpop.f32.mrb[0].mxu0
      %2454 = vmatprep.mubr.bf16.mxu0 0
      %2455 = vmatmul.mubr.bf16.gmra.mrb[0].mxu0 %v2227
      %v2456 = vpop.f32.mrb[0].mxu0
      %v2457 = vadd.f32 0.0, %v2456
      %v2458 = vpop.f32.mrb[0].mxu0
      %v2459 = vpop.f32.mrb[0].mxu0
      %v2460 = vadd.f32 0.0, %v2459
      %v2461 = vpop.f32.mrb[0].mxu0
      %2462 = vmatprep.mubr.bf16.mxu0 0
      %2463 = vmatmul.mubr.bf16.gmra.mrb[0].mxu0 %v2236
      %v2464 = vpop.f32.mrb[0].mxu0
      %v2465 = vadd.f32 0.0, %v2464
      %v2466 = vpop.f32.mrb[0].mxu0
      %v2467 = vpop.f32.mrb[0].mxu0
      %v2468 = vadd.f32 0.0, %v2467
      %v2469 = vpop.f32.mrb[0].mxu0
      %2470 = vdwg.mxu0
      %v2471 = vadd.f32 %v2100, %v2337
      %v2472 = vadd.f32 %v2101, %v2340
      %v2473 = vadd.f32 %v2102, %v2345
      %v2474 = vadd.f32 %v2103, %v2348
      %v2475 = vadd.f32 %v2104, %v2353
      %v2476 = vadd.f32 %v2105, %v2356
      %v2477 = vadd.f32 %v2106, %v2361
      %v2478 = vadd.f32 %v2107, %v2364
      %v2479 = vadd.f32 %v2108, %v2369
      %v2480 = vadd.f32 %v2109, %v2372
      %v2481 = vadd.f32 %v2110, %v2377
      %v2482 = vadd.f32 %v2111, %v2380
      %v2483 = vadd.f32 %v2112, %v2385
      %v2484 = vadd.f32 %v2113, %v2388
      %v2485 = vadd.f32 %v2114, %v2393
      %v2486 = vadd.f32 %v2115, %v2396
      %v2487 = vadd.f32 %v2116, %v2401
      %v2488 = vadd.f32 %v2117, %v2404
      %v2489 = vadd.f32 %v2118, %v2409
      %v2490 = vadd.f32 %v2119, %v2412
      %v2491 = vadd.f32 %v2120, %v2417
      %v2492 = vadd.f32 %v2121, %v2420
      %v2493 = vadd.f32 %v2122, %v2425
      %v2494 = vadd.f32 %v2123, %v2428
      %v2495 = vadd.f32 %v2124, %v2433
      %v2496 = vadd.f32 %v2125, %v2436
      %v2497 = vadd.f32 %v2126, %v2441
      %v2498 = vadd.f32 %v2127, %v2444
      %v2499 = vadd.f32 %v2128, %v2449
      %v2500 = vadd.f32 %v2129, %v2452
      %v2501 = vadd.f32 %v2130, %v2457
      %v2502 = vadd.f32 %v2131, %v2460
      %v2503 = vadd.f32 %v2132, %v2465
      %v2504 = vadd.f32 %v2133, %v2468
      %v2505 = vld [vmem:[%s165 + $0x10] sm:$0xe]
      %v2506 = vld [vmem:[%s165 + $0x14] sm:$0xf]
      %v2507 = vld [vmem:[%s165 + $0x18] sm:$0xf]
      %v2508 = vld [vmem:[%s165 + $0x1c] sm:$0xf]
      %v2509 = vld [vmem:[%s165 + $0x20] sm:$0xf]
      %v2510 = vld [vmem:[%s165 + $0x24] sm:$0xf]
      %v2511 = vld [vmem:[%s165 + $0x28] sm:$0xf]
      %v2512 = vld [vmem:[%s165 + $0x2c] sm:$0xf]
      %v2513 = vld [vmem:[%s165 + $0x30] sm:$0xf]
      %v2514 = vld [vmem:[%s165 + $0x34] sm:$0xf]
      %v2515 = vld [vmem:[%s165 + $0x38] sm:$0xf]
      %v2516 = vld [vmem:[%s165 + $0x3c] sm:$0xf]
      %v2517 = vld [vmem:[%s165 + $0x40] sm:$0xf]
      %v2518 = vld [vmem:[%s165 + $0x44] sm:$0xf]
      %v2519 = vld [vmem:[%s165 + $0x48] sm:$0xf]
      %v2520 = vld [vmem:[%s165 + $0x4c] sm:$0xf]
      %v2521 = vld [vmem:[%s165 + $0x50] sm:$0xf]
      %v2522 = vld [vmem:[%s165 + $0x54] sm:$0xf]
      %v2523 = vld [vmem:[%s165 + $0x58] sm:$0xf]
      %v2524 = vld [vmem:[%s165 + $0x5c] sm:$0xf]
      %v2525 = vld [vmem:[%s165 + $0x60] sm:$0xf]
      %v2526 = vld [vmem:[%s165 + $0x64] sm:$0xf]
      %v2527 = vld [vmem:[%s165 + $0x68] sm:$0xf]
      %v2528 = vld [vmem:[%s165 + $0x6c] sm:$0xf]
      %v2529 = vld [vmem:[%s165 + $0x70] sm:$0xf]
      %v2530 = vld [vmem:[%s165 + $0x74] sm:$0xf]
      %v2531 = vld [vmem:[%s165 + $0x78] sm:$0xf]
      %v2532 = vld [vmem:[%s165 + $0x7c] sm:$0xf]
      %v2533 = vld [vmem:[%s165 + $0x80] sm:$0xf]
      %v2534 = vld [vmem:[%s165 + $0x84] sm:$0xf]
      %v2535 = vld [vmem:[%s165 + $0x88] sm:$0xf]
      %v2536 = vld [vmem:[%s165 + $0x8c] sm:$0xf]
      %v2537 = vld [vmem:[%s165 + $0x90] sm:$0xf]
      %v2538 = vld [vmem:[%s165 + $0x94] sm:$0xf]
      %v2539 = vld [vmem:[%s165 + $0x98] sm:$0x1]
      %s2540 = scalar_lea.vmem %s1, 384
      %v2541 = vld [vmem:[%s2540] sm:$0xf]
      %v2542 = vld [vmem:[%s2540 + $0x4] sm:$0xf]
      %v2543 = vld [vmem:[%s2540 + $0x8] sm:$0xf]
      %v2544 = vld [vmem:[%s2540 + $0xc] sm:$0xf]
      %v2545 = vld [vmem:[%s2540 + $0x10] sm:$0xf]
      %v2546 = vld [vmem:[%s2540 + $0x14] sm:$0xf]
      %v2547 = vld [vmem:[%s2540 + $0x18] sm:$0xf]
      %v2548 = vld [vmem:[%s2540 + $0x1c] sm:$0xf]
      %v2549 = vld [vmem:[%s2540 + $0x20] sm:$0xf]
      %v2550 = vld [vmem:[%s2540 + $0x24] sm:$0xf]
      %v2551 = vld [vmem:[%s2540 + $0x28] sm:$0xf]
      %v2552 = vld [vmem:[%s2540 + $0x2c] sm:$0xf]
      %v2553 = vld [vmem:[%s2540 + $0x30] sm:$0xf]
      %v2554 = vld [vmem:[%s2540 + $0x34] sm:$0xf]
      %v2555 = vld [vmem:[%s2540 + $0x38] sm:$0xf]
      %v2556 = vld [vmem:[%s2540 + $0x3c] sm:$0xf]
      %v2592 = vunpack.c.l.b16 %v2505
      %v2593 = vunpack.c.l.b16 %v2506
      %v2594 = vunpack.c.l.b16 %v2507
      %v2595 = vunpack.c.l.b16 %v2508
      %v2596 = vunpack.c.l.b16 %v2509
      %v2597 = vunpack.c.l.b16 %v2510
      %v2598 = vunpack.c.l.b16 %v2511
      %v2599 = vunpack.c.l.b16 %v2512
      %v2600 = vunpack.c.l.b16 %v2513
      %v2601 = vunpack.c.l.b16 %v2514
      %v2602 = vunpack.c.l.b16 %v2515
      %v2603 = vunpack.c.l.b16 %v2516
      %v2604 = vunpack.c.l.b16 %v2517
      %v2605 = vunpack.c.l.b16 %v2518
      %v2606 = vunpack.c.l.b16 %v2519
      %v2607 = vunpack.c.l.b16 %v2520
      %v2608 = vunpack.c.l.b16 %v2521
      %v2609 = vunpack.c.l.b16 %v2522
      %v2610 = vunpack.c.l.b16 %v2523
      %v2611 = vunpack.c.l.b16 %v2524
      %v2612 = vunpack.c.l.b16 %v2525
      %v2613 = vunpack.c.l.b16 %v2526
      %v2614 = vunpack.c.l.b16 %v2527
      %v2615 = vunpack.c.l.b16 %v2528
      %v2616 = vunpack.c.l.b16 %v2529
      %v2617 = vunpack.c.l.b16 %v2530
      %v2618 = vunpack.c.l.b16 %v2531
      %v2619 = vunpack.c.l.b16 %v2532
      %v2620 = vunpack.c.l.b16 %v2533
      %v2621 = vunpack.c.l.b16 %v2534
      %v2622 = vunpack.c.l.b16 %v2535
      %v2623 = vunpack.c.l.b16 %v2536
      %v2624 = vunpack.c.l.b16 %v2537
      %v2625 = vunpack.c.l.b16 %v2538
      %v2626 = vunpack.c.l.b16 %v2539
      %v2627 = vpack.c.b16 %v2593, %v2592
      %v2628 = vpack.c.b16 %v2595, %v2594
      %v2629 = vpack.c.b16 %v2597, %v2596
      %v2630 = vpack.c.b16 %v2599, %v2598
      %v2631 = vpack.c.b16 %v2601, %v2600
      %v2632 = vpack.c.b16 %v2603, %v2602
      %v2633 = vpack.c.b16 %v2605, %v2604
      %v2634 = vpack.c.b16 %v2607, %v2606
      %v2635 = vpack.c.b16 %v2609, %v2608
      %v2636 = vpack.c.b16 %v2611, %v2610
      %v2637 = vpack.c.b16 %v2613, %v2612
      %v2638 = vpack.c.b16 %v2615, %v2614
      %v2639 = vpack.c.b16 %v2617, %v2616
      %v2640 = vpack.c.b16 %v2619, %v2618
      %v2641 = vpack.c.b16 %v2621, %v2620
      %v2642 = vpack.c.b16 %v2623, %v2622
      %v2643 = vpack.c.b16 %v2625, %v2624
      %v2644 = vpack.c.b16 %v2626, %v2626
      %v2645 = vrot.slane %v2627, 1
      %v2646 = vrot.slane %v2628, 1
      %v2647 = vsel %vm958, %v2645, %v2646
      %v2648 = vrot.slane %v2629, 1
      %v2649 = vsel %vm958, %v2646, %v2648
      %v2650 = vrot.slane %v2630, 1
      %v2651 = vsel %vm958, %v2648, %v2650
      %v2652 = vrot.slane %v2631, 1
      %v2653 = vsel %vm958, %v2650, %v2652
      %v2654 = vrot.slane %v2632, 1
      %v2655 = vsel %vm958, %v2652, %v2654
      %v2656 = vrot.slane %v2633, 1
      %v2657 = vsel %vm958, %v2654, %v2656
      %v2658 = vrot.slane %v2634, 1
      %v2659 = vsel %vm958, %v2656, %v2658
      %v2660 = vrot.slane %v2635, 1
      %v2661 = vsel %vm958, %v2658, %v2660
      %v2662 = vrot.slane %v2636, 1
      %v2663 = vsel %vm958, %v2660, %v2662
      %v2664 = vrot.slane %v2637, 1
      %v2665 = vsel %vm958, %v2662, %v2664
      %v2666 = vrot.slane %v2638, 1
      %v2667 = vsel %vm958, %v2664, %v2666
      %v2668 = vrot.slane %v2639, 1
      %v2669 = vsel %vm958, %v2666, %v2668
      %v2670 = vrot.slane %v2640, 1
      %v2671 = vsel %vm958, %v2668, %v2670
      %v2672 = vrot.slane %v2641, 1
      %v2673 = vsel %vm958, %v2670, %v2672
      %v2674 = vrot.slane %v2642, 1
      %v2675 = vsel %vm958, %v2672, %v2674
      %v2676 = vrot.slane %v2643, 1
      %v2677 = vsel %vm958, %v2674, %v2676
      %v2678 = vrot.slane %v2644, 1
      %v2679 = vsel %vm958, %v2676, %v2678
      %v2713 = vunpack.c.l.b16 %v2541
      %v2714 = vunpack.c.l.b16 %v2542
      %v2715 = vunpack.c.l.b16 %v2543
      %v2716 = vunpack.c.l.b16 %v2544
      %v2717 = vunpack.c.l.b16 %v2545
      %v2718 = vunpack.c.l.b16 %v2546
      %v2719 = vunpack.c.l.b16 %v2547
      %v2720 = vunpack.c.l.b16 %v2548
      %v2721 = vunpack.c.l.b16 %v2549
      %v2722 = vunpack.c.l.b16 %v2550
      %v2723 = vunpack.c.l.b16 %v2551
      %v2724 = vunpack.c.l.b16 %v2552
      %v2725 = vunpack.c.l.b16 %v2553
      %v2726 = vunpack.c.l.b16 %v2554
      %v2727 = vunpack.c.l.b16 %v2555
      %v2728 = vunpack.c.l.b16 %v2556
      %v2729 = vpack.c.b16 %v2714, %v2713
      %v2730 = vpack.c.b16 %v2716, %v2715
      %v2731 = vpack.c.b16 %v2718, %v2717
      %v2732 = vpack.c.b16 %v2720, %v2719
      %v2733 = vpack.c.b16 %v2722, %v2721
      %v2734 = vpack.c.b16 %v2724, %v2723
      %v2735 = vpack.c.b16 %v2726, %v2725
      %v2736 = vpack.c.b16 %v2728, %v2727
      %2745 = vmatprep.subr.bf16.mxu0 0
      %2746 = vmatpush1.bf16.msra.mxu0 %v2729
      %2747 = vmatprep.subr.bf16.mxu0 0
      %2748 = vmatpush1.bf16.msra.mxu0 %v2730
      %2749 = vmatprep.subr.bf16.mxu0 0
      %2750 = vmatpush1.bf16.msra.mxu0 %v2731
      %2751 = vmatprep.subr.bf16.mxu0 0
      %2752 = vmatpush1.bf16.msra.mxu0 %v2732
      %2753 = vmatprep.subr.bf16.mxu0 0
      %2754 = vmatpush1.bf16.msra.mxu0 %v2733
      %2755 = vmatprep.subr.bf16.mxu0 0
      %2756 = vmatpush1.bf16.msra.mxu0 %v2734
      %2757 = vmatprep.subr.bf16.mxu0 0
      %2758 = vmatpush1.bf16.msra.mxu0 %v2735
      %2759 = vmatprep.subr.bf16.mxu0 0
      %2760 = vmatpush1.bf16.msra.mxu0 %v2736
      %2761 = vmatprep.subr.bf16.mxu0 0
      %2762 = vmatpush1.bf16.msra.mxu0 0
      %2763 = vmatprep.subr.bf16.mxu0 0
      %2764 = vmatpush1.bf16.msra.mxu0 0
      %2765 = vmatprep.subr.bf16.mxu0 0
      %2766 = vmatpush1.bf16.msra.mxu0 0
      %2767 = vmatprep.subr.bf16.mxu0 0
      %2768 = vmatpush1.bf16.msra.mxu0 0
      %2769 = vmatprep.subr.bf16.mxu0 0
      %2770 = vmatpush1.bf16.msra.mxu0 0
      %2771 = vmatprep.subr.bf16.mxu0 0
      %2772 = vmatpush1.bf16.msra.mxu0 0
      %2773 = vmatprep.subr.bf16.mxu0 0
      %2774 = vmatpush1.bf16.msra.mxu0 0
      %2775 = vmatprep.subr.bf16.mxu0 0
      %2776 = vmatpush1.bf16.msra.mxu0 0
      %2777 = vmatprep.mubr.bf16.mxu0 0
      %2778 = vmatmul.mubr.bf16.gmra.mrb[0].mxu0 %v2647
      %v2779 = vpop.f32.mrb[0].mxu0
      %v2780 = vadd.f32 0.0, %v2779
      %v2781 = vpop.f32.mrb[0].mxu0
      %v2782 = vpop.f32.mrb[0].mxu0
      %v2783 = vadd.f32 0.0, %v2782
      %v2784 = vpop.f32.mrb[0].mxu0
      %2785 = vmatprep.mubr.bf16.mxu0 0
      %2786 = vmatmul.mubr.bf16.gmra.mrb[0].mxu0 %v2649
      %v2787 = vpop.f32.mrb[0].mxu0
      %v2788 = vadd.f32 0.0, %v2787
      %v2789 = vpop.f32.mrb[0].mxu0
      %v2790 = vpop.f32.mrb[0].mxu0
      %v2791 = vadd.f32 0.0, %v2790
      %v2792 = vpop.f32.mrb[0].mxu0
      %2793 = vmatprep.mubr.bf16.mxu0 0
      %2794 = vmatmul.mubr.bf16.gmra.mrb[0].mxu0 %v2651
      %v2795 = vpop.f32.mrb[0].mxu0
      %v2796 = vadd.f32 0.0, %v2795
      %v2797 = vpop.f32.mrb[0].mxu0
      %v2798 = vpop.f32.mrb[0].mxu0
      %v2799 = vadd.f32 0.0, %v2798
      %v2800 = vpop.f32.mrb[0].mxu0
      %2801 = vmatprep.mubr.bf16.mxu0 0
      %2802 = vmatmul.mubr.bf16.gmra.mrb[0].mxu0 %v2653
      %v2803 = vpop.f32.mrb[0].mxu0
      %v2804 = vadd.f32 0.0, %v2803
      %v2805 = vpop.f32.mrb[0].mxu0
      %v2806 = vpop.f32.mrb[0].mxu0
      %v2807 = vadd.f32 0.0, %v2806
      %v2808 = vpop.f32.mrb[0].mxu0
      %2809 = vmatprep.mubr.bf16.mxu0 0
      %2810 = vmatmul.mubr.bf16.gmra.mrb[0].mxu0 %v2655
      %v2811 = vpop.f32.mrb[0].mxu0
      %v2812 = vadd.f32 0.0, %v2811
      %v2813 = vpop.f32.mrb[0].mxu0
      %v2814 = vpop.f32.mrb[0].mxu0
      %v2815 = vadd.f32 0.0, %v2814
      %v2816 = vpop.f32.mrb[0].mxu0
      %2817 = vmatprep.mubr.bf16.mxu0 0
      %2818 = vmatmul.mubr.bf16.gmra.mrb[0].mxu0 %v2657
      %v2819 = vpop.f32.mrb[0].mxu0
      %v2820 = vadd.f32 0.0, %v2819
      %v2821 = vpop.f32.mrb[0].mxu0
      %v2822 = vpop.f32.mrb[0].mxu0
      %v2823 = vadd.f32 0.0, %v2822
      %v2824 = vpop.f32.mrb[0].mxu0
      %2825 = vmatprep.mubr.bf16.mxu0 0
      %2826 = vmatmul.mubr.bf16.gmra.mrb[0].mxu0 %v2659
      %v2827 = vpop.f32.mrb[0].mxu0
      %v2828 = vadd.f32 0.0, %v2827
      %v2829 = vpop.f32.mrb[0].mxu0
      %v2830 = vpop.f32.mrb[0].mxu0
      %v2831 = vadd.f32 0.0, %v2830
      %v2832 = vpop.f32.mrb[0].mxu0
      %2833 = vmatprep.mubr.bf16.mxu0 0
      %2834 = vmatmul.mubr.bf16.gmra.mrb[0].mxu0 %v2661
      %v2835 = vpop.f32.mrb[0].mxu0
      %v2836 = vadd.f32 0.0, %v2835
      %v2837 = vpop.f32.mrb[0].mxu0
      %v2838 = vpop.f32.mrb[0].mxu0
      %v2839 = vadd.f32 0.0, %v2838
      %v2840 = vpop.f32.mrb[0].mxu0
      %2841 = vmatprep.mubr.bf16.mxu0 0
      %2842 = vmatmul.mubr.bf16.gmra.mrb[0].mxu0 %v2663
      %v2843 = vpop.f32.mrb[0].mxu0
      %v2844 = vadd.f32 0.0, %v2843
      %v2845 = vpop.f32.mrb[0].mxu0
      %v2846 = vpop.f32.mrb[0].mxu0
      %v2847 = vadd.f32 0.0, %v2846
      %v2848 = vpop.f32.mrb[0].mxu0
      %2849 = vmatprep.mubr.bf16.mxu0 0
      %2850 = vmatmul.mubr.bf16.gmra.mrb[0].mxu0 %v2665
      %v2851 = vpop.f32.mrb[0].mxu0
      %v2852 = vadd.f32 0.0, %v2851
      %v2853 = vpop.f32.mrb[0].mxu0
      %v2854 = vpop.f32.mrb[0].mxu0
      %v2855 = vadd.f32 0.0, %v2854
      %v2856 = vpop.f32.mrb[0].mxu0
      %2857 = vmatprep.mubr.bf16.mxu0 0
      %2858 = vmatmul.mubr.bf16.gmra.mrb[0].mxu0 %v2667
      %v2859 = vpop.f32.mrb[0].mxu0
      %v2860 = vadd.f32 0.0, %v2859
      %v2861 = vpop.f32.mrb[0].mxu0
      %v2862 = vpop.f32.mrb[0].mxu0
      %v2863 = vadd.f32 0.0, %v2862
      %v2864 = vpop.f32.mrb[0].mxu0
      %2865 = vmatprep.mubr.bf16.mxu0 0
      %2866 = vmatmul.mubr.bf16.gmra.mrb[0].mxu0 %v2669
      %v2867 = vpop.f32.mrb[0].mxu0
      %v2868 = vadd.f32 0.0, %v2867
      %v2869 = vpop.f32.mrb[0].mxu0
      %v2870 = vpop.f32.mrb[0].mxu0
      %v2871 = vadd.f32 0.0, %v2870
      %v2872 = vpop.f32.mrb[0].mxu0
      %2873 = vmatprep.mubr.bf16.mxu0 0
      %2874 = vmatmul.mubr.bf16.gmra.mrb[0].mxu0 %v2671
      %v2875 = vpop.f32.mrb[0].mxu0
      %v2876 = vadd.f32 0.0, %v2875
      %v2877 = vpop.f32.mrb[0].mxu0
      %v2878 = vpop.f32.mrb[0].mxu0
      %v2879 = vadd.f32 0.0, %v2878
      %v2880 = vpop.f32.mrb[0].mxu0
      %2881 = vmatprep.mubr.bf16.mxu0 0
      %2882 = vmatmul.mubr.bf16.gmra.mrb[0].mxu0 %v2673
      %v2883 = vpop.f32.mrb[0].mxu0
      %v2884 = vadd.f32 0.0, %v2883
      %v2885 = vpop.f32.mrb[0].mxu0
      %v2886 = vpop.f32.mrb[0].mxu0
      %v2887 = vadd.f32 0.0, %v2886
      %v2888 = vpop.f32.mrb[0].mxu0
      %2889 = vmatprep.mubr.bf16.mxu0 0
      %2890 = vmatmul.mubr.bf16.gmra.mrb[0].mxu0 %v2675
      %v2891 = vpop.f32.mrb[0].mxu0
      %v2892 = vadd.f32 0.0, %v2891
      %v2893 = vpop.f32.mrb[0].mxu0
      %v2894 = vpop.f32.mrb[0].mxu0
      %v2895 = vadd.f32 0.0, %v2894
      %v2896 = vpop.f32.mrb[0].mxu0
      %2897 = vmatprep.mubr.bf16.mxu0 0
      %2898 = vmatmul.mubr.bf16.gmra.mrb[0].mxu0 %v2677
      %v2899 = vpop.f32.mrb[0].mxu0
      %v2900 = vadd.f32 0.0, %v2899
      %v2901 = vpop.f32.mrb[0].mxu0
      %v2902 = vpop.f32.mrb[0].mxu0
      %v2903 = vadd.f32 0.0, %v2902
      %v2904 = vpop.f32.mrb[0].mxu0
      %2905 = vmatprep.mubr.bf16.mxu0 0
      %2906 = vmatmul.mubr.bf16.gmra.mrb[0].mxu0 %v2679
      %v2907 = vpop.f32.mrb[0].mxu0
      %v2908 = vadd.f32 0.0, %v2907
      %v2909 = vpop.f32.mrb[0].mxu0
      %v2910 = vpop.f32.mrb[0].mxu0
      %v2911 = vadd.f32 0.0, %v2910
      %v2912 = vpop.f32.mrb[0].mxu0
      %2913 = vdwg.mxu0
      %v2914 = vadd.f32 %v2471, %v2780
      %v2915 = vadd.f32 %v2472, %v2783
      %v2916 = vadd.f32 %v2473, %v2788
      %v2917 = vadd.f32 %v2474, %v2791
      %v2918 = vadd.f32 %v2475, %v2796
      %v2919 = vadd.f32 %v2476, %v2799
      %v2920 = vadd.f32 %v2477, %v2804
      %v2921 = vadd.f32 %v2478, %v2807
      %v2922 = vadd.f32 %v2479, %v2812
      %v2923 = vadd.f32 %v2480, %v2815
      %v2924 = vadd.f32 %v2481, %v2820
      %v2925 = vadd.f32 %v2482, %v2823
      %v2926 = vadd.f32 %v2483, %v2828
      %v2927 = vadd.f32 %v2484, %v2831
      %v2928 = vadd.f32 %v2485, %v2836
      %v2929 = vadd.f32 %v2486, %v2839
      %v2930 = vadd.f32 %v2487, %v2844
      %v2931 = vadd.f32 %v2488, %v2847
      %v2932 = vadd.f32 %v2489, %v2852
      %v2933 = vadd.f32 %v2490, %v2855
      %v2934 = vadd.f32 %v2491, %v2860
      %v2935 = vadd.f32 %v2492, %v2863
      %v2936 = vadd.f32 %v2493, %v2868
      %v2937 = vadd.f32 %v2494, %v2871
      %v2938 = vadd.f32 %v2495, %v2876
      %v2939 = vadd.f32 %v2496, %v2879
      %v2940 = vadd.f32 %v2497, %v2884
      %v2941 = vadd.f32 %v2498, %v2887
      %v2942 = vadd.f32 %v2499, %v2892
      %v2943 = vadd.f32 %v2500, %v2895
      %v2944 = vadd.f32 %v2501, %v2900
      %v2945 = vadd.f32 %v2502, %v2903
      %v2946 = vadd.f32 %v2503, %v2908
      %v2947 = vadd.f32 %v2504, %v2911
      %v2948 = vld [vmem:[%s165 + $0x98] sm:$0x3]
      %s2949 = scalar_lea.vmem %s1, 448
      %v2950 = vld [vmem:[%s2949] sm:$0xf]
      %v2951 = vld [vmem:[%s2949 + $0x4] sm:$0xf]
      %v2952 = vld [vmem:[%s2949 + $0x8] sm:$0xf]
      %v2953 = vld [vmem:[%s2949 + $0xc] sm:$0xf]
      %v2954 = vld [vmem:[%s2949 + $0x10] sm:$0xf]
      %v2955 = vld [vmem:[%s2949 + $0x14] sm:$0xf]
      %v2956 = vld [vmem:[%s2949 + $0x18] sm:$0xf]
      %v2957 = vld [vmem:[%s2949 + $0x1c] sm:$0xf]
      %v2958 = vld [vmem:[%s2949 + $0x20] sm:$0xf]
      %v2959 = vld [vmem:[%s2949 + $0x24] sm:$0xf]
      %v2960 = vld [vmem:[%s2949 + $0x28] sm:$0xf]
      %v2961 = vld [vmem:[%s2949 + $0x2c] sm:$0xf]
      %v2962 = vld [vmem:[%s2949 + $0x30] sm:$0xf]
      %v2963 = vld [vmem:[%s2949 + $0x34] sm:$0xf]
      %v2964 = vld [vmem:[%s2949 + $0x38] sm:$0xf]
      %v2965 = vld [vmem:[%s2949 + $0x3c] sm:$0xf]
      %v2967 = vunpack.c.l.b16 %v2948
      %v2968 = vpack.c.b16 %v2967, %v2967
      %v2970 = vshrl.u32 %v2627, 16
      %v2972 = vrot.slane %v2970, 1
      %v2973 = vshll.u32 %v2627, 16
      %v2975 = vrot.slane %v2973, 2
      %v2976 = vor.u32 %v2972, %v2975
      %v2978 = vshrl.u32 %v2628, 16
      %v2980 = vrot.slane %v2978, 1
      %v2981 = vshll.u32 %v2628, 16
      %v2983 = vrot.slane %v2981, 2
      %v2984 = vor.u32 %v2980, %v2983
      %v2985 = vsel %vm2155, %v2976, %v2984
      %v2987 = vshrl.u32 %v2629, 16
      %v2989 = vrot.slane %v2987, 1
      %v2990 = vshll.u32 %v2629, 16
      %v2992 = vrot.slane %v2990, 2
      %v2993 = vor.u32 %v2989, %v2992
      %v2994 = vsel %vm2155, %v2984, %v2993
      %v2996 = vshrl.u32 %v2630, 16
      %v2998 = vrot.slane %v2996, 1
      %v2999 = vshll.u32 %v2630, 16
      %v3001 = vrot.slane %v2999, 2
      %v3002 = vor.u32 %v2998, %v3001
      %v3003 = vsel %vm2155, %v2993, %v3002
      %v3005 = vshrl.u32 %v2631, 16
      %v3007 = vrot.slane %v3005, 1
      %v3008 = vshll.u32 %v2631, 16
      %v3010 = vrot.slane %v3008, 2
      %v3011 = vor.u32 %v3007, %v3010
      %v3012 = vsel %vm2155, %v3002, %v3011
      %v3014 = vshrl.u32 %v2632, 16
      %v3016 = vrot.slane %v3014, 1
      %v3017 = vshll.u32 %v2632, 16
      %v3019 = vrot.slane %v3017, 2
      %v3020 = vor.u32 %v3016, %v3019
      %v3021 = vsel %vm2155, %v3011, %v3020
      %v3023 = vshrl.u32 %v2633, 16
      %v3025 = vrot.slane %v3023, 1
      %v3026 = vshll.u32 %v2633, 16
      %v3028 = vrot.slane %v3026, 2
      %v3029 = vor.u32 %v3025, %v3028
      %v3030 = vsel %vm2155, %v3020, %v3029
      %v3032 = vshrl.u32 %v2634, 16
      %v3034 = vrot.slane %v3032, 1
      %v3035 = vshll.u32 %v2634, 16
      %v3037 = vrot.slane %v3035, 2
      %v3038 = vor.u32 %v3034, %v3037
      %v3039 = vsel %vm2155, %v3029, %v3038
      %v3041 = vshrl.u32 %v2635, 16
      %v3043 = vrot.slane %v3041, 1
      %v3044 = vshll.u32 %v2635, 16
      %v3046 = vrot.slane %v3044, 2
      %v3047 = vor.u32 %v3043, %v3046
      %v3048 = vsel %vm2155, %v3038, %v3047
      %v3050 = vshrl.u32 %v2636, 16
      %v3052 = vrot.slane %v3050, 1
      %v3053 = vshll.u32 %v2636, 16
      %v3055 = vrot.slane %v3053, 2
      %v3056 = vor.u32 %v3052, %v3055
      %v3057 = vsel %vm2155, %v3047, %v3056
      %v3059 = vshrl.u32 %v2637, 16
      %v3061 = vrot.slane %v3059, 1
      %v3062 = vshll.u32 %v2637, 16
      %v3064 = vrot.slane %v3062, 2
      %v3065 = vor.u32 %v3061, %v3064
      %v3066 = vsel %vm2155, %v3056, %v3065
      %v3068 = vshrl.u32 %v2638, 16
      %v3070 = vrot.slane %v3068, 1
      %v3071 = vshll.u32 %v2638, 16
      %v3073 = vrot.slane %v3071, 2
      %v3074 = vor.u32 %v3070, %v3073
      %v3075 = vsel %vm2155, %v3065, %v3074
      %v3077 = vshrl.u32 %v2639, 16
      %v3079 = vrot.slane %v3077, 1
      %v3080 = vshll.u32 %v2639, 16
      %v3082 = vrot.slane %v3080, 2
      %v3083 = vor.u32 %v3079, %v3082
      %v3084 = vsel %vm2155, %v3074, %v3083
      %v3086 = vshrl.u32 %v2640, 16
      %v3088 = vrot.slane %v3086, 1
      %v3089 = vshll.u32 %v2640, 16
      %v3091 = vrot.slane %v3089, 2
      %v3092 = vor.u32 %v3088, %v3091
      %v3093 = vsel %vm2155, %v3083, %v3092
      %v3095 = vshrl.u32 %v2641, 16
      %v3097 = vrot.slane %v3095, 1
      %v3098 = vshll.u32 %v2641, 16
      %v3100 = vrot.slane %v3098, 2
      %v3101 = vor.u32 %v3097, %v3100
      %v3102 = vsel %vm2155, %v3092, %v3101
      %v3104 = vshrl.u32 %v2642, 16
      %v3106 = vrot.slane %v3104, 1
      %v3107 = vshll.u32 %v2642, 16
      %v3109 = vrot.slane %v3107, 2
      %v3110 = vor.u32 %v3106, %v3109
      %v3111 = vsel %vm2155, %v3101, %v3110
      %v3113 = vshrl.u32 %v2643, 16
      %v3115 = vrot.slane %v3113, 1
      %v3116 = vshll.u32 %v2643, 16
      %v3118 = vrot.slane %v3116, 2
      %v3119 = vor.u32 %v3115, %v3118
      %v3120 = vsel %vm2155, %v3110, %v3119
      %v3122 = vshrl.u32 %v2968, 16
      %v3124 = vrot.slane %v3122, 1
      %v3125 = vshll.u32 %v2968, 16
      %v3127 = vrot.slane %v3125, 2
      %v3128 = vor.u32 %v3124, %v3127
      %v3129 = vsel %vm2155, %v3119, %v3128
      %v3163 = vunpack.c.l.b16 %v2950
      %v3164 = vunpack.c.l.b16 %v2951
      %v3165 = vunpack.c.l.b16 %v2952
      %v3166 = vunpack.c.l.b16 %v2953
      %v3167 = vunpack.c.l.b16 %v2954
      %v3168 = vunpack.c.l.b16 %v2955
      %v3169 = vunpack.c.l.b16 %v2956
      %v3170 = vunpack.c.l.b16 %v2957
      %v3171 = vunpack.c.l.b16 %v2958
      %v3172 = vunpack.c.l.b16 %v2959
      %v3173 = vunpack.c.l.b16 %v2960
      %v3174 = vunpack.c.l.b16 %v2961
      %v3175 = vunpack.c.l.b16 %v2962
      %v3176 = vunpack.c.l.b16 %v2963
      %v3177 = vunpack.c.l.b16 %v2964
      %v3178 = vunpack.c.l.b16 %v2965
      %v3179 = vpack.c.b16 %v3164, %v3163
      %v3180 = vpack.c.b16 %v3166, %v3165
      %v3181 = vpack.c.b16 %v3168, %v3167
      %v3182 = vpack.c.b16 %v3170, %v3169
      %v3183 = vpack.c.b16 %v3172, %v3171
      %v3184 = vpack.c.b16 %v3174, %v3173
      %v3185 = vpack.c.b16 %v3176, %v3175
      %v3186 = vpack.c.b16 %v3178, %v3177
      %3195 = vmatprep.subr.bf16.mxu0 0
      %3196 = vmatpush1.bf16.msra.mxu0 %v3179
      %3197 = vmatprep.subr.bf16.mxu0 0
      %3198 = vmatpush1.bf16.msra.mxu0 %v3180
      %3199 = vmatprep.subr.bf16.mxu0 0
      %3200 = vmatpush1.bf16.msra.mxu0 %v3181
      %3201 = vmatprep.subr.bf16.mxu0 0
      %3202 = vmatpush1.bf16.msra.mxu0 %v3182
      %3203 = vmatprep.subr.bf16.mxu0 0
      %3204 = vmatpush1.bf16.msra.mxu0 %v3183
      %3205 = vmatprep.subr.bf16.mxu0 0
      %3206 = vmatpush1.bf16.msra.mxu0 %v3184
      %3207 = vmatprep.subr.bf16.mxu0 0
      %3208 = vmatpush1.bf16.msra.mxu0 %v3185
      %3209 = vmatprep.subr.bf16.mxu0 0
      %3210 = vmatpush1.bf16.msra.mxu0 %v3186
      %3211 = vmatprep.subr.bf16.mxu0 0
      %3212 = vmatpush1.bf16.msra.mxu0 0
      %3213 = vmatprep.subr.bf16.mxu0 0
      %3214 = vmatpush1.bf16.msra.mxu0 0
      %3215 = vmatprep.subr.bf16.mxu0 0
      %3216 = vmatpush1.bf16.msra.mxu0 0
      %3217 = vmatprep.subr.bf16.mxu0 0
      %3218 = vmatpush1.bf16.msra.mxu0 0
      %3219 = vmatprep.subr.bf16.mxu0 0
      %3220 = vmatpush1.bf16.msra.mxu0 0
      %3221 = vmatprep.subr.bf16.mxu0 0
      %3222 = vmatpush1.bf16.msra.mxu0 0
      %3223 = vmatprep.subr.bf16.mxu0 0
      %3224 = vmatpush1.bf16.msra.mxu0 0
      %3225 = vmatprep.subr.bf16.mxu0 0
      %3226 = vmatpush1.bf16.msra.mxu0 0
      %3227 = vmatprep.mubr.bf16.mxu0 0
      %3228 = vmatmul.mubr.bf16.gmra.mrb[0].mxu0 %v2985
      %v3229 = vpop.f32.mrb[0].mxu0
      %v3230 = vadd.f32 0.0, %v3229
      %v3231 = vpop.f32.mrb[0].mxu0
      %v3232 = vpop.f32.mrb[0].mxu0
      %v3233 = vadd.f32 0.0, %v3232
      %v3234 = vpop.f32.mrb[0].mxu0
      %3235 = vmatprep.mubr.bf16.mxu0 0
      %3236 = vmatmul.mubr.bf16.gmra.mrb[0].mxu0 %v2994
      %v3237 = vpop.f32.mrb[0].mxu0
      %v3238 = vadd.f32 0.0, %v3237
      %v3239 = vpop.f32.mrb[0].mxu0
      %v3240 = vpop.f32.mrb[0].mxu0
      %v3241 = vadd.f32 0.0, %v3240
      %v3242 = vpop.f32.mrb[0].mxu0
      %3243 = vmatprep.mubr.bf16.mxu0 0
      %3244 = vmatmul.mubr.bf16.gmra.mrb[0].mxu0 %v3003
      %v3245 = vpop.f32.mrb[0].mxu0
      %v3246 = vadd.f32 0.0, %v3245
      %v3247 = vpop.f32.mrb[0].mxu0
      %v3248 = vpop.f32.mrb[0].mxu0
      %v3249 = vadd.f32 0.0, %v3248
      %v3250 = vpop.f32.mrb[0].mxu0
      %3251 = vmatprep.mubr.bf16.mxu0 0
      %3252 = vmatmul.mubr.bf16.gmra.mrb[0].mxu0 %v3012
      %v3253 = vpop.f32.mrb[0].mxu0
      %v3254 = vadd.f32 0.0, %v3253
      %v3255 = vpop.f32.mrb[0].mxu0
      %v3256 = vpop.f32.mrb[0].mxu0
      %v3257 = vadd.f32 0.0, %v3256
      %v3258 = vpop.f32.mrb[0].mxu0
      %3259 = vmatprep.mubr.bf16.mxu0 0
      %3260 = vmatmul.mubr.bf16.gmra.mrb[0].mxu0 %v3021
      %v3261 = vpop.f32.mrb[0].mxu0
      %v3262 = vadd.f32 0.0, %v3261
      %v3263 = vpop.f32.mrb[0].mxu0
      %v3264 = vpop.f32.mrb[0].mxu0
      %v3265 = vadd.f32 0.0, %v3264
      %v3266 = vpop.f32.mrb[0].mxu0
      %3267 = vmatprep.mubr.bf16.mxu0 0
      %3268 = vmatmul.mubr.bf16.gmra.mrb[0].mxu0 %v3030
      %v3269 = vpop.f32.mrb[0].mxu0
      %v3270 = vadd.f32 0.0, %v3269
      %v3271 = vpop.f32.mrb[0].mxu0
      %v3272 = vpop.f32.mrb[0].mxu0
      %v3273 = vadd.f32 0.0, %v3272
      %v3274 = vpop.f32.mrb[0].mxu0
      %3275 = vmatprep.mubr.bf16.mxu0 0
      %3276 = vmatmul.mubr.bf16.gmra.mrb[0].mxu0 %v3039
      %v3277 = vpop.f32.mrb[0].mxu0
      %v3278 = vadd.f32 0.0, %v3277
      %v3279 = vpop.f32.mrb[0].mxu0
      %v3280 = vpop.f32.mrb[0].mxu0
      %v3281 = vadd.f32 0.0, %v3280
      %v3282 = vpop.f32.mrb[0].mxu0
      %3283 = vmatprep.mubr.bf16.mxu0 0
      %3284 = vmatmul.mubr.bf16.gmra.mrb[0].mxu0 %v3048
      %v3285 = vpop.f32.mrb[0].mxu0
      %v3286 = vadd.f32 0.0, %v3285
      %v3287 = vpop.f32.mrb[0].mxu0
      %v3288 = vpop.f32.mrb[0].mxu0
      %v3289 = vadd.f32 0.0, %v3288
      %v3290 = vpop.f32.mrb[0].mxu0
      %3291 = vmatprep.mubr.bf16.mxu0 0
      %3292 = vmatmul.mubr.bf16.gmra.mrb[0].mxu0 %v3057
      %v3293 = vpop.f32.mrb[0].mxu0
      %v3294 = vadd.f32 0.0, %v3293
      %v3295 = vpop.f32.mrb[0].mxu0
      %v3296 = vpop.f32.mrb[0].mxu0
      %v3297 = vadd.f32 0.0, %v3296
      %v3298 = vpop.f32.mrb[0].mxu0
      %3299 = vmatprep.mubr.bf16.mxu0 0
      %3300 = vmatmul.mubr.bf16.gmra.mrb[0].mxu0 %v3066
      %v3301 = vpop.f32.mrb[0].mxu0
      %v3302 = vadd.f32 0.0, %v3301
      %v3303 = vpop.f32.mrb[0].mxu0
      %v3304 = vpop.f32.mrb[0].mxu0
      %v3305 = vadd.f32 0.0, %v3304
      %v3306 = vpop.f32.mrb[0].mxu0
      %3307 = vmatprep.mubr.bf16.mxu0 0
      %3308 = vmatmul.mubr.bf16.gmra.mrb[0].mxu0 %v3075
      %v3309 = vpop.f32.mrb[0].mxu0
      %v3310 = vadd.f32 0.0, %v3309
      %v3311 = vpop.f32.mrb[0].mxu0
      %v3312 = vpop.f32.mrb[0].mxu0
      %v3313 = vadd.f32 0.0, %v3312
      %v3314 = vpop.f32.mrb[0].mxu0
      %3315 = vmatprep.mubr.bf16.mxu0 0
      %3316 = vmatmul.mubr.bf16.gmra.mrb[0].mxu0 %v3084
      %v3317 = vpop.f32.mrb[0].mxu0
      %v3318 = vadd.f32 0.0, %v3317
      %v3319 = vpop.f32.mrb[0].mxu0
      %v3320 = vpop.f32.mrb[0].mxu0
      %v3321 = vadd.f32 0.0, %v3320
      %v3322 = vpop.f32.mrb[0].mxu0
      %3323 = vmatprep.mubr.bf16.mxu0 0
      %3324 = vmatmul.mubr.bf16.gmra.mrb[0].mxu0 %v3093
      %v3325 = vpop.f32.mrb[0].mxu0
      %v3326 = vadd.f32 0.0, %v3325
      %v3327 = vpop.f32.mrb[0].mxu0
      %v3328 = vpop.f32.mrb[0].mxu0
      %v3329 = vadd.f32 0.0, %v3328
      %v3330 = vpop.f32.mrb[0].mxu0
      %3331 = vmatprep.mubr.bf16.mxu0 0
      %3332 = vmatmul.mubr.bf16.gmra.mrb[0].mxu0 %v3102
      %v3333 = vpop.f32.mrb[0].mxu0
      %v3334 = vadd.f32 0.0, %v3333
      %v3335 = vpop.f32.mrb[0].mxu0
      %v3336 = vpop.f32.mrb[0].mxu0
      %v3337 = vadd.f32 0.0, %v3336
      %v3338 = vpop.f32.mrb[0].mxu0
      %3339 = vmatprep.mubr.bf16.mxu0 0
      %3340 = vmatmul.mubr.bf16.gmra.mrb[0].mxu0 %v3111
      %v3341 = vpop.f32.mrb[0].mxu0
      %v3342 = vadd.f32 0.0, %v3341
      %v3343 = vpop.f32.mrb[0].mxu0
      %v3344 = vpop.f32.mrb[0].mxu0
      %v3345 = vadd.f32 0.0, %v3344
      %v3346 = vpop.f32.mrb[0].mxu0
      %3347 = vmatprep.mubr.bf16.mxu0 0
      %3348 = vmatmul.mubr.bf16.gmra.mrb[0].mxu0 %v3120
      %v3349 = vpop.f32.mrb[0].mxu0
      %v3350 = vadd.f32 0.0, %v3349
      %v3351 = vpop.f32.mrb[0].mxu0
      %v3352 = vpop.f32.mrb[0].mxu0
      %v3353 = vadd.f32 0.0, %v3352
      %v3354 = vpop.f32.mrb[0].mxu0
      %3355 = vmatprep.mubr.bf16.mxu0 0
      %3356 = vmatmul.mubr.bf16.gmra.mrb[0].mxu0 %v3129
      %v3357 = vpop.f32.mrb[0].mxu0
      %v3358 = vadd.f32 0.0, %v3357
      %v3359 = vpop.f32.mrb[0].mxu0
      %v3360 = vpop.f32.mrb[0].mxu0
      %v3361 = vadd.f32 0.0, %v3360
      %v3362 = vpop.f32.mrb[0].mxu0
      %3363 = vdwg.mxu0
      %v3364 = vadd.f32 %v2914, %v3230
      %v3365 = vadd.f32 %v2915, %v3233
      %v3366 = vadd.f32 %v2916, %v3238
      %v3367 = vadd.f32 %v2917, %v3241
      %v3368 = vadd.f32 %v2918, %v3246
      %v3369 = vadd.f32 %v2919, %v3249
      %v3370 = vadd.f32 %v2920, %v3254
      %v3371 = vadd.f32 %v2921, %v3257
      %v3372 = vadd.f32 %v2922, %v3262
      %v3373 = vadd.f32 %v2923, %v3265
      %v3374 = vadd.f32 %v2924, %v3270
      %v3375 = vadd.f32 %v2925, %v3273
      %v3376 = vadd.f32 %v2926, %v3278
      %v3377 = vadd.f32 %v2927, %v3281
      %v3378 = vadd.f32 %v2928, %v3286
      %v3379 = vadd.f32 %v2929, %v3289
      %v3380 = vadd.f32 %v2930, %v3294
      %v3381 = vadd.f32 %v2931, %v3297
      %v3382 = vadd.f32 %v2932, %v3302
      %v3383 = vadd.f32 %v2933, %v3305
      %v3384 = vadd.f32 %v2934, %v3310
      %v3385 = vadd.f32 %v2935, %v3313
      %v3386 = vadd.f32 %v2936, %v3318
      %v3387 = vadd.f32 %v2937, %v3321
      %v3388 = vadd.f32 %v2938, %v3326
      %v3389 = vadd.f32 %v2939, %v3329
      %v3390 = vadd.f32 %v2940, %v3334
      %v3391 = vadd.f32 %v2941, %v3337
      %v3392 = vadd.f32 %v2942, %v3342
      %v3393 = vadd.f32 %v2943, %v3345
      %v3394 = vadd.f32 %v2944, %v3350
      %v3395 = vadd.f32 %v2945, %v3353
      %v3396 = vadd.f32 %v2946, %v3358
      %v3397 = vadd.f32 %v2947, %v3361
      %v3398 = vld [vmem:[%s165 + $0x10] sm:$0xc]
      %s3399 = scalar_lea.vmem %s1, 512
      %v3400 = vld [vmem:[%s3399] sm:$0xf]
      %v3401 = vld [vmem:[%s3399 + $0x4] sm:$0xf]
      %v3402 = vld [vmem:[%s3399 + $0x8] sm:$0xf]
      %v3403 = vld [vmem:[%s3399 + $0xc] sm:$0xf]
      %v3404 = vld [vmem:[%s3399 + $0x10] sm:$0xf]
      %v3405 = vld [vmem:[%s3399 + $0x14] sm:$0xf]
      %v3406 = vld [vmem:[%s3399 + $0x18] sm:$0xf]
      %v3407 = vld [vmem:[%s3399 + $0x1c] sm:$0xf]
      %v3408 = vld [vmem:[%s3399 + $0x20] sm:$0xf]
      %v3409 = vld [vmem:[%s3399 + $0x24] sm:$0xf]
      %v3410 = vld [vmem:[%s3399 + $0x28] sm:$0xf]
      %v3411 = vld [vmem:[%s3399 + $0x2c] sm:$0xf]
      %v3412 = vld [vmem:[%s3399 + $0x30] sm:$0xf]
      %v3413 = vld [vmem:[%s3399 + $0x34] sm:$0xf]
      %v3414 = vld [vmem:[%s3399 + $0x38] sm:$0xf]
      %v3415 = vld [vmem:[%s3399 + $0x3c] sm:$0xf]
      %v3417 = vunpack.c.l.b16 %v3398
      %v3418 = vpack.c.b16 %v2593, %v3417
      %vm3419 = vcmask 1045504
      %v3420 = vrot.slane %v3418, 2
      %v3421 = vrot.slane %v2628, 2
      %v3422 = vsel %vm3419, %v3420, %v3421
      %v3423 = vrot.slane %v2629, 2
      %v3424 = vsel %vm3419, %v3421, %v3423
      %v3425 = vrot.slane %v2630, 2
      %v3426 = vsel %vm3419, %v3423, %v3425
      %v3427 = vrot.slane %v2631, 2
      %v3428 = vsel %vm3419, %v3425, %v3427
      %v3429 = vrot.slane %v2632, 2
      %v3430 = vsel %vm3419, %v3427, %v3429
      %v3431 = vrot.slane %v2633, 2
      %v3432 = vsel %vm3419, %v3429, %v3431
      %v3433 = vrot.slane %v2634, 2
      %v3434 = vsel %vm3419, %v3431, %v3433
      %v3435 = vrot.slane %v2635, 2
      %v3436 = vsel %vm3419, %v3433, %v3435
      %v3437 = vrot.slane %v2636, 2
      %v3438 = vsel %vm3419, %v3435, %v3437
      %v3439 = vrot.slane %v2637, 2
      %v3440 = vsel %vm3419, %v3437, %v3439
      %v3441 = vrot.slane %v2638, 2
      %v3442 = vsel %vm3419, %v3439, %v3441
      %v3443 = vrot.slane %v2639, 2
      %v3444 = vsel %vm3419, %v3441, %v3443
      %v3445 = vrot.slane %v2640, 2
      %v3446 = vsel %vm3419, %v3443, %v3445
      %v3447 = vrot.slane %v2641, 2
      %v3448 = vsel %vm3419, %v3445, %v3447
      %v3449 = vrot.slane %v2642, 2
      %v3450 = vsel %vm3419, %v3447, %v3449
      %v3451 = vrot.slane %v2643, 2
      %v3452 = vsel %vm3419, %v3449, %v3451
      %v3453 = vrot.slane %v2968, 2
      %v3454 = vsel %vm3419, %v3451, %v3453
      %v3488 = vunpack.c.l.b16 %v3400
      %v3489 = vunpack.c.l.b16 %v3401
      %v3490 = vunpack.c.l.b16 %v3402
      %v3491 = vunpack.c.l.b16 %v3403
      %v3492 = vunpack.c.l.b16 %v3404
      %v3493 = vunpack.c.l.b16 %v3405
      %v3494 = vunpack.c.l.b16 %v3406
      %v3495 = vunpack.c.l.b16 %v3407
      %v3496 = vunpack.c.l.b16 %v3408
      %v3497 = vunpack.c.l.b16 %v3409
      %v3498 = vunpack.c.l.b16 %v3410
      %v3499 = vunpack.c.l.b16 %v3411
      %v3500 = vunpack.c.l.b16 %v3412
      %v3501 = vunpack.c.l.b16 %v3413
      %v3502 = vunpack.c.l.b16 %v3414
      %v3503 = vunpack.c.l.b16 %v3415
      %v3504 = vpack.c.b16 %v3489, %v3488
      %v3505 = vpack.c.b16 %v3491, %v3490
      %v3506 = vpack.c.b16 %v3493, %v3492
      %v3507 = vpack.c.b16 %v3495, %v3494
      %v3508 = vpack.c.b16 %v3497, %v3496
      %v3509 = vpack.c.b16 %v3499, %v3498
      %v3510 = vpack.c.b16 %v3501, %v3500
      %v3511 = vpack.c.b16 %v3503, %v3502
      %3520 = vmatprep.subr.bf16.mxu0 0
      %3521 = vmatpush1.bf16.msra.mxu0 %v3504
      %3522 = vmatprep.subr.bf16.mxu0 0
      %3523 = vmatpush1.bf16.msra.mxu0 %v3505
      %3524 = vmatprep.subr.bf16.mxu0 0
      %3525 = vmatpush1.bf16.msra.mxu0 %v3506
      %3526 = vmatprep.subr.bf16.mxu0 0
      %3527 = vmatpush1.bf16.msra.mxu0 %v3507
      %3528 = vmatprep.subr.bf16.mxu0 0
      %3529 = vmatpush1.bf16.msra.mxu0 %v3508
      %3530 = vmatprep.subr.bf16.mxu0 0
      %3531 = vmatpush1.bf16.msra.mxu0 %v3509
      %3532 = vmatprep.subr.bf16.mxu0 0
      %3533 = vmatpush1.bf16.msra.mxu0 %v3510
      %3534 = vmatprep.subr.bf16.mxu0 0
      %3535 = vmatpush1.bf16.msra.mxu0 %v3511
      %3536 = vmatprep.subr.bf16.mxu0 0
      %3537 = vmatpush1.bf16.msra.mxu0 0
      %3538 = vmatprep.subr.bf16.mxu0 0
      %3539 = vmatpush1.bf16.msra.mxu0 0
      %3540 = vmatprep.subr.bf16.mxu0 0
      %3541 = vmatpush1.bf16.msra.mxu0 0
      %3542 = vmatprep.subr.bf16.mxu0 0
      %3543 = vmatpush1.bf16.msra.mxu0 0
      %3544 = vmatprep.subr.bf16.mxu0 0
      %3545 = vmatpush1.bf16.msra.mxu0 0
      %3546 = vmatprep.subr.bf16.mxu0 0
      %3547 = vmatpush1.bf16.msra.mxu0 0
      %3548 = vmatprep.subr.bf16.mxu0 0
      %3549 = vmatpush1.bf16.msra.mxu0 0
      %3550 = vmatprep.subr.bf16.mxu0 0
      %3551 = vmatpush1.bf16.msra.mxu0 0
      %3552 = vmatprep.mubr.bf16.mxu0 0
      %3553 = vmatmul.mubr.bf16.gmra.mrb[0].mxu0 %v3422
      %v3554 = vpop.f32.mrb[0].mxu0
      %v3555 = vadd.f32 0.0, %v3554
      %v3556 = vpop.f32.mrb[0].mxu0
      %v3557 = vpop.f32.mrb[0].mxu0
      %v3558 = vadd.f32 0.0, %v3557
      %v3559 = vpop.f32.mrb[0].mxu0
      %3560 = vmatprep.mubr.bf16.mxu0 0
      %3561 = vmatmul.mubr.bf16.gmra.mrb[0].mxu0 %v3424
      %v3562 = vpop.f32.mrb[0].mxu0
      %v3563 = vadd.f32 0.0, %v3562
      %v3564 = vpop.f32.mrb[0].mxu0
      %v3565 = vpop.f32.mrb[0].mxu0
      %v3566 = vadd.f32 0.0, %v3565
      %v3567 = vpop.f32.mrb[0].mxu0
      %3568 = vmatprep.mubr.bf16.mxu0 0
      %3569 = vmatmul.mubr.bf16.gmra.mrb[0].mxu0 %v3426
      %v3570 = vpop.f32.mrb[0].mxu0
      %v3571 = vadd.f32 0.0, %v3570
      %v3572 = vpop.f32.mrb[0].mxu0
      %v3573 = vpop.f32.mrb[0].mxu0
      %v3574 = vadd.f32 0.0, %v3573
      %v3575 = vpop.f32.mrb[0].mxu0
      %3576 = vmatprep.mubr.bf16.mxu0 0
      %3577 = vmatmul.mubr.bf16.gmra.mrb[0].mxu0 %v3428
      %v3578 = vpop.f32.mrb[0].mxu0
      %v3579 = vadd.f32 0.0, %v3578
      %v3580 = vpop.f32.mrb[0].mxu0
      %v3581 = vpop.f32.mrb[0].mxu0
      %v3582 = vadd.f32 0.0, %v3581
      %v3583 = vpop.f32.mrb[0].mxu0
      %3584 = vmatprep.mubr.bf16.mxu0 0
      %3585 = vmatmul.mubr.bf16.gmra.mrb[0].mxu0 %v3430
      %v3586 = vpop.f32.mrb[0].mxu0
      %v3587 = vadd.f32 0.0, %v3586
      %v3588 = vpop.f32.mrb[0].mxu0
      %v3589 = vpop.f32.mrb[0].mxu0
      %v3590 = vadd.f32 0.0, %v3589
      %v3591 = vpop.f32.mrb[0].mxu0
      %3592 = vmatprep.mubr.bf16.mxu0 0
      %3593 = vmatmul.mubr.bf16.gmra.mrb[0].mxu0 %v3432
      %v3594 = vpop.f32.mrb[0].mxu0
      %v3595 = vadd.f32 0.0, %v3594
      %v3596 = vpop.f32.mrb[0].mxu0
      %v3597 = vpop.f32.mrb[0].mxu0
      %v3598 = vadd.f32 0.0, %v3597
      %v3599 = vpop.f32.mrb[0].mxu0
      %3600 = vmatprep.mubr.bf16.mxu0 0
      %3601 = vmatmul.mubr.bf16.gmra.mrb[0].mxu0 %v3434
      %v3602 = vpop.f32.mrb[0].mxu0
      %v3603 = vadd.f32 0.0, %v3602
      %v3604 = vpop.f32.mrb[0].mxu0
      %v3605 = vpop.f32.mrb[0].mxu0
      %v3606 = vadd.f32 0.0, %v3605
      %v3607 = vpop.f32.mrb[0].mxu0
      %3608 = vmatprep.mubr.bf16.mxu0 0
      %3609 = vmatmul.mubr.bf16.gmra.mrb[0].mxu0 %v3436
      %v3610 = vpop.f32.mrb[0].mxu0
      %v3611 = vadd.f32 0.0, %v3610
      %v3612 = vpop.f32.mrb[0].mxu0
      %v3613 = vpop.f32.mrb[0].mxu0
      %v3614 = vadd.f32 0.0, %v3613
      %v3615 = vpop.f32.mrb[0].mxu0
      %3616 = vmatprep.mubr.bf16.mxu0 0
      %3617 = vmatmul.mubr.bf16.gmra.mrb[0].mxu0 %v3438
      %v3618 = vpop.f32.mrb[0].mxu0
      %v3619 = vadd.f32 0.0, %v3618
      %v3620 = vpop.f32.mrb[0].mxu0
      %v3621 = vpop.f32.mrb[0].mxu0
      %v3622 = vadd.f32 0.0, %v3621
      %v3623 = vpop.f32.mrb[0].mxu0
      %3624 = vmatprep.mubr.bf16.mxu0 0
      %3625 = vmatmul.mubr.bf16.gmra.mrb[0].mxu0 %v3440
      %v3626 = vpop.f32.mrb[0].mxu0
      %v3627 = vadd.f32 0.0, %v3626
      %v3628 = vpop.f32.mrb[0].mxu0
      %v3629 = vpop.f32.mrb[0].mxu0
      %v3630 = vadd.f32 0.0, %v3629
      %v3631 = vpop.f32.mrb[0].mxu0
      %3632 = vmatprep.mubr.bf16.mxu0 0
      %3633 = vmatmul.mubr.bf16.gmra.mrb[0].mxu0 %v3442
      %v3634 = vpop.f32.mrb[0].mxu0
      %v3635 = vadd.f32 0.0, %v3634
      %v3636 = vpop.f32.mrb[0].mxu0
      %v3637 = vpop.f32.mrb[0].mxu0
      %v3638 = vadd.f32 0.0, %v3637
      %v3639 = vpop.f32.mrb[0].mxu0
      %3640 = vmatprep.mubr.bf16.mxu0 0
      %3641 = vmatmul.mubr.bf16.gmra.mrb[0].mxu0 %v3444
      %v3642 = vpop.f32.mrb[0].mxu0
      %v3643 = vadd.f32 0.0, %v3642
      %v3644 = vpop.f32.mrb[0].mxu0
      %v3645 = vpop.f32.mrb[0].mxu0
      %v3646 = vadd.f32 0.0, %v3645
      %v3647 = vpop.f32.mrb[0].mxu0
      %3648 = vmatprep.mubr.bf16.mxu0 0
      %3649 = vmatmul.mubr.bf16.gmra.mrb[0].mxu0 %v3446
      %v3650 = vpop.f32.mrb[0].mxu0
      %v3651 = vadd.f32 0.0, %v3650
      %v3652 = vpop.f32.mrb[0].mxu0
      %v3653 = vpop.f32.mrb[0].mxu0
      %v3654 = vadd.f32 0.0, %v3653
      %v3655 = vpop.f32.mrb[0].mxu0
      %3656 = vmatprep.mubr.bf16.mxu0 0
      %3657 = vmatmul.mubr.bf16.gmra.mrb[0].mxu0 %v3448
      %v3658 = vpop.f32.mrb[0].mxu0
      %v3659 = vadd.f32 0.0, %v3658
      %v3660 = vpop.f32.mrb[0].mxu0
      %v3661 = vpop.f32.mrb[0].mxu0
      %v3662 = vadd.f32 0.0, %v3661
      %v3663 = vpop.f32.mrb[0].mxu0
      %3664 = vmatprep.mubr.bf16.mxu0 0
      %3665 = vmatmul.mubr.bf16.gmra.mrb[0].mxu0 %v3450
      %v3666 = vpop.f32.mrb[0].mxu0
      %v3667 = vadd.f32 0.0, %v3666
      %v3668 = vpop.f32.mrb[0].mxu0
      %v3669 = vpop.f32.mrb[0].mxu0
      %v3670 = vadd.f32 0.0, %v3669
      %v3671 = vpop.f32.mrb[0].mxu0
      %3672 = vmatprep.mubr.bf16.mxu0 0
      %3673 = vmatmul.mubr.bf16.gmra.mrb[0].mxu0 %v3452
      %v3674 = vpop.f32.mrb[0].mxu0
      %v3675 = vadd.f32 0.0, %v3674
      %v3676 = vpop.f32.mrb[0].mxu0
      %v3677 = vpop.f32.mrb[0].mxu0
      %v3678 = vadd.f32 0.0, %v3677
      %v3679 = vpop.f32.mrb[0].mxu0
      %3680 = vmatprep.mubr.bf16.mxu0 0
      %3681 = vmatmul.mubr.bf16.gmra.mrb[0].mxu0 %v3454
      %v3682 = vpop.f32.mrb[0].mxu0
      %v3683 = vadd.f32 0.0, %v3682
      %v3684 = vpop.f32.mrb[0].mxu0
      %v3685 = vpop.f32.mrb[0].mxu0
      %v3686 = vadd.f32 0.0, %v3685
      %v3687 = vpop.f32.mrb[0].mxu0
      %3688 = vdwg.mxu0
      %v3689 = vadd.f32 %v3364, %v3555
      %v3690 = vadd.f32 %v3365, %v3558
      %v3691 = vadd.f32 %v3366, %v3563
      %v3692 = vadd.f32 %v3367, %v3566
      %v3693 = vadd.f32 %v3368, %v3571
      %v3694 = vadd.f32 %v3369, %v3574
      %v3695 = vadd.f32 %v3370, %v3579
      %v3696 = vadd.f32 %v3371, %v3582
      %v3697 = vadd.f32 %v3372, %v3587
      %v3698 = vadd.f32 %v3373, %v3590
      %v3699 = vadd.f32 %v3374, %v3595
      %v3700 = vadd.f32 %v3375, %v3598
      %v3701 = vadd.f32 %v3376, %v3603
      %v3702 = vadd.f32 %v3377, %v3606
      %v3703 = vadd.f32 %v3378, %v3611
      %v3704 = vadd.f32 %v3379, %v3614
      %v3705 = vadd.f32 %v3380, %v3619
      %v3706 = vadd.f32 %v3381, %v3622
      %v3707 = vadd.f32 %v3382, %v3627
      %v3708 = vadd.f32 %v3383, %v3630
      %v3709 = vadd.f32 %v3384, %v3635
      %v3710 = vadd.f32 %v3385, %v3638
      %v3711 = vadd.f32 %v3386, %v3643
      %v3712 = vadd.f32 %v3387, %v3646
      %v3713 = vadd.f32 %v3388, %v3651
      %v3714 = vadd.f32 %v3389, %v3654
      %v3715 = vadd.f32 %v3390, %v3659
      %v3716 = vadd.f32 %v3391, %v3662
      %v3717 = vadd.f32 %v3392, %v3667
      %v3718 = vadd.f32 %v3393, %v3670
      %v3719 = vadd.f32 %v3394, %v3675
      %v3720 = vadd.f32 %v3395, %v3678
      %v3721 = vadd.f32 %v3396, %v3683
      %v3722 = vadd.f32 %v3397, %v3686
      %v3723 = vld [vmem:[%s2] sm:$0x1]
      %v3725 = vlaneseq
      %v3726 = vshrl.u32 %v3725, 7
      %v3727 = vsub.s32 0, %v3726
      %v3728 = vrot.slane %v3723, %v3727
      %v3730 = vadd.f32 %v3689, %v3728
      %v3731 = vadd.f32 %v3690, %v3728
      %v3732 = vadd.f32 %v3691, %v3728
      %v3733 = vadd.f32 %v3692, %v3728
      %v3734 = vadd.f32 %v3693, %v3728
      %v3735 = vadd.f32 %v3694, %v3728
      %v3736 = vadd.f32 %v3695, %v3728
      %v3737 = vadd.f32 %v3696, %v3728
      %v3738 = vadd.f32 %v3697, %v3728
      %v3739 = vadd.f32 %v3698, %v3728
      %v3740 = vadd.f32 %v3699, %v3728
      %v3741 = vadd.f32 %v3700, %v3728
      %v3742 = vadd.f32 %v3701, %v3728
      %v3743 = vadd.f32 %v3702, %v3728
      %v3744 = vadd.f32 %v3703, %v3728
      %v3745 = vadd.f32 %v3704, %v3728
      %v3746 = vadd.f32 %v3705, %v3728
      %v3747 = vadd.f32 %v3706, %v3728
      %v3748 = vadd.f32 %v3707, %v3728
      %v3749 = vadd.f32 %v3708, %v3728
      %v3750 = vadd.f32 %v3709, %v3728
      %v3751 = vadd.f32 %v3710, %v3728
      %v3752 = vadd.f32 %v3711, %v3728
      %v3753 = vadd.f32 %v3712, %v3728
      %v3754 = vadd.f32 %v3713, %v3728
      %v3755 = vadd.f32 %v3714, %v3728
      %v3756 = vadd.f32 %v3715, %v3728
      %v3757 = vadd.f32 %v3716, %v3728
      %v3758 = vadd.f32 %v3717, %v3728
      %v3759 = vadd.f32 %v3718, %v3728
      %v3760 = vadd.f32 %v3719, %v3728
      %v3761 = vadd.f32 %v3720, %v3728
      %v3762 = vadd.f32 %v3721, %v3728
      %v3763 = vadd.f32 %v3722, %v3728
      %v3764 = vmax.f32 %v3730, 0.0
      %v3765 = vmax.f32 %v3731, 0.0
      %v3766 = vmax.f32 %v3732, 0.0
      %v3767 = vmax.f32 %v3733, 0.0
      %v3768 = vmax.f32 %v3734, 0.0
      %v3769 = vmax.f32 %v3735, 0.0
      %v3770 = vmax.f32 %v3736, 0.0
      %v3771 = vmax.f32 %v3737, 0.0
      %v3772 = vmax.f32 %v3738, 0.0
      %v3773 = vmax.f32 %v3739, 0.0
      %v3774 = vmax.f32 %v3740, 0.0
      %v3775 = vmax.f32 %v3741, 0.0
      %v3776 = vmax.f32 %v3742, 0.0
      %v3777 = vmax.f32 %v3743, 0.0
      %v3778 = vmax.f32 %v3744, 0.0
      %v3779 = vmax.f32 %v3745, 0.0
      %v3780 = vmax.f32 %v3746, 0.0
      %v3781 = vmax.f32 %v3747, 0.0
      %v3782 = vmax.f32 %v3748, 0.0
      %v3783 = vmax.f32 %v3749, 0.0
      %v3784 = vmax.f32 %v3750, 0.0
      %v3785 = vmax.f32 %v3751, 0.0
      %v3786 = vmax.f32 %v3752, 0.0
      %v3787 = vmax.f32 %v3753, 0.0
      %v3788 = vmax.f32 %v3754, 0.0
      %v3789 = vmax.f32 %v3755, 0.0
      %v3790 = vmax.f32 %v3756, 0.0
      %v3791 = vmax.f32 %v3757, 0.0
      %v3792 = vmax.f32 %v3758, 0.0
      %v3793 = vmax.f32 %v3759, 0.0
      %v3794 = vmax.f32 %v3760, 0.0
      %v3795 = vmax.f32 %v3761, 0.0
      %v3796 = vmax.f32 %v3762, 0.0
      %v3797 = vmax.f32 %v3763, 0.0
      %3798 = vst [vmem:[%s170] sm:$0xff] %v3764
      %3799 = vst [vmem:[%s170 + $0x8] sm:$0xff] %v3765
      %3800 = vst [vmem:[%s170 + $0x10] sm:$0xff] %v3766
      %3801 = vst [vmem:[%s170 + $0x18] sm:$0xff] %v3767
      %3802 = vst [vmem:[%s170 + $0x20] sm:$0xff] %v3768
      %3803 = vst [vmem:[%s170 + $0x28] sm:$0xff] %v3769
      %3804 = vst [vmem:[%s170 + $0x30] sm:$0xff] %v3770
      %3805 = vst [vmem:[%s170 + $0x38] sm:$0xff] %v3771
      %3806 = vst [vmem:[%s170 + $0x40] sm:$0xff] %v3772
      %3807 = vst [vmem:[%s170 + $0x48] sm:$0xff] %v3773
      %3808 = vst [vmem:[%s170 + $0x50] sm:$0xff] %v3774
      %3809 = vst [vmem:[%s170 + $0x58] sm:$0xff] %v3775
      %3810 = vst [vmem:[%s170 + $0x60] sm:$0xff] %v3776
      %3811 = vst [vmem:[%s170 + $0x68] sm:$0xff] %v3777
      %3812 = vst [vmem:[%s170 + $0x70] sm:$0xff] %v3778
      %3813 = vst [vmem:[%s170 + $0x78] sm:$0xff] %v3779
      %3814 = vst [vmem:[%s170 + $0x80] sm:$0xff] %v3780
      %3815 = vst [vmem:[%s170 + $0x88] sm:$0xff] %v3781
      %3816 = vst [vmem:[%s170 + $0x90] sm:$0xff] %v3782
      %3817 = vst [vmem:[%s170 + $0x98] sm:$0xff] %v3783
      %3818 = vst [vmem:[%s170 + $0xa0] sm:$0xff] %v3784
      %3819 = vst [vmem:[%s170 + $0xa8] sm:$0xff] %v3785
      %3820 = vst [vmem:[%s170 + $0xb0] sm:$0xff] %v3786
      %3821 = vst [vmem:[%s170 + $0xb8] sm:$0xff] %v3787
      %3822 = vst [vmem:[%s170 + $0xc0] sm:$0xff] %v3788
      %3823 = vst [vmem:[%s170 + $0xc8] sm:$0xff] %v3789
      %3824 = vst [vmem:[%s170 + $0xd0] sm:$0xff] %v3790
      %3825 = vst [vmem:[%s170 + $0xd8] sm:$0xff] %v3791
      %3826 = vst [vmem:[%s170 + $0xe0] sm:$0xff] %v3792
      %3827 = vst [vmem:[%s170 + $0xe8] sm:$0xff] %v3793
      %3828 = vst [vmem:[%s170 + $0xf0] sm:$0xff] %v3794
      %3829 = vst [vmem:[%s170 + $0xf8] sm:$0xff] %v3795
      %3830 = vst [vmem:[%s170 + $0x100] sm:$0xff] %v3796
      %3831 = vst [vmem:[%s170 + $0x108] sm:$0xff] %v3797
      %p3832 = scmp.lt.s32.totalorder %s14, 1
      %s3833 = scalar_select %p3832, %s14, 1
      %s3834 = smul.addr %s3833, 34
      %s3835 = smul.addr %s3834, 8
      %s3836 = scalar_lea.vmem %s3, %s3835
      // Predicated region
      $region33: #{inception_forward.5} parent=31 // pred_check
        %p3837 = pneg %p100
      $region34: #{inception_forward.5} parent=31 // pred_check_branch
        %3839 = sbr.rel (%p3837) target = $region36
      $region35: #{inception_forward.5} parent=31 // pred_region
        _
      $region36: #{inception_forward.5} parent=31 // pred_fallthru
        _
    $region32: #{inception_forward.5} parent=5 // pred_fallthru
      _
    %p3840 = scmp.le.s32.totalorder 2, %s9
    // Predicated region
    $region37: #{inception_forward.5} parent=5 // pred_check
      %p3841 = pneg %p3840
    $region38: #{inception_forward.5} parent=5 // pred_check_branch
      %3843 = sbr.rel (%p3841) target = $region40
    $region39: #{inception_forward.5} parent=5 // pred_region
      %s3844 = ssub.s32 %s9, 2
      // Predicated region
      $region41: #{inception_forward.5} parent=39 // pred_check
        %p3845 = pneg %p106
      $region42: #{inception_forward.5} parent=39 // pred_check_branch
        %3847 = sbr.rel (%p3845) target = $region44
      $region43: #{inception_forward.5} parent=39 // pred_region
        %p3848 = scmp.lt.s32.totalorder %s15, 1
        %s3849 = scalar_select %p3848, %s15, 1
        %s3850 = smul.addr %s3849, 34
        %s3851 = smul.addr %s3850, 8
        %s3852 = scalar_lea.vmem %s3, %s3851
      $region44: #{inception_forward.5} parent=39 // pred_fallthru
        _
    $region40: #{inception_forward.5} parent=5 // pred_fallthru
      _
  $region6: #{inception_forward.5} parent=0 // loop_footer
    %s13 = sadd.s32 1, %s9
  $region7: #{inception_forward.5} parent=0 // loop_footer_branch
    %8 = sbr.rel target = $region3
  $region8: #{inception_forward.5} parent=0 // loop_exit
    _

// kernel: inception_forward.6
$region0: #{inception_forward.6}
  #allocation0 [shape = 'u32[]', space=smem, size = 0x4, offset = 0x4, fixed_abs, tag = 'smem constant byte address 0x4 - core index']
  #allocation1 [shape = 'u32[144,128]{1,0:T(1,128)}', space=vmem, size = 0x12000, scoped, tag = 'internal scratch']
  %s0 = inlined_call_operand.vmem [shape: bf16[2,308,128], index: 0, kind: input, shape index: {}]
  %s1 = inlined_call_operand.vmem [shape: bf16[9,128,128], index: 1, kind: input, shape index: {}]
  %s2 = inlined_call_operand.vmem [shape: f32[1,128], index: 2, kind: input, shape index: {}]
  %s3 = inlined_call_operand.vmem [shape: bf16[2,272,128], index: 3, kind: output, shape index: {}]
  %s4 = sld [smem:[#allocation0]]
  $region45: #{inception_forward.6} parent=0
    _
  %s6 = ssub.s32 1, %s4
  %s7 = scalar_select 0, %s6, %s4
  loop: start=0, step=1, limit=4
  $region2: #{inception_forward.6} parent=0 // loop_pre_header
    _
  $region3: #{inception_forward.6} parent=0 // loop_header
    %s9 = sphi 0, %s13
    %p10 = scmp.ge.s32.totalorder %s9, 4
    %s19 = sphi 0, %s21
    %s22 = sphi 0, %s19
    %s23 = sphi 0, %s22
    %s39 = sphi 0, %s23
    %s43 = sphi 0, %s43
    %s45 = sphi 0, %s43
    %s46 = sphi 0, %s45
    %s60 = sphi 0, %s46
    %s64 = sphi 0, %s64
    %s66 = sphi 0, %s64
    %s67 = sphi 0, %s66
    %s81 = sphi 0, %s67
    %s87 = sphi 0, %s89
    %s90 = sphi 0, %s87
    %s91 = sphi 0, %s90
    %s107 = sphi 0, %s91
  $region4: #{inception_forward.6} parent=0 // loop_header_branch
    %12 = sbr.rel (%p10) target = $region8
  $region5: #{inception_forward.6} parent=0 // loop_body
    %s14 = ssub.s32 %s9, 1
    %s15 = ssub.s32 %s9, 2
    %s16 = sadd.s32 %s9, 1
    %s17 = ssub.s32 %s9, %s16
    %p18 = scmp.eq.s32.totalorder %s17, 0
    %s20 = sadd.s32 %s19, 1
    %s21 = scalar_select %p18, %s19, %s20
    %p24 = pneg %p18
    %p25 = scmp.eq.s32.totalorder %s9, 1
    %p26 = por %p24, %p25
    %p27 = scmp.ne.s32.totalorder %s19, %s22
    %p28 = scmp.eq.s32.totalorder %s9, 0
    %p29 = por %p27, %p28
    %p30 = scmp.ne.s32.totalorder %s19, %s22
    %p31 = scmp.eq.s32.totalorder %s14, 1
    %p32 = por %p30, %p31
    %p33 = scmp.ne.s32.totalorder %s22, %s23
    %p34 = scmp.eq.s32.totalorder %s14, 0
    %p35 = por %p33, %p34
    %p36 = scmp.ne.s32.totalorder %s22, %s23
    %p37 = scmp.eq.s32.totalorder %s15, 1
    %p38 = por %p36, %p37
    %p40 = scmp.ne.s32.totalorder %s23, %s39
    %p41 = scmp.eq.s32.totalorder %s15, 0
    %p42 = por %p40, %p41
    %s44 = sadd.s32 %s43, 1
    %p47 = scmp.eq.s32.totalorder %s9, 1
    %p48 = scmp.ne.s32.totalorder %s43, %s45
    %p49 = scmp.eq.s32.totalorder %s9, 0
    %p50 = por %p48, %p49
    %p51 = scmp.ne.s32.totalorder %s43, %s45
    %p52 = scmp.eq.s32.totalorder %s14, 1
    %p53 = por %p51, %p52
    %p54 = scmp.ne.s32.totalorder %s45, %s46
    %p55 = scmp.eq.s32.totalorder %s14, 0
    %p56 = por %p54, %p55
    %p57 = scmp.ne.s32.totalorder %s45, %s46
    %p58 = scmp.eq.s32.totalorder %s15, 1
    %p59 = por %p57, %p58
    %p61 = scmp.ne.s32.totalorder %s46, %s60
    %p62 = scmp.eq.s32.totalorder %s15, 0
    %p63 = por %p61, %p62
    %s65 = sadd.s32 %s64, 1
    %p68 = scmp.eq.s32.totalorder %s9, 1
    %p69 = scmp.ne.s32.totalorder %s64, %s66
    %p70 = scmp.eq.s32.totalorder %s9, 0
    %p71 = por %p69, %p70
    %p72 = scmp.ne.s32.totalorder %s64, %s66
    %p73 = scmp.eq.s32.totalorder %s14, 1
    %p74 = por %p72, %p73
    %p75 = scmp.ne.s32.totalorder %s66, %s67
    %p76 = scmp.eq.s32.totalorder %s14, 0
    %p77 = por %p75, %p76
    %p78 = scmp.ne.s32.totalorder %s66, %s67
    %p79 = scmp.eq.s32.totalorder %s15, 1
    %p80 = por %p78, %p79
    %p82 = scmp.ne.s32.totalorder %s67, %s81
    %p83 = scmp.eq.s32.totalorder %s15, 0
    %p84 = por %p82, %p83
    %s85 = ssub.s32 %s9, %s16
    %p86 = scmp.eq.s32.totalorder %s85, 0
    %s88 = sadd.s32 %s87, 1
    %s89 = scalar_select %p86, %s87, %s88
    %p92 = pneg %p86
    %p93 = scmp.eq.s32.totalorder %s9, 1
    %p94 = por %p92, %p93
    %p95 = scmp.ne.s32.totalorder %s87, %s90
    %p96 = scmp.eq.s32.totalorder %s9, 0
    %p97 = por %p95, %p96
    %p98 = scmp.ne.s32.totalorder %s87, %s90
    %p99 = scmp.eq.s32.totalorder %s14, 1
    %p100 = por %p98, %p99
    %p101 = scmp.ne.s32.totalorder %s90, %s91
    %p102 = scmp.eq.s32.totalorder %s14, 0
    %p103 = por %p101, %p102
    %p104 = scmp.ne.s32.totalorder %s90, %s91
    %p105 = scmp.eq.s32.totalorder %s15, 1
    %p106 = por %p104, %p105
    %p108 = scmp.ne.s32.totalorder %s91, %s107
    %p109 = scmp.eq.s32.totalorder %s15, 0
    %p110 = por %p108, %p109
    %p111 = scmp.le.s32.totalorder 1, %s9
    %p112 = scmp.lt.s32.totalorder %s9, 3
    %p113 = pnand %p111, %p112
    %p114 = pneg %p113
    // Predicated region
    $region9: #{inception_forward.6} parent=5 // pred_check
      _
    $region10: #{inception_forward.6} parent=5 // pred_check_branch
      %116 = sbr.rel (%p113) target = $region12
    $region11: #{inception_forward.6} parent=5 // pred_region
      %s117 = ssub.s32 %s9, 1
      // Predicated region
      $region13: #{inception_forward.6} parent=11 // pred_check
        %p118 = pneg %p56
      $region14: #{inception_forward.6} parent=11 // pred_check_branch
        %120 = sbr.rel (%p118) target = $region16
      $region15: #{inception_forward.6} parent=11 // pred_region
        _
      $region16: #{inception_forward.6} parent=11 // pred_fallthru
        _
      // Predicated region
      $region17: #{inception_forward.6} parent=11 // pred_check
        %p121 = pneg %p77
      $region18: #{inception_forward.6} parent=11 // pred_check_branch
        %123 = sbr.rel (%p121) target = $region20
      $region19: #{inception_forward.6} parent=11 // pred_region
        _
      $region20: #{inception_forward.6} parent=11 // pred_fallthru
        _
    $region12: #{inception_forward.6} parent=5 // pred_fallthru
      _
    %p124 = scmp.lt.s32.totalorder %s9, 2
    // Predicated region
    $region21: #{inception_forward.6} parent=5 // pred_check
      %p125 = pneg %p124
    $region22: #{inception_forward.6} parent=5 // pred_check_branch
      %127 = sbr.rel (%p125) target = $region24
    $region23: #{inception_forward.6} parent=5 // pred_region
      // Predicated region
      $region25: #{inception_forward.6} parent=23 // pred_check
        %p128 = pneg %p29
      $region26: #{inception_forward.6} parent=23 // pred_check_branch
        %130 = sbr.rel (%p128) target = $region28
      $region27: #{inception_forward.6} parent=23 // pred_region
        %p131 = scmp.lt.s32.totalorder %s9, 1
        %s132 = scalar_select %p131, %s9, 1
        %s133 = smul.addr %s132, 39
        %s134 = smul.addr %s133, 4
        %s135 = scalar_lea.vmem %s0, %s134
      $region28: #{inception_forward.6} parent=23 // pred_fallthru
        _
    $region24: #{inception_forward.6} parent=5 // pred_fallthru
      _
    %p136 = scmp.le.s32.totalorder 1, %s9
    %p137 = scmp.lt.s32.totalorder %s9, 3
    %p138 = pnand %p136, %p137
    %p139 = pneg %p138
    // Predicated region
    $region29: #{inception_forward.6} parent=5 // pred_check
      _
    $region30: #{inception_forward.6} parent=5 // pred_check_branch
      %141 = sbr.rel (%p138) target = $region32
    $region31: #{inception_forward.6} parent=5 // pred_region
      %s142 = ssub.s32 %s9, 1
      %p143 = scmp.lt.s32.totalorder %s14, 1
      %s144 = scalar_select %p143, %s14, 1
      %s145 = smul.addr %s144, 39
      %s146 = smul.addr %s145, 4
      %s147 = scalar_lea.vmem %s0, %s146
      %p148 = pneg %p35
      %p149 = pneg %p32
      %p150 = pneg %p56
      %p151 = pneg %p53
      %p152 = pneg %p77
      %p153 = pneg %p74
      %p154 = pneg %p103
      %p155 = pneg %p100
      %p156 = scmp.lt.s32.totalorder %s14, 1
      %s157 = scalar_select %p156, %s14, 1
      %s158 = smul.addr %s157, 34
      %s159 = smul.addr %s158, 4
      %s160 = scalar_lea.vmem %s3, %s159
      %p161 = scmp.lt.s32.totalorder %s14, 1
      %s162 = scalar_select %p161, %s14, 1
      %s163 = smul.addr %s162, 39
      %s164 = smul.addr %s163, 4
      %s165 = scalar_lea.vmem %s0, %s164
      %p166 = scmp.lt.s32.totalorder %s14, 1
      %s167 = scalar_select %p166, %s14, 1
      %s168 = smul.addr %s167, 34
      %s169 = smul.addr %s168, 4
      %s170 = scalar_lea.vmem %s3, %s169
      %v172 = vld [vmem:[%s165] sm:$0xf]
      %v173 = vld [vmem:[%s165 + $0x4] sm:$0xf]
      %v174 = vld [vmem:[%s165 + $0x8] sm:$0xf]
      %v175 = vld [vmem:[%s165 + $0xc] sm:$0xf]
      %v176 = vld [vmem:[%s165 + $0x10] sm:$0xf]
      %v177 = vld [vmem:[%s165 + $0x14] sm:$0xf]
      %v178 = vld [vmem:[%s165 + $0x18] sm:$0xf]
      %v179 = vld [vmem:[%s165 + $0x1c] sm:$0xf]
      %v180 = vld [vmem:[%s165 + $0x20] sm:$0xf]
      %v181 = vld [vmem:[%s165 + $0x24] sm:$0xf]
      %v182 = vld [vmem:[%s165 + $0x28] sm:$0xf]
      %v183 = vld [vmem:[%s165 + $0x2c] sm:$0xf]
      %v184 = vld [vmem:[%s165 + $0x30] sm:$0xf]
      %v185 = vld [vmem:[%s165 + $0x34] sm:$0xf]
      %v186 = vld [vmem:[%s165 + $0x38] sm:$0xf]
      %v187 = vld [vmem:[%s165 + $0x3c] sm:$0xf]
      %v188 = vld [vmem:[%s165 + $0x40] sm:$0xf]
      %v189 = vld [vmem:[%s165 + $0x44] sm:$0xf]
      %v190 = vld [vmem:[%s165 + $0x48] sm:$0xf]
      %v191 = vld [vmem:[%s165 + $0x4c] sm:$0xf]
      %v192 = vld [vmem:[%s165 + $0x50] sm:$0xf]
      %v193 = vld [vmem:[%s165 + $0x54] sm:$0xf]
      %v194 = vld [vmem:[%s165 + $0x58] sm:$0xf]
      %v195 = vld [vmem:[%s165 + $0x5c] sm:$0xf]
      %v196 = vld [vmem:[%s165 + $0x60] sm:$0xf]
      %v197 = vld [vmem:[%s165 + $0x64] sm:$0xf]
      %v198 = vld [vmem:[%s165 + $0x68] sm:$0xf]
      %v199 = vld [vmem:[%s165 + $0x6c] sm:$0xf]
      %v200 = vld [vmem:[%s165 + $0x70] sm:$0xf]
      %v201 = vld [vmem:[%s165 + $0x74] sm:$0xf]
      %v202 = vld [vmem:[%s165 + $0x78] sm:$0xf]
      %v203 = vld [vmem:[%s165 + $0x7c] sm:$0xf]
      %v204 = vld [vmem:[%s165 + $0x80] sm:$0xf]
      %v205 = vld [vmem:[%s165 + $0x84] sm:$0xf]
      %v206 = vld [vmem:[%s1] sm:$0xf]
      %v207 = vld [vmem:[%s1 + $0x4] sm:$0xf]
      %v208 = vld [vmem:[%s1 + $0x8] sm:$0xf]
      %v209 = vld [vmem:[%s1 + $0xc] sm:$0xf]
      %v210 = vld [vmem:[%s1 + $0x10] sm:$0xf]
      %v211 = vld [vmem:[%s1 + $0x14] sm:$0xf]
      %v212 = vld [vmem:[%s1 + $0x18] sm:$0xf]
      %v213 = vld [vmem:[%s1 + $0x1c] sm:$0xf]
      %v214 = vld [vmem:[%s1 + $0x20] sm:$0xf]
      %v215 = vld [vmem:[%s1 + $0x24] sm:$0xf]
      %v216 = vld [vmem:[%s1 + $0x28] sm:$0xf]
      %v217 = vld [vmem:[%s1 + $0x2c] sm:$0xf]
      %v218 = vld [vmem:[%s1 + $0x30] sm:$0xf]
      %v219 = vld [vmem:[%s1 + $0x34] sm:$0xf]
      %v220 = vld [vmem:[%s1 + $0x38] sm:$0xf]
      %v221 = vld [vmem:[%s1 + $0x3c] sm:$0xf]
      %v222 = vld [vmem:[%s165 + $0x88] sm:$0x1]
      %s223 = scalar_lea.vmem %s1, 64
      %v224 = vld [vmem:[%s223] sm:$0xf]
      %v225 = vld [vmem:[%s223 + $0x4] sm:$0xf]
      %v226 = vld [vmem:[%s223 + $0x8] sm:$0xf]
      %v227 = vld [vmem:[%s223 + $0xc] sm:$0xf]
      %v228 = vld [vmem:[%s223 + $0x10] sm:$0xf]
      %v229 = vld [vmem:[%s223 + $0x14] sm:$0xf]
      %v230 = vld [vmem:[%s223 + $0x18] sm:$0xf]
      %v231 = vld [vmem:[%s223 + $0x1c] sm:$0xf]
      %v232 = vld [vmem:[%s223 + $0x20] sm:$0xf]
      %v233 = vld [vmem:[%s223 + $0x24] sm:$0xf]
      %v234 = vld [vmem:[%s223 + $0x28] sm:$0xf]
      %v235 = vld [vmem:[%s223 + $0x2c] sm:$0xf]
      %v236 = vld [vmem:[%s223 + $0x30] sm:$0xf]
      %v237 = vld [vmem:[%s223 + $0x34] sm:$0xf]
      %v238 = vld [vmem:[%s223 + $0x38] sm:$0xf]
      %v239 = vld [vmem:[%s223 + $0x3c] sm:$0xf]
      %v275 = vunpack.c.l.b16 %v172
      %v276 = vunpack.c.l.b16 %v173
      %v277 = vunpack.c.l.b16 %v174
      %v278 = vunpack.c.l.b16 %v175
      %v279 = vunpack.c.l.b16 %v176
      %v280 = vunpack.c.l.b16 %v177
      %v281 = vunpack.c.l.b16 %v178
      %v282 = vunpack.c.l.b16 %v179
      %v283 = vunpack.c.l.b16 %v180
      %v284 = vunpack.c.l.b16 %v181
      %v285 = vunpack.c.l.b16 %v182
      %v286 = vunpack.c.l.b16 %v183
      %v287 = vunpack.c.l.b16 %v184
      %v288 = vunpack.c.l.b16 %v185
      %v289 = vunpack.c.l.b16 %v186
      %v290 = vunpack.c.l.b16 %v187
      %v291 = vunpack.c.l.b16 %v188
      %v292 = vunpack.c.l.b16 %v189
      %v293 = vunpack.c.l.b16 %v190
      %v294 = vunpack.c.l.b16 %v191
      %v295 = vunpack.c.l.b16 %v192
      %v296 = vunpack.c.l.b16 %v193
      %v297 = vunpack.c.l.b16 %v194
      %v298 = vunpack.c.l.b16 %v195
      %v299 = vunpack.c.l.b16 %v196
      %v300 = vunpack.c.l.b16 %v197
      %v301 = vunpack.c.l.b16 %v198
      %v302 = vunpack.c.l.b16 %v199
      %v303 = vunpack.c.l.b16 %v200
      %v304 = vunpack.c.l.b16 %v201
      %v305 = vunpack.c.l.b16 %v202
      %v306 = vunpack.c.l.b16 %v203
      %v307 = vunpack.c.l.b16 %v204
      %v308 = vunpack.c.l.b16 %v205
      %v309 = vunpack.c.l.b16 %v222
      %v310 = vpack.c.b16 %v276, %v275
      %v311 = vpack.c.b16 %v278, %v277
      %v312 = vpack.c.b16 %v280, %v279
      %v313 = vpack.c.b16 %v282, %v281
      %v314 = vpack.c.b16 %v284, %v283
      %v315 = vpack.c.b16 %v286, %v285
      %v316 = vpack.c.b16 %v288, %v287
      %v317 = vpack.c.b16 %v290, %v289
      %v318 = vpack.c.b16 %v292, %v291
      %v319 = vpack.c.b16 %v294, %v293
      %v320 = vpack.c.b16 %v296, %v295
      %v321 = vpack.c.b16 %v298, %v297
      %v322 = vpack.c.b16 %v300, %v299
      %v323 = vpack.c.b16 %v302, %v301
      %v324 = vpack.c.b16 %v304, %v303
      %v325 = vpack.c.b16 %v306, %v305
      %v326 = vpack.c.b16 %v308, %v307
      %v327 = vpack.c.b16 %v309, %v309
      %vm328 = vsmask.f32 7424
      %v330 = vshrl.u32 %v310, 16
      %v332 = vshll.u32 %v310, 16
      %v334 = vrot.slane %v332, 1
      %v335 = vor.u32 %v330, %v334
      %v337 = vshll.u32 %v311, 16
      %v339 = vrot.slane %v337, 1
      %v340 = vsel %vm328, %v335, %v339
      %v341 = vshrl.u32 %v311, 16
      %v343 = vor.u32 %v341, %v339
      %v345 = vshll.u32 %v312, 16
      %v347 = vrot.slane %v345, 1
      %v348 = vsel %vm328, %v343, %v347
      %v349 = vshrl.u32 %v312, 16
      %v351 = vor.u32 %v349, %v347
      %v353 = vshll.u32 %v313, 16
      %v355 = vrot.slane %v353, 1
      %v356 = vsel %vm328, %v351, %v355
      %v357 = vshrl.u32 %v313, 16
      %v359 = vor.u32 %v357, %v355
      %v361 = vshll.u32 %v314, 16
      %v363 = vrot.slane %v361, 1
      %v364 = vsel %vm328, %v359, %v363
      %v365 = vshrl.u32 %v314, 16
      %v367 = vor.u32 %v365, %v363
      %v369 = vshll.u32 %v315, 16
      %v371 = vrot.slane %v369, 1
      %v372 = vsel %vm328, %v367, %v371
      %v373 = vshrl.u32 %v315, 16
      %v375 = vor.u32 %v373, %v371
      %v377 = vshll.u32 %v316, 16
      %v379 = vrot.slane %v377, 1
      %v380 = vsel %vm328, %v375, %v379
      %v381 = vshrl.u32 %v316, 16
      %v383 = vor.u32 %v381, %v379
      %v385 = vshll.u32 %v317, 16
      %v387 = vrot.slane %v385, 1
      %v388 = vsel %vm328, %v383, %v387
      %v389 = vshrl.u32 %v317, 16
      %v391 = vor.u32 %v389, %v387
      %v393 = vshll.u32 %v318, 16
      %v395 = vrot.slane %v393, 1
      %v396 = vsel %vm328, %v391, %v395
      %v397 = vshrl.u32 %v318, 16
      %v399 = vor.u32 %v397, %v395
      %v401 = vshll.u32 %v319, 16
      %v403 = vrot.slane %v401, 1
      %v404 = vsel %vm328, %v399, %v403
      %v405 = vshrl.u32 %v319, 16
      %v407 = vor.u32 %v405, %v403
      %v409 = vshll.u32 %v320, 16
      %v411 = vrot.slane %v409, 1
      %v412 = vsel %vm328, %v407, %v411
      %v413 = vshrl.u32 %v320, 16
      %v415 = vor.u32 %v413, %v411
      %v417 = vshll.u32 %v321, 16
      %v419 = vrot.slane %v417, 1
      %v420 = vsel %vm328, %v415, %v419
      %v421 = vshrl.u32 %v321, 16
      %v423 = vor.u32 %v421, %v419
      %v425 = vshll.u32 %v322, 16
      %v427 = vrot.slane %v425, 1
      %v428 = vsel %vm328, %v423, %v427
      %v429 = vshrl.u32 %v322, 16
      %v431 = vor.u32 %v429, %v427
      %v433 = vshll.u32 %v323, 16
      %v435 = vrot.slane %v433, 1
      %v436 = vsel %vm328, %v431, %v435
      %v437 = vshrl.u32 %v323, 16
      %v439 = vor.u32 %v437, %v435
      %v441 = vshll.u32 %v324, 16
      %v443 = vrot.slane %v441, 1
      %v444 = vsel %vm328, %v439, %v443
      %v445 = vshrl.u32 %v324, 16
      %v447 = vor.u32 %v445, %v443
      %v449 = vshll.u32 %v325, 16
      %v451 = vrot.slane %v449, 1
      %v452 = vsel %vm328, %v447, %v451
      %v453 = vshrl.u32 %v325, 16
      %v455 = vor.u32 %v453, %v451
      %v457 = vshll.u32 %v326, 16
      %v459 = vrot.slane %v457, 1
      %v460 = vsel %vm328, %v455, %v459
      %v461 = vshrl.u32 %v326, 16
      %v463 = vor.u32 %v461, %v459
      %v465 = vshll.u32 %v327, 16
      %v467 = vrot.slane %v465, 1
      %v468 = vsel %vm328, %v463, %v467
      %v502 = vunpack.c.l.b16 %v224
      %v503 = vunpack.c.l.b16 %v225
      %v504 = vunpack.c.l.b16 %v226
      %v505 = vunpack.c.l.b16 %v227
      %v506 = vunpack.c.l.b16 %v228
      %v507 = vunpack.c.l.b16 %v229
      %v508 = vunpack.c.l.b16 %v230
      %v509 = vunpack.c.l.b16 %v231
      %v510 = vunpack.c.l.b16 %v232
      %v511 = vunpack.c.l.b16 %v233
      %v512 = vunpack.c.l.b16 %v234
      %v513 = vunpack.c.l.b16 %v235
      %v514 = vunpack.c.l.b16 %v236
      %v515 = vunpack.c.l.b16 %v237
      %v516 = vunpack.c.l.b16 %v238
      %v517 = vunpack.c.l.b16 %v239
      %v518 = vpack.c.b16 %v503, %v502
      %v519 = vpack.c.b16 %v505, %v504
      %v520 = vpack.c.b16 %v507, %v506
      %v521 = vpack.c.b16 %v509, %v508
      %v522 = vpack.c.b16 %v511, %v510
      %v523 = vpack.c.b16 %v513, %v512
      %v524 = vpack.c.b16 %v515, %v514
      %v525 = vpack.c.b16 %v517, %v516
      %534 = vmatprep.subr.bf16.mxu0 0
      %535 = vmatpush1.bf16.msra.mxu0 %v518
      %536 = vmatprep.subr.bf16.mxu0 0
      %537 = vmatpush1.bf16.msra.mxu0 %v519
      %538 = vmatprep.subr.bf16.mxu0 0
      %539 = vmatpush1.bf16.msra.mxu0 %v520
      %540 = vmatprep.subr.bf16.mxu0 0
      %541 = vmatpush1.bf16.msra.mxu0 %v521
      %542 = vmatprep.subr.bf16.mxu0 0
      %543 = vmatpush1.bf16.msra.mxu0 %v522
      %544 = vmatprep.subr.bf16.mxu0 0
      %545 = vmatpush1.bf16.msra.mxu0 %v523
      %546 = vmatprep.subr.bf16.mxu0 0
      %547 = vmatpush1.bf16.msra.mxu0 %v524
      %548 = vmatprep.subr.bf16.mxu0 0
      %549 = vmatpush1.bf16.msra.mxu0 %v525
      %550 = vmatprep.subr.bf16.mxu0 0
      %551 = vmatpush1.bf16.msra.mxu0 0
      %552 = vmatprep.subr.bf16.mxu0 0
      %553 = vmatpush1.bf16.msra.mxu0 0
      %554 = vmatprep.subr.bf16.mxu0 0
      %555 = vmatpush1.bf16.msra.mxu0 0
      %556 = vmatprep.subr.bf16.mxu0 0
      %557 = vmatpush1.bf16.msra.mxu0 0
      %558 = vmatprep.subr.bf16.mxu0 0
      %559 = vmatpush1.bf16.msra.mxu0 0
      %560 = vmatprep.subr.bf16.mxu0 0
      %561 = vmatpush1.bf16.msra.mxu0 0
      %562 = vmatprep.subr.bf16.mxu0 0
      %563 = vmatpush1.bf16.msra.mxu0 0
      %564 = vmatprep.subr.bf16.mxu0 0
      %565 = vmatpush1.bf16.msra.mxu0 0
      %566 = vmatprep.mubr.bf16.mxu0 0
      %567 = vmatmul.mubr.bf16.gmra.mrb[0].mxu0 %v340
      %v568 = vpop.f32.mrb[0].mxu0
      %v569 = vadd.f32 0.0, %v568
      %v570 = vpop.f32.mrb[0].mxu0
      %v571 = vpop.f32.mrb[0].mxu0
      %v572 = vadd.f32 0.0, %v571
      %v573 = vpop.f32.mrb[0].mxu0
      %574 = vmatprep.mubr.bf16.mxu0 0
      %575 = vmatmul.mubr.bf16.gmra.mrb[0].mxu0 %v348
      %v576 = vpop.f32.mrb[0].mxu0
      %v577 = vadd.f32 0.0, %v576
      %v578 = vpop.f32.mrb[0].mxu0
      %v579 = vpop.f32.mrb[0].mxu0
      %v580 = vadd.f32 0.0, %v579
      %v581 = vpop.f32.mrb[0].mxu0
      %582 = vmatprep.mubr.bf16.mxu0 0
      %583 = vmatmul.mubr.bf16.gmra.mrb[0].mxu0 %v356
      %v584 = vpop.f32.mrb[0].mxu0
      %v585 = vadd.f32 0.0, %v584
      %v586 = vpop.f32.mrb[0].mxu0
      %v587 = vpop.f32.mrb[0].mxu0
      %v588 = vadd.f32 0.0, %v587
      %v589 = vpop.f32.mrb[0].mxu0
      %590 = vmatprep.mubr.bf16.mxu0 0
      %591 = vmatmul.mubr.bf16.gmra.mrb[0].mxu0 %v364
      %v592 = vpop.f32.mrb[0].mxu0
      %v593 = vadd.f32 0.0, %v592
      %v594 = vpop.f32.mrb[0].mxu0
      %v595 = vpop.f32.mrb[0].mxu0
      %v596 = vadd.f32 0.0, %v595
      %v597 = vpop.f32.mrb[0].mxu0
      %598 = vmatprep.mubr.bf16.mxu0 0
      %599 = vmatmul.mubr.bf16.gmra.mrb[0].mxu0 %v372
      %v600 = vpop.f32.mrb[0].mxu0
      %v601 = vadd.f32 0.0, %v600
      %v602 = vpop.f32.mrb[0].mxu0
      %v603 = vpop.f32.mrb[0].mxu0
      %v604 = vadd.f32 0.0, %v603
      %v605 = vpop.f32.mrb[0].mxu0
      %606 = vmatprep.mubr.bf16.mxu0 0
      %607 = vmatmul.mubr.bf16.gmra.mrb[0].mxu0 %v380
      %v608 = vpop.f32.mrb[0].mxu0
      %v609 = vadd.f32 0.0, %v608
      %v610 = vpop.f32.mrb[0].mxu0
      %v611 = vpop.f32.mrb[0].mxu0
      %v612 = vadd.f32 0.0, %v611
      %v613 = vpop.f32.mrb[0].mxu0
      %614 = vmatprep.mubr.bf16.mxu0 0
      %615 = vmatmul.mubr.bf16.gmra.mrb[0].mxu0 %v388
      %v616 = vpop.f32.mrb[0].mxu0
      %v617 = vadd.f32 0.0, %v616
      %v618 = vpop.f32.mrb[0].mxu0
      %v619 = vpop.f32.mrb[0].mxu0
      %v620 = vadd.f32 0.0, %v619
      %v621 = vpop.f32.mrb[0].mxu0
      %622 = vmatprep.mubr.bf16.mxu0 0
      %623 = vmatmul.mubr.bf16.gmra.mrb[0].mxu0 %v396
      %v624 = vpop.f32.mrb[0].mxu0
      %v625 = vadd.f32 0.0, %v624
      %v626 = vpop.f32.mrb[0].mxu0
      %v627 = vpop.f32.mrb[0].mxu0
      %v628 = vadd.f32 0.0, %v627
      %v629 = vpop.f32.mrb[0].mxu0
      %630 = vmatprep.mubr.bf16.mxu0 0
      %631 = vmatmul.mubr.bf16.gmra.mrb[0].mxu0 %v404
      %v632 = vpop.f32.mrb[0].mxu0
      %v633 = vadd.f32 0.0, %v632
      %v634 = vpop.f32.mrb[0].mxu0
      %v635 = vpop.f32.mrb[0].mxu0
      %v636 = vadd.f32 0.0, %v635
      %v637 = vpop.f32.mrb[0].mxu0
      %638 = vmatprep.mubr.bf16.mxu0 0
      %639 = vmatmul.mubr.bf16.gmra.mrb[0].mxu0 %v412
      %v640 = vpop.f32.mrb[0].mxu0
      %v641 = vadd.f32 0.0, %v640
      %v642 = vpop.f32.mrb[0].mxu0
      %v643 = vpop.f32.mrb[0].mxu0
      %v644 = vadd.f32 0.0, %v643
      %v645 = vpop.f32.mrb[0].mxu0
      %646 = vmatprep.mubr.bf16.mxu0 0
      %647 = vmatmul.mubr.bf16.gmra.mrb[0].mxu0 %v420
      %v648 = vpop.f32.mrb[0].mxu0
      %v649 = vadd.f32 0.0, %v648
      %v650 = vpop.f32.mrb[0].mxu0
      %v651 = vpop.f32.mrb[0].mxu0
      %v652 = vadd.f32 0.0, %v651
      %v653 = vpop.f32.mrb[0].mxu0
      %654 = vmatprep.mubr.bf16.mxu0 0
      %655 = vmatmul.mubr.bf16.gmra.mrb[0].mxu0 %v428
      %v656 = vpop.f32.mrb[0].mxu0
      %v657 = vadd.f32 0.0, %v656
      %v658 = vpop.f32.mrb[0].mxu0
      %v659 = vpop.f32.mrb[0].mxu0
      %v660 = vadd.f32 0.0, %v659
      %v661 = vpop.f32.mrb[0].mxu0
      %662 = vmatprep.mubr.bf16.mxu0 0
      %663 = vmatmul.mubr.bf16.gmra.mrb[0].mxu0 %v436
      %v664 = vpop.f32.mrb[0].mxu0
      %v665 = vadd.f32 0.0, %v664
      %v666 = vpop.f32.mrb[0].mxu0
      %v667 = vpop.f32.mrb[0].mxu0
      %v668 = vadd.f32 0.0, %v667
      %v669 = vpop.f32.mrb[0].mxu0
      %670 = vmatprep.mubr.bf16.mxu0 0
      %671 = vmatmul.mubr.bf16.gmra.mrb[0].mxu0 %v444
      %v672 = vpop.f32.mrb[0].mxu0
      %v673 = vadd.f32 0.0, %v672
      %v674 = vpop.f32.mrb[0].mxu0
      %v675 = vpop.f32.mrb[0].mxu0
      %v676 = vadd.f32 0.0, %v675
      %v677 = vpop.f32.mrb[0].mxu0
      %678 = vmatprep.mubr.bf16.mxu0 0
      %679 = vmatmul.mubr.bf16.gmra.mrb[0].mxu0 %v452
      %v680 = vpop.f32.mrb[0].mxu0
      %v681 = vadd.f32 0.0, %v680
      %v682 = vpop.f32.mrb[0].mxu0
      %v683 = vpop.f32.mrb[0].mxu0
      %v684 = vadd.f32 0.0, %v683
      %v685 = vpop.f32.mrb[0].mxu0
      %686 = vmatprep.mubr.bf16.mxu0 0
      %687 = vmatmul.mubr.bf16.gmra.mrb[0].mxu0 %v460
      %v688 = vpop.f32.mrb[0].mxu0
      %v689 = vadd.f32 0.0, %v688
      %v690 = vpop.f32.mrb[0].mxu0
      %v691 = vpop.f32.mrb[0].mxu0
      %v692 = vadd.f32 0.0, %v691
      %v693 = vpop.f32.mrb[0].mxu0
      %694 = vmatprep.mubr.bf16.mxu0 0
      %695 = vmatmul.mubr.bf16.gmra.mrb[0].mxu0 %v468
      %v696 = vpop.f32.mrb[0].mxu0
      %v697 = vadd.f32 0.0, %v696
      %v698 = vpop.f32.mrb[0].mxu0
      %v699 = vpop.f32.mrb[0].mxu0
      %v700 = vadd.f32 0.0, %v699
      %v701 = vpop.f32.mrb[0].mxu0
      %702 = vdwg.mxu0
      %v736 = vunpack.c.l.b16 %v206
      %v737 = vunpack.c.l.b16 %v207
      %v738 = vunpack.c.l.b16 %v208
      %v739 = vunpack.c.l.b16 %v209
      %v740 = vunpack.c.l.b16 %v210
      %v741 = vunpack.c.l.b16 %v211
      %v742 = vunpack.c.l.b16 %v212
      %v743 = vunpack.c.l.b16 %v213
      %v744 = vunpack.c.l.b16 %v214
      %v745 = vunpack.c.l.b16 %v215
      %v746 = vunpack.c.l.b16 %v216
      %v747 = vunpack.c.l.b16 %v217
      %v748 = vunpack.c.l.b16 %v218
      %v749 = vunpack.c.l.b16 %v219
      %v750 = vunpack.c.l.b16 %v220
      %v751 = vunpack.c.l.b16 %v221
      %v752 = vpack.c.b16 %v737, %v736
      %v753 = vpack.c.b16 %v739, %v738
      %v754 = vpack.c.b16 %v741, %v740
      %v755 = vpack.c.b16 %v743, %v742
      %v756 = vpack.c.b16 %v745, %v744
      %v757 = vpack.c.b16 %v747, %v746
      %v758 = vpack.c.b16 %v749, %v748
      %v759 = vpack.c.b16 %v751, %v750
      %768 = vmatprep.subr.bf16.mxu0 0
      %769 = vmatpush1.bf16.msra.mxu0 %v752
      %770 = vmatprep.subr.bf16.mxu0 0
      %771 = vmatpush1.bf16.msra.mxu0 %v753
      %772 = vmatprep.subr.bf16.mxu0 0
      %773 = vmatpush1.bf16.msra.mxu0 %v754
      %774 = vmatprep.subr.bf16.mxu0 0
      %775 = vmatpush1.bf16.msra.mxu0 %v755
      %776 = vmatprep.subr.bf16.mxu0 0
      %777 = vmatpush1.bf16.msra.mxu0 %v756
      %778 = vmatprep.subr.bf16.mxu0 0
      %779 = vmatpush1.bf16.msra.mxu0 %v757
      %780 = vmatprep.subr.bf16.mxu0 0
      %781 = vmatpush1.bf16.msra.mxu0 %v758
      %782 = vmatprep.subr.bf16.mxu0 0
      %783 = vmatpush1.bf16.msra.mxu0 %v759
      %784 = vmatprep.subr.bf16.mxu0 0
      %785 = vmatpush1.bf16.msra.mxu0 0
      %786 = vmatprep.subr.bf16.mxu0 0
      %787 = vmatpush1.bf16.msra.mxu0 0
      %788 = vmatprep.subr.bf16.mxu0 0
      %789 = vmatpush1.bf16.msra.mxu0 0
      %790 = vmatprep.subr.bf16.mxu0 0
      %791 = vmatpush1.bf16.msra.mxu0 0
      %792 = vmatprep.subr.bf16.mxu0 0
      %793 = vmatpush1.bf16.msra.mxu0 0
      %794 = vmatprep.subr.bf16.mxu0 0
      %795 = vmatpush1.bf16.msra.mxu0 0
      %796 = vmatprep.subr.bf16.mxu0 0
      %797 = vmatpush1.bf16.msra.mxu0 0
      %798 = vmatprep.subr.bf16.mxu0 0
      %799 = vmatpush1.bf16.msra.mxu0 0
      %800 = vmatprep.mubr.bf16.mxu0 0
      %801 = vmatmul.mubr.bf16.gmra.mrb[0].mxu0 %v310
      %v802 = vpop.f32.mrb[0].mxu0
      %v803 = vadd.f32 %v569, %v802
      %v804 = vpop.f32.mrb[0].mxu0
      %v805 = vpop.f32.mrb[0].mxu0
      %v806 = vadd.f32 %v572, %v805
      %v807 = vpop.f32.mrb[0].mxu0
      %808 = vmatprep.mubr.bf16.mxu0 0
      %809 = vmatmul.mubr.bf16.gmra.mrb[0].mxu0 %v311
      %v810 = vpop.f32.mrb[0].mxu0
      %v811 = vadd.f32 %v577, %v810
      %v812 = vpop.f32.mrb[0].mxu0
      %v813 = vpop.f32.mrb[0].mxu0
      %v814 = vadd.f32 %v580, %v813
      %v815 = vpop.f32.mrb[0].mxu0
      %816 = vmatprep.mubr.bf16.mxu0 0
      %817 = vmatmul.mubr.bf16.gmra.mrb[0].mxu0 %v312
      %v818 = vpop.f32.mrb[0].mxu0
      %v819 = vadd.f32 %v585, %v818
      %v820 = vpop.f32.mrb[0].mxu0
      %v821 = vpop.f32.mrb[0].mxu0
      %v822 = vadd.f32 %v588, %v821
      %v823 = vpop.f32.mrb[0].mxu0
      %824 = vmatprep.mubr.bf16.mxu0 0
      %825 = vmatmul.mubr.bf16.gmra.mrb[0].mxu0 %v313
      %v826 = vpop.f32.mrb[0].mxu0
      %v827 = vadd.f32 %v593, %v826
      %v828 = vpop.f32.mrb[0].mxu0
      %v829 = vpop.f32.mrb[0].mxu0
      %v830 = vadd.f32 %v596, %v829
      %v831 = vpop.f32.mrb[0].mxu0
      %832 = vmatprep.mubr.bf16.mxu0 0
      %833 = vmatmul.mubr.bf16.gmra.mrb[0].mxu0 %v314
      %v834 = vpop.f32.mrb[0].mxu0
      %v835 = vadd.f32 %v601, %v834
      %v836 = vpop.f32.mrb[0].mxu0
      %v837 = vpop.f32.mrb[0].mxu0
      %v838 = vadd.f32 %v604, %v837
      %v839 = vpop.f32.mrb[0].mxu0
      %840 = vmatprep.mubr.bf16.mxu0 0
      %841 = vmatmul.mubr.bf16.gmra.mrb[0].mxu0 %v315
      %v842 = vpop.f32.mrb[0].mxu0
      %v843 = vadd.f32 %v609, %v842
      %v844 = vpop.f32.mrb[0].mxu0
      %v845 = vpop.f32.mrb[0].mxu0
      %v846 = vadd.f32 %v612, %v845
      %v847 = vpop.f32.mrb[0].mxu0
      %848 = vmatprep.mubr.bf16.mxu0 0
      %849 = vmatmul.mubr.bf16.gmra.mrb[0].mxu0 %v316
      %v850 = vpop.f32.mrb[0].mxu0
      %v851 = vadd.f32 %v617, %v850
      %v852 = vpop.f32.mrb[0].mxu0
      %v853 = vpop.f32.mrb[0].mxu0
      %v854 = vadd.f32 %v620, %v853
      %v855 = vpop.f32.mrb[0].mxu0
      %856 = vmatprep.mubr.bf16.mxu0 0
      %857 = vmatmul.mubr.bf16.gmra.mrb[0].mxu0 %v317
      %v858 = vpop.f32.mrb[0].mxu0
      %v859 = vadd.f32 %v625, %v858
      %v860 = vpop.f32.mrb[0].mxu0
      %v861 = vpop.f32.mrb[0].mxu0
      %v862 = vadd.f32 %v628, %v861
      %v863 = vpop.f32.mrb[0].mxu0
      %864 = vmatprep.mubr.bf16.mxu0 0
      %865 = vmatmul.mubr.bf16.gmra.mrb[0].mxu0 %v318
      %v866 = vpop.f32.mrb[0].mxu0
      %v867 = vadd.f32 %v633, %v866
      %v868 = vpop.f32.mrb[0].mxu0
      %v869 = vpop.f32.mrb[0].mxu0
      %v870 = vadd.f32 %v636, %v869
      %v871 = vpop.f32.mrb[0].mxu0
      %872 = vmatprep.mubr.bf16.mxu0 0
      %873 = vmatmul.mubr.bf16.gmra.mrb[0].mxu0 %v319
      %v874 = vpop.f32.mrb[0].mxu0
      %v875 = vadd.f32 %v641, %v874
      %v876 = vpop.f32.mrb[0].mxu0
      %v877 = vpop.f32.mrb[0].mxu0
      %v878 = vadd.f32 %v644, %v877
      %v879 = vpop.f32.mrb[0].mxu0
      %880 = vmatprep.mubr.bf16.mxu0 0
      %881 = vmatmul.mubr.bf16.gmra.mrb[0].mxu0 %v320
      %v882 = vpop.f32.mrb[0].mxu0
      %v883 = vadd.f32 %v649, %v882
      %v884 = vpop.f32.mrb[0].mxu0
      %v885 = vpop.f32.mrb[0].mxu0
      %v886 = vadd.f32 %v652, %v885
      %v887 = vpop.f32.mrb[0].mxu0
      %888 = vmatprep.mubr.bf16.mxu0 0
      %889 = vmatmul.mubr.bf16.gmra.mrb[0].mxu0 %v321
      %v890 = vpop.f32.mrb[0].mxu0
      %v891 = vadd.f32 %v657, %v890
      %v892 = vpop.f32.mrb[0].mxu0
      %v893 = vpop.f32.mrb[0].mxu0
      %v894 = vadd.f32 %v660, %v893
      %v895 = vpop.f32.mrb[0].mxu0
      %896 = vmatprep.mubr.bf16.mxu0 0
      %897 = vmatmul.mubr.bf16.gmra.mrb[0].mxu0 %v322
      %v898 = vpop.f32.mrb[0].mxu0
      %v899 = vadd.f32 %v665, %v898
      %v900 = vpop.f32.mrb[0].mxu0
      %v901 = vpop.f32.mrb[0].mxu0
      %v902 = vadd.f32 %v668, %v901
      %v903 = vpop.f32.mrb[0].mxu0
      %904 = vmatprep.mubr.bf16.mxu0 0
      %905 = vmatmul.mubr.bf16.gmra.mrb[0].mxu0 %v323
      %v906 = vpop.f32.mrb[0].mxu0
      %v907 = vadd.f32 %v673, %v906
      %v908 = vpop.f32.mrb[0].mxu0
      %v909 = vpop.f32.mrb[0].mxu0
      %v910 = vadd.f32 %v676, %v909
      %v911 = vpop.f32.mrb[0].mxu0
      %912 = vmatprep.mubr.bf16.mxu0 0
      %913 = vmatmul.mubr.bf16.gmra.mrb[0].mxu0 %v324
      %v914 = vpop.f32.mrb[0].mxu0
      %v915 = vadd.f32 %v681, %v914
      %v916 = vpop.f32.mrb[0].mxu0
      %v917 = vpop.f32.mrb[0].mxu0
      %v918 = vadd.f32 %v684, %v917
      %v919 = vpop.f32.mrb[0].mxu0
      %920 = vmatprep.mubr.bf16.mxu0 0
      %921 = vmatmul.mubr.bf16.gmra.mrb[0].mxu0 %v325
      %v922 = vpop.f32.mrb[0].mxu0
      %v923 = vadd.f32 %v689, %v922
      %v924 = vpop.f32.mrb[0].mxu0
      %v925 = vpop.f32.mrb[0].mxu0
      %v926 = vadd.f32 %v692, %v925
      %v927 = vpop.f32.mrb[0].mxu0
      %928 = vmatprep.mubr.bf16.mxu0 0
      %929 = vmatmul.mubr.bf16.gmra.mrb[0].mxu0 %v326
      %v930 = vpop.f32.mrb[0].mxu0
      %v931 = vadd.f32 %v697, %v930
      %v932 = vpop.f32.mrb[0].mxu0
      %v933 = vpop.f32.mrb[0].mxu0
      %v934 = vadd.f32 %v700, %v933
      %v935 = vpop.f32.mrb[0].mxu0
      %936 = vdwg.mxu0
      %v937 = vld [vmem:[%s165] sm:$0xe]
      %s938 = scalar_lea.vmem %s1, 128
      %v939 = vld [vmem:[%s938] sm:$0xf]
      %v940 = vld [vmem:[%s938 + $0x4] sm:$0xf]
      %v941 = vld [vmem:[%s938 + $0x8] sm:$0xf]
      %v942 = vld [vmem:[%s938 + $0xc] sm:$0xf]
      %v943 = vld [vmem:[%s938 + $0x10] sm:$0xf]
      %v944 = vld [vmem:[%s938 + $0x14] sm:$0xf]
      %v945 = vld [vmem:[%s938 + $0x18] sm:$0xf]
      %v946 = vld [vmem:[%s938 + $0x1c] sm:$0xf]
      %v947 = vld [vmem:[%s938 + $0x20] sm:$0xf]
      %v948 = vld [vmem:[%s938 + $0x24] sm:$0xf]
      %v949 = vld [vmem:[%s938 + $0x28] sm:$0xf]
      %v950 = vld [vmem:[%s938 + $0x2c] sm:$0xf]
      %v951 = vld [vmem:[%s938 + $0x30] sm:$0xf]
      %v952 = vld [vmem:[%s938 + $0x34] sm:$0xf]
      %v953 = vld [vmem:[%s938 + $0x38] sm:$0xf]
      %v954 = vld [vmem:[%s938 + $0x3c] sm:$0xf]
      %v956 = vunpack.c.l.b16 %v937
      %v957 = vpack.c.b16 %v276, %v956
      %vm958 = vcmask 1046528
      %v959 = vrot.slane %v957, 1
      %v960 = vrot.slane %v311, 1
      %v961 = vsel %vm958, %v959, %v960
      %v962 = vrot.slane %v312, 1
      %v963 = vsel %vm958, %v960, %v962
      %v964 = vrot.slane %v313, 1
      %v965 = vsel %vm958, %v962, %v964
      %v966 = vrot.slane %v314, 1
      %v967 = vsel %vm958, %v964, %v966
      %v968 = vrot.slane %v315, 1
      %v969 = vsel %vm958, %v966, %v968
      %v970 = vrot.slane %v316, 1
      %v971 = vsel %vm958, %v968, %v970
      %v972 = vrot.slane %v317, 1
      %v973 = vsel %vm958, %v970, %v972
      %v974 = vrot.slane %v318, 1
      %v975 = vsel %vm958, %v972, %v974
      %v976 = vrot.slane %v319, 1
      %v977 = vsel %vm958, %v974, %v976
      %v978 = vrot.slane %v320, 1
      %v979 = vsel %vm958, %v976, %v978
      %v980 = vrot.slane %v321, 1
      %v981 = vsel %vm958, %v978, %v980
      %v982 = vrot.slane %v322, 1
      %v983 = vsel %vm958, %v980, %v982
      %v984 = vrot.slane %v323, 1
      %v985 = vsel %vm958, %v982, %v984
      %v986 = vrot.slane %v324, 1
      %v987 = vsel %vm958, %v984, %v986
      %v988 = vrot.slane %v325, 1
      %v989 = vsel %vm958, %v986, %v988
      %v990 = vrot.slane %v326, 1
      %v991 = vsel %vm958, %v988, %v990
      %v992 = vrot.slane %v327, 1
      %v993 = vsel %vm958, %v990, %v992
      %v1027 = vunpack.c.l.b16 %v939
      %v1028 = vunpack.c.l.b16 %v940
      %v1029 = vunpack.c.l.b16 %v941
      %v1030 = vunpack.c.l.b16 %v942
      %v1031 = vunpack.c.l.b16 %v943
      %v1032 = vunpack.c.l.b16 %v944
      %v1033 = vunpack.c.l.b16 %v945
      %v1034 = vunpack.c.l.b16 %v946
      %v1035 = vunpack.c.l.b16 %v947
      %v1036 = vunpack.c.l.b16 %v948
      %v1037 = vunpack.c.l.b16 %v949
      %v1038 = vunpack.c.l.b16 %v950
      %v1039 = vunpack.c.l.b16 %v951
      %v1040 = vunpack.c.l.b16 %v952
      %v1041 = vunpack.c.l.b16 %v953
      %v1042 = vunpack.c.l.b16 %v954
      %v1043 = vpack.c.b16 %v1028, %v1027
      %v1044 = vpack.c.b16 %v1030, %v1029
      %v1045 = vpack.c.b16 %v1032, %v1031
      %v1046 = vpack.c.b16 %v1034, %v1033
      %v1047 = vpack.c.b16 %v1036, %v1035
      %v1048 = vpack.c.b16 %v1038, %v1037
      %v1049 = vpack.c.b16 %v1040, %v1039
      %v1050 = vpack.c.b16 %v1042, %v1041
      %1059 = vmatprep.subr.bf16.mxu0 0
      %1060 = vmatpush1.bf16.msra.mxu0 %v1043
      %1061 = vmatprep.subr.bf16.mxu0 0
      %1062 = vmatpush1.bf16.msra.mxu0 %v1044
      %1063 = vmatprep.subr.bf16.mxu0 0
      %1064 = vmatpush1.bf16.msra.mxu0 %v1045
      %1065 = vmatprep.subr.bf16.mxu0 0
      %1066 = vmatpush1.bf16.msra.mxu0 %v1046
      %1067 = vmatprep.subr.bf16.mxu0 0
      %1068 = vmatpush1.bf16.msra.mxu0 %v1047
      %1069 = vmatprep.subr.bf16.mxu0 0
      %1070 = vmatpush1.bf16.msra.mxu0 %v1048
      %1071 = vmatprep.subr.bf16.mxu0 0
      %1072 = vmatpush1.bf16.msra.mxu0 %v1049
      %1073 = vmatprep.subr.bf16.mxu0 0
      %1074 = vmatpush1.bf16.msra.mxu0 %v1050
      %1075 = vmatprep.subr.bf16.mxu0 0
      %1076 = vmatpush1.bf16.msra.mxu0 0
      %1077 = vmatprep.subr.bf16.mxu0 0
      %1078 = vmatpush1.bf16.msra.mxu0 0
      %1079 = vmatprep.subr.bf16.mxu0 0
      %1080 = vmatpush1.bf16.msra.mxu0 0
      %1081 = vmatprep.subr.bf16.mxu0 0
      %1082 = vmatpush1.bf16.msra.mxu0 0
      %1083 = vmatprep.subr.bf16.mxu0 0
      %1084 = vmatpush1.bf16.msra.mxu0 0
      %1085 = vmatprep.subr.bf16.mxu0 0
      %1086 = vmatpush1.bf16.msra.mxu0 0
      %1087 = vmatprep.subr.bf16.mxu0 0
      %1088 = vmatpush1.bf16.msra.mxu0 0
      %1089 = vmatprep.subr.bf16.mxu0 0
      %1090 = vmatpush1.bf16.msra.mxu0 0
      %1091 = vmatprep.mubr.bf16.mxu0 0
      %1092 = vmatmul.mubr.bf16.gmra.mrb[0].mxu0 %v961
      %v1093 = vpop.f32.mrb[0].mxu0
      %v1094 = vadd.f32 0.0, %v1093
      %v1095 = vpop.f32.mrb[0].mxu0
      %v1096 = vpop.f32.mrb[0].mxu0
      %v1097 = vadd.f32 0.0, %v1096
      %v1098 = vpop.f32.mrb[0].mxu0
      %1099 = vmatprep.mubr.bf16.mxu0 0
      %1100 = vmatmul.mubr.bf16.gmra.mrb[0].mxu0 %v963
      %v1101 = vpop.f32.mrb[0].mxu0
      %v1102 = vadd.f32 0.0, %v1101
      %v1103 = vpop.f32.mrb[0].mxu0
      %v1104 = vpop.f32.mrb[0].mxu0
      %v1105 = vadd.f32 0.0, %v1104
      %v1106 = vpop.f32.mrb[0].mxu0
      %1107 = vmatprep.mubr.bf16.mxu0 0
      %1108 = vmatmul.mubr.bf16.gmra.mrb[0].mxu0 %v965
      %v1109 = vpop.f32.mrb[0].mxu0
      %v1110 = vadd.f32 0.0, %v1109
      %v1111 = vpop.f32.mrb[0].mxu0
      %v1112 = vpop.f32.mrb[0].mxu0
      %v1113 = vadd.f32 0.0, %v1112
      %v1114 = vpop.f32.mrb[0].mxu0
      %1115 = vmatprep.mubr.bf16.mxu0 0
      %1116 = vmatmul.mubr.bf16.gmra.mrb[0].mxu0 %v967
      %v1117 = vpop.f32.mrb[0].mxu0
      %v1118 = vadd.f32 0.0, %v1117
      %v1119 = vpop.f32.mrb[0].mxu0
      %v1120 = vpop.f32.mrb[0].mxu0
      %v1121 = vadd.f32 0.0, %v1120
      %v1122 = vpop.f32.mrb[0].mxu0
      %1123 = vmatprep.mubr.bf16.mxu0 0
      %1124 = vmatmul.mubr.bf16.gmra.mrb[0].mxu0 %v969
      %v1125 = vpop.f32.mrb[0].mxu0
      %v1126 = vadd.f32 0.0, %v1125
      %v1127 = vpop.f32.mrb[0].mxu0
      %v1128 = vpop.f32.mrb[0].mxu0
      %v1129 = vadd.f32 0.0, %v1128
      %v1130 = vpop.f32.mrb[0].mxu0
      %1131 = vmatprep.mubr.bf16.mxu0 0
      %1132 = vmatmul.mubr.bf16.gmra.mrb[0].mxu0 %v971
      %v1133 = vpop.f32.mrb[0].mxu0
      %v1134 = vadd.f32 0.0, %v1133
      %v1135 = vpop.f32.mrb[0].mxu0
      %v1136 = vpop.f32.mrb[0].mxu0
      %v1137 = vadd.f32 0.0, %v1136
      %v1138 = vpop.f32.mrb[0].mxu0
      %1139 = vmatprep.mubr.bf16.mxu0 0
      %1140 = vmatmul.mubr.bf16.gmra.mrb[0].mxu0 %v973
      %v1141 = vpop.f32.mrb[0].mxu0
      %v1142 = vadd.f32 0.0, %v1141
      %v1143 = vpop.f32.mrb[0].mxu0
      %v1144 = vpop.f32.mrb[0].mxu0
      %v1145 = vadd.f32 0.0, %v1144
      %v1146 = vpop.f32.mrb[0].mxu0
      %1147 = vmatprep.mubr.bf16.mxu0 0
      %1148 = vmatmul.mubr.bf16.gmra.mrb[0].mxu0 %v975
      %v1149 = vpop.f32.mrb[0].mxu0
      %v1150 = vadd.f32 0.0, %v1149
      %v1151 = vpop.f32.mrb[0].mxu0
      %v1152 = vpop.f32.mrb[0].mxu0
      %v1153 = vadd.f32 0.0, %v1152
      %v1154 = vpop.f32.mrb[0].mxu0
      %1155 = vmatprep.mubr.bf16.mxu0 0
      %1156 = vmatmul.mubr.bf16.gmra.mrb[0].mxu0 %v977
      %v1157 = vpop.f32.mrb[0].mxu0
      %v1158 = vadd.f32 0.0, %v1157
      %v1159 = vpop.f32.mrb[0].mxu0
      %v1160 = vpop.f32.mrb[0].mxu0
      %v1161 = vadd.f32 0.0, %v1160
      %v1162 = vpop.f32.mrb[0].mxu0
      %1163 = vmatprep.mubr.bf16.mxu0 0
      %1164 = vmatmul.mubr.bf16.gmra.mrb[0].mxu0 %v979
      %v1165 = vpop.f32.mrb[0].mxu0
      %v1166 = vadd.f32 0.0, %v1165
      %v1167 = vpop.f32.mrb[0].mxu0
      %v1168 = vpop.f32.mrb[0].mxu0
      %v1169 = vadd.f32 0.0, %v1168
      %v1170 = vpop.f32.mrb[0].mxu0
      %1171 = vmatprep.mubr.bf16.mxu0 0
      %1172 = vmatmul.mubr.bf16.gmra.mrb[0].mxu0 %v981
      %v1173 = vpop.f32.mrb[0].mxu0
      %v1174 = vadd.f32 0.0, %v1173
      %v1175 = vpop.f32.mrb[0].mxu0
      %v1176 = vpop.f32.mrb[0].mxu0
      %v1177 = vadd.f32 0.0, %v1176
      %v1178 = vpop.f32.mrb[0].mxu0
      %1179 = vmatprep.mubr.bf16.mxu0 0
      %1180 = vmatmul.mubr.bf16.gmra.mrb[0].mxu0 %v983
      %v1181 = vpop.f32.mrb[0].mxu0
      %v1182 = vadd.f32 0.0, %v1181
      %v1183 = vpop.f32.mrb[0].mxu0
      %v1184 = vpop.f32.mrb[0].mxu0
      %v1185 = vadd.f32 0.0, %v1184
      %v1186 = vpop.f32.mrb[0].mxu0
      %1187 = vmatprep.mubr.bf16.mxu0 0
      %1188 = vmatmul.mubr.bf16.gmra.mrb[0].mxu0 %v985
      %v1189 = vpop.f32.mrb[0].mxu0
      %v1190 = vadd.f32 0.0, %v1189
      %v1191 = vpop.f32.mrb[0].mxu0
      %v1192 = vpop.f32.mrb[0].mxu0
      %v1193 = vadd.f32 0.0, %v1192
      %v1194 = vpop.f32.mrb[0].mxu0
      %1195 = vmatprep.mubr.bf16.mxu0 0
      %1196 = vmatmul.mubr.bf16.gmra.mrb[0].mxu0 %v987
      %v1197 = vpop.f32.mrb[0].mxu0
      %v1198 = vadd.f32 0.0, %v1197
      %v1199 = vpop.f32.mrb[0].mxu0
      %v1200 = vpop.f32.mrb[0].mxu0
      %v1201 = vadd.f32 0.0, %v1200
      %v1202 = vpop.f32.mrb[0].mxu0
      %1203 = vmatprep.mubr.bf16.mxu0 0
      %1204 = vmatmul.mubr.bf16.gmra.mrb[0].mxu0 %v989
      %v1205 = vpop.f32.mrb[0].mxu0
      %v1206 = vadd.f32 0.0, %v1205
      %v1207 = vpop.f32.mrb[0].mxu0
      %v1208 = vpop.f32.mrb[0].mxu0
      %v1209 = vadd.f32 0.0, %v1208
      %v1210 = vpop.f32.mrb[0].mxu0
      %1211 = vmatprep.mubr.bf16.mxu0 0
      %1212 = vmatmul.mubr.bf16.gmra.mrb[0].mxu0 %v991
      %v1213 = vpop.f32.mrb[0].mxu0
      %v1214 = vadd.f32 0.0, %v1213
      %v1215 = vpop.f32.mrb[0].mxu0
      %v1216 = vpop.f32.mrb[0].mxu0
      %v1217 = vadd.f32 0.0, %v1216
      %v1218 = vpop.f32.mrb[0].mxu0
      %1219 = vmatprep.mubr.bf16.mxu0 0
      %1220 = vmatmul.mubr.bf16.gmra.mrb[0].mxu0 %v993
      %v1221 = vpop.f32.mrb[0].mxu0
      %v1222 = vadd.f32 0.0, %v1221
      %v1223 = vpop.f32.mrb[0].mxu0
      %v1224 = vpop.f32.mrb[0].mxu0
      %v1225 = vadd.f32 0.0, %v1224
      %v1226 = vpop.f32.mrb[0].mxu0
      %1227 = vdwg.mxu0
      %v1228 = vadd.f32 %v803, %v1094
      %v1229 = vadd.f32 %v806, %v1097
      %v1230 = vadd.f32 %v811, %v1102
      %v1231 = vadd.f32 %v814, %v1105
      %v1232 = vadd.f32 %v819, %v1110
      %v1233 = vadd.f32 %v822, %v1113
      %v1234 = vadd.f32 %v827, %v1118
      %v1235 = vadd.f32 %v830, %v1121
      %v1236 = vadd.f32 %v835, %v1126
      %v1237 = vadd.f32 %v838, %v1129
      %v1238 = vadd.f32 %v843, %v1134
      %v1239 = vadd.f32 %v846, %v1137
      %v1240 = vadd.f32 %v851, %v1142
      %v1241 = vadd.f32 %v854, %v1145
      %v1242 = vadd.f32 %v859, %v1150
      %v1243 = vadd.f32 %v862, %v1153
      %v1244 = vadd.f32 %v867, %v1158
      %v1245 = vadd.f32 %v870, %v1161
      %v1246 = vadd.f32 %v875, %v1166
      %v1247 = vadd.f32 %v878, %v1169
      %v1248 = vadd.f32 %v883, %v1174
      %v1249 = vadd.f32 %v886, %v1177
      %v1250 = vadd.f32 %v891, %v1182
      %v1251 = vadd.f32 %v894, %v1185
      %v1252 = vadd.f32 %v899, %v1190
      %v1253 = vadd.f32 %v902, %v1193
      %v1254 = vadd.f32 %v907, %v1198
      %v1255 = vadd.f32 %v910, %v1201
      %v1256 = vadd.f32 %v915, %v1206
      %v1257 = vadd.f32 %v918, %v1209
      %v1258 = vadd.f32 %v923, %v1214
      %v1259 = vadd.f32 %v926, %v1217
      %v1260 = vadd.f32 %v931, %v1222
      %v1261 = vadd.f32 %v934, %v1225
      %v1262 = vld [vmem:[%s165 + $0x8] sm:$0xf]
      %v1263 = vld [vmem:[%s165 + $0xc] sm:$0xf]
      %v1264 = vld [vmem:[%s165 + $0x10] sm:$0xf]
      %v1265 = vld [vmem:[%s165 + $0x14] sm:$0xf]
      %v1266 = vld [vmem:[%s165 + $0x18] sm:$0xf]
      %v1267 = vld [vmem:[%s165 + $0x1c] sm:$0xf]
      %v1268 = vld [vmem:[%s165 + $0x20] sm:$0xf]
      %v1269 = vld [vmem:[%s165 + $0x24] sm:$0xf]
      %v1270 = vld [vmem:[%s165 + $0x28] sm:$0xf]
      %v1271 = vld [vmem:[%s165 + $0x2c] sm:$0xf]
      %v1272 = vld [vmem:[%s165 + $0x30] sm:$0xf]
      %v1273 = vld [vmem:[%s165 + $0x34] sm:$0xf]
      %v1274 = vld [vmem:[%s165 + $0x38] sm:$0xf]
      %v1275 = vld [vmem:[%s165 + $0x3c] sm:$0xf]
      %v1276 = vld [vmem:[%s165 + $0x40] sm:$0xf]
      %v1277 = vld [vmem:[%s165 + $0x44] sm:$0xf]
      %v1278 = vld [vmem:[%s165 + $0x48] sm:$0xf]
      %v1279 = vld [vmem:[%s165 + $0x4c] sm:$0xf]
      %v1280 = vld [vmem:[%s165 + $0x50] sm:$0xf]
      %v1281 = vld [vmem:[%s165 + $0x54] sm:$0xf]
      %v1282 = vld [vmem:[%s165 + $0x58] sm:$0xf]
      %v1283 = vld [vmem:[%s165 + $0x5c] sm:$0xf]
      %v1284 = vld [vmem:[%s165 + $0x60] sm:$0xf]
      %v1285 = vld [vmem:[%s165 + $0x64] sm:$0xf]
      %v1286 = vld [vmem:[%s165 + $0x68] sm:$0xf]
      %v1287 = vld [vmem:[%s165 + $0x6c] sm:$0xf]
      %v1288 = vld [vmem:[%s165 + $0x70] sm:$0xf]
      %v1289 = vld [vmem:[%s165 + $0x74] sm:$0xf]
      %v1290 = vld [vmem:[%s165 + $0x78] sm:$0xf]
      %v1291 = vld [vmem:[%s165 + $0x7c] sm:$0xf]
      %v1292 = vld [vmem:[%s165 + $0x80] sm:$0xf]
      %v1293 = vld [vmem:[%s165 + $0x84] sm:$0xf]
      %v1294 = vld [vmem:[%s165 + $0x88] sm:$0xf]
      %v1295 = vld [vmem:[%s165 + $0x8c] sm:$0xf]
      %v1296 = vld [vmem:[%s165 + $0x90] sm:$0x1]
      %s1297 = scalar_lea.vmem %s1, 192
      %v1298 = vld [vmem:[%s1297] sm:$0xf]
      %v1299 = vld [vmem:[%s1297 + $0x4] sm:$0xf]
      %v1300 = vld [vmem:[%s1297 + $0x8] sm:$0xf]
      %v1301 = vld [vmem:[%s1297 + $0xc] sm:$0xf]
      %v1302 = vld [vmem:[%s1297 + $0x10] sm:$0xf]
      %v1303 = vld [vmem:[%s1297 + $0x14] sm:$0xf]
      %v1304 = vld [vmem:[%s1297 + $0x18] sm:$0xf]
      %v1305 = vld [vmem:[%s1297 + $0x1c] sm:$0xf]
      %v1306 = vld [vmem:[%s1297 + $0x20] sm:$0xf]
      %v1307 = vld [vmem:[%s1297 + $0x24] sm:$0xf]
      %v1308 = vld [vmem:[%s1297 + $0x28] sm:$0xf]
      %v1309 = vld [vmem:[%s1297 + $0x2c] sm:$0xf]
      %v1310 = vld [vmem:[%s1297 + $0x30] sm:$0xf]
      %v1311 = vld [vmem:[%s1297 + $0x34] sm:$0xf]
      %v1312 = vld [vmem:[%s1297 + $0x38] sm:$0xf]
      %v1313 = vld [vmem:[%s1297 + $0x3c] sm:$0xf]
      %v1349 = vunpack.c.l.b16 %v1262
      %v1350 = vunpack.c.l.b16 %v1263
      %v1351 = vunpack.c.l.b16 %v1264
      %v1352 = vunpack.c.l.b16 %v1265
      %v1353 = vunpack.c.l.b16 %v1266
      %v1354 = vunpack.c.l.b16 %v1267
      %v1355 = vunpack.c.l.b16 %v1268
      %v1356 = vunpack.c.l.b16 %v1269
      %v1357 = vunpack.c.l.b16 %v1270
      %v1358 = vunpack.c.l.b16 %v1271
      %v1359 = vunpack.c.l.b16 %v1272
      %v1360 = vunpack.c.l.b16 %v1273
      %v1361 = vunpack.c.l.b16 %v1274
      %v1362 = vunpack.c.l.b16 %v1275
      %v1363 = vunpack.c.l.b16 %v1276
      %v1364 = vunpack.c.l.b16 %v1277
      %v1365 = vunpack.c.l.b16 %v1278
      %v1366 = vunpack.c.l.b16 %v1279
      %v1367 = vunpack.c.l.b16 %v1280
      %v1368 = vunpack.c.l.b16 %v1281
      %v1369 = vunpack.c.l.b16 %v1282
      %v1370 = vunpack.c.l.b16 %v1283
      %v1371 = vunpack.c.l.b16 %v1284
      %v1372 = vunpack.c.l.b16 %v1285
      %v1373 = vunpack.c.l.b16 %v1286
      %v1374 = vunpack.c.l.b16 %v1287
      %v1375 = vunpack.c.l.b16 %v1288
      %v1376 = vunpack.c.l.b16 %v1289
      %v1377 = vunpack.c.l.b16 %v1290
      %v1378 = vunpack.c.l.b16 %v1291
      %v1379 = vunpack.c.l.b16 %v1292
      %v1380 = vunpack.c.l.b16 %v1293
      %v1381 = vunpack.c.l.b16 %v1294
      %v1382 = vunpack.c.l.b16 %v1295
      %v1383 = vunpack.c.l.b16 %v1296
      %v1384 = vpack.c.b16 %v1350, %v1349
      %v1385 = vpack.c.b16 %v1352, %v1351
      %v1386 = vpack.c.b16 %v1354, %v1353
      %v1387 = vpack.c.b16 %v1356, %v1355
      %v1388 = vpack.c.b16 %v1358, %v1357
      %v1389 = vpack.c.b16 %v1360, %v1359
      %v1390 = vpack.c.b16 %v1362, %v1361
      %v1391 = vpack.c.b16 %v1364, %v1363
      %v1392 = vpack.c.b16 %v1366, %v1365
      %v1393 = vpack.c.b16 %v1368, %v1367
      %v1394 = vpack.c.b16 %v1370, %v1369
      %v1395 = vpack.c.b16 %v1372, %v1371
      %v1396 = vpack.c.b16 %v1374, %v1373
      %v1397 = vpack.c.b16 %v1376, %v1375
      %v1398 = vpack.c.b16 %v1378, %v1377
      %v1399 = vpack.c.b16 %v1380, %v1379
      %v1400 = vpack.c.b16 %v1382, %v1381
      %v1401 = vpack.c.b16 %v1383, %v1383
      %v1403 = vshrl.u32 %v1384, 16
      %v1405 = vshll.u32 %v1384, 16
      %v1407 = vrot.slane %v1405, 1
      %v1408 = vor.u32 %v1403, %v1407
      %v1410 = vshll.u32 %v1385, 16
      %v1412 = vrot.slane %v1410, 1
      %v1413 = vsel %vm328, %v1408, %v1412
      %v1414 = vshrl.u32 %v1385, 16
      %v1416 = vor.u32 %v1414, %v1412
      %v1418 = vshll.u32 %v1386, 16
      %v1420 = vrot.slane %v1418, 1
      %v1421 = vsel %vm328, %v1416, %v1420
      %v1422 = vshrl.u32 %v1386, 16
      %v1424 = vor.u32 %v1422, %v1420
      %v1426 = vshll.u32 %v1387, 16
      %v1428 = vrot.slane %v1426, 1
      %v1429 = vsel %vm328, %v1424, %v1428
      %v1430 = vshrl.u32 %v1387, 16
      %v1432 = vor.u32 %v1430, %v1428
      %v1434 = vshll.u32 %v1388, 16
      %v1436 = vrot.slane %v1434, 1
      %v1437 = vsel %vm328, %v1432, %v1436
      %v1438 = vshrl.u32 %v1388, 16
      %v1440 = vor.u32 %v1438, %v1436
      %v1442 = vshll.u32 %v1389, 16
      %v1444 = vrot.slane %v1442, 1
      %v1445 = vsel %vm328, %v1440, %v1444
      %v1446 = vshrl.u32 %v1389, 16
      %v1448 = vor.u32 %v1446, %v1444
      %v1450 = vshll.u32 %v1390, 16
      %v1452 = vrot.slane %v1450, 1
      %v1453 = vsel %vm328, %v1448, %v1452
      %v1454 = vshrl.u32 %v1390, 16
      %v1456 = vor.u32 %v1454, %v1452
      %v1458 = vshll.u32 %v1391, 16
      %v1460 = vrot.slane %v1458, 1
      %v1461 = vsel %vm328, %v1456, %v1460
      %v1462 = vshrl.u32 %v1391, 16
      %v1464 = vor.u32 %v1462, %v1460
      %v1466 = vshll.u32 %v1392, 16
      %v1468 = vrot.slane %v1466, 1
      %v1469 = vsel %vm328, %v1464, %v1468
      %v1470 = vshrl.u32 %v1392, 16
      %v1472 = vor.u32 %v1470, %v1468
      %v1474 = vshll.u32 %v1393, 16
      %v1476 = vrot.slane %v1474, 1
      %v1477 = vsel %vm328, %v1472, %v1476
      %v1478 = vshrl.u32 %v1393, 16
      %v1480 = vor.u32 %v1478, %v1476
      %v1482 = vshll.u32 %v1394, 16
      %v1484 = vrot.slane %v1482, 1
      %v1485 = vsel %vm328, %v1480, %v1484
      %v1486 = vshrl.u32 %v1394, 16
      %v1488 = vor.u32 %v1486, %v1484
      %v1490 = vshll.u32 %v1395, 16
      %v1492 = vrot.slane %v1490, 1
      %v1493 = vsel %vm328, %v1488, %v1492
      %v1494 = vshrl.u32 %v1395, 16
      %v1496 = vor.u32 %v1494, %v1492
      %v1498 = vshll.u32 %v1396, 16
      %v1500 = vrot.slane %v1498, 1
      %v1501 = vsel %vm328, %v1496, %v1500
      %v1502 = vshrl.u32 %v1396, 16
      %v1504 = vor.u32 %v1502, %v1500
      %v1506 = vshll.u32 %v1397, 16
      %v1508 = vrot.slane %v1506, 1
      %v1509 = vsel %vm328, %v1504, %v1508
      %v1510 = vshrl.u32 %v1397, 16
      %v1512 = vor.u32 %v1510, %v1508
      %v1514 = vshll.u32 %v1398, 16
      %v1516 = vrot.slane %v1514, 1
      %v1517 = vsel %vm328, %v1512, %v1516
      %v1518 = vshrl.u32 %v1398, 16
      %v1520 = vor.u32 %v1518, %v1516
      %v1522 = vshll.u32 %v1399, 16
      %v1524 = vrot.slane %v1522, 1
      %v1525 = vsel %vm328, %v1520, %v1524
      %v1526 = vshrl.u32 %v1399, 16
      %v1528 = vor.u32 %v1526, %v1524
      %v1530 = vshll.u32 %v1400, 16
      %v1532 = vrot.slane %v1530, 1
      %v1533 = vsel %vm328, %v1528, %v1532
      %v1534 = vshrl.u32 %v1400, 16
      %v1536 = vor.u32 %v1534, %v1532
      %v1538 = vshll.u32 %v1401, 16
      %v1540 = vrot.slane %v1538, 1
      %v1541 = vsel %vm328, %v1536, %v1540
      %v1575 = vunpack.c.l.b16 %v1298
      %v1576 = vunpack.c.l.b16 %v1299
      %v1577 = vunpack.c.l.b16 %v1300
      %v1578 = vunpack.c.l.b16 %v1301
      %v1579 = vunpack.c.l.b16 %v1302
      %v1580 = vunpack.c.l.b16 %v1303
      %v1581 = vunpack.c.l.b16 %v1304
      %v1582 = vunpack.c.l.b16 %v1305
      %v1583 = vunpack.c.l.b16 %v1306
      %v1584 = vunpack.c.l.b16 %v1307
      %v1585 = vunpack.c.l.b16 %v1308
      %v1586 = vunpack.c.l.b16 %v1309
      %v1587 = vunpack.c.l.b16 %v1310
      %v1588 = vunpack.c.l.b16 %v1311
      %v1589 = vunpack.c.l.b16 %v1312
      %v1590 = vunpack.c.l.b16 %v1313
      %v1591 = vpack.c.b16 %v1576, %v1575
      %v1592 = vpack.c.b16 %v1578, %v1577
      %v1593 = vpack.c.b16 %v1580, %v1579
      %v1594 = vpack.c.b16 %v1582, %v1581
      %v1595 = vpack.c.b16 %v1584, %v1583
      %v1596 = vpack.c.b16 %v1586, %v1585
      %v1597 = vpack.c.b16 %v1588, %v1587
      %v1598 = vpack.c.b16 %v1590, %v1589
      %1607 = vmatprep.subr.bf16.mxu0 0
      %1608 = vmatpush1.bf16.msra.mxu0 %v1591
      %1609 = vmatprep.subr.bf16.mxu0 0
      %1610 = vmatpush1.bf16.msra.mxu0 %v1592
      %1611 = vmatprep.subr.bf16.mxu0 0
      %1612 = vmatpush1.bf16.msra.mxu0 %v1593
      %1613 = vmatprep.subr.bf16.mxu0 0
      %1614 = vmatpush1.bf16.msra.mxu0 %v1594
      %1615 = vmatprep.subr.bf16.mxu0 0
      %1616 = vmatpush1.bf16.msra.mxu0 %v1595
      %1617 = vmatprep.subr.bf16.mxu0 0
      %1618 = vmatpush1.bf16.msra.mxu0 %v1596
      %1619 = vmatprep.subr.bf16.mxu0 0
      %1620 = vmatpush1.bf16.msra.mxu0 %v1597
      %1621 = vmatprep.subr.bf16.mxu0 0
      %1622 = vmatpush1.bf16.msra.mxu0 %v1598
      %1623 = vmatprep.subr.bf16.mxu0 0
      %1624 = vmatpush1.bf16.msra.mxu0 0
      %1625 = vmatprep.subr.bf16.mxu0 0
      %1626 = vmatpush1.bf16.msra.mxu0 0
      %1627 = vmatprep.subr.bf16.mxu0 0
      %1628 = vmatpush1.bf16.msra.mxu0 0
      %1629 = vmatprep.subr.bf16.mxu0 0
      %1630 = vmatpush1.bf16.msra.mxu0 0
      %1631 = vmatprep.subr.bf16.mxu0 0
      %1632 = vmatpush1.bf16.msra.mxu0 0
      %1633 = vmatprep.subr.bf16.mxu0 0
      %1634 = vmatpush1.bf16.msra.mxu0 0
      %1635 = vmatprep.subr.bf16.mxu0 0
      %1636 = vmatpush1.bf16.msra.mxu0 0
      %1637 = vmatprep.subr.bf16.mxu0 0
      %1638 = vmatpush1.bf16.msra.mxu0 0
      %1639 = vmatprep.mubr.bf16.mxu0 0
      %1640 = vmatmul.mubr.bf16.gmra.mrb[0].mxu0 %v1413
      %v1641 = vpop.f32.mrb[0].mxu0
      %v1642 = vadd.f32 0.0, %v1641
      %v1643 = vpop.f32.mrb[0].mxu0
      %v1644 = vpop.f32.mrb[0].mxu0
      %v1645 = vadd.f32 0.0, %v1644
      %v1646 = vpop.f32.mrb[0].mxu0
      %1647 = vmatprep.mubr.bf16.mxu0 0
      %1648 = vmatmul.mubr.bf16.gmra.mrb[0].mxu0 %v1421
      %v1649 = vpop.f32.mrb[0].mxu0
      %v1650 = vadd.f32 0.0, %v1649
      %v1651 = vpop.f32.mrb[0].mxu0
      %v1652 = vpop.f32.mrb[0].mxu0
      %v1653 = vadd.f32 0.0, %v1652
      %v1654 = vpop.f32.mrb[0].mxu0
      %1655 = vmatprep.mubr.bf16.mxu0 0
      %1656 = vmatmul.mubr.bf16.gmra.mrb[0].mxu0 %v1429
      %v1657 = vpop.f32.mrb[0].mxu0
      %v1658 = vadd.f32 0.0, %v1657
      %v1659 = vpop.f32.mrb[0].mxu0
      %v1660 = vpop.f32.mrb[0].mxu0
      %v1661 = vadd.f32 0.0, %v1660
      %v1662 = vpop.f32.mrb[0].mxu0
      %1663 = vmatprep.mubr.bf16.mxu0 0
      %1664 = vmatmul.mubr.bf16.gmra.mrb[0].mxu0 %v1437
      %v1665 = vpop.f32.mrb[0].mxu0
      %v1666 = vadd.f32 0.0, %v1665
      %v1667 = vpop.f32.mrb[0].mxu0
      %v1668 = vpop.f32.mrb[0].mxu0
      %v1669 = vadd.f32 0.0, %v1668
      %v1670 = vpop.f32.mrb[0].mxu0
      %1671 = vmatprep.mubr.bf16.mxu0 0
      %1672 = vmatmul.mubr.bf16.gmra.mrb[0].mxu0 %v1445
      %v1673 = vpop.f32.mrb[0].mxu0
      %v1674 = vadd.f32 0.0, %v1673
      %v1675 = vpop.f32.mrb[0].mxu0
      %v1676 = vpop.f32.mrb[0].mxu0
      %v1677 = vadd.f32 0.0, %v1676
      %v1678 = vpop.f32.mrb[0].mxu0
      %1679 = vmatprep.mubr.bf16.mxu0 0
      %1680 = vmatmul.mubr.bf16.gmra.mrb[0].mxu0 %v1453
      %v1681 = vpop.f32.mrb[0].mxu0
      %v1682 = vadd.f32 0.0, %v1681
      %v1683 = vpop.f32.mrb[0].mxu0
      %v1684 = vpop.f32.mrb[0].mxu0
      %v1685 = vadd.f32 0.0, %v1684
      %v1686 = vpop.f32.mrb[0].mxu0
      %1687 = vmatprep.mubr.bf16.mxu0 0
      %1688 = vmatmul.mubr.bf16.gmra.mrb[0].mxu0 %v1461
      %v1689 = vpop.f32.mrb[0].mxu0
      %v1690 = vadd.f32 0.0, %v1689
      %v1691 = vpop.f32.mrb[0].mxu0
      %v1692 = vpop.f32.mrb[0].mxu0
      %v1693 = vadd.f32 0.0, %v1692
      %v1694 = vpop.f32.mrb[0].mxu0
      %1695 = vmatprep.mubr.bf16.mxu0 0
      %1696 = vmatmul.mubr.bf16.gmra.mrb[0].mxu0 %v1469
      %v1697 = vpop.f32.mrb[0].mxu0
      %v1698 = vadd.f32 0.0, %v1697
      %v1699 = vpop.f32.mrb[0].mxu0
      %v1700 = vpop.f32.mrb[0].mxu0
      %v1701 = vadd.f32 0.0, %v1700
      %v1702 = vpop.f32.mrb[0].mxu0
      %1703 = vmatprep.mubr.bf16.mxu0 0
      %1704 = vmatmul.mubr.bf16.gmra.mrb[0].mxu0 %v1477
      %v1705 = vpop.f32.mrb[0].mxu0
      %v1706 = vadd.f32 0.0, %v1705
      %v1707 = vpop.f32.mrb[0].mxu0
      %v1708 = vpop.f32.mrb[0].mxu0
      %v1709 = vadd.f32 0.0, %v1708
      %v1710 = vpop.f32.mrb[0].mxu0
      %1711 = vmatprep.mubr.bf16.mxu0 0
      %1712 = vmatmul.mubr.bf16.gmra.mrb[0].mxu0 %v1485
      %v1713 = vpop.f32.mrb[0].mxu0
      %v1714 = vadd.f32 0.0, %v1713
      %v1715 = vpop.f32.mrb[0].mxu0
      %v1716 = vpop.f32.mrb[0].mxu0
      %v1717 = vadd.f32 0.0, %v1716
      %v1718 = vpop.f32.mrb[0].mxu0
      %1719 = vmatprep.mubr.bf16.mxu0 0
      %1720 = vmatmul.mubr.bf16.gmra.mrb[0].mxu0 %v1493
      %v1721 = vpop.f32.mrb[0].mxu0
      %v1722 = vadd.f32 0.0, %v1721
      %v1723 = vpop.f32.mrb[0].mxu0
      %v1724 = vpop.f32.mrb[0].mxu0
      %v1725 = vadd.f32 0.0, %v1724
      %v1726 = vpop.f32.mrb[0].mxu0
      %1727 = vmatprep.mubr.bf16.mxu0 0
      %1728 = vmatmul.mubr.bf16.gmra.mrb[0].mxu0 %v1501
      %v1729 = vpop.f32.mrb[0].mxu0
      %v1730 = vadd.f32 0.0, %v1729
      %v1731 = vpop.f32.mrb[0].mxu0
      %v1732 = vpop.f32.mrb[0].mxu0
      %v1733 = vadd.f32 0.0, %v1732
      %v1734 = vpop.f32.mrb[0].mxu0
      %1735 = vmatprep.mubr.bf16.mxu0 0
      %1736 = vmatmul.mubr.bf16.gmra.mrb[0].mxu0 %v1509
      %v1737 = vpop.f32.mrb[0].mxu0
      %v1738 = vadd.f32 0.0, %v1737
      %v1739 = vpop.f32.mrb[0].mxu0
      %v1740 = vpop.f32.mrb[0].mxu0
      %v1741 = vadd.f32 0.0, %v1740
      %v1742 = vpop.f32.mrb[0].mxu0
      %1743 = vmatprep.mubr.bf16.mxu0 0
      %1744 = vmatmul.mubr.bf16.gmra.mrb[0].mxu0 %v1517
      %v1745 = vpop.f32.mrb[0].mxu0
      %v1746 = vadd.f32 0.0, %v1745
      %v1747 = vpop.f32.mrb[0].mxu0
      %v1748 = vpop.f32.mrb[0].mxu0
      %v1749 = vadd.f32 0.0, %v1748
      %v1750 = vpop.f32.mrb[0].mxu0
      %1751 = vmatprep.mubr.bf16.mxu0 0
      %1752 = vmatmul.mubr.bf16.gmra.mrb[0].mxu0 %v1525
      %v1753 = vpop.f32.mrb[0].mxu0
      %v1754 = vadd.f32 0.0, %v1753
      %v1755 = vpop.f32.mrb[0].mxu0
      %v1756 = vpop.f32.mrb[0].mxu0
      %v1757 = vadd.f32 0.0, %v1756
      %v1758 = vpop.f32.mrb[0].mxu0
      %1759 = vmatprep.mubr.bf16.mxu0 0
      %1760 = vmatmul.mubr.bf16.gmra.mrb[0].mxu0 %v1533
      %v1761 = vpop.f32.mrb[0].mxu0
      %v1762 = vadd.f32 0.0, %v1761
      %v1763 = vpop.f32.mrb[0].mxu0
      %v1764 = vpop.f32.mrb[0].mxu0
      %v1765 = vadd.f32 0.0, %v1764
      %v1766 = vpop.f32.mrb[0].mxu0
      %1767 = vmatprep.mubr.bf16.mxu0 0
      %1768 = vmatmul.mubr.bf16.gmra.mrb[0].mxu0 %v1541
      %v1769 = vpop.f32.mrb[0].mxu0
      %v1770 = vadd.f32 0.0, %v1769
      %v1771 = vpop.f32.mrb[0].mxu0
      %v1772 = vpop.f32.mrb[0].mxu0
      %v1773 = vadd.f32 0.0, %v1772
      %v1774 = vpop.f32.mrb[0].mxu0
      %1775 = vdwg.mxu0
      %v1776 = vadd.f32 %v1228, %v1642
      %v1777 = vadd.f32 %v1229, %v1645
      %v1778 = vadd.f32 %v1230, %v1650
      %v1779 = vadd.f32 %v1231, %v1653
      %v1780 = vadd.f32 %v1232, %v1658
      %v1781 = vadd.f32 %v1233, %v1661
      %v1782 = vadd.f32 %v1234, %v1666
      %v1783 = vadd.f32 %v1235, %v1669
      %v1784 = vadd.f32 %v1236, %v1674
      %v1785 = vadd.f32 %v1237, %v1677
      %v1786 = vadd.f32 %v1238, %v1682
      %v1787 = vadd.f32 %v1239, %v1685
      %v1788 = vadd.f32 %v1240, %v1690
      %v1789 = vadd.f32 %v1241, %v1693
      %v1790 = vadd.f32 %v1242, %v1698
      %v1791 = vadd.f32 %v1243, %v1701
      %v1792 = vadd.f32 %v1244, %v1706
      %v1793 = vadd.f32 %v1245, %v1709
      %v1794 = vadd.f32 %v1246, %v1714
      %v1795 = vadd.f32 %v1247, %v1717
      %v1796 = vadd.f32 %v1248, %v1722
      %v1797 = vadd.f32 %v1249, %v1725
      %v1798 = vadd.f32 %v1250, %v1730
      %v1799 = vadd.f32 %v1251, %v1733
      %v1800 = vadd.f32 %v1252, %v1738
      %v1801 = vadd.f32 %v1253, %v1741
      %v1802 = vadd.f32 %v1254, %v1746
      %v1803 = vadd.f32 %v1255, %v1749
      %v1804 = vadd.f32 %v1256, %v1754
      %v1805 = vadd.f32 %v1257, %v1757
      %v1806 = vadd.f32 %v1258, %v1762
      %v1807 = vadd.f32 %v1259, %v1765
      %v1808 = vadd.f32 %v1260, %v1770
      %v1809 = vadd.f32 %v1261, %v1773
      %v1810 = vld [vmem:[%s165 + $0x8] sm:$0xe]
      %s1811 = scalar_lea.vmem %s1, 256
      %v1812 = vld [vmem:[%s1811] sm:$0xf]
      %v1813 = vld [vmem:[%s1811 + $0x4] sm:$0xf]
      %v1814 = vld [vmem:[%s1811 + $0x8] sm:$0xf]
      %v1815 = vld [vmem:[%s1811 + $0xc] sm:$0xf]
      %v1816 = vld [vmem:[%s1811 + $0x10] sm:$0xf]
      %v1817 = vld [vmem:[%s1811 + $0x14] sm:$0xf]
      %v1818 = vld [vmem:[%s1811 + $0x18] sm:$0xf]
      %v1819 = vld [vmem:[%s1811 + $0x1c] sm:$0xf]
      %v1820 = vld [vmem:[%s1811 + $0x20] sm:$0xf]
      %v1821 = vld [vmem:[%s1811 + $0x24] sm:$0xf]
      %v1822 = vld [vmem:[%s1811 + $0x28] sm:$0xf]
      %v1823 = vld [vmem:[%s1811 + $0x2c] sm:$0xf]
      %v1824 = vld [vmem:[%s1811 + $0x30] sm:$0xf]
      %v1825 = vld [vmem:[%s1811 + $0x34] sm:$0xf]
      %v1826 = vld [vmem:[%s1811 + $0x38] sm:$0xf]
      %v1827 = vld [vmem:[%s1811 + $0x3c] sm:$0xf]
      %v1829 = vunpack.c.l.b16 %v1810
      %v1830 = vpack.c.b16 %v1350, %v1829
      %v1831 = vrot.slane %v1830, 1
      %v1832 = vrot.slane %v1385, 1
      %v1833 = vsel %vm958, %v1831, %v1832
      %v1834 = vrot.slane %v1386, 1
      %v1835 = vsel %vm958, %v1832, %v1834
      %v1836 = vrot.slane %v1387, 1
      %v1837 = vsel %vm958, %v1834, %v1836
      %v1838 = vrot.slane %v1388, 1
      %v1839 = vsel %vm958, %v1836, %v1838
      %v1840 = vrot.slane %v1389, 1
      %v1841 = vsel %vm958, %v1838, %v1840
      %v1842 = vrot.slane %v1390, 1
      %v1843 = vsel %vm958, %v1840, %v1842
      %v1844 = vrot.slane %v1391, 1
      %v1845 = vsel %vm958, %v1842, %v1844
      %v1846 = vrot.slane %v1392, 1
      %v1847 = vsel %vm958, %v1844, %v1846
      %v1848 = vrot.slane %v1393, 1
      %v1849 = vsel %vm958, %v1846, %v1848
      %v1850 = vrot.slane %v1394, 1
      %v1851 = vsel %vm958, %v1848, %v1850
      %v1852 = vrot.slane %v1395, 1
      %v1853 = vsel %vm958, %v1850, %v1852
      %v1854 = vrot.slane %v1396, 1
      %v1855 = vsel %vm958, %v1852, %v1854
      %v1856 = vrot.slane %v1397, 1
      %v1857 = vsel %vm958, %v1854, %v1856
      %v1858 = vrot.slane %v1398, 1
      %v1859 = vsel %vm958, %v1856, %v1858
      %v1860 = vrot.slane %v1399, 1
      %v1861 = vsel %vm958, %v1858, %v1860
      %v1862 = vrot.slane %v1400, 1
      %v1863 = vsel %vm958, %v1860, %v1862
      %v1864 = vrot.slane %v1401, 1
      %v1865 = vsel %vm958, %v1862, %v1864
      %v1899 = vunpack.c.l.b16 %v1812
      %v1900 = vunpack.c.l.b16 %v1813
      %v1901 = vunpack.c.l.b16 %v1814
      %v1902 = vunpack.c.l.b16 %v1815
      %v1903 = vunpack.c.l.b16 %v1816
      %v1904 = vunpack.c.l.b16 %v1817
      %v1905 = vunpack.c.l.b16 %v1818
      %v1906 = vunpack.c.l.b16 %v1819
      %v1907 = vunpack.c.l.b16 %v1820
      %v1908 = vunpack.c.l.b16 %v1821
      %v1909 = vunpack.c.l.b16 %v1822
      %v1910 = vunpack.c.l.b16 %v1823
      %v1911 = vunpack.c.l.b16 %v1824
      %v1912 = vunpack.c.l.b16 %v1825
      %v1913 = vunpack.c.l.b16 %v1826
      %v1914 = vunpack.c.l.b16 %v1827
      %v1915 = vpack.c.b16 %v1900, %v1899
      %v1916 = vpack.c.b16 %v1902, %v1901
      %v1917 = vpack.c.b16 %v1904, %v1903
      %v1918 = vpack.c.b16 %v1906, %v1905
      %v1919 = vpack.c.b16 %v1908, %v1907
      %v1920 = vpack.c.b16 %v1910, %v1909
      %v1921 = vpack.c.b16 %v1912, %v1911
      %v1922 = vpack.c.b16 %v1914, %v1913
      %1931 = vmatprep.subr.bf16.mxu0 0
      %1932 = vmatpush1.bf16.msra.mxu0 %v1915
      %1933 = vmatprep.subr.bf16.mxu0 0
      %1934 = vmatpush1.bf16.msra.mxu0 %v1916
      %1935 = vmatprep.subr.bf16.mxu0 0
      %1936 = vmatpush1.bf16.msra.mxu0 %v1917
      %1937 = vmatprep.subr.bf16.mxu0 0
      %1938 = vmatpush1.bf16.msra.mxu0 %v1918
      %1939 = vmatprep.subr.bf16.mxu0 0
      %1940 = vmatpush1.bf16.msra.mxu0 %v1919
      %1941 = vmatprep.subr.bf16.mxu0 0
      %1942 = vmatpush1.bf16.msra.mxu0 %v1920
      %1943 = vmatprep.subr.bf16.mxu0 0
      %1944 = vmatpush1.bf16.msra.mxu0 %v1921
      %1945 = vmatprep.subr.bf16.mxu0 0
      %1946 = vmatpush1.bf16.msra.mxu0 %v1922
      %1947 = vmatprep.subr.bf16.mxu0 0
      %1948 = vmatpush1.bf16.msra.mxu0 0
      %1949 = vmatprep.subr.bf16.mxu0 0
      %1950 = vmatpush1.bf16.msra.mxu0 0
      %1951 = vmatprep.subr.bf16.mxu0 0
      %1952 = vmatpush1.bf16.msra.mxu0 0
      %1953 = vmatprep.subr.bf16.mxu0 0
      %1954 = vmatpush1.bf16.msra.mxu0 0
      %1955 = vmatprep.subr.bf16.mxu0 0
      %1956 = vmatpush1.bf16.msra.mxu0 0
      %1957 = vmatprep.subr.bf16.mxu0 0
      %1958 = vmatpush1.bf16.msra.mxu0 0
      %1959 = vmatprep.subr.bf16.mxu0 0
      %1960 = vmatpush1.bf16.msra.mxu0 0
      %1961 = vmatprep.subr.bf16.mxu0 0
      %1962 = vmatpush1.bf16.msra.mxu0 0
      %1963 = vmatprep.mubr.bf16.mxu0 0
      %1964 = vmatmul.mubr.bf16.gmra.mrb[0].mxu0 %v1833
      %v1965 = vpop.f32.mrb[0].mxu0
      %v1966 = vadd.f32 0.0, %v1965
      %v1967 = vpop.f32.mrb[0].mxu0
      %v1968 = vpop.f32.mrb[0].mxu0
      %v1969 = vadd.f32 0.0, %v1968
      %v1970 = vpop.f32.mrb[0].mxu0
      %1971 = vmatprep.mubr.bf16.mxu0 0
      %1972 = vmatmul.mubr.bf16.gmra.mrb[0].mxu0 %v1835
      %v1973 = vpop.f32.mrb[0].mxu0
      %v1974 = vadd.f32 0.0, %v1973
      %v1975 = vpop.f32.mrb[0].mxu0
      %v1976 = vpop.f32.mrb[0].mxu0
      %v1977 = vadd.f32 0.0, %v1976
      %v1978 = vpop.f32.mrb[0].mxu0
      %1979 = vmatprep.mubr.bf16.mxu0 0
      %1980 = vmatmul.mubr.bf16.gmra.mrb[0].mxu0 %v1837
      %v1981 = vpop.f32.mrb[0].mxu0
      %v1982 = vadd.f32 0.0, %v1981
      %v1983 = vpop.f32.mrb[0].mxu0
      %v1984 = vpop.f32.mrb[0].mxu0
      %v1985 = vadd.f32 0.0, %v1984
      %v1986 = vpop.f32.mrb[0].mxu0
      %1987 = vmatprep.mubr.bf16.mxu0 0
      %1988 = vmatmul.mubr.bf16.gmra.mrb[0].mxu0 %v1839
      %v1989 = vpop.f32.mrb[0].mxu0
      %v1990 = vadd.f32 0.0, %v1989
      %v1991 = vpop.f32.mrb[0].mxu0
      %v1992 = vpop.f32.mrb[0].mxu0
      %v1993 = vadd.f32 0.0, %v1992
      %v1994 = vpop.f32.mrb[0].mxu0
      %1995 = vmatprep.mubr.bf16.mxu0 0
      %1996 = vmatmul.mubr.bf16.gmra.mrb[0].mxu0 %v1841
      %v1997 = vpop.f32.mrb[0].mxu0
      %v1998 = vadd.f32 0.0, %v1997
      %v1999 = vpop.f32.mrb[0].mxu0
      %v2000 = vpop.f32.mrb[0].mxu0
      %v2001 = vadd.f32 0.0, %v2000
      %v2002 = vpop.f32.mrb[0].mxu0
      %2003 = vmatprep.mubr.bf16.mxu0 0
      %2004 = vmatmul.mubr.bf16.gmra.mrb[0].mxu0 %v1843
      %v2005 = vpop.f32.mrb[0].mxu0
      %v2006 = vadd.f32 0.0, %v2005
      %v2007 = vpop.f32.mrb[0].mxu0
      %v2008 = vpop.f32.mrb[0].mxu0
      %v2009 = vadd.f32 0.0, %v2008
      %v2010 = vpop.f32.mrb[0].mxu0
      %2011 = vmatprep.mubr.bf16.mxu0 0
      %2012 = vmatmul.mubr.bf16.gmra.mrb[0].mxu0 %v1845
      %v2013 = vpop.f32.mrb[0].mxu0
      %v2014 = vadd.f32 0.0, %v2013
      %v2015 = vpop.f32.mrb[0].mxu0
      %v2016 = vpop.f32.mrb[0].mxu0
      %v2017 = vadd.f32 0.0, %v2016
      %v2018 = vpop.f32.mrb[0].mxu0
      %2019 = vmatprep.mubr.bf16.mxu0 0
      %2020 = vmatmul.mubr.bf16.gmra.mrb[0].mxu0 %v1847
      %v2021 = vpop.f32.mrb[0].mxu0
      %v2022 = vadd.f32 0.0, %v2021
      %v2023 = vpop.f32.mrb[0].mxu0
      %v2024 = vpop.f32.mrb[0].mxu0
      %v2025 = vadd.f32 0.0, %v2024
      %v2026 = vpop.f32.mrb[0].mxu0
      %2027 = vmatprep.mubr.bf16.mxu0 0
      %2028 = vmatmul.mubr.bf16.gmra.mrb[0].mxu0 %v1849
      %v2029 = vpop.f32.mrb[0].mxu0
      %v2030 = vadd.f32 0.0, %v2029
      %v2031 = vpop.f32.mrb[0].mxu0
      %v2032 = vpop.f32.mrb[0].mxu0
      %v2033 = vadd.f32 0.0, %v2032
      %v2034 = vpop.f32.mrb[0].mxu0
      %2035 = vmatprep.mubr.bf16.mxu0 0
      %2036 = vmatmul.mubr.bf16.gmra.mrb[0].mxu0 %v1851
      %v2037 = vpop.f32.mrb[0].mxu0
      %v2038 = vadd.f32 0.0, %v2037
      %v2039 = vpop.f32.mrb[0].mxu0
      %v2040 = vpop.f32.mrb[0].mxu0
      %v2041 = vadd.f32 0.0, %v2040
      %v2042 = vpop.f32.mrb[0].mxu0
      %2043 = vmatprep.mubr.bf16.mxu0 0
      %2044 = vmatmul.mubr.bf16.gmra.mrb[0].mxu0 %v1853
      %v2045 = vpop.f32.mrb[0].mxu0
      %v2046 = vadd.f32 0.0, %v2045
      %v2047 = vpop.f32.mrb[0].mxu0
      %v2048 = vpop.f32.mrb[0].mxu0
      %v2049 = vadd.f32 0.0, %v2048
      %v2050 = vpop.f32.mrb[0].mxu0
      %2051 = vmatprep.mubr.bf16.mxu0 0
      %2052 = vmatmul.mubr.bf16.gmra.mrb[0].mxu0 %v1855
      %v2053 = vpop.f32.mrb[0].mxu0
      %v2054 = vadd.f32 0.0, %v2053
      %v2055 = vpop.f32.mrb[0].mxu0
      %v2056 = vpop.f32.mrb[0].mxu0
      %v2057 = vadd.f32 0.0, %v2056
      %v2058 = vpop.f32.mrb[0].mxu0
      %2059 = vmatprep.mubr.bf16.mxu0 0
      %2060 = vmatmul.mubr.bf16.gmra.mrb[0].mxu0 %v1857
      %v2061 = vpop.f32.mrb[0].mxu0
      %v2062 = vadd.f32 0.0, %v2061
      %v2063 = vpop.f32.mrb[0].mxu0
      %v2064 = vpop.f32.mrb[0].mxu0
      %v2065 = vadd.f32 0.0, %v2064
      %v2066 = vpop.f32.mrb[0].mxu0
      %2067 = vmatprep.mubr.bf16.mxu0 0
      %2068 = vmatmul.mubr.bf16.gmra.mrb[0].mxu0 %v1859
      %v2069 = vpop.f32.mrb[0].mxu0
      %v2070 = vadd.f32 0.0, %v2069
      %v2071 = vpop.f32.mrb[0].mxu0
      %v2072 = vpop.f32.mrb[0].mxu0
      %v2073 = vadd.f32 0.0, %v2072
      %v2074 = vpop.f32.mrb[0].mxu0
      %2075 = vmatprep.mubr.bf16.mxu0 0
      %2076 = vmatmul.mubr.bf16.gmra.mrb[0].mxu0 %v1861
      %v2077 = vpop.f32.mrb[0].mxu0
      %v2078 = vadd.f32 0.0, %v2077
      %v2079 = vpop.f32.mrb[0].mxu0
      %v2080 = vpop.f32.mrb[0].mxu0
      %v2081 = vadd.f32 0.0, %v2080
      %v2082 = vpop.f32.mrb[0].mxu0
      %2083 = vmatprep.mubr.bf16.mxu0 0
      %2084 = vmatmul.mubr.bf16.gmra.mrb[0].mxu0 %v1863
      %v2085 = vpop.f32.mrb[0].mxu0
      %v2086 = vadd.f32 0.0, %v2085
      %v2087 = vpop.f32.mrb[0].mxu0
      %v2088 = vpop.f32.mrb[0].mxu0
      %v2089 = vadd.f32 0.0, %v2088
      %v2090 = vpop.f32.mrb[0].mxu0
      %2091 = vmatprep.mubr.bf16.mxu0 0
      %2092 = vmatmul.mubr.bf16.gmra.mrb[0].mxu0 %v1865
      %v2093 = vpop.f32.mrb[0].mxu0
      %v2094 = vadd.f32 0.0, %v2093
      %v2095 = vpop.f32.mrb[0].mxu0
      %v2096 = vpop.f32.mrb[0].mxu0
      %v2097 = vadd.f32 0.0, %v2096
      %v2098 = vpop.f32.mrb[0].mxu0
      %2099 = vdwg.mxu0
      %v2100 = vadd.f32 %v1776, %v1966
      %v2101 = vadd.f32 %v1777, %v1969
      %v2102 = vadd.f32 %v1778, %v1974
      %v2103 = vadd.f32 %v1779, %v1977
      %v2104 = vadd.f32 %v1780, %v1982
      %v2105 = vadd.f32 %v1781, %v1985
      %v2106 = vadd.f32 %v1782, %v1990
      %v2107 = vadd.f32 %v1783, %v1993
      %v2108 = vadd.f32 %v1784, %v1998
      %v2109 = vadd.f32 %v1785, %v2001
      %v2110 = vadd.f32 %v1786, %v2006
      %v2111 = vadd.f32 %v1787, %v2009
      %v2112 = vadd.f32 %v1788, %v2014
      %v2113 = vadd.f32 %v1789, %v2017
      %v2114 = vadd.f32 %v1790, %v2022
      %v2115 = vadd.f32 %v1791, %v2025
      %v2116 = vadd.f32 %v1792, %v2030
      %v2117 = vadd.f32 %v1793, %v2033
      %v2118 = vadd.f32 %v1794, %v2038
      %v2119 = vadd.f32 %v1795, %v2041
      %v2120 = vadd.f32 %v1796, %v2046
      %v2121 = vadd.f32 %v1797, %v2049
      %v2122 = vadd.f32 %v1798, %v2054
      %v2123 = vadd.f32 %v1799, %v2057
      %v2124 = vadd.f32 %v1800, %v2062
      %v2125 = vadd.f32 %v1801, %v2065
      %v2126 = vadd.f32 %v1802, %v2070
      %v2127 = vadd.f32 %v1803, %v2073
      %v2128 = vadd.f32 %v1804, %v2078
      %v2129 = vadd.f32 %v1805, %v2081
      %v2130 = vadd.f32 %v1806, %v2086
      %v2131 = vadd.f32 %v1807, %v2089
      %v2132 = vadd.f32 %v1808, %v2094
      %v2133 = vadd.f32 %v1809, %v2097
      %v2134 = vld [vmem:[%s165 + $0x90] sm:$0x3]
      %s2135 = scalar_lea.vmem %s1, 320
      %v2136 = vld [vmem:[%s2135] sm:$0xf]
      %v2137 = vld [vmem:[%s2135 + $0x4] sm:$0xf]
      %v2138 = vld [vmem:[%s2135 + $0x8] sm:$0xf]
      %v2139 = vld [vmem:[%s2135 + $0xc] sm:$0xf]
      %v2140 = vld [vmem:[%s2135 + $0x10] sm:$0xf]
      %v2141 = vld [vmem:[%s2135 + $0x14] sm:$0xf]
      %v2142 = vld [vmem:[%s2135 + $0x18] sm:$0xf]
      %v2143 = vld [vmem:[%s2135 + $0x1c] sm:$0xf]
      %v2144 = vld [vmem:[%s2135 + $0x20] sm:$0xf]
      %v2145 = vld [vmem:[%s2135 + $0x24] sm:$0xf]
      %v2146 = vld [vmem:[%s2135 + $0x28] sm:$0xf]
      %v2147 = vld [vmem:[%s2135 + $0x2c] sm:$0xf]
      %v2148 = vld [vmem:[%s2135 + $0x30] sm:$0xf]
      %v2149 = vld [vmem:[%s2135 + $0x34] sm:$0xf]
      %v2150 = vld [vmem:[%s2135 + $0x38] sm:$0xf]
      %v2151 = vld [vmem:[%s2135 + $0x3c] sm:$0xf]
      %v2153 = vunpack.c.l.b16 %v2134
      %v2154 = vpack.c.b16 %v2153, %v2153
      %vm2155 = vsmask.f32 6400
      %v2157 = vshrl.u32 %v1830, 16
      %v2159 = vrot.slane %v2157, 1
      %v2160 = vshll.u32 %v1830, 16
      %v2162 = vrot.slane %v2160, 2
      %v2163 = vor.u32 %v2159, %v2162
      %v2164 = vrot.slane %v1414, 1
      %v2165 = vrot.slane %v1410, 2
      %v2166 = vor.u32 %v2164, %v2165
      %v2167 = vsel %vm2155, %v2163, %v2166
      %v2168 = vrot.slane %v1422, 1
      %v2169 = vrot.slane %v1418, 2
      %v2170 = vor.u32 %v2168, %v2169
      %v2171 = vsel %vm2155, %v2166, %v2170
      %v2172 = vrot.slane %v1430, 1
      %v2173 = vrot.slane %v1426, 2
      %v2174 = vor.u32 %v2172, %v2173
      %v2175 = vsel %vm2155, %v2170, %v2174
      %v2176 = vrot.slane %v1438, 1
      %v2177 = vrot.slane %v1434, 2
      %v2178 = vor.u32 %v2176, %v2177
      %v2179 = vsel %vm2155, %v2174, %v2178
      %v2180 = vrot.slane %v1446, 1
      %v2181 = vrot.slane %v1442, 2
      %v2182 = vor.u32 %v2180, %v2181
      %v2183 = vsel %vm2155, %v2178, %v2182
      %v2184 = vrot.slane %v1454, 1
      %v2185 = vrot.slane %v1450, 2
      %v2186 = vor.u32 %v2184, %v2185
      %v2187 = vsel %vm2155, %v2182, %v2186
      %v2188 = vrot.slane %v1462, 1
      %v2189 = vrot.slane %v1458, 2
      %v2190 = vor.u32 %v2188, %v2189
      %v2191 = vsel %vm2155, %v2186, %v2190
      %v2192 = vrot.slane %v1470, 1
      %v2193 = vrot.slane %v1466, 2
      %v2194 = vor.u32 %v2192, %v2193
      %v2195 = vsel %vm2155, %v2190, %v2194
      %v2196 = vrot.slane %v1478, 1
      %v2197 = vrot.slane %v1474, 2
      %v2198 = vor.u32 %v2196, %v2197
      %v2199 = vsel %vm2155, %v2194, %v2198
      %v2200 = vrot.slane %v1486, 1
      %v2201 = vrot.slane %v1482, 2
      %v2202 = vor.u32 %v2200, %v2201
      %v2203 = vsel %vm2155, %v2198, %v2202
      %v2204 = vrot.slane %v1494, 1
      %v2205 = vrot.slane %v1490, 2
      %v2206 = vor.u32 %v2204, %v2205
      %v2207 = vsel %vm2155, %v2202, %v2206
      %v2208 = vrot.slane %v1502, 1
      %v2209 = vrot.slane %v1498, 2
      %v2210 = vor.u32 %v2208, %v2209
      %v2211 = vsel %vm2155, %v2206, %v2210
      %v2212 = vrot.slane %v1510, 1
      %v2213 = vrot.slane %v1506, 2
      %v2214 = vor.u32 %v2212, %v2213
      %v2215 = vsel %vm2155, %v2210, %v2214
      %v2216 = vrot.slane %v1518, 1
      %v2217 = vrot.slane %v1514, 2
      %v2218 = vor.u32 %v2216, %v2217
      %v2219 = vsel %vm2155, %v2214, %v2218
      %v2220 = vrot.slane %v1526, 1
      %v2221 = vrot.slane %v1522, 2
      %v2222 = vor.u32 %v2220, %v2221
      %v2223 = vsel %vm2155, %v2218, %v2222
      %v2224 = vrot.slane %v1534, 1
      %v2225 = vrot.slane %v1530, 2
      %v2226 = vor.u32 %v2224, %v2225
      %v2227 = vsel %vm2155, %v2222, %v2226
      %v2229 = vshrl.u32 %v2154, 16
      %v2231 = vrot.slane %v2229, 1
      %v2232 = vshll.u32 %v2154, 16
      %v2234 = vrot.slane %v2232, 2
      %v2235 = vor.u32 %v2231, %v2234
      %v2236 = vsel %vm2155, %v2226, %v2235
      %v2270 = vunpack.c.l.b16 %v2136
      %v2271 = vunpack.c.l.b16 %v2137
      %v2272 = vunpack.c.l.b16 %v2138
      %v2273 = vunpack.c.l.b16 %v2139
      %v2274 = vunpack.c.l.b16 %v2140
      %v2275 = vunpack.c.l.b16 %v2141
      %v2276 = vunpack.c.l.b16 %v2142
      %v2277 = vunpack.c.l.b16 %v2143
      %v2278 = vunpack.c.l.b16 %v2144
      %v2279 = vunpack.c.l.b16 %v2145
      %v2280 = vunpack.c.l.b16 %v2146
      %v2281 = vunpack.c.l.b16 %v2147
      %v2282 = vunpack.c.l.b16 %v2148
      %v2283 = vunpack.c.l.b16 %v2149
      %v2284 = vunpack.c.l.b16 %v2150
      %v2285 = vunpack.c.l.b16 %v2151
      %v2286 = vpack.c.b16 %v2271, %v2270
      %v2287 = vpack.c.b16 %v2273, %v2272
      %v2288 = vpack.c.b16 %v2275, %v2274
      %v2289 = vpack.c.b16 %v2277, %v2276
      %v2290 = vpack.c.b16 %v2279, %v2278
      %v2291 = vpack.c.b16 %v2281, %v2280
      %v2292 = vpack.c.b16 %v2283, %v2282
      %v2293 = vpack.c.b16 %v2285, %v2284
      %2302 = vmatprep.subr.bf16.mxu0 0
      %2303 = vmatpush1.bf16.msra.mxu0 %v2286
      %2304 = vmatprep.subr.bf16.mxu0 0
      %2305 = vmatpush1.bf16.msra.mxu0 %v2287
      %2306 = vmatprep.subr.bf16.mxu0 0
      %2307 = vmatpush1.bf16.msra.mxu0 %v2288
      %2308 = vmatprep.subr.bf16.mxu0 0
      %2309 = vmatpush1.bf16.msra.mxu0 %v2289
      %2310 = vmatprep.subr.bf16.mxu0 0
      %2311 = vmatpush1.bf16.msra.mxu0 %v2290
      %2312 = vmatprep.subr.bf16.mxu0 0
      %2313 = vmatpush1.bf16.msra.mxu0 %v2291
      %2314 = vmatprep.subr.bf16.mxu0 0
      %2315 = vmatpush1.bf16.msra.mxu0 %v2292
      %2316 = vmatprep.subr.bf16.mxu0 0
      %2317 = vmatpush1.bf16.msra.mxu0 %v2293
      %2318 = vmatprep.subr.bf16.mxu0 0
      %2319 = vmatpush1.bf16.msra.mxu0 0
      %2320 = vmatprep.subr.bf16.mxu0 0
      %2321 = vmatpush1.bf16.msra.mxu0 0
      %2322 = vmatprep.subr.bf16.mxu0 0
      %2323 = vmatpush1.bf16.msra.mxu0 0
      %2324 = vmatprep.subr.bf16.mxu0 0
      %2325 = vmatpush1.bf16.msra.mxu0 0
      %2326 = vmatprep.subr.bf16.mxu0 0
      %2327 = vmatpush1.bf16.msra.mxu0 0
      %2328 = vmatprep.subr.bf16.mxu0 0
      %2329 = vmatpush1.bf16.msra.mxu0 0
      %2330 = vmatprep.subr.bf16.mxu0 0
      %2331 = vmatpush1.bf16.msra.mxu0 0
      %2332 = vmatprep.subr.bf16.mxu0 0
      %2333 = vmatpush1.bf16.msra.mxu0 0
      %2334 = vmatprep.mubr.bf16.mxu0 0
      %2335 = vmatmul.mubr.bf16.gmra.mrb[0].mxu0 %v2167
      %v2336 = vpop.f32.mrb[0].mxu0
      %v2337 = vadd.f32 0.0, %v2336
      %v2338 = vpop.f32.mrb[0].mxu0
      %v2339 = vpop.f32.mrb[0].mxu0
      %v2340 = vadd.f32 0.0, %v2339
      %v2341 = vpop.f32.mrb[0].mxu0
      %2342 = vmatprep.mubr.bf16.mxu0 0
      %2343 = vmatmul.mubr.bf16.gmra.mrb[0].mxu0 %v2171
      %v2344 = vpop.f32.mrb[0].mxu0
      %v2345 = vadd.f32 0.0, %v2344
      %v2346 = vpop.f32.mrb[0].mxu0
      %v2347 = vpop.f32.mrb[0].mxu0
      %v2348 = vadd.f32 0.0, %v2347
      %v2349 = vpop.f32.mrb[0].mxu0
      %2350 = vmatprep.mubr.bf16.mxu0 0
      %2351 = vmatmul.mubr.bf16.gmra.mrb[0].mxu0 %v2175
      %v2352 = vpop.f32.mrb[0].mxu0
      %v2353 = vadd.f32 0.0, %v2352
      %v2354 = vpop.f32.mrb[0].mxu0
      %v2355 = vpop.f32.mrb[0].mxu0
      %v2356 = vadd.f32 0.0, %v2355
      %v2357 = vpop.f32.mrb[0].mxu0
      %2358 = vmatprep.mubr.bf16.mxu0 0
      %2359 = vmatmul.mubr.bf16.gmra.mrb[0].mxu0 %v2179
      %v2360 = vpop.f32.mrb[0].mxu0
      %v2361 = vadd.f32 0.0, %v2360
      %v2362 = vpop.f32.mrb[0].mxu0
      %v2363 = vpop.f32.mrb[0].mxu0
      %v2364 = vadd.f32 0.0, %v2363
      %v2365 = vpop.f32.mrb[0].mxu0
      %2366 = vmatprep.mubr.bf16.mxu0 0
      %2367 = vmatmul.mubr.bf16.gmra.mrb[0].mxu0 %v2183
      %v2368 = vpop.f32.mrb[0].mxu0
      %v2369 = vadd.f32 0.0, %v2368
      %v2370 = vpop.f32.mrb[0].mxu0
      %v2371 = vpop.f32.mrb[0].mxu0
      %v2372 = vadd.f32 0.0, %v2371
      %v2373 = vpop.f32.mrb[0].mxu0
      %2374 = vmatprep.mubr.bf16.mxu0 0
      %2375 = vmatmul.mubr.bf16.gmra.mrb[0].mxu0 %v2187
      %v2376 = vpop.f32.mrb[0].mxu0
      %v2377 = vadd.f32 0.0, %v2376
      %v2378 = vpop.f32.mrb[0].mxu0
      %v2379 = vpop.f32.mrb[0].mxu0
      %v2380 = vadd.f32 0.0, %v2379
      %v2381 = vpop.f32.mrb[0].mxu0
      %2382 = vmatprep.mubr.bf16.mxu0 0
      %2383 = vmatmul.mubr.bf16.gmra.mrb[0].mxu0 %v2191
      %v2384 = vpop.f32.mrb[0].mxu0
      %v2385 = vadd.f32 0.0, %v2384
      %v2386 = vpop.f32.mrb[0].mxu0
      %v2387 = vpop.f32.mrb[0].mxu0
      %v2388 = vadd.f32 0.0, %v2387
      %v2389 = vpop.f32.mrb[0].mxu0
      %2390 = vmatprep.mubr.bf16.mxu0 0
      %2391 = vmatmul.mubr.bf16.gmra.mrb[0].mxu0 %v2195
      %v2392 = vpop.f32.mrb[0].mxu0
      %v2393 = vadd.f32 0.0, %v2392
      %v2394 = vpop.f32.mrb[0].mxu0
      %v2395 = vpop.f32.mrb[0].mxu0
      %v2396 = vadd.f32 0.0, %v2395
      %v2397 = vpop.f32.mrb[0].mxu0
      %2398 = vmatprep.mubr.bf16.mxu0 0
      %2399 = vmatmul.mubr.bf16.gmra.mrb[0].mxu0 %v2199
      %v2400 = vpop.f32.mrb[0].mxu0
      %v2401 = vadd.f32 0.0, %v2400
      %v2402 = vpop.f32.mrb[0].mxu0
      %v2403 = vpop.f32.mrb[0].mxu0
      %v2404 = vadd.f32 0.0, %v2403
      %v2405 = vpop.f32.mrb[0].mxu0
      %2406 = vmatprep.mubr.bf16.mxu0 0
      %2407 = vmatmul.mubr.bf16.gmra.mrb[0].mxu0 %v2203
      %v2408 = vpop.f32.mrb[0].mxu0
      %v2409 = vadd.f32 0.0, %v2408
      %v2410 = vpop.f32.mrb[0].mxu0
      %v2411 = vpop.f32.mrb[0].mxu0
      %v2412 = vadd.f32 0.0, %v2411
      %v2413 = vpop.f32.mrb[0].mxu0
      %2414 = vmatprep.mubr.bf16.mxu0 0
      %2415 = vmatmul.mubr.bf16.gmra.mrb[0].mxu0 %v2207
      %v2416 = vpop.f32.mrb[0].mxu0
      %v2417 = vadd.f32 0.0, %v2416
      %v2418 = vpop.f32.mrb[0].mxu0
      %v2419 = vpop.f32.mrb[0].mxu0
      %v2420 = vadd.f32 0.0, %v2419
      %v2421 = vpop.f32.mrb[0].mxu0
      %2422 = vmatprep.mubr.bf16.mxu0 0
      %2423 = vmatmul.mubr.bf16.gmra.mrb[0].mxu0 %v2211
      %v2424 = vpop.f32.mrb[0].mxu0
      %v2425 = vadd.f32 0.0, %v2424
      %v2426 = vpop.f32.mrb[0].mxu0
      %v2427 = vpop.f32.mrb[0].mxu0
      %v2428 = vadd.f32 0.0, %v2427
      %v2429 = vpop.f32.mrb[0].mxu0
      %2430 = vmatprep.mubr.bf16.mxu0 0
      %2431 = vmatmul.mubr.bf16.gmra.mrb[0].mxu0 %v2215
      %v2432 = vpop.f32.mrb[0].mxu0
      %v2433 = vadd.f32 0.0, %v2432
      %v2434 = vpop.f32.mrb[0].mxu0
      %v2435 = vpop.f32.mrb[0].mxu0
      %v2436 = vadd.f32 0.0, %v2435
      %v2437 = vpop.f32.mrb[0].mxu0
      %2438 = vmatprep.mubr.bf16.mxu0 0
      %2439 = vmatmul.mubr.bf16.gmra.mrb[0].mxu0 %v2219
      %v2440 = vpop.f32.mrb[0].mxu0
      %v2441 = vadd.f32 0.0, %v2440
      %v2442 = vpop.f32.mrb[0].mxu0
      %v2443 = vpop.f32.mrb[0].mxu0
      %v2444 = vadd.f32 0.0, %v2443
      %v2445 = vpop.f32.mrb[0].mxu0
      %2446 = vmatprep.mubr.bf16.mxu0 0
      %2447 = vmatmul.mubr.bf16.gmra.mrb[0].mxu0 %v2223
      %v2448 = vpop.f32.mrb[0].mxu0
      %v2449 = vadd.f32 0.0, %v2448
      %v2450 = vpop.f32.mrb[0].mxu0
      %v2451 = vpop.f32.mrb[0].mxu0
      %v2452 = vadd.f32 0.0, %v2451
      %v2453 = vpop.f32.mrb[0].mxu0
      %2454 = vmatprep.mubr.bf16.mxu0 0
      %2455 = vmatmul.mubr.bf16.gmra.mrb[0].mxu0 %v2227
      %v2456 = vpop.f32.mrb[0].mxu0
      %v2457 = vadd.f32 0.0, %v2456
      %v2458 = vpop.f32.mrb[0].mxu0
      %v2459 = vpop.f32.mrb[0].mxu0
      %v2460 = vadd.f32 0.0, %v2459
      %v2461 = vpop.f32.mrb[0].mxu0
      %2462 = vmatprep.mubr.bf16.mxu0 0
      %2463 = vmatmul.mubr.bf16.gmra.mrb[0].mxu0 %v2236
      %v2464 = vpop.f32.mrb[0].mxu0
      %v2465 = vadd.f32 0.0, %v2464
      %v2466 = vpop.f32.mrb[0].mxu0
      %v2467 = vpop.f32.mrb[0].mxu0
      %v2468 = vadd.f32 0.0, %v2467
      %v2469 = vpop.f32.mrb[0].mxu0
      %2470 = vdwg.mxu0
      %v2471 = vadd.f32 %v2100, %v2337
      %v2472 = vadd.f32 %v2101, %v2340
      %v2473 = vadd.f32 %v2102, %v2345
      %v2474 = vadd.f32 %v2103, %v2348
      %v2475 = vadd.f32 %v2104, %v2353
      %v2476 = vadd.f32 %v2105, %v2356
      %v2477 = vadd.f32 %v2106, %v2361
      %v2478 = vadd.f32 %v2107, %v2364
      %v2479 = vadd.f32 %v2108, %v2369
      %v2480 = vadd.f32 %v2109, %v2372
      %v2481 = vadd.f32 %v2110, %v2377
      %v2482 = vadd.f32 %v2111, %v2380
      %v2483 = vadd.f32 %v2112, %v2385
      %v2484 = vadd.f32 %v2113, %v2388
      %v2485 = vadd.f32 %v2114, %v2393
      %v2486 = vadd.f32 %v2115, %v2396
      %v2487 = vadd.f32 %v2116, %v2401
      %v2488 = vadd.f32 %v2117, %v2404
      %v2489 = vadd.f32 %v2118, %v2409
      %v2490 = vadd.f32 %v2119, %v2412
      %v2491 = vadd.f32 %v2120, %v2417
      %v2492 = vadd.f32 %v2121, %v2420
      %v2493 = vadd.f32 %v2122, %v2425
      %v2494 = vadd.f32 %v2123, %v2428
      %v2495 = vadd.f32 %v2124, %v2433
      %v2496 = vadd.f32 %v2125, %v2436
      %v2497 = vadd.f32 %v2126, %v2441
      %v2498 = vadd.f32 %v2127, %v2444
      %v2499 = vadd.f32 %v2128, %v2449
      %v2500 = vadd.f32 %v2129, %v2452
      %v2501 = vadd.f32 %v2130, %v2457
      %v2502 = vadd.f32 %v2131, %v2460
      %v2503 = vadd.f32 %v2132, %v2465
      %v2504 = vadd.f32 %v2133, %v2468
      %v2505 = vld [vmem:[%s165 + $0x10] sm:$0xe]
      %v2506 = vld [vmem:[%s165 + $0x14] sm:$0xf]
      %v2507 = vld [vmem:[%s165 + $0x18] sm:$0xf]
      %v2508 = vld [vmem:[%s165 + $0x1c] sm:$0xf]
      %v2509 = vld [vmem:[%s165 + $0x20] sm:$0xf]
      %v2510 = vld [vmem:[%s165 + $0x24] sm:$0xf]
      %v2511 = vld [vmem:[%s165 + $0x28] sm:$0xf]
      %v2512 = vld [vmem:[%s165 + $0x2c] sm:$0xf]
      %v2513 = vld [vmem:[%s165 + $0x30] sm:$0xf]
      %v2514 = vld [vmem:[%s165 + $0x34] sm:$0xf]
      %v2515 = vld [vmem:[%s165 + $0x38] sm:$0xf]
      %v2516 = vld [vmem:[%s165 + $0x3c] sm:$0xf]
      %v2517 = vld [vmem:[%s165 + $0x40] sm:$0xf]
      %v2518 = vld [vmem:[%s165 + $0x44] sm:$0xf]
      %v2519 = vld [vmem:[%s165 + $0x48] sm:$0xf]
      %v2520 = vld [vmem:[%s165 + $0x4c] sm:$0xf]
      %v2521 = vld [vmem:[%s165 + $0x50] sm:$0xf]
      %v2522 = vld [vmem:[%s165 + $0x54] sm:$0xf]
      %v2523 = vld [vmem:[%s165 + $0x58] sm:$0xf]
      %v2524 = vld [vmem:[%s165 + $0x5c] sm:$0xf]
      %v2525 = vld [vmem:[%s165 + $0x60] sm:$0xf]
      %v2526 = vld [vmem:[%s165 + $0x64] sm:$0xf]
      %v2527 = vld [vmem:[%s165 + $0x68] sm:$0xf]
      %v2528 = vld [vmem:[%s165 + $0x6c] sm:$0xf]
      %v2529 = vld [vmem:[%s165 + $0x70] sm:$0xf]
      %v2530 = vld [vmem:[%s165 + $0x74] sm:$0xf]
      %v2531 = vld [vmem:[%s165 + $0x78] sm:$0xf]
      %v2532 = vld [vmem:[%s165 + $0x7c] sm:$0xf]
      %v2533 = vld [vmem:[%s165 + $0x80] sm:$0xf]
      %v2534 = vld [vmem:[%s165 + $0x84] sm:$0xf]
      %v2535 = vld [vmem:[%s165 + $0x88] sm:$0xf]
      %v2536 = vld [vmem:[%s165 + $0x8c] sm:$0xf]
      %v2537 = vld [vmem:[%s165 + $0x90] sm:$0xf]
      %v2538 = vld [vmem:[%s165 + $0x94] sm:$0xf]
      %v2539 = vld [vmem:[%s165 + $0x98] sm:$0x1]
      %s2540 = scalar_lea.vmem %s1, 384
      %v2541 = vld [vmem:[%s2540] sm:$0xf]
      %v2542 = vld [vmem:[%s2540 + $0x4] sm:$0xf]
      %v2543 = vld [vmem:[%s2540 + $0x8] sm:$0xf]
      %v2544 = vld [vmem:[%s2540 + $0xc] sm:$0xf]
      %v2545 = vld [vmem:[%s2540 + $0x10] sm:$0xf]
      %v2546 = vld [vmem:[%s2540 + $0x14] sm:$0xf]
      %v2547 = vld [vmem:[%s2540 + $0x18] sm:$0xf]
      %v2548 = vld [vmem:[%s2540 + $0x1c] sm:$0xf]
      %v2549 = vld [vmem:[%s2540 + $0x20] sm:$0xf]
      %v2550 = vld [vmem:[%s2540 + $0x24] sm:$0xf]
      %v2551 = vld [vmem:[%s2540 + $0x28] sm:$0xf]
      %v2552 = vld [vmem:[%s2540 + $0x2c] sm:$0xf]
      %v2553 = vld [vmem:[%s2540 + $0x30] sm:$0xf]
      %v2554 = vld [vmem:[%s2540 + $0x34] sm:$0xf]
      %v2555 = vld [vmem:[%s2540 + $0x38] sm:$0xf]
      %v2556 = vld [vmem:[%s2540 + $0x3c] sm:$0xf]
      %v2592 = vunpack.c.l.b16 %v2505
      %v2593 = vunpack.c.l.b16 %v2506
      %v2594 = vunpack.c.l.b16 %v2507
      %v2595 = vunpack.c.l.b16 %v2508
      %v2596 = vunpack.c.l.b16 %v2509
      %v2597 = vunpack.c.l.b16 %v2510
      %v2598 = vunpack.c.l.b16 %v2511
      %v2599 = vunpack.c.l.b16 %v2512
      %v2600 = vunpack.c.l.b16 %v2513
      %v2601 = vunpack.c.l.b16 %v2514
      %v2602 = vunpack.c.l.b16 %v2515
      %v2603 = vunpack.c.l.b16 %v2516
      %v2604 = vunpack.c.l.b16 %v2517
      %v2605 = vunpack.c.l.b16 %v2518
      %v2606 = vunpack.c.l.b16 %v2519
      %v2607 = vunpack.c.l.b16 %v2520
      %v2608 = vunpack.c.l.b16 %v2521
      %v2609 = vunpack.c.l.b16 %v2522
      %v2610 = vunpack.c.l.b16 %v2523
      %v2611 = vunpack.c.l.b16 %v2524
      %v2612 = vunpack.c.l.b16 %v2525
      %v2613 = vunpack.c.l.b16 %v2526
      %v2614 = vunpack.c.l.b16 %v2527
      %v2615 = vunpack.c.l.b16 %v2528
      %v2616 = vunpack.c.l.b16 %v2529
      %v2617 = vunpack.c.l.b16 %v2530
      %v2618 = vunpack.c.l.b16 %v2531
      %v2619 = vunpack.c.l.b16 %v2532
      %v2620 = vunpack.c.l.b16 %v2533
      %v2621 = vunpack.c.l.b16 %v2534
      %v2622 = vunpack.c.l.b16 %v2535
      %v2623 = vunpack.c.l.b16 %v2536
      %v2624 = vunpack.c.l.b16 %v2537
      %v2625 = vunpack.c.l.b16 %v2538
      %v2626 = vunpack.c.l.b16 %v2539
      %v2627 = vpack.c.b16 %v2593, %v2592
      %v2628 = vpack.c.b16 %v2595, %v2594
      %v2629 = vpack.c.b16 %v2597, %v2596
      %v2630 = vpack.c.b16 %v2599, %v2598
      %v2631 = vpack.c.b16 %v2601, %v2600
      %v2632 = vpack.c.b16 %v2603, %v2602
      %v2633 = vpack.c.b16 %v2605, %v2604
      %v2634 = vpack.c.b16 %v2607, %v2606
      %v2635 = vpack.c.b16 %v2609, %v2608
      %v2636 = vpack.c.b16 %v2611, %v2610
      %v2637 = vpack.c.b16 %v2613, %v2612
      %v2638 = vpack.c.b16 %v2615, %v2614
      %v2639 = vpack.c.b16 %v2617, %v2616
      %v2640 = vpack.c.b16 %v2619, %v2618
      %v2641 = vpack.c.b16 %v2621, %v2620
      %v2642 = vpack.c.b16 %v2623, %v2622
      %v2643 = vpack.c.b16 %v2625, %v2624
      %v2644 = vpack.c.b16 %v2626, %v2626
      %v2645 = vrot.slane %v2627, 1
      %v2646 = vrot.slane %v2628, 1
      %v2647 = vsel %vm958, %v2645, %v2646
      %v2648 = vrot.slane %v2629, 1
      %v2649 = vsel %vm958, %v2646, %v2648
      %v2650 = vrot.slane %v2630, 1
      %v2651 = vsel %vm958, %v2648, %v2650
      %v2652 = vrot.slane %v2631, 1
      %v2653 = vsel %vm958, %v2650, %v2652
      %v2654 = vrot.slane %v2632, 1
      %v2655 = vsel %vm958, %v2652, %v2654
      %v2656 = vrot.slane %v2633, 1
      %v2657 = vsel %vm958, %v2654, %v2656
      %v2658 = vrot.slane %v2634, 1
      %v2659 = vsel %vm958, %v2656, %v2658
      %v2660 = vrot.slane %v2635, 1
      %v2661 = vsel %vm958, %v2658, %v2660
      %v2662 = vrot.slane %v2636, 1
      %v2663 = vsel %vm958, %v2660, %v2662
      %v2664 = vrot.slane %v2637, 1
      %v2665 = vsel %vm958, %v2662, %v2664
      %v2666 = vrot.slane %v2638, 1
      %v2667 = vsel %vm958, %v2664, %v2666
      %v2668 = vrot.slane %v2639, 1
      %v2669 = vsel %vm958, %v2666, %v2668
      %v2670 = vrot.slane %v2640, 1
      %v2671 = vsel %vm958, %v2668, %v2670
      %v2672 = vrot.slane %v2641, 1
      %v2673 = vsel %vm958, %v2670, %v2672
      %v2674 = vrot.slane %v2642, 1
      %v2675 = vsel %vm958, %v2672, %v2674
      %v2676 = vrot.slane %v2643, 1
      %v2677 = vsel %vm958, %v2674, %v2676
      %v2678 = vrot.slane %v2644, 1
      %v2679 = vsel %vm958, %v2676, %v2678
      %v2713 = vunpack.c.l.b16 %v2541
      %v2714 = vunpack.c.l.b16 %v2542
      %v2715 = vunpack.c.l.b16 %v2543
      %v2716 = vunpack.c.l.b16 %v2544
      %v2717 = vunpack.c.l.b16 %v2545
      %v2718 = vunpack.c.l.b16 %v2546
      %v2719 = vunpack.c.l.b16 %v2547
      %v2720 = vunpack.c.l.b16 %v2548
      %v2721 = vunpack.c.l.b16 %v2549
      %v2722 = vunpack.c.l.b16 %v2550
      %v2723 = vunpack.c.l.b16 %v2551
      %v2724 = vunpack.c.l.b16 %v2552
      %v2725 = vunpack.c.l.b16 %v2553
      %v2726 = vunpack.c.l.b16 %v2554
      %v2727 = vunpack.c.l.b16 %v2555
      %v2728 = vunpack.c.l.b16 %v2556
      %v2729 = vpack.c.b16 %v2714, %v2713
      %v2730 = vpack.c.b16 %v2716, %v2715
      %v2731 = vpack.c.b16 %v2718, %v2717
      %v2732 = vpack.c.b16 %v2720, %v2719
      %v2733 = vpack.c.b16 %v2722, %v2721
      %v2734 = vpack.c.b16 %v2724, %v2723
      %v2735 = vpack.c.b16 %v2726, %v2725
      %v2736 = vpack.c.b16 %v2728, %v2727
      %2745 = vmatprep.subr.bf16.mxu0 0
      %2746 = vmatpush1.bf16.msra.mxu0 %v2729
      %2747 = vmatprep.subr.bf16.mxu0 0
      %2748 = vmatpush1.bf16.msra.mxu0 %v2730
      %2749 = vmatprep.subr.bf16.mxu0 0
      %2750 = vmatpush1.bf16.msra.mxu0 %v2731
      %2751 = vmatprep.subr.bf16.mxu0 0
      %2752 = vmatpush1.bf16.msra.mxu0 %v2732
      %2753 = vmatprep.subr.bf16.mxu0 0
      %2754 = vmatpush1.bf16.msra.mxu0 %v2733
      %2755 = vmatprep.subr.bf16.mxu0 0
      %2756 = vmatpush1.bf16.msra.mxu0 %v2734
      %2757 = vmatprep.subr.bf16.mxu0 0
      %2758 = vmatpush1.bf16.msra.mxu0 %v2735
      %2759 = vmatprep.subr.bf16.mxu0 0
      %2760 = vmatpush1.bf16.msra.mxu0 %v2736
      %2761 = vmatprep.subr.bf16.mxu0 0
      %2762 = vmatpush1.bf16.msra.mxu0 0
      %2763 = vmatprep.subr.bf16.mxu0 0
      %2764 = vmatpush1.bf16.msra.mxu0 0
      %2765 = vmatprep.subr.bf16.mxu0 0
      %2766 = vmatpush1.bf16.msra.mxu0 0
      %2767 = vmatprep.subr.bf16.mxu0 0
      %2768 = vmatpush1.bf16.msra.mxu0 0
      %2769 = vmatprep.subr.bf16.mxu0 0
      %2770 = vmatpush1.bf16.msra.mxu0 0
      %2771 = vmatprep.subr.bf16.mxu0 0
      %2772 = vmatpush1.bf16.msra.mxu0 0
      %2773 = vmatprep.subr.bf16.mxu0 0
      %2774 = vmatpush1.bf16.msra.mxu0 0
      %2775 = vmatprep.subr.bf16.mxu0 0
      %2776 = vmatpush1.bf16.msra.mxu0 0
      %2777 = vmatprep.mubr.bf16.mxu0 0
      %2778 = vmatmul.mubr.bf16.gmra.mrb[0].mxu0 %v2647
      %v2779 = vpop.f32.mrb[0].mxu0
      %v2780 = vadd.f32 0.0, %v2779
      %v2781 = vpop.f32.mrb[0].mxu0
      %v2782 = vpop.f32.mrb[0].mxu0
      %v2783 = vadd.f32 0.0, %v2782
      %v2784 = vpop.f32.mrb[0].mxu0
      %2785 = vmatprep.mubr.bf16.mxu0 0
      %2786 = vmatmul.mubr.bf16.gmra.mrb[0].mxu0 %v2649
      %v2787 = vpop.f32.mrb[0].mxu0
      %v2788 = vadd.f32 0.0, %v2787
      %v2789 = vpop.f32.mrb[0].mxu0
      %v2790 = vpop.f32.mrb[0].mxu0
      %v2791 = vadd.f32 0.0, %v2790
      %v2792 = vpop.f32.mrb[0].mxu0
      %2793 = vmatprep.mubr.bf16.mxu0 0
      %2794 = vmatmul.mubr.bf16.gmra.mrb[0].mxu0 %v2651
      %v2795 = vpop.f32.mrb[0].mxu0
      %v2796 = vadd.f32 0.0, %v2795
      %v2797 = vpop.f32.mrb[0].mxu0
      %v2798 = vpop.f32.mrb[0].mxu0
      %v2799 = vadd.f32 0.0, %v2798
      %v2800 = vpop.f32.mrb[0].mxu0
      %2801 = vmatprep.mubr.bf16.mxu0 0
      %2802 = vmatmul.mubr.bf16.gmra.mrb[0].mxu0 %v2653
      %v2803 = vpop.f32.mrb[0].mxu0
      %v2804 = vadd.f32 0.0, %v2803
      %v2805 = vpop.f32.mrb[0].mxu0
      %v2806 = vpop.f32.mrb[0].mxu0
      %v2807 = vadd.f32 0.0, %v2806
      %v2808 = vpop.f32.mrb[0].mxu0
      %2809 = vmatprep.mubr.bf16.mxu0 0
      %2810 = vmatmul.mubr.bf16.gmra.mrb[0].mxu0 %v2655
      %v2811 = vpop.f32.mrb[0].mxu0
      %v2812 = vadd.f32 0.0, %v2811
      %v2813 = vpop.f32.mrb[0].mxu0
      %v2814 = vpop.f32.mrb[0].mxu0
      %v2815 = vadd.f32 0.0, %v2814
      %v2816 = vpop.f32.mrb[0].mxu0
      %2817 = vmatprep.mubr.bf16.mxu0 0
      %2818 = vmatmul.mubr.bf16.gmra.mrb[0].mxu0 %v2657
      %v2819 = vpop.f32.mrb[0].mxu0
      %v2820 = vadd.f32 0.0, %v2819
      %v2821 = vpop.f32.mrb[0].mxu0
      %v2822 = vpop.f32.mrb[0].mxu0
      %v2823 = vadd.f32 0.0, %v2822
      %v2824 = vpop.f32.mrb[0].mxu0
      %2825 = vmatprep.mubr.bf16.mxu0 0
      %2826 = vmatmul.mubr.bf16.gmra.mrb[0].mxu0 %v2659
      %v2827 = vpop.f32.mrb[0].mxu0
      %v2828 = vadd.f32 0.0, %v2827
      %v2829 = vpop.f32.mrb[0].mxu0
      %v2830 = vpop.f32.mrb[0].mxu0
      %v2831 = vadd.f32 0.0, %v2830
      %v2832 = vpop.f32.mrb[0].mxu0
      %2833 = vmatprep.mubr.bf16.mxu0 0
      %2834 = vmatmul.mubr.bf16.gmra.mrb[0].mxu0 %v2661
      %v2835 = vpop.f32.mrb[0].mxu0
      %v2836 = vadd.f32 0.0, %v2835
      %v2837 = vpop.f32.mrb[0].mxu0
      %v2838 = vpop.f32.mrb[0].mxu0
      %v2839 = vadd.f32 0.0, %v2838
      %v2840 = vpop.f32.mrb[0].mxu0
      %2841 = vmatprep.mubr.bf16.mxu0 0
      %2842 = vmatmul.mubr.bf16.gmra.mrb[0].mxu0 %v2663
      %v2843 = vpop.f32.mrb[0].mxu0
      %v2844 = vadd.f32 0.0, %v2843
      %v2845 = vpop.f32.mrb[0].mxu0
      %v2846 = vpop.f32.mrb[0].mxu0
      %v2847 = vadd.f32 0.0, %v2846
      %v2848 = vpop.f32.mrb[0].mxu0
      %2849 = vmatprep.mubr.bf16.mxu0 0
      %2850 = vmatmul.mubr.bf16.gmra.mrb[0].mxu0 %v2665
      %v2851 = vpop.f32.mrb[0].mxu0
      %v2852 = vadd.f32 0.0, %v2851
      %v2853 = vpop.f32.mrb[0].mxu0
      %v2854 = vpop.f32.mrb[0].mxu0
      %v2855 = vadd.f32 0.0, %v2854
      %v2856 = vpop.f32.mrb[0].mxu0
      %2857 = vmatprep.mubr.bf16.mxu0 0
      %2858 = vmatmul.mubr.bf16.gmra.mrb[0].mxu0 %v2667
      %v2859 = vpop.f32.mrb[0].mxu0
      %v2860 = vadd.f32 0.0, %v2859
      %v2861 = vpop.f32.mrb[0].mxu0
      %v2862 = vpop.f32.mrb[0].mxu0
      %v2863 = vadd.f32 0.0, %v2862
      %v2864 = vpop.f32.mrb[0].mxu0
      %2865 = vmatprep.mubr.bf16.mxu0 0
      %2866 = vmatmul.mubr.bf16.gmra.mrb[0].mxu0 %v2669
      %v2867 = vpop.f32.mrb[0].mxu0
      %v2868 = vadd.f32 0.0, %v2867
      %v2869 = vpop.f32.mrb[0].mxu0
      %v2870 = vpop.f32.mrb[0].mxu0
      %v2871 = vadd.f32 0.0, %v2870
      %v2872 = vpop.f32.mrb[0].mxu0
      %2873 = vmatprep.mubr.bf16.mxu0 0
      %2874 = vmatmul.mubr.bf16.gmra.mrb[0].mxu0 %v2671
      %v2875 = vpop.f32.mrb[0].mxu0
      %v2876 = vadd.f32 0.0, %v2875
      %v2877 = vpop.f32.mrb[0].mxu0
      %v2878 = vpop.f32.mrb[0].mxu0
      %v2879 = vadd.f32 0.0, %v2878
      %v2880 = vpop.f32.mrb[0].mxu0
      %2881 = vmatprep.mubr.bf16.mxu0 0
      %2882 = vmatmul.mubr.bf16.gmra.mrb[0].mxu0 %v2673
      %v2883 = vpop.f32.mrb[0].mxu0
      %v2884 = vadd.f32 0.0, %v2883
      %v2885 = vpop.f32.mrb[0].mxu0
      %v2886 = vpop.f32.mrb[0].mxu0
      %v2887 = vadd.f32 0.0, %v2886
      %v2888 = vpop.f32.mrb[0].mxu0
      %2889 = vmatprep.mubr.bf16.mxu0 0
      %2890 = vmatmul.mubr.bf16.gmra.mrb[0].mxu0 %v2675
      %v2891 = vpop.f32.mrb[0].mxu0
      %v2892 = vadd.f32 0.0, %v2891
      %v2893 = vpop.f32.mrb[0].mxu0
      %v2894 = vpop.f32.mrb[0].mxu0
      %v2895 = vadd.f32 0.0, %v2894
      %v2896 = vpop.f32.mrb[0].mxu0
      %2897 = vmatprep.mubr.bf16.mxu0 0
      %2898 = vmatmul.mubr.bf16.gmra.mrb[0].mxu0 %v2677
      %v2899 = vpop.f32.mrb[0].mxu0
      %v2900 = vadd.f32 0.0, %v2899
      %v2901 = vpop.f32.mrb[0].mxu0
      %v2902 = vpop.f32.mrb[0].mxu0
      %v2903 = vadd.f32 0.0, %v2902
      %v2904 = vpop.f32.mrb[0].mxu0
      %2905 = vmatprep.mubr.bf16.mxu0 0
      %2906 = vmatmul.mubr.bf16.gmra.mrb[0].mxu0 %v2679
      %v2907 = vpop.f32.mrb[0].mxu0
      %v2908 = vadd.f32 0.0, %v2907
      %v2909 = vpop.f32.mrb[0].mxu0
      %v2910 = vpop.f32.mrb[0].mxu0
      %v2911 = vadd.f32 0.0, %v2910
      %v2912 = vpop.f32.mrb[0].mxu0
      %2913 = vdwg.mxu0
      %v2914 = vadd.f32 %v2471, %v2780
      %v2915 = vadd.f32 %v2472, %v2783
      %v2916 = vadd.f32 %v2473, %v2788
      %v2917 = vadd.f32 %v2474, %v2791
      %v2918 = vadd.f32 %v2475, %v2796
      %v2919 = vadd.f32 %v2476, %v2799
      %v2920 = vadd.f32 %v2477, %v2804
      %v2921 = vadd.f32 %v2478, %v2807
      %v2922 = vadd.f32 %v2479, %v2812
      %v2923 = vadd.f32 %v2480, %v2815
      %v2924 = vadd.f32 %v2481, %v2820
      %v2925 = vadd.f32 %v2482, %v2823
      %v2926 = vadd.f32 %v2483, %v2828
      %v2927 = vadd.f32 %v2484, %v2831
      %v2928 = vadd.f32 %v2485, %v2836
      %v2929 = vadd.f32 %v2486, %v2839
      %v2930 = vadd.f32 %v2487, %v2844
      %v2931 = vadd.f32 %v2488, %v2847
      %v2932 = vadd.f32 %v2489, %v2852
      %v2933 = vadd.f32 %v2490, %v2855
      %v2934 = vadd.f32 %v2491, %v2860
      %v2935 = vadd.f32 %v2492, %v2863
      %v2936 = vadd.f32 %v2493, %v2868
      %v2937 = vadd.f32 %v2494, %v2871
      %v2938 = vadd.f32 %v2495, %v2876
      %v2939 = vadd.f32 %v2496, %v2879
      %v2940 = vadd.f32 %v2497, %v2884
      %v2941 = vadd.f32 %v2498, %v2887
      %v2942 = vadd.f32 %v2499, %v2892
      %v2943 = vadd.f32 %v2500, %v2895
      %v2944 = vadd.f32 %v2501, %v2900
      %v2945 = vadd.f32 %v2502, %v2903
      %v2946 = vadd.f32 %v2503, %v2908
      %v2947 = vadd.f32 %v2504, %v2911
      %v2948 = vld [vmem:[%s165 + $0x98] sm:$0x3]
      %s2949 = scalar_lea.vmem %s1, 448
      %v2950 = vld [vmem:[%s2949] sm:$0xf]
      %v2951 = vld [vmem:[%s2949 + $0x4] sm:$0xf]
      %v2952 = vld [vmem:[%s2949 + $0x8] sm:$0xf]
      %v2953 = vld [vmem:[%s2949 + $0xc] sm:$0xf]
      %v2954 = vld [vmem:[%s2949 + $0x10] sm:$0xf]
      %v2955 = vld [vmem:[%s2949 + $0x14] sm:$0xf]
      %v2956 = vld [vmem:[%s2949 + $0x18] sm:$0xf]
      %v2957 = vld [vmem:[%s2949 + $0x1c] sm:$0xf]
      %v2958 = vld [vmem:[%s2949 + $0x20] sm:$0xf]
      %v2959 = vld [vmem:[%s2949 + $0x24] sm:$0xf]
      %v2960 = vld [vmem:[%s2949 + $0x28] sm:$0xf]
      %v2961 = vld [vmem:[%s2949 + $0x2c] sm:$0xf]
      %v2962 = vld [vmem:[%s2949 + $0x30] sm:$0xf]
      %v2963 = vld [vmem:[%s2949 + $0x34] sm:$0xf]
      %v2964 = vld [vmem:[%s2949 + $0x38] sm:$0xf]
      %v2965 = vld [vmem:[%s2949 + $0x3c] sm:$0xf]
      %v2967 = vunpack.c.l.b16 %v2948
      %v2968 = vpack.c.b16 %v2967, %v2967
      %v2970 = vshrl.u32 %v2627, 16
      %v2972 = vrot.slane %v2970, 1
      %v2973 = vshll.u32 %v2627, 16
      %v2975 = vrot.slane %v2973, 2
      %v2976 = vor.u32 %v2972, %v2975
      %v2978 = vshrl.u32 %v2628, 16
      %v2980 = vrot.slane %v2978, 1
      %v2981 = vshll.u32 %v2628, 16
      %v2983 = vrot.slane %v2981, 2
      %v2984 = vor.u32 %v2980, %v2983
      %v2985 = vsel %vm2155, %v2976, %v2984
      %v2987 = vshrl.u32 %v2629, 16
      %v2989 = vrot.slane %v2987, 1
      %v2990 = vshll.u32 %v2629, 16
      %v2992 = vrot.slane %v2990, 2
      %v2993 = vor.u32 %v2989, %v2992
      %v2994 = vsel %vm2155, %v2984, %v2993
      %v2996 = vshrl.u32 %v2630, 16
      %v2998 = vrot.slane %v2996, 1
      %v2999 = vshll.u32 %v2630, 16
      %v3001 = vrot.slane %v2999, 2
      %v3002 = vor.u32 %v2998, %v3001
      %v3003 = vsel %vm2155, %v2993, %v3002
      %v3005 = vshrl.u32 %v2631, 16
      %v3007 = vrot.slane %v3005, 1
      %v3008 = vshll.u32 %v2631, 16
      %v3010 = vrot.slane %v3008, 2
      %v3011 = vor.u32 %v3007, %v3010
      %v3012 = vsel %vm2155, %v3002, %v3011
      %v3014 = vshrl.u32 %v2632, 16
      %v3016 = vrot.slane %v3014, 1
      %v3017 = vshll.u32 %v2632, 16
      %v3019 = vrot.slane %v3017, 2
      %v3020 = vor.u32 %v3016, %v3019
      %v3021 = vsel %vm2155, %v3011, %v3020
      %v3023 = vshrl.u32 %v2633, 16
      %v3025 = vrot.slane %v3023, 1
      %v3026 = vshll.u32 %v2633, 16
      %v3028 = vrot.slane %v3026, 2
      %v3029 = vor.u32 %v3025, %v3028
      %v3030 = vsel %vm2155, %v3020, %v3029
      %v3032 = vshrl.u32 %v2634, 16
      %v3034 = vrot.slane %v3032, 1
      %v3035 = vshll.u32 %v2634, 16
      %v3037 = vrot.slane %v3035, 2
      %v3038 = vor.u32 %v3034, %v3037
      %v3039 = vsel %vm2155, %v3029, %v3038
      %v3041 = vshrl.u32 %v2635, 16
      %v3043 = vrot.slane %v3041, 1
      %v3044 = vshll.u32 %v2635, 16
      %v3046 = vrot.slane %v3044, 2
      %v3047 = vor.u32 %v3043, %v3046
      %v3048 = vsel %vm2155, %v3038, %v3047
      %v3050 = vshrl.u32 %v2636, 16
      %v3052 = vrot.slane %v3050, 1
      %v3053 = vshll.u32 %v2636, 16
      %v3055 = vrot.slane %v3053, 2
      %v3056 = vor.u32 %v3052, %v3055
      %v3057 = vsel %vm2155, %v3047, %v3056
      %v3059 = vshrl.u32 %v2637, 16
      %v3061 = vrot.slane %v3059, 1
      %v3062 = vshll.u32 %v2637, 16
      %v3064 = vrot.slane %v3062, 2
      %v3065 = vor.u32 %v3061, %v3064
      %v3066 = vsel %vm2155, %v3056, %v3065
      %v3068 = vshrl.u32 %v2638, 16
      %v3070 = vrot.slane %v3068, 1
      %v3071 = vshll.u32 %v2638, 16
      %v3073 = vrot.slane %v3071, 2
      %v3074 = vor.u32 %v3070, %v3073
      %v3075 = vsel %vm2155, %v3065, %v3074
      %v3077 = vshrl.u32 %v2639, 16
      %v3079 = vrot.slane %v3077, 1
      %v3080 = vshll.u32 %v2639, 16
      %v3082 = vrot.slane %v3080, 2
      %v3083 = vor.u32 %v3079, %v3082
      %v3084 = vsel %vm2155, %v3074, %v3083
      %v3086 = vshrl.u32 %v2640, 16
      %v3088 = vrot.slane %v3086, 1
      %v3089 = vshll.u32 %v2640, 16
      %v3091 = vrot.slane %v3089, 2
      %v3092 = vor.u32 %v3088, %v3091
      %v3093 = vsel %vm2155, %v3083, %v3092
      %v3095 = vshrl.u32 %v2641, 16
      %v3097 = vrot.slane %v3095, 1
      %v3098 = vshll.u32 %v2641, 16
      %v3100 = vrot.slane %v3098, 2
      %v3101 = vor.u32 %v3097, %v3100
      %v3102 = vsel %vm2155, %v3092, %v3101
      %v3104 = vshrl.u32 %v2642, 16
      %v3106 = vrot.slane %v3104, 1
      %v3107 = vshll.u32 %v2642, 16
      %v3109 = vrot.slane %v3107, 2
      %v3110 = vor.u32 %v3106, %v3109
      %v3111 = vsel %vm2155, %v3101, %v3110
      %v3113 = vshrl.u32 %v2643, 16
      %v3115 = vrot.slane %v3113, 1
      %v3116 = vshll.u32 %v2643, 16
      %v3118 = vrot.slane %v3116, 2
      %v3119 = vor.u32 %v3115, %v3118
      %v3120 = vsel %vm2155, %v3110, %v3119
      %v3122 = vshrl.u32 %v2968, 16
      %v3124 = vrot.slane %v3122, 1
      %v3125 = vshll.u32 %v2968, 16
      %v3127 = vrot.slane %v3125, 2
      %v3128 = vor.u32 %v3124, %v3127
      %v3129 = vsel %vm2155, %v3119, %v3128
      %v3163 = vunpack.c.l.b16 %v2950
      %v3164 = vunpack.c.l.b16 %v2951
      %v3165 = vunpack.c.l.b16 %v2952
      %v3166 = vunpack.c.l.b16 %v2953
      %v3167 = vunpack.c.l.b16 %v2954
      %v3168 = vunpack.c.l.b16 %v2955
      %v3169 = vunpack.c.l.b16 %v2956
      %v3170 = vunpack.c.l.b16 %v2957
      %v3171 = vunpack.c.l.b16 %v2958
      %v3172 = vunpack.c.l.b16 %v2959
      %v3173 = vunpack.c.l.b16 %v2960
      %v3174 = vunpack.c.l.b16 %v2961
      %v3175 = vunpack.c.l.b16 %v2962
      %v3176 = vunpack.c.l.b16 %v2963
      %v3177 = vunpack.c.l.b16 %v2964
      %v3178 = vunpack.c.l.b16 %v2965
      %v3179 = vpack.c.b16 %v3164, %v3163
      %v3180 = vpack.c.b16 %v3166, %v3165
      %v3181 = vpack.c.b16 %v3168, %v3167
      %v3182 = vpack.c.b16 %v3170, %v3169
      %v3183 = vpack.c.b16 %v3172, %v3171
      %v3184 = vpack.c.b16 %v3174, %v3173
      %v3185 = vpack.c.b16 %v3176, %v3175
      %v3186 = vpack.c.b16 %v3178, %v3177
      %3195 = vmatprep.subr.bf16.mxu0 0
      %3196 = vmatpush1.bf16.msra.mxu0 %v3179
      %3197 = vmatprep.subr.bf16.mxu0 0
      %3198 = vmatpush1.bf16.msra.mxu0 %v3180
      %3199 = vmatprep.subr.bf16.mxu0 0
      %3200 = vmatpush1.bf16.msra.mxu0 %v3181
      %3201 = vmatprep.subr.bf16.mxu0 0
      %3202 = vmatpush1.bf16.msra.mxu0 %v3182
      %3203 = vmatprep.subr.bf16.mxu0 0
      %3204 = vmatpush1.bf16.msra.mxu0 %v3183
      %3205 = vmatprep.subr.bf16.mxu0 0
      %3206 = vmatpush1.bf16.msra.mxu0 %v3184
      %3207 = vmatprep.subr.bf16.mxu0 0
      %3208 = vmatpush1.bf16.msra.mxu0 %v3185
      %3209 = vmatprep.subr.bf16.mxu0 0
      %3210 = vmatpush1.bf16.msra.mxu0 %v3186
      %3211 = vmatprep.subr.bf16.mxu0 0
      %3212 = vmatpush1.bf16.msra.mxu0 0
      %3213 = vmatprep.subr.bf16.mxu0 0
      %3214 = vmatpush1.bf16.msra.mxu0 0
      %3215 = vmatprep.subr.bf16.mxu0 0
      %3216 = vmatpush1.bf16.msra.mxu0 0
      %3217 = vmatprep.subr.bf16.mxu0 0
      %3218 = vmatpush1.bf16.msra.mxu0 0
      %3219 = vmatprep.subr.bf16.mxu0 0
      %3220 = vmatpush1.bf16.msra.mxu0 0
      %3221 = vmatprep.subr.bf16.mxu0 0
      %3222 = vmatpush1.bf16.msra.mxu0 0
      %3223 = vmatprep.subr.bf16.mxu0 0
      %3224 = vmatpush1.bf16.msra.mxu0 0
      %3225 = vmatprep.subr.bf16.mxu0 0
      %3226 = vmatpush1.bf16.msra.mxu0 0
      %3227 = vmatprep.mubr.bf16.mxu0 0
      %3228 = vmatmul.mubr.bf16.gmra.mrb[0].mxu0 %v2985
      %v3229 = vpop.f32.mrb[0].mxu0
      %v3230 = vadd.f32 0.0, %v3229
      %v3231 = vpop.f32.mrb[0].mxu0
      %v3232 = vpop.f32.mrb[0].mxu0
      %v3233 = vadd.f32 0.0, %v3232
      %v3234 = vpop.f32.mrb[0].mxu0
      %3235 = vmatprep.mubr.bf16.mxu0 0
      %3236 = vmatmul.mubr.bf16.gmra.mrb[0].mxu0 %v2994
      %v3237 = vpop.f32.mrb[0].mxu0
      %v3238 = vadd.f32 0.0, %v3237
      %v3239 = vpop.f32.mrb[0].mxu0
      %v3240 = vpop.f32.mrb[0].mxu0
      %v3241 = vadd.f32 0.0, %v3240
      %v3242 = vpop.f32.mrb[0].mxu0
      %3243 = vmatprep.mubr.bf16.mxu0 0
      %3244 = vmatmul.mubr.bf16.gmra.mrb[0].mxu0 %v3003
      %v3245 = vpop.f32.mrb[0].mxu0
      %v3246 = vadd.f32 0.0, %v3245
      %v3247 = vpop.f32.mrb[0].mxu0
      %v3248 = vpop.f32.mrb[0].mxu0
      %v3249 = vadd.f32 0.0, %v3248
      %v3250 = vpop.f32.mrb[0].mxu0
      %3251 = vmatprep.mubr.bf16.mxu0 0
      %3252 = vmatmul.mubr.bf16.gmra.mrb[0].mxu0 %v3012
      %v3253 = vpop.f32.mrb[0].mxu0
      %v3254 = vadd.f32 0.0, %v3253
      %v3255 = vpop.f32.mrb[0].mxu0
      %v3256 = vpop.f32.mrb[0].mxu0
      %v3257 = vadd.f32 0.0, %v3256
      %v3258 = vpop.f32.mrb[0].mxu0
      %3259 = vmatprep.mubr.bf16.mxu0 0
      %3260 = vmatmul.mubr.bf16.gmra.mrb[0].mxu0 %v3021
      %v3261 = vpop.f32.mrb[0].mxu0
      %v3262 = vadd.f32 0.0, %v3261
      %v3263 = vpop.f32.mrb[0].mxu0
      %v3264 = vpop.f32.mrb[0].mxu0
      %v3265 = vadd.f32 0.0, %v3264
      %v3266 = vpop.f32.mrb[0].mxu0
      %3267 = vmatprep.mubr.bf16.mxu0 0
      %3268 = vmatmul.mubr.bf16.gmra.mrb[0].mxu0 %v3030
      %v3269 = vpop.f32.mrb[0].mxu0
      %v3270 = vadd.f32 0.0, %v3269
      %v3271 = vpop.f32.mrb[0].mxu0
      %v3272 = vpop.f32.mrb[0].mxu0
      %v3273 = vadd.f32 0.0, %v3272
      %v3274 = vpop.f32.mrb[0].mxu0
      %3275 = vmatprep.mubr.bf16.mxu0 0
      %3276 = vmatmul.mubr.bf16.gmra.mrb[0].mxu0 %v3039
      %v3277 = vpop.f32.mrb[0].mxu0
      %v3278 = vadd.f32 0.0, %v3277
      %v3279 = vpop.f32.mrb[0].mxu0
      %v3280 = vpop.f32.mrb[0].mxu0
      %v3281 = vadd.f32 0.0, %v3280
      %v3282 = vpop.f32.mrb[0].mxu0
      %3283 = vmatprep.mubr.bf16.mxu0 0
      %3284 = vmatmul.mubr.bf16.gmra.mrb[0].mxu0 %v3048
      %v3285 = vpop.f32.mrb[0].mxu0
      %v3286 = vadd.f32 0.0, %v3285
      %v3287 = vpop.f32.mrb[0].mxu0
      %v3288 = vpop.f32.mrb[0].mxu0
      %v3289 = vadd.f32 0.0, %v3288
      %v3290 = vpop.f32.mrb[0].mxu0
      %3291 = vmatprep.mubr.bf16.mxu0 0
      %3292 = vmatmul.mubr.bf16.gmra.mrb[0].mxu0 %v3057
      %v3293 = vpop.f32.mrb[0].mxu0
      %v3294 = vadd.f32 0.0, %v3293
      %v3295 = vpop.f32.mrb[0].mxu0
      %v3296 = vpop.f32.mrb[0].mxu0
      %v3297 = vadd.f32 0.0, %v3296
      %v3298 = vpop.f32.mrb[0].mxu0
      %3299 = vmatprep.mubr.bf16.mxu0 0
      %3300 = vmatmul.mubr.bf16.gmra.mrb[0].mxu0 %v3066
      %v3301 = vpop.f32.mrb[0].mxu0
      %v3302 = vadd.f32 0.0, %v3301
      %v3303 = vpop.f32.mrb[0].mxu0
      %v3304 = vpop.f32.mrb[0].mxu0
      %v3305 = vadd.f32 0.0, %v3304
      %v3306 = vpop.f32.mrb[0].mxu0
      %3307 = vmatprep.mubr.bf16.mxu0 0
      %3308 = vmatmul.mubr.bf16.gmra.mrb[0].mxu0 %v3075
      %v3309 = vpop.f32.mrb[0].mxu0
      %v3310 = vadd.f32 0.0, %v3309
      %v3311 = vpop.f32.mrb[0].mxu0
      %v3312 = vpop.f32.mrb[0].mxu0
      %v3313 = vadd.f32 0.0, %v3312
      %v3314 = vpop.f32.mrb[0].mxu0
      %3315 = vmatprep.mubr.bf16.mxu0 0
      %3316 = vmatmul.mubr.bf16.gmra.mrb[0].mxu0 %v3084
      %v3317 = vpop.f32.mrb[0].mxu0
      %v3318 = vadd.f32 0.0, %v3317
      %v3319 = vpop.f32.mrb[0].mxu0
      %v3320 = vpop.f32.mrb[0].mxu0
      %v3321 = vadd.f32 0.0, %v3320
      %v3322 = vpop.f32.mrb[0].mxu0
      %3323 = vmatprep.mubr.bf16.mxu0 0
      %3324 = vmatmul.mubr.bf16.gmra.mrb[0].mxu0 %v3093
      %v3325 = vpop.f32.mrb[0].mxu0
      %v3326 = vadd.f32 0.0, %v3325
      %v3327 = vpop.f32.mrb[0].mxu0
      %v3328 = vpop.f32.mrb[0].mxu0
      %v3329 = vadd.f32 0.0, %v3328
      %v3330 = vpop.f32.mrb[0].mxu0
      %3331 = vmatprep.mubr.bf16.mxu0 0
      %3332 = vmatmul.mubr.bf16.gmra.mrb[0].mxu0 %v3102
      %v3333 = vpop.f32.mrb[0].mxu0
      %v3334 = vadd.f32 0.0, %v3333
      %v3335 = vpop.f32.mrb[0].mxu0
      %v3336 = vpop.f32.mrb[0].mxu0
      %v3337 = vadd.f32 0.0, %v3336
      %v3338 = vpop.f32.mrb[0].mxu0
      %3339 = vmatprep.mubr.bf16.mxu0 0
      %3340 = vmatmul.mubr.bf16.gmra.mrb[0].mxu0 %v3111
      %v3341 = vpop.f32.mrb[0].mxu0
      %v3342 = vadd.f32 0.0, %v3341
      %v3343 = vpop.f32.mrb[0].mxu0
      %v3344 = vpop.f32.mrb[0].mxu0
      %v3345 = vadd.f32 0.0, %v3344
      %v3346 = vpop.f32.mrb[0].mxu0
      %3347 = vmatprep.mubr.bf16.mxu0 0
      %3348 = vmatmul.mubr.bf16.gmra.mrb[0].mxu0 %v3120
      %v3349 = vpop.f32.mrb[0].mxu0
      %v3350 = vadd.f32 0.0, %v3349
      %v3351 = vpop.f32.mrb[0].mxu0
      %v3352 = vpop.f32.mrb[0].mxu0
      %v3353 = vadd.f32 0.0, %v3352
      %v3354 = vpop.f32.mrb[0].mxu0
      %3355 = vmatprep.mubr.bf16.mxu0 0
      %3356 = vmatmul.mubr.bf16.gmra.mrb[0].mxu0 %v3129
      %v3357 = vpop.f32.mrb[0].mxu0
      %v3358 = vadd.f32 0.0, %v3357
      %v3359 = vpop.f32.mrb[0].mxu0
      %v3360 = vpop.f32.mrb[0].mxu0
      %v3361 = vadd.f32 0.0, %v3360
      %v3362 = vpop.f32.mrb[0].mxu0
      %3363 = vdwg.mxu0
      %v3364 = vadd.f32 %v2914, %v3230
      %v3365 = vadd.f32 %v2915, %v3233
      %v3366 = vadd.f32 %v2916, %v3238
      %v3367 = vadd.f32 %v2917, %v3241
      %v3368 = vadd.f32 %v2918, %v3246
      %v3369 = vadd.f32 %v2919, %v3249
      %v3370 = vadd.f32 %v2920, %v3254
      %v3371 = vadd.f32 %v2921, %v3257
      %v3372 = vadd.f32 %v2922, %v3262
      %v3373 = vadd.f32 %v2923, %v3265
      %v3374 = vadd.f32 %v2924, %v3270
      %v3375 = vadd.f32 %v2925, %v3273
      %v3376 = vadd.f32 %v2926, %v3278
      %v3377 = vadd.f32 %v2927, %v3281
      %v3378 = vadd.f32 %v2928, %v3286
      %v3379 = vadd.f32 %v2929, %v3289
      %v3380 = vadd.f32 %v2930, %v3294
      %v3381 = vadd.f32 %v2931, %v3297
      %v3382 = vadd.f32 %v2932, %v3302
      %v3383 = vadd.f32 %v2933, %v3305
      %v3384 = vadd.f32 %v2934, %v3310
      %v3385 = vadd.f32 %v2935, %v3313
      %v3386 = vadd.f32 %v2936, %v3318
      %v3387 = vadd.f32 %v2937, %v3321
      %v3388 = vadd.f32 %v2938, %v3326
      %v3389 = vadd.f32 %v2939, %v3329
      %v3390 = vadd.f32 %v2940, %v3334
      %v3391 = vadd.f32 %v2941, %v3337
      %v3392 = vadd.f32 %v2942, %v3342
      %v3393 = vadd.f32 %v2943, %v3345
      %v3394 = vadd.f32 %v2944, %v3350
      %v3395 = vadd.f32 %v2945, %v3353
      %v3396 = vadd.f32 %v2946, %v3358
      %v3397 = vadd.f32 %v2947, %v3361
      %v3398 = vld [vmem:[%s165 + $0x10] sm:$0xc]
      %s3399 = scalar_lea.vmem %s1, 512
      %v3400 = vld [vmem:[%s3399] sm:$0xf]
      %v3401 = vld [vmem:[%s3399 + $0x4] sm:$0xf]
      %v3402 = vld [vmem:[%s3399 + $0x8] sm:$0xf]
      %v3403 = vld [vmem:[%s3399 + $0xc] sm:$0xf]
      %v3404 = vld [vmem:[%s3399 + $0x10] sm:$0xf]
      %v3405 = vld [vmem:[%s3399 + $0x14] sm:$0xf]
      %v3406 = vld [vmem:[%s3399 + $0x18] sm:$0xf]
      %v3407 = vld [vmem:[%s3399 + $0x1c] sm:$0xf]
      %v3408 = vld [vmem:[%s3399 + $0x20] sm:$0xf]
      %v3409 = vld [vmem:[%s3399 + $0x24] sm:$0xf]
      %v3410 = vld [vmem:[%s3399 + $0x28] sm:$0xf]
      %v3411 = vld [vmem:[%s3399 + $0x2c] sm:$0xf]
      %v3412 = vld [vmem:[%s3399 + $0x30] sm:$0xf]
      %v3413 = vld [vmem:[%s3399 + $0x34] sm:$0xf]
      %v3414 = vld [vmem:[%s3399 + $0x38] sm:$0xf]
      %v3415 = vld [vmem:[%s3399 + $0x3c] sm:$0xf]
      %v3417 = vunpack.c.l.b16 %v3398
      %v3418 = vpack.c.b16 %v2593, %v3417
      %vm3419 = vcmask 1045504
      %v3420 = vrot.slane %v3418, 2
      %v3421 = vrot.slane %v2628, 2
      %v3422 = vsel %vm3419, %v3420, %v3421
      %v3423 = vrot.slane %v2629, 2
      %v3424 = vsel %vm3419, %v3421, %v3423
      %v3425 = vrot.slane %v2630, 2
      %v3426 = vsel %vm3419, %v3423, %v3425
      %v3427 = vrot.slane %v2631, 2
      %v3428 = vsel %vm3419, %v3425, %v3427
      %v3429 = vrot.slane %v2632, 2
      %v3430 = vsel %vm3419, %v3427, %v3429
      %v3431 = vrot.slane %v2633, 2
      %v3432 = vsel %vm3419, %v3429, %v3431
      %v3433 = vrot.slane %v2634, 2
      %v3434 = vsel %vm3419, %v3431, %v3433
      %v3435 = vrot.slane %v2635, 2
      %v3436 = vsel %vm3419, %v3433, %v3435
      %v3437 = vrot.slane %v2636, 2
      %v3438 = vsel %vm3419, %v3435, %v3437
      %v3439 = vrot.slane %v2637, 2
      %v3440 = vsel %vm3419, %v3437, %v3439
      %v3441 = vrot.slane %v2638, 2
      %v3442 = vsel %vm3419, %v3439, %v3441
      %v3443 = vrot.slane %v2639, 2
      %v3444 = vsel %vm3419, %v3441, %v3443
      %v3445 = vrot.slane %v2640, 2
      %v3446 = vsel %vm3419, %v3443, %v3445
      %v3447 = vrot.slane %v2641, 2
      %v3448 = vsel %vm3419, %v3445, %v3447
      %v3449 = vrot.slane %v2642, 2
      %v3450 = vsel %vm3419, %v3447, %v3449
      %v3451 = vrot.slane %v2643, 2
      %v3452 = vsel %vm3419, %v3449, %v3451
      %v3453 = vrot.slane %v2968, 2
      %v3454 = vsel %vm3419, %v3451, %v3453
      %v3488 = vunpack.c.l.b16 %v3400
      %v3489 = vunpack.c.l.b16 %v3401
      %v3490 = vunpack.c.l.b16 %v3402
      %v3491 = vunpack.c.l.b16 %v3403
      %v3492 = vunpack.c.l.b16 %v3404
      %v3493 = vunpack.c.l.b16 %v3405
      %v3494 = vunpack.c.l.b16 %v3406
      %v3495 = vunpack.c.l.b16 %v3407
      %v3496 = vunpack.c.l.b16 %v3408
      %v3497 = vunpack.c.l.b16 %v3409
      %v3498 = vunpack.c.l.b16 %v3410
      %v3499 = vunpack.c.l.b16 %v3411
      %v3500 = vunpack.c.l.b16 %v3412
      %v3501 = vunpack.c.l.b16 %v3413
      %v3502 = vunpack.c.l.b16 %v3414
      %v3503 = vunpack.c.l.b16 %v3415
      %v3504 = vpack.c.b16 %v3489, %v3488
      %v3505 = vpack.c.b16 %v3491, %v3490
      %v3506 = vpack.c.b16 %v3493, %v3492
      %v3507 = vpack.c.b16 %v3495, %v3494
      %v3508 = vpack.c.b16 %v3497, %v3496
      %v3509 = vpack.c.b16 %v3499, %v3498
      %v3510 = vpack.c.b16 %v3501, %v3500
      %v3511 = vpack.c.b16 %v3503, %v3502
      %3520 = vmatprep.subr.bf16.mxu0 0
      %3521 = vmatpush1.bf16.msra.mxu0 %v3504
      %3522 = vmatprep.subr.bf16.mxu0 0
      %3523 = vmatpush1.bf16.msra.mxu0 %v3505
      %3524 = vmatprep.subr.bf16.mxu0 0
      %3525 = vmatpush1.bf16.msra.mxu0 %v3506
      %3526 = vmatprep.subr.bf16.mxu0 0
      %3527 = vmatpush1.bf16.msra.mxu0 %v3507
      %3528 = vmatprep.subr.bf16.mxu0 0
      %3529 = vmatpush1.bf16.msra.mxu0 %v3508
      %3530 = vmatprep.subr.bf16.mxu0 0
      %3531 = vmatpush1.bf16.msra.mxu0 %v3509
      %3532 = vmatprep.subr.bf16.mxu0 0
      %3533 = vmatpush1.bf16.msra.mxu0 %v3510
      %3534 = vmatprep.subr.bf16.mxu0 0
      %3535 = vmatpush1.bf16.msra.mxu0 %v3511
      %3536 = vmatprep.subr.bf16.mxu0 0
      %3537 = vmatpush1.bf16.msra.mxu0 0
      %3538 = vmatprep.subr.bf16.mxu0 0
      %3539 = vmatpush1.bf16.msra.mxu0 0
      %3540 = vmatprep.subr.bf16.mxu0 0
      %3541 = vmatpush1.bf16.msra.mxu0 0
      %3542 = vmatprep.subr.bf16.mxu0 0
      %3543 = vmatpush1.bf16.msra.mxu0 0
      %3544 = vmatprep.subr.bf16.mxu0 0
      %3545 = vmatpush1.bf16.msra.mxu0 0
      %3546 = vmatprep.subr.bf16.mxu0 0
      %3547 = vmatpush1.bf16.msra.mxu0 0
      %3548 = vmatprep.subr.bf16.mxu0 0
      %3549 = vmatpush1.bf16.msra.mxu0 0
      %3550 = vmatprep.subr.bf16.mxu0 0
      %3551 = vmatpush1.bf16.msra.mxu0 0
      %3552 = vmatprep.mubr.bf16.mxu0 0
      %3553 = vmatmul.mubr.bf16.gmra.mrb[0].mxu0 %v3422
      %v3554 = vpop.f32.mrb[0].mxu0
      %v3555 = vadd.f32 0.0, %v3554
      %v3556 = vpop.f32.mrb[0].mxu0
      %v3557 = vpop.f32.mrb[0].mxu0
      %v3558 = vadd.f32 0.0, %v3557
      %v3559 = vpop.f32.mrb[0].mxu0
      %3560 = vmatprep.mubr.bf16.mxu0 0
      %3561 = vmatmul.mubr.bf16.gmra.mrb[0].mxu0 %v3424
      %v3562 = vpop.f32.mrb[0].mxu0
      %v3563 = vadd.f32 0.0, %v3562
      %v3564 = vpop.f32.mrb[0].mxu0
      %v3565 = vpop.f32.mrb[0].mxu0
      %v3566 = vadd.f32 0.0, %v3565
      %v3567 = vpop.f32.mrb[0].mxu0
      %3568 = vmatprep.mubr.bf16.mxu0 0
      %3569 = vmatmul.mubr.bf16.gmra.mrb[0].mxu0 %v3426
      %v3570 = vpop.f32.mrb[0].mxu0
      %v3571 = vadd.f32 0.0, %v3570
      %v3572 = vpop.f32.mrb[0].mxu0
      %v3573 = vpop.f32.mrb[0].mxu0
      %v3574 = vadd.f32 0.0, %v3573
      %v3575 = vpop.f32.mrb[0].mxu0
      %3576 = vmatprep.mubr.bf16.mxu0 0
      %3577 = vmatmul.mubr.bf16.gmra.mrb[0].mxu0 %v3428
      %v3578 = vpop.f32.mrb[0].mxu0
      %v3579 = vadd.f32 0.0, %v3578
      %v3580 = vpop.f32.mrb[0].mxu0
      %v3581 = vpop.f32.mrb[0].mxu0
      %v3582 = vadd.f32 0.0, %v3581
      %v3583 = vpop.f32.mrb[0].mxu0
      %3584 = vmatprep.mubr.bf16.mxu0 0
      %3585 = vmatmul.mubr.bf16.gmra.mrb[0].mxu0 %v3430
      %v3586 = vpop.f32.mrb[0].mxu0
      %v3587 = vadd.f32 0.0, %v3586
      %v3588 = vpop.f32.mrb[0].mxu0
      %v3589 = vpop.f32.mrb[0].mxu0
      %v3590 = vadd.f32 0.0, %v3589
      %v3591 = vpop.f32.mrb[0].mxu0
      %3592 = vmatprep.mubr.bf16.mxu0 0
      %3593 = vmatmul.mubr.bf16.gmra.mrb[0].mxu0 %v3432
      %v3594 = vpop.f32.mrb[0].mxu0
      %v3595 = vadd.f32 0.0, %v3594
      %v3596 = vpop.f32.mrb[0].mxu0
      %v3597 = vpop.f32.mrb[0].mxu0
      %v3598 = vadd.f32 0.0, %v3597
      %v3599 = vpop.f32.mrb[0].mxu0
      %3600 = vmatprep.mubr.bf16.mxu0 0
      %3601 = vmatmul.mubr.bf16.gmra.mrb[0].mxu0 %v3434
      %v3602 = vpop.f32.mrb[0].mxu0
      %v3603 = vadd.f32 0.0, %v3602
      %v3604 = vpop.f32.mrb[0].mxu0
      %v3605 = vpop.f32.mrb[0].mxu0
      %v3606 = vadd.f32 0.0, %v3605
      %v3607 = vpop.f32.mrb[0].mxu0
      %3608 = vmatprep.mubr.bf16.mxu0 0
      %3609 = vmatmul.mubr.bf16.gmra.mrb[0].mxu0 %v3436
      %v3610 = vpop.f32.mrb[0].mxu0
      %v3611 = vadd.f32 0.0, %v3610
      %v3612 = vpop.f32.mrb[0].mxu0
      %v3613 = vpop.f32.mrb[0].mxu0
      %v3614 = vadd.f32 0.0, %v3613
      %v3615 = vpop.f32.mrb[0].mxu0
      %3616 = vmatprep.mubr.bf16.mxu0 0
      %3617 = vmatmul.mubr.bf16.gmra.mrb[0].mxu0 %v3438
      %v3618 = vpop.f32.mrb[0].mxu0
      %v3619 = vadd.f32 0.0, %v3618
      %v3620 = vpop.f32.mrb[0].mxu0
      %v3621 = vpop.f32.mrb[0].mxu0
      %v3622 = vadd.f32 0.0, %v3621
      %v3623 = vpop.f32.mrb[0].mxu0
      %3624 = vmatprep.mubr.bf16.mxu0 0
      %3625 = vmatmul.mubr.bf16.gmra.mrb[0].mxu0 %v3440
      %v3626 = vpop.f32.mrb[0].mxu0
      %v3627 = vadd.f32 0.0, %v3626
      %v3628 = vpop.f32.mrb[0].mxu0
      %v3629 = vpop.f32.mrb[0].mxu0
      %v3630 = vadd.f32 0.0, %v3629
      %v3631 = vpop.f32.mrb[0].mxu0
      %3632 = vmatprep.mubr.bf16.mxu0 0
      %3633 = vmatmul.mubr.bf16.gmra.mrb[0].mxu0 %v3442
      %v3634 = vpop.f32.mrb[0].mxu0
      %v3635 = vadd.f32 0.0, %v3634
      %v3636 = vpop.f32.mrb[0].mxu0
      %v3637 = vpop.f32.mrb[0].mxu0
      %v3638 = vadd.f32 0.0, %v3637
      %v3639 = vpop.f32.mrb[0].mxu0
      %3640 = vmatprep.mubr.bf16.mxu0 0
      %3641 = vmatmul.mubr.bf16.gmra.mrb[0].mxu0 %v3444
      %v3642 = vpop.f32.mrb[0].mxu0
      %v3643 = vadd.f32 0.0, %v3642
      %v3644 = vpop.f32.mrb[0].mxu0
      %v3645 = vpop.f32.mrb[0].mxu0
      %v3646 = vadd.f32 0.0, %v3645
      %v3647 = vpop.f32.mrb[0].mxu0
      %3648 = vmatprep.mubr.bf16.mxu0 0
      %3649 = vmatmul.mubr.bf16.gmra.mrb[0].mxu0 %v3446
      %v3650 = vpop.f32.mrb[0].mxu0
      %v3651 = vadd.f32 0.0, %v3650
      %v3652 = vpop.f32.mrb[0].mxu0
      %v3653 = vpop.f32.mrb[0].mxu0
      %v3654 = vadd.f32 0.0, %v3653
      %v3655 = vpop.f32.mrb[0].mxu0
      %3656 = vmatprep.mubr.bf16.mxu0 0
      %3657 = vmatmul.mubr.bf16.gmra.mrb[0].mxu0 %v3448
      %v3658 = vpop.f32.mrb[0].mxu0
      %v3659 = vadd.f32 0.0, %v3658
      %v3660 = vpop.f32.mrb[0].mxu0
      %v3661 = vpop.f32.mrb[0].mxu0
      %v3662 = vadd.f32 0.0, %v3661
      %v3663 = vpop.f32.mrb[0].mxu0
      %3664 = vmatprep.mubr.bf16.mxu0 0
      %3665 = vmatmul.mubr.bf16.gmra.mrb[0].mxu0 %v3450
      %v3666 = vpop.f32.mrb[0].mxu0
      %v3667 = vadd.f32 0.0, %v3666
      %v3668 = vpop.f32.mrb[0].mxu0
      %v3669 = vpop.f32.mrb[0].mxu0
      %v3670 = vadd.f32 0.0, %v3669
      %v3671 = vpop.f32.mrb[0].mxu0
      %3672 = vmatprep.mubr.bf16.mxu0 0
      %3673 = vmatmul.mubr.bf16.gmra.mrb[0].mxu0 %v3452
      %v3674 = vpop.f32.mrb[0].mxu0
      %v3675 = vadd.f32 0.0, %v3674
      %v3676 = vpop.f32.mrb[0].mxu0
      %v3677 = vpop.f32.mrb[0].mxu0
      %v3678 = vadd.f32 0.0, %v3677
      %v3679 = vpop.f32.mrb[0].mxu0
      %3680 = vmatprep.mubr.bf16.mxu0 0
      %3681 = vmatmul.mubr.bf16.gmra.mrb[0].mxu0 %v3454
      %v3682 = vpop.f32.mrb[0].mxu0
      %v3683 = vadd.f32 0.0, %v3682
      %v3684 = vpop.f32.mrb[0].mxu0
      %v3685 = vpop.f32.mrb[0].mxu0
      %v3686 = vadd.f32 0.0, %v3685
      %v3687 = vpop.f32.mrb[0].mxu0
      %3688 = vdwg.mxu0
      %v3689 = vadd.f32 %v3364, %v3555
      %v3690 = vadd.f32 %v3365, %v3558
      %v3691 = vadd.f32 %v3366, %v3563
      %v3692 = vadd.f32 %v3367, %v3566
      %v3693 = vadd.f32 %v3368, %v3571
      %v3694 = vadd.f32 %v3369, %v3574
      %v3695 = vadd.f32 %v3370, %v3579
      %v3696 = vadd.f32 %v3371, %v3582
      %v3697 = vadd.f32 %v3372, %v3587
      %v3698 = vadd.f32 %v3373, %v3590
      %v3699 = vadd.f32 %v3374, %v3595
      %v3700 = vadd.f32 %v3375, %v3598
      %v3701 = vadd.f32 %v3376, %v3603
      %v3702 = vadd.f32 %v3377, %v3606
      %v3703 = vadd.f32 %v3378, %v3611
      %v3704 = vadd.f32 %v3379, %v3614
      %v3705 = vadd.f32 %v3380, %v3619
      %v3706 = vadd.f32 %v3381, %v3622
      %v3707 = vadd.f32 %v3382, %v3627
      %v3708 = vadd.f32 %v3383, %v3630
      %v3709 = vadd.f32 %v3384, %v3635
      %v3710 = vadd.f32 %v3385, %v3638
      %v3711 = vadd.f32 %v3386, %v3643
      %v3712 = vadd.f32 %v3387, %v3646
      %v3713 = vadd.f32 %v3388, %v3651
      %v3714 = vadd.f32 %v3389, %v3654
      %v3715 = vadd.f32 %v3390, %v3659
      %v3716 = vadd.f32 %v3391, %v3662
      %v3717 = vadd.f32 %v3392, %v3667
      %v3718 = vadd.f32 %v3393, %v3670
      %v3719 = vadd.f32 %v3394, %v3675
      %v3720 = vadd.f32 %v3395, %v3678
      %v3721 = vadd.f32 %v3396, %v3683
      %v3722 = vadd.f32 %v3397, %v3686
      %v3723 = vld [vmem:[%s2] sm:$0x1]
      %v3725 = vlaneseq
      %v3726 = vshrl.u32 %v3725, 7
      %v3727 = vsub.s32 0, %v3726
      %v3728 = vrot.slane %v3723, %v3727
      %v3730 = vadd.f32 %v3689, %v3728
      %v3731 = vadd.f32 %v3690, %v3728
      %v3732 = vadd.f32 %v3691, %v3728
      %v3733 = vadd.f32 %v3692, %v3728
      %v3734 = vadd.f32 %v3693, %v3728
      %v3735 = vadd.f32 %v3694, %v3728
      %v3736 = vadd.f32 %v3695, %v3728
      %v3737 = vadd.f32 %v3696, %v3728
      %v3738 = vadd.f32 %v3697, %v3728
      %v3739 = vadd.f32 %v3698, %v3728
      %v3740 = vadd.f32 %v3699, %v3728
      %v3741 = vadd.f32 %v3700, %v3728
      %v3742 = vadd.f32 %v3701, %v3728
      %v3743 = vadd.f32 %v3702, %v3728
      %v3744 = vadd.f32 %v3703, %v3728
      %v3745 = vadd.f32 %v3704, %v3728
      %v3746 = vadd.f32 %v3705, %v3728
      %v3747 = vadd.f32 %v3706, %v3728
      %v3748 = vadd.f32 %v3707, %v3728
      %v3749 = vadd.f32 %v3708, %v3728
      %v3750 = vadd.f32 %v3709, %v3728
      %v3751 = vadd.f32 %v3710, %v3728
      %v3752 = vadd.f32 %v3711, %v3728
      %v3753 = vadd.f32 %v3712, %v3728
      %v3754 = vadd.f32 %v3713, %v3728
      %v3755 = vadd.f32 %v3714, %v3728
      %v3756 = vadd.f32 %v3715, %v3728
      %v3757 = vadd.f32 %v3716, %v3728
      %v3758 = vadd.f32 %v3717, %v3728
      %v3759 = vadd.f32 %v3718, %v3728
      %v3760 = vadd.f32 %v3719, %v3728
      %v3761 = vadd.f32 %v3720, %v3728
      %v3762 = vadd.f32 %v3721, %v3728
      %v3763 = vadd.f32 %v3722, %v3728
      %v3764 = vmax.f32 %v3730, 0.0
      %v3765 = vmax.f32 %v3731, 0.0
      %v3766 = vmax.f32 %v3732, 0.0
      %v3767 = vmax.f32 %v3733, 0.0
      %v3768 = vmax.f32 %v3734, 0.0
      %v3769 = vmax.f32 %v3735, 0.0
      %v3770 = vmax.f32 %v3736, 0.0
      %v3771 = vmax.f32 %v3737, 0.0
      %v3772 = vmax.f32 %v3738, 0.0
      %v3773 = vmax.f32 %v3739, 0.0
      %v3774 = vmax.f32 %v3740, 0.0
      %v3775 = vmax.f32 %v3741, 0.0
      %v3776 = vmax.f32 %v3742, 0.0
      %v3777 = vmax.f32 %v3743, 0.0
      %v3778 = vmax.f32 %v3744, 0.0
      %v3779 = vmax.f32 %v3745, 0.0
      %v3780 = vmax.f32 %v3746, 0.0
      %v3781 = vmax.f32 %v3747, 0.0
      %v3782 = vmax.f32 %v3748, 0.0
      %v3783 = vmax.f32 %v3749, 0.0
      %v3784 = vmax.f32 %v3750, 0.0
      %v3785 = vmax.f32 %v3751, 0.0
      %v3786 = vmax.f32 %v3752, 0.0
      %v3787 = vmax.f32 %v3753, 0.0
      %v3788 = vmax.f32 %v3754, 0.0
      %v3789 = vmax.f32 %v3755, 0.0
      %v3790 = vmax.f32 %v3756, 0.0
      %v3791 = vmax.f32 %v3757, 0.0
      %v3792 = vmax.f32 %v3758, 0.0
      %v3793 = vmax.f32 %v3759, 0.0
      %v3794 = vmax.f32 %v3760, 0.0
      %v3795 = vmax.f32 %v3761, 0.0
      %v3796 = vmax.f32 %v3762, 0.0
      %v3797 = vmax.f32 %v3763, 0.0
      %v3798 = vpack.c.bf16 %v3765, %v3764
      %v3799 = vpack.c.bf16 %v3767, %v3766
      %v3800 = vpack.c.bf16 %v3769, %v3768
      %v3801 = vpack.c.bf16 %v3771, %v3770
      %v3802 = vpack.c.bf16 %v3773, %v3772
      %v3803 = vpack.c.bf16 %v3775, %v3774
      %v3804 = vpack.c.bf16 %v3777, %v3776
      %v3805 = vpack.c.bf16 %v3779, %v3778
      %v3806 = vpack.c.bf16 %v3781, %v3780
      %v3807 = vpack.c.bf16 %v3783, %v3782
      %v3808 = vpack.c.bf16 %v3785, %v3784
      %v3809 = vpack.c.bf16 %v3787, %v3786
      %v3810 = vpack.c.bf16 %v3789, %v3788
      %v3811 = vpack.c.bf16 %v3791, %v3790
      %v3812 = vpack.c.bf16 %v3793, %v3792
      %v3813 = vpack.c.bf16 %v3795, %v3794
      %v3814 = vpack.c.bf16 %v3797, %v3796
      %v3832 = vunpack.c.l.b16 %v3798
      %v3833 = vunpack.c.h.b16 %v3798
      %v3834 = vunpack.c.l.b16 %v3799
      %v3835 = vunpack.c.h.b16 %v3799
      %v3836 = vunpack.c.l.b16 %v3800
      %v3837 = vunpack.c.h.b16 %v3800
      %v3838 = vunpack.c.l.b16 %v3801
      %v3839 = vunpack.c.h.b16 %v3801
      %v3840 = vunpack.c.l.b16 %v3802
      %v3841 = vunpack.c.h.b16 %v3802
      %v3842 = vunpack.c.l.b16 %v3803
      %v3843 = vunpack.c.h.b16 %v3803
      %v3844 = vunpack.c.l.b16 %v3804
      %v3845 = vunpack.c.h.b16 %v3804
      %v3846 = vunpack.c.l.b16 %v3805
      %v3847 = vunpack.c.h.b16 %v3805
      %v3848 = vunpack.c.l.b16 %v3806
      %v3849 = vunpack.c.h.b16 %v3806
      %v3850 = vunpack.c.l.b16 %v3807
      %v3851 = vunpack.c.h.b16 %v3807
      %v3852 = vunpack.c.l.b16 %v3808
      %v3853 = vunpack.c.h.b16 %v3808
      %v3854 = vunpack.c.l.b16 %v3809
      %v3855 = vunpack.c.h.b16 %v3809
      %v3856 = vunpack.c.l.b16 %v3810
      %v3857 = vunpack.c.h.b16 %v3810
      %v3858 = vunpack.c.l.b16 %v3811
      %v3859 = vunpack.c.h.b16 %v3811
      %v3860 = vunpack.c.l.b16 %v3812
      %v3861 = vunpack.c.h.b16 %v3812
      %v3862 = vunpack.c.l.b16 %v3813
      %v3863 = vunpack.c.h.b16 %v3813
      %v3864 = vunpack.c.l.b16 %v3814
      %v3865 = vunpack.c.h.b16 %v3814
      %v3866 = vpack.c.b16 %v3832, %v3832
      %v3867 = vpack.c.b16 %v3833, %v3833
      %v3868 = vpack.c.b16 %v3834, %v3834
      %v3869 = vpack.c.b16 %v3835, %v3835
      %v3870 = vpack.c.b16 %v3836, %v3836
      %v3871 = vpack.c.b16 %v3837, %v3837
      %v3872 = vpack.c.b16 %v3838, %v3838
      %v3873 = vpack.c.b16 %v3839, %v3839
      %v3874 = vpack.c.b16 %v3840, %v3840
      %v3875 = vpack.c.b16 %v3841, %v3841
      %v3876 = vpack.c.b16 %v3842, %v3842
      %v3877 = vpack.c.b16 %v3843, %v3843
      %v3878 = vpack.c.b16 %v3844, %v3844
      %v3879 = vpack.c.b16 %v3845, %v3845
      %v3880 = vpack.c.b16 %v3846, %v3846
      %v3881 = vpack.c.b16 %v3847, %v3847
      %v3882 = vpack.c.b16 %v3848, %v3848
      %v3883 = vpack.c.b16 %v3849, %v3849
      %v3884 = vpack.c.b16 %v3850, %v3850
      %v3885 = vpack.c.b16 %v3851, %v3851
      %v3886 = vpack.c.b16 %v3852, %v3852
      %v3887 = vpack.c.b16 %v3853, %v3853
      %v3888 = vpack.c.b16 %v3854, %v3854
      %v3889 = vpack.c.b16 %v3855, %v3855
      %v3890 = vpack.c.b16 %v3856, %v3856
      %v3891 = vpack.c.b16 %v3857, %v3857
      %v3892 = vpack.c.b16 %v3858, %v3858
      %v3893 = vpack.c.b16 %v3859, %v3859
      %v3894 = vpack.c.b16 %v3860, %v3860
      %v3895 = vpack.c.b16 %v3861, %v3861
      %v3896 = vpack.c.b16 %v3862, %v3862
      %v3897 = vpack.c.b16 %v3863, %v3863
      %v3898 = vpack.c.b16 %v3864, %v3864
      %v3899 = vpack.c.b16 %v3865, %v3865
      %3934 = vst [vmem:[%s170] sm:$0xf] %v3866
      %3935 = vst [vmem:[%s170 + $0x4] sm:$0xf] %v3867
      %3936 = vst [vmem:[%s170 + $0x8] sm:$0xf] %v3868
      %3937 = vst [vmem:[%s170 + $0xc] sm:$0xf] %v3869
      %3938 = vst [vmem:[%s170 + $0x10] sm:$0xf] %v3870
      %3939 = vst [vmem:[%s170 + $0x14] sm:$0xf] %v3871
      %3940 = vst [vmem:[%s170 + $0x18] sm:$0xf] %v3872
      %3941 = vst [vmem:[%s170 + $0x1c] sm:$0xf] %v3873
      %3942 = vst [vmem:[%s170 + $0x20] sm:$0xf] %v3874
      %3943 = vst [vmem:[%s170 + $0x24] sm:$0xf] %v3875
      %3944 = vst [vmem:[%s170 + $0x28] sm:$0xf] %v3876
      %3945 = vst [vmem:[%s170 + $0x2c] sm:$0xf] %v3877
      %3946 = vst [vmem:[%s170 + $0x30] sm:$0xf] %v3878
      %3947 = vst [vmem:[%s170 + $0x34] sm:$0xf] %v3879
      %3948 = vst [vmem:[%s170 + $0x38] sm:$0xf] %v3880
      %3949 = vst [vmem:[%s170 + $0x3c] sm:$0xf] %v3881
      %3950 = vst [vmem:[%s170 + $0x40] sm:$0xf] %v3882
      %3951 = vst [vmem:[%s170 + $0x44] sm:$0xf] %v3883
      %3952 = vst [vmem:[%s170 + $0x48] sm:$0xf] %v3884
      %3953 = vst [vmem:[%s170 + $0x4c] sm:$0xf] %v3885
      %3954 = vst [vmem:[%s170 + $0x50] sm:$0xf] %v3886
      %3955 = vst [vmem:[%s170 + $0x54] sm:$0xf] %v3887
      %3956 = vst [vmem:[%s170 + $0x58] sm:$0xf] %v3888
      %3957 = vst [vmem:[%s170 + $0x5c] sm:$0xf] %v3889
      %3958 = vst [vmem:[%s170 + $0x60] sm:$0xf] %v3890
      %3959 = vst [vmem:[%s170 + $0x64] sm:$0xf] %v3891
      %3960 = vst [vmem:[%s170 + $0x68] sm:$0xf] %v3892
      %3961 = vst [vmem:[%s170 + $0x6c] sm:$0xf] %v3893
      %3962 = vst [vmem:[%s170 + $0x70] sm:$0xf] %v3894
      %3963 = vst [vmem:[%s170 + $0x74] sm:$0xf] %v3895
      %3964 = vst [vmem:[%s170 + $0x78] sm:$0xf] %v3896
      %3965 = vst [vmem:[%s170 + $0x7c] sm:$0xf] %v3897
      %3966 = vst [vmem:[%s170 + $0x80] sm:$0xf] %v3898
      %3967 = vst [vmem:[%s170 + $0x84] sm:$0xf] %v3899
      %p3968 = scmp.lt.s32.totalorder %s14, 1
      %s3969 = scalar_select %p3968, %s14, 1
      %s3970 = smul.addr %s3969, 34
      %s3971 = smul.addr %s3970, 4
      %s3972 = scalar_lea.vmem %s3, %s3971
      // Predicated region
      $region33: #{inception_forward.6} parent=31 // pred_check
        %p3973 = pneg %p100
      $region34: #{inception_forward.6} parent=31 // pred_check_branch
        %3975 = sbr.rel (%p3973) target = $region36
      $region35: #{inception_forward.6} parent=31 // pred_region
        _
      $region36: #{inception_forward.6} parent=31 // pred_fallthru
        _
    $region32: #{inception_forward.6} parent=5 // pred_fallthru
      _
    %p3976 = scmp.le.s32.totalorder 2, %s9
    // Predicated region
    $region37: #{inception_forward.6} parent=5 // pred_check
      %p3977 = pneg %p3976
    $region38: #{inception_forward.6} parent=5 // pred_check_branch
      %3979 = sbr.rel (%p3977) target = $region40
    $region39: #{inception_forward.6} parent=5 // pred_region
      %s3980 = ssub.s32 %s9, 2
      // Predicated region
      $region41: #{inception_forward.6} parent=39 // pred_check
        %p3981 = pneg %p106
      $region42: #{inception_forward.6} parent=39 // pred_check_branch
        %3983 = sbr.rel (%p3981) target = $region44
      $region43: #{inception_forward.6} parent=39 // pred_region
        %p3984 = scmp.lt.s32.totalorder %s15, 1
        %s3985 = scalar_select %p3984, %s15, 1
        %s3986 = smul.addr %s3985, 34
        %s3987 = smul.addr %s3986, 4
        %s3988 = scalar_lea.vmem %s3, %s3987
      $region44: #{inception_forward.6} parent=39 // pred_fallthru
        _
    $region40: #{inception_forward.6} parent=5 // pred_fallthru
      _
  $region6: #{inception_forward.6} parent=0 // loop_footer
    %s13 = sadd.s32 1, %s9
  $region7: #{inception_forward.6} parent=0 // loop_footer_branch
    %8 = sbr.rel target = $region3
  $region8: #{inception_forward.6} parent=0 // loop_exit
    _

</llo_original>
